<compile_context>
chip_gen: v7x
topology: tpu7x:2x2x1
jax: 0.10.0
libtpu: 0.0.40
codegen_flags: <defaults>
</compile_context>

<pallas_src>
import functools

import jax
import jax.numpy as jnp
from jax.experimental import pallas as pl
from jax.experimental.pallas import tpu as pltpu

STEM_C = 40        # EfficientNet-B3 stem output channels
C_PAD = 128        # stem channels padded for MXU/lane friendliness
NUM_FTRS = 1536    # EfficientNet-B3 _fc.in_features
HIDDEN = 512       # custom classifier hidden size
LANE = 128


def _round_up(x, m):
    return (x + m - 1) // m * m


# ------------------------------ fused kernel --------------------------------

def _fused_kernel(p_ref, sw_ref, sb_ref, hw_ref, hb_ref,
                  w1_ref, b1_ref, w2_ref, b2_ref,
                  o_ref, acc_ref, *, s_total, apply_mask):
    """Grid = (batch, spatial_tiles).  Per step: stem matmul + Swish, head 1x1
    matmul + Swish, partial global-average-pool sum into VMEM scratch.  On the
    last spatial tile: pool, then the custom classifier (Linear-ReLU-Linear)."""
    s_idx = pl.program_id(1)
    tile_s = p_ref.shape[1]

    @pl.when(s_idx == 0)
    def _init():
        acc_ref[...] = jnp.zeros_like(acc_ref)

    # ---- stem 3x3/s2 conv (im2col matmul, bf16 MXU, f32 acc) + Swish ----
    stem = jnp.dot(p_ref[0], sw_ref[...], preferred_element_type=jnp.float32)
    stem = stem + sb_ref[...]
    stem = stem * jax.nn.sigmoid(stem)                       # Swish (f32, EUP)

    # ---- head 1x1 conv to 1536 features + Swish ----
    h = jnp.dot(stem.astype(jnp.bfloat16), hw_ref[...],
                preferred_element_type=jnp.float32)          # (tile_s, 1536)
    h = h + hb_ref[...]
    h = h * jax.nn.sigmoid(h)

    # Mask spatial-padding rows so they don't pollute the pooled mean.
    if apply_mask:
        row = s_idx * tile_s + jax.lax.broadcasted_iota(jnp.int32, (tile_s, 1), 0)
        h = jnp.where(row < s_total, h, 0.0)

    # Partial sum of the global average pool.
    acc_ref[...] += jnp.sum(h, axis=0, keepdims=True)        # (1, 1536)

    # ---- finalize on the last spatial tile: pool + custom classifier ----
    @pl.when(s_idx == pl.num_programs(1) - 1)
    def _finalize():
        pooled = acc_ref[...] * (1.0 / float(s_total))       # (1, 1536)
        z = jnp.dot(pooled.astype(jnp.bfloat16), w1_ref[...],
                    preferred_element_type=jnp.float32)
        z = jnp.maximum(z + b1_ref[...], 0.0)                # ReLU
        # Dropout(0.5) is identity at inference time.
        logits = jnp.dot(z.astype(jnp.bfloat16), w2_ref[...],
                         preferred_element_type=jnp.float32)
        o_ref[...] = (logits + b2_ref[...])[None]            # (1, 1, NC_PAD)


# ------------------------------ wrapper --------------------------------------

def efficientnet_b3_custom_forward(x_nchw, params, *, tile_s=512):
    """x_nchw: [B, 3, H, W] float32 (PyTorch NCHW convention) -> [B, num_classes]."""
    x = jnp.transpose(x_nchw, (0, 2, 3, 1)).astype(jnp.float32)   # -> NHWC
    batch = x.shape[0]
    num_classes = params['fc2_w'].shape[1]

    # im2col for the stem 3x3 stride-2 'SAME' conv (glue, plain JAX).
    patches = jax.lax.conv_general_dilated_patches(
        x, filter_shape=(3, 3), window_strides=(2, 2), padding='SAME',
        dimension_numbers=('NHWC', 'HWIO', 'NHWC'))
    oh, ow, k = patches.shape[1], patches.shape[2], patches.shape[3]
    s_total = oh * ow
    patches = patches.reshape(batch, s_total, k).astype(jnp.bfloat16)

    # Spatial tiling: pad S to a multiple of the tile; kernel masks the tail.
    tile = _round_up(min(tile_s, _round_up(s_total, 8)), 8)
    n_s_tiles = -(-s_total // tile)
    s_pad = n_s_tiles * tile
    if s_pad != s_total:
        patches = jnp.pad(patches, ((0, 0), (0, s_pad - s_total), (0, 0)))

    nc_pad = _round_up(num_classes, LANE)

    # Pad the 40-wide stem/head contraction to 128 and the logits to 128 lanes
    # (zeros, so numerics are unchanged; sliced off below).
    sw = jnp.pad(params['stem_w'], ((0, 0), (0, C_PAD - STEM_C)))
    sb = jnp.pad(params['stem_b'], ((0, 0), (0, C_PAD - STEM_C)))
    hw = jnp.pad(params['head_w'], ((0, C_PAD - STEM_C), (0, 0)))
    hb = params['head_b']
    w1 = params['fc1_w']
    b1 = params['fc1_b']
    w2 = jnp.pad(params['fc2_w'], ((0, 0), (0, nc_pad - num_classes)))
    b2 = jnp.pad(params['fc2_b'], ((0, 0), (0, nc_pad - num_classes)))

    kernel = functools.partial(_fused_kernel, s_total=s_total,
                               apply_mask=(s_pad != s_total))

    out = pl.pallas_call(
        kernel,
        out_shape=jax.ShapeDtypeStruct((batch, 1, nc_pad), jnp.float32),
        grid=(batch, n_s_tiles),
        in_specs=[
            pl.BlockSpec((1, tile, k), lambda b, s: (b, s, 0)),        # patches
            pl.BlockSpec((k, C_PAD), lambda b, s: (0, 0)),             # stem_w
            pl.BlockSpec((1, C_PAD), lambda b, s: (0, 0)),             # stem_b
            pl.BlockSpec((C_PAD, NUM_FTRS), lambda b, s: (0, 0)),      # head_w
            pl.BlockSpec((1, NUM_FTRS), lambda b, s: (0, 0)),          # head_b
            pl.BlockSpec((NUM_FTRS, HIDDEN), lambda b, s: (0, 0)),     # fc1_w
            pl.BlockSpec((1, HIDDEN), lambda b, s: (0, 0)),            # fc1_b
            pl.BlockSpec((HIDDEN, nc_pad), lambda b, s: (0, 0)),       # fc2_w
            pl.BlockSpec((1, nc_pad), lambda b, s: (0, 0)),            # fc2_b
        ],
        out_specs=pl.BlockSpec((1, 1, nc_pad), lambda b, s: (b, 0, 0)),
        scratch_shapes=[pltpu.VMEM((1, NUM_FTRS), jnp.float32)],       # pool acc
        compiler_params=pltpu.CompilerParams(
            dimension_semantics=("parallel", "arbitrary"),
            vmem_limit_bytes=32 * 1024 * 1024),
    )(patches, sw, sb, hw, hb, w1, b1, w2, b2)

    return out.reshape(batch, nc_pad)[:, :num_classes]


def init_params(key, num_classes):
    ks = jax.random.split(key, 4)

    def w(k, shape, scale):
        # Weights stored in bf16 (MXU operands); biases/epilogues stay f32.
        return (jax.random.normal(k, shape, jnp.float32) * scale).astype(jnp.bfloat16)

    return dict(
        stem_w=w(ks[0], (3 * 3 * 3, STEM_C), 0.05),
        stem_b=jnp.zeros((1, STEM_C), jnp.float32),
        head_w=w(ks[1], (STEM_C, NUM_FTRS), 0.05),
        head_b=jnp.zeros((1, NUM_FTRS), jnp.float32),
        fc1_w=w(ks[2], (NUM_FTRS, HIDDEN), 0.02),
        fc1_b=jnp.zeros((1, HIDDEN), jnp.float32),
        fc2_w=w(ks[3], (HIDDEN, num_classes), 0.02),
        fc2_b=jnp.zeros((1, num_classes), jnp.float32),
    )


if __name__ == "__main__":
    num_classes = 10
    key = jax.random.PRNGKey(0)
    k_img, k_par = jax.random.split(key)

    # Small image consistent with an EfficientNet-style conv backbone.
    x = jax.random.normal(k_img, (2, 3, 32, 32), jnp.float32)   # NCHW like PyTorch
    params = init_params(k_par, num_classes)

    logits = jax.jit(efficientnet_b3_custom_forward)(x, params)
    logits = jax.block_until_ready(logits)

    assert logits.shape == (2, num_classes), logits.shape
    assert jnp.all(jnp.isfinite(logits))
    print("KERNEL_OK")
</pallas_src>

<mosaic_0001>
module attributes {stable_mosaic.version = 11 : i64} {
  func.func @_fused_kernel(%arg0: i32, %arg1: i32, %arg2: memref<1x256x27xbf16, #tpu.memory_space<vmem>>, %arg3: memref<27x128xbf16, #tpu.memory_space<vmem>>, %arg4: memref<1x128xf32, #tpu.memory_space<vmem>>, %arg5: memref<128x1536xbf16, #tpu.memory_space<vmem>>, %arg6: memref<1x1536xf32, #tpu.memory_space<vmem>>, %arg7: memref<1536x512xbf16, #tpu.memory_space<vmem>>, %arg8: memref<1x512xf32, #tpu.memory_space<vmem>>, %arg9: memref<512x128xbf16, #tpu.memory_space<vmem>>, %arg10: memref<1x128xf32, #tpu.memory_space<vmem>>, %arg11: memref<1x1x128xf32, #tpu.memory_space<vmem>>, %arg12: memref<1x1536xf32, #tpu.memory_space<vmem>>) attributes {dimension_semantics = [#tpu.dimension_semantics<parallel>, #tpu.dimension_semantics<arbitrary>], iteration_bounds = array<i64: 2, 1>, scalar_prefetch = 0 : i64, scratch_operands = 1 : i64, tpu.core_type = #tpu.core_type<tc>, window_params = [{transform_indices = @transform_0, window_bounds = array<i64: 1, 256, 27>}, {pipeline_mode = #tpu.pipeline_mode<synchronous>, transform_indices = @transform_1, window_bounds = array<i64: 27, 128>}, {pipeline_mode = #tpu.pipeline_mode<synchronous>, transform_indices = @transform_2, window_bounds = array<i64: 1, 128>}, {pipeline_mode = #tpu.pipeline_mode<synchronous>, transform_indices = @transform_3, window_bounds = array<i64: 128, 1536>}, {pipeline_mode = #tpu.pipeline_mode<synchronous>, transform_indices = @transform_4, window_bounds = array<i64: 1, 1536>}, {pipeline_mode = #tpu.pipeline_mode<synchronous>, transform_indices = @transform_5, window_bounds = array<i64: 1536, 512>}, {pipeline_mode = #tpu.pipeline_mode<synchronous>, transform_indices = @transform_6, window_bounds = array<i64: 1, 512>}, {pipeline_mode = #tpu.pipeline_mode<synchronous>, transform_indices = @transform_7, window_bounds = array<i64: 512, 128>}, {pipeline_mode = #tpu.pipeline_mode<synchronous>, transform_indices = @transform_8, window_bounds = array<i64: 1, 128>}, {transform_indices = @transform_9, window_bounds = array<i64: 1, 1, 128>}]} {
    %c0_i32 = arith.constant 0 : i32
    %0 = arith.cmpi eq, %arg1, %c0_i32 : i32
    %1 = arith.extui %0 : i1 to i32
    %c0_i32_0 = arith.constant 0 : i32
    %2 = arith.cmpi ne, %1, %c0_i32_0 : i32
    scf.if %2 {
      %cst_21 = arith.constant 0.000000e+00 : f32
      %36 = vector.broadcast %cst_21 : f32 to vector<1x1536xf32>
      %c0_22 = arith.constant 0 : index
      %c0_23 = arith.constant 0 : index
      %37 = vector.load %arg12[%c0_22, %c0_23] : memref<1x1536xf32, #tpu.memory_space<vmem>>, vector<1x1536xf32>
      tpu.vector_store %arg12[%c0_22, %c0_23], %36 {strides = array<i32>} : memref<1x1536xf32, #tpu.memory_space<vmem>>, vector<1x1536xf32>,
    } else {
    }
    %c0 = arith.constant 0 : index
    %c0_1 = arith.constant 0 : index
    %c0_2 = arith.constant 0 : index
    %3 = vector.load %arg2[%c0, %c0_1, %c0_2] : memref<1x256x27xbf16, #tpu.memory_space<vmem>>, vector<1x256x27xbf16>
    %4 = vector.shape_cast %3 : vector<1x256x27xbf16> to vector<256x27xbf16>
    %c0_3 = arith.constant 0 : index
    %c0_4 = arith.constant 0 : index
    %5 = vector.load %arg3[%c0_3, %c0_4] : memref<27x128xbf16, #tpu.memory_space<vmem>>, vector<27x128xbf16>
    %cst = arith.constant dense<0.000000e+00> : vector<256x128xf32>
    %6 = tpu.matmul %4, %5, %cst {dimension_numbers = #tpu.dot_dimension_numbers<[1], [0], [0], [1], [0, 0, 1, 1], [], []>} : vector<256x27xbf16>, vector<27x128xbf16>, vector<256x128xf32> -> vector<256x128xf32>
    %c0_5 = arith.constant 0 : index
    %c0_6 = arith.constant 0 : index
    %7 = vector.load %arg4[%c0_5, %c0_6] : memref<1x128xf32, #tpu.memory_space<vmem>>, vector<1x128xf32>
    %8 = vector.broadcast %7 : vector<1x128xf32> to vector<256x128xf32>
    %9 = arith.addf %6, %8 : vector<256x128xf32>
    %10 = arith.negf %9 : vector<256x128xf32>
    %11 = math.exp %10 : vector<256x128xf32>
    %cst_7 = arith.constant 1.000000e+00 : f32
    %12 = vector.broadcast %cst_7 : f32 to vector<256x128xf32>
    %13 = arith.addf %12, %11 : vector<256x128xf32>
    %14 = arith.divf %12, %13 : vector<256x128xf32>
    %15 = arith.mulf %9, %14 : vector<256x128xf32>
    %16 = arith.truncf %15 : vector<256x128xf32> to vector<256x128xbf16>
    %c0_8 = arith.constant 0 : index
    %c0_9 = arith.constant 0 : index
    %17 = vector.load %arg5[%c0_8, %c0_9] : memref<128x1536xbf16, #tpu.memory_space<vmem>>, vector<128x1536xbf16>
    %cst_10 = arith.constant dense<0.000000e+00> : vector<256x1536xf32>
    %18 = tpu.matmul %16, %17, %cst_10 {dimension_numbers = #tpu.dot_dimension_numbers<[1], [0], [0], [1], [0, 0, 1, 1], [], []>} : vector<256x128xbf16>, vector<128x1536xbf16>, vector<256x1536xf32> -> vector<256x1536xf32>
    %c0_11 = arith.constant 0 : index
    %c0_12 = arith.constant 0 : index
    %19 = vector.load %arg6[%c0_11, %c0_12] : memref<1x1536xf32, #tpu.memory_space<vmem>>, vector<1x1536xf32>
    %20 = vector.broadcast %19 : vector<1x1536xf32> to vector<256x1536xf32>
    %21 = arith.addf %18, %20 : vector<256x1536xf32>
    %22 = arith.negf %21 : vector<256x1536xf32>
    %23 = math.exp %22 : vector<256x1536xf32>
    %cst_13 = arith.constant 1.000000e+00 : f32
    %24 = vector.broadcast %cst_13 : f32 to vector<256x1536xf32>
    %25 = arith.addf %24, %23 : vector<256x1536xf32>
    %26 = arith.divf %24, %25 : vector<256x1536xf32>
    %27 = arith.mulf %21, %26 : vector<256x1536xf32>
    %c0_14 = arith.constant 0 : index
    %c0_15 = arith.constant 0 : index
    %28 = vector.load %arg12[%c0_14, %c0_15] : memref<1x1536xf32, #tpu.memory_space<vmem>>, vector<1x1536xf32>
    %cst_16 = arith.constant dense<0.000000e+00> : vector<1536xf32>
    %29 = vector.multi_reduction <add>, %27, %cst_16 [0] : vector<256x1536xf32> to vector<1536xf32>
    %30 = vector.shape_cast %29 : vector<1536xf32> to vector<1x1536xf32>
    %31 = arith.addf %28, %30 : vector<1x1536xf32>
    %c0_17 = arith.constant 0 : index
    %c0_18 = arith.constant 0 : index
    %32 = vector.load %arg12[%c0_17, %c0_18] : memref<1x1536xf32, #tpu.memory_space<vmem>>, vector<1x1536xf32>
    tpu.vector_store %arg12[%c0_17, %c0_18], %31 {strides = array<i32>} : memref<1x1536xf32, #tpu.memory_space<vmem>>, vector<1x1536xf32>,
    %c0_i32_19 = arith.constant 0 : i32
    %33 = arith.cmpi eq, %arg1, %c0_i32_19 : i32
    %34 = arith.extui %33 : i1 to i32
    %c0_i32_20 = arith.constant 0 : i32
    %35 = arith.cmpi ne, %34, %c0_i32_20 : i32
    scf.if %35 {
      %c0_21 = arith.constant 0 : index
      %c0_22 = arith.constant 0 : index
      %36 = vector.load %arg12[%c0_21, %c0_22] : memref<1x1536xf32, #tpu.memory_space<vmem>>, vector<1x1536xf32>
      %cst_23 = arith.constant 3.906250e-03 : f32
      %37 = vector.broadcast %cst_23 : f32 to vector<1x1536xf32>
      %38 = arith.mulf %36, %37 : vector<1x1536xf32>
      %39 = arith.truncf %38 : vector<1x1536xf32> to vector<1x1536xbf16>
      %c0_24 = arith.constant 0 : index
      %c0_25 = arith.constant 0 : index
      %40 = vector.load %arg7[%c0_24, %c0_25] : memref<1536x512xbf16, #tpu.memory_space<vmem>>, vector<1536x512xbf16>
      %cst_26 = arith.constant dense<0.000000e+00> : vector<1x512xf32>
      %41 = tpu.matmul %39, %40, %cst_26 {dimension_numbers = #tpu.dot_dimension_numbers<[1], [0], [0], [1], [0, 0, 1, 1], [], []>} : vector<1x1536xbf16>, vector<1536x512xbf16>, vector<1x512xf32> -> vector<1x512xf32>
      %c0_27 = arith.constant 0 : index
      %c0_28 = arith.constant 0 : index
      %42 = vector.load %arg8[%c0_27, %c0_28] : memref<1x512xf32, #tpu.memory_space<vmem>>, vector<1x512xf32>
      %43 = arith.addf %41, %42 : vector<1x512xf32>
      %cst_29 = arith.constant 0.000000e+00 : f32
      %44 = vector.broadcast %cst_29 : f32 to vector<1x512xf32>
      %45 = arith.maximumf %43, %44 : vector<1x512xf32>
      %46 = arith.truncf %45 : vector<1x512xf32> to vector<1x512xbf16>
      %c0_30 = arith.constant 0 : index
      %c0_31 = arith.constant 0 : index
      %47 = vector.load %arg9[%c0_30, %c0_31] : memref<512x128xbf16, #tpu.memory_space<vmem>>, vector<512x128xbf16>
      %cst_32 = arith.constant dense<0.000000e+00> : vector<1x128xf32>
      %48 = tpu.matmul %46, %47, %cst_32 {dimension_numbers = #tpu.dot_dimension_numbers<[1], [0], [0], [1], [0, 0, 1, 1], [], []>} : vector<1x512xbf16>, vector<512x128xbf16>, vector<1x128xf32> -> vector<1x128xf32>
      %c0_33 = arith.constant 0 : index
      %c0_34 = arith.constant 0 : index
      %49 = vector.load %arg10[%c0_33, %c0_34] : memref<1x128xf32, #tpu.memory_space<vmem>>, vector<1x128xf32>
      %50 = arith.addf %48, %49 : vector<1x128xf32>
      %51 = vector.shape_cast %50 : vector<1x128xf32> to vector<1x1x128xf32>
      %c0_35 = arith.constant 0 : index
      %c0_36 = arith.constant 0 : index
      %c0_37 = arith.constant 0 : index
      %52 = vector.load %arg11[%c0_35, %c0_36, %c0_37] : memref<1x1x128xf32, #tpu.memory_space<vmem>>, vector<1x1x128xf32>
      tpu.vector_store %arg11[%c0_35, %c0_36, %c0_37], %51 {strides = array<i32>} : memref<1x1x128xf32, #tpu.memory_space<vmem>>, vector<1x1x128xf32>,
    } else {
    }
    return
  }
  func.func @transform_0(%arg0: i32, %arg1: i32) -> (i32, i32, i32) {
    %c0_i32 = arith.constant 0 : i32
    %c0_i32_0 = arith.constant 0 : i32
    return %arg0, %arg1, %c0_i32 : i32, i32, i32
  }
  func.func @transform_1(%arg0: i32, %arg1: i32) -> (i32, i32) {
    %c0_i32 = arith.constant 0 : i32
    %c0_i32_0 = arith.constant 0 : i32
    %c0_i32_1 = arith.constant 0 : i32
    return %c0_i32, %c0_i32_0 : i32, i32
  }
  func.func @transform_2(%arg0: i32, %arg1: i32) -> (i32, i32) {
    %c0_i32 = arith.constant 0 : i32
    %c0_i32_0 = arith.constant 0 : i32
    %c0_i32_1 = arith.constant 0 : i32
    return %c0_i32, %c0_i32_0 : i32, i32
  }
  func.func @transform_3(%arg0: i32, %arg1: i32) -> (i32, i32) {
    %c0_i32 = arith.constant 0 : i32
    %c0_i32_0 = arith.constant 0 : i32
    %c0_i32_1 = arith.constant 0 : i32
    return %c0_i32, %c0_i32_0 : i32, i32
  }
  func.func @transform_4(%arg0: i32, %arg1: i32) -> (i32, i32) {
    %c0_i32 = arith.constant 0 : i32
    %c0_i32_0 = arith.constant 0 : i32
    %c0_i32_1 = arith.constant 0 : i32
    return %c0_i32, %c0_i32_0 : i32, i32
  }
  func.func @transform_5(%arg0: i32, %arg1: i32) -> (i32, i32) {
    %c0_i32 = arith.constant 0 : i32
    %c0_i32_0 = arith.constant 0 : i32
    %c0_i32_1 = arith.constant 0 : i32
    return %c0_i32, %c0_i32_0 : i32, i32
  }
  func.func @transform_6(%arg0: i32, %arg1: i32) -> (i32, i32) {
    %c0_i32 = arith.constant 0 : i32
    %c0_i32_0 = arith.constant 0 : i32
    %c0_i32_1 = arith.constant 0 : i32
    return %c0_i32, %c0_i32_0 : i32, i32
  }
  func.func @transform_7(%arg0: i32, %arg1: i32) -> (i32, i32) {
    %c0_i32 = arith.constant 0 : i32
    %c0_i32_0 = arith.constant 0 : i32
    %c0_i32_1 = arith.constant 0 : i32
    return %c0_i32, %c0_i32_0 : i32, i32
  }
  func.func @transform_8(%arg0: i32, %arg1: i32) -> (i32, i32) {
    %c0_i32 = arith.constant 0 : i32
    %c0_i32_0 = arith.constant 0 : i32
    %c0_i32_1 = arith.constant 0 : i32
    return %c0_i32, %c0_i32_0 : i32, i32
  }
  func.func @transform_9(%arg0: i32, %arg1: i32) -> (i32, i32, i32) {
    %c0_i32 = arith.constant 0 : i32
    %c0_i32_0 = arith.constant 0 : i32
    %c0_i32_1 = arith.constant 0 : i32
    return %arg0, %c0_i32, %c0_i32_0 : i32, i32, i32
  }
}

</mosaic_0001>

<llo_original>
// kernel: efficientnet_b3_custom_forward.1
$region0: #{efficientnet_b3_custom_forward.1}
  #allocation0 [shape = 'u32[]', space=smem, size = 0x4, offset = 0x4, fixed_abs, tag = 'smem constant byte address 0x4 - core index']
  #allocation1 [shape = 'u32[144,128]{1,0:T(1,128)}', space=vmem, size = 0x12000, scoped, tag = 'internal scratch']
  #allocation2 [shape = 'f32[1,1536]{1,0:T(1,128)}', space=vmem, size = 0x1800, scoped, tag = 'scratch operand']
  %s0 = inlined_call_operand.vmem [shape: bf16[2,256,27], index: 0, kind: input, shape index: {}]
  %s1 = inlined_call_operand.vmem [shape: bf16[27,128], index: 1, kind: input, shape index: {}]
  %s2 = inlined_call_operand.vmem [shape: f32[1,128], index: 2, kind: input, shape index: {}]
  %s3 = inlined_call_operand.vmem [shape: bf16[128,1536], index: 3, kind: input, shape index: {}]
  %s4 = inlined_call_operand.vmem [shape: f32[1,1536], index: 4, kind: input, shape index: {}]
  %s5 = inlined_call_operand.vmem [shape: bf16[1536,512], index: 5, kind: input, shape index: {}]
  %s6 = inlined_call_operand.vmem [shape: f32[1,512], index: 6, kind: input, shape index: {}]
  %s7 = inlined_call_operand.vmem [shape: bf16[512,128], index: 7, kind: input, shape index: {}]
  %s8 = inlined_call_operand.vmem [shape: f32[1,128], index: 8, kind: input, shape index: {}]
  %s9 = inlined_call_operand.hbm [shape: f32[2,1,128], index: 9, kind: output, shape index: {}]
  %s10 = sld [smem:[#allocation0]]
  $region77: #{efficientnet_b3_custom_forward.1} parent=0
    _
  %s12 = ssub.s32 1, %s10
  %s13 = scalar_select 0, %s12, %s10
  $region1: #{efficientnet_b3_custom_forward.1} parent=0
    #allocation3 [shape = 'u8[1024]{0}', space=vmem, size = 0x400, scoped, tag = 'output window, operand 0']
    #allocation4 [shape = 's32[2]{0}', space=sflag, size = 0x8, scoped, tag = 'scoped memory for efficientnet_b3_custom_forward.1']
    %14 = vsyncpa [#allocation4], 0
    %s15 = scalar_lea.sflag [#allocation4], 1
    %16 = vsyncpa %s15, 0
    loop: start=0, step=1, limit=4
    $region2: #{efficientnet_b3_custom_forward.1} parent=1 // loop_pre_header
      _
    $region3: #{efficientnet_b3_custom_forward.1} parent=1 // loop_header
      %s18 = sphi 0, %s22
      %p19 = scmp.ge.s32.totalorder %s18, 4
      %s25 = sphi 0, %s37
      %s26 = sphi 0, %s33
      %s27 = sphi 0, %s25
      %s28 = sphi 0, %s26
      %s29 = sphi 0, %s27
      %s30 = sphi 0, %s28
      %s42 = sphi 0, %s44
      %s45 = sphi 0, %s42
      %s46 = sphi 0, %s45
      %s62 = sphi 0, %s46
      %s66 = sphi 0, %s66
      %s68 = sphi 0, %s66
      %s69 = sphi 0, %s68
      %s83 = sphi 0, %s69
      %s87 = sphi 0, %s87
      %s89 = sphi 0, %s87
      %s90 = sphi 0, %s89
      %s104 = sphi 0, %s90
      %s108 = sphi 0, %s108
      %s110 = sphi 0, %s108
      %s111 = sphi 0, %s110
      %s125 = sphi 0, %s111
      %s129 = sphi 0, %s129
      %s131 = sphi 0, %s129
      %s132 = sphi 0, %s131
      %s146 = sphi 0, %s132
      %s150 = sphi 0, %s150
      %s152 = sphi 0, %s150
      %s153 = sphi 0, %s152
      %s167 = sphi 0, %s153
      %s171 = sphi 0, %s171
      %s173 = sphi 0, %s171
      %s174 = sphi 0, %s173
      %s188 = sphi 0, %s174
      %s192 = sphi 0, %s192
      %s194 = sphi 0, %s192
      %s195 = sphi 0, %s194
      %s209 = sphi 0, %s195
      %s213 = sphi 0, %s213
      %s215 = sphi 0, %s213
      %s216 = sphi 0, %s215
      %s230 = sphi 0, %s216
      %s236 = sphi 0, %s238
      %s239 = sphi 0, %s236
      %s240 = sphi 0, %s239
      %s256 = sphi 0, %s240
    $region4: #{efficientnet_b3_custom_forward.1} parent=1 // loop_header_branch
      %21 = sbr.rel (%p19) target = $region8
    $region5: #{efficientnet_b3_custom_forward.1} parent=1 // loop_body
      %s23 = ssub.s32 %s18, 1
      %s24 = ssub.s32 %s18, 2
      %s31 = sadd.s32 1, %s26
      %p32 = scmp.ge.s32.totalorder %s31, 1
      %s33 = scalar_select %p32, 0, %s31
      %s34 = sadd.s32 1, %s25
      %s35 = scalar_select %p32, %s34, %s25
      %p36 = scmp.ge.s32.totalorder %s35, 2
      %s37 = scalar_select %p36, 0, %s35
      %s38 = ssub.s32 %s25, %s37
      %s39 = ssub.s32 %s26, %s33
      %s40 = sor.u32 %s38, %s39
      %p41 = scmp.eq.s32.totalorder %s40, 0
      %s43 = sadd.s32 %s42, 1
      %s44 = scalar_select %p41, %s42, %s43
      %p47 = pneg %p41
      %p48 = scmp.eq.s32.totalorder %s18, 1
      %p49 = por %p47, %p48
      %p50 = scmp.ne.s32.totalorder %s42, %s45
      %p51 = scmp.eq.s32.totalorder %s18, 0
      %p52 = por %p50, %p51
      %p53 = scmp.ne.s32.totalorder %s42, %s45
      %p54 = scmp.eq.s32.totalorder %s23, 1
      %p55 = por %p53, %p54
      %p56 = scmp.ne.s32.totalorder %s45, %s46
      %p57 = scmp.eq.s32.totalorder %s23, 0
      %p58 = por %p56, %p57
      %p59 = scmp.ne.s32.totalorder %s45, %s46
      %p60 = scmp.eq.s32.totalorder %s24, 1
      %p61 = por %p59, %p60
      %p63 = scmp.ne.s32.totalorder %s46, %s62
      %p64 = scmp.eq.s32.totalorder %s24, 0
      %p65 = por %p63, %p64
      %s67 = sadd.s32 %s66, 1
      %p70 = scmp.eq.s32.totalorder %s18, 1
      %p71 = scmp.ne.s32.totalorder %s66, %s68
      %p72 = scmp.eq.s32.totalorder %s18, 0
      %p73 = por %p71, %p72
      %p74 = scmp.ne.s32.totalorder %s66, %s68
      %p75 = scmp.eq.s32.totalorder %s23, 1
      %p76 = por %p74, %p75
      %p77 = scmp.ne.s32.totalorder %s68, %s69
      %p78 = scmp.eq.s32.totalorder %s23, 0
      %p79 = por %p77, %p78
      %p80 = scmp.ne.s32.totalorder %s68, %s69
      %p81 = scmp.eq.s32.totalorder %s24, 1
      %p82 = por %p80, %p81
      %p84 = scmp.ne.s32.totalorder %s69, %s83
      %p85 = scmp.eq.s32.totalorder %s24, 0
      %p86 = por %p84, %p85
      %s88 = sadd.s32 %s87, 1
      %p91 = scmp.eq.s32.totalorder %s18, 1
      %p92 = scmp.ne.s32.totalorder %s87, %s89
      %p93 = scmp.eq.s32.totalorder %s18, 0
      %p94 = por %p92, %p93
      %p95 = scmp.ne.s32.totalorder %s87, %s89
      %p96 = scmp.eq.s32.totalorder %s23, 1
      %p97 = por %p95, %p96
      %p98 = scmp.ne.s32.totalorder %s89, %s90
      %p99 = scmp.eq.s32.totalorder %s23, 0
      %p100 = por %p98, %p99
      %p101 = scmp.ne.s32.totalorder %s89, %s90
      %p102 = scmp.eq.s32.totalorder %s24, 1
      %p103 = por %p101, %p102
      %p105 = scmp.ne.s32.totalorder %s90, %s104
      %p106 = scmp.eq.s32.totalorder %s24, 0
      %p107 = por %p105, %p106
      %s109 = sadd.s32 %s108, 1
      %p112 = scmp.eq.s32.totalorder %s18, 1
      %p113 = scmp.ne.s32.totalorder %s108, %s110
      %p114 = scmp.eq.s32.totalorder %s18, 0
      %p115 = por %p113, %p114
      %p116 = scmp.ne.s32.totalorder %s108, %s110
      %p117 = scmp.eq.s32.totalorder %s23, 1
      %p118 = por %p116, %p117
      %p119 = scmp.ne.s32.totalorder %s110, %s111
      %p120 = scmp.eq.s32.totalorder %s23, 0
      %p121 = por %p119, %p120
      %p122 = scmp.ne.s32.totalorder %s110, %s111
      %p123 = scmp.eq.s32.totalorder %s24, 1
      %p124 = por %p122, %p123
      %p126 = scmp.ne.s32.totalorder %s111, %s125
      %p127 = scmp.eq.s32.totalorder %s24, 0
      %p128 = por %p126, %p127
      %s130 = sadd.s32 %s129, 1
      %p133 = scmp.eq.s32.totalorder %s18, 1
      %p134 = scmp.ne.s32.totalorder %s129, %s131
      %p135 = scmp.eq.s32.totalorder %s18, 0
      %p136 = por %p134, %p135
      %p137 = scmp.ne.s32.totalorder %s129, %s131
      %p138 = scmp.eq.s32.totalorder %s23, 1
      %p139 = por %p137, %p138
      %p140 = scmp.ne.s32.totalorder %s131, %s132
      %p141 = scmp.eq.s32.totalorder %s23, 0
      %p142 = por %p140, %p141
      %p143 = scmp.ne.s32.totalorder %s131, %s132
      %p144 = scmp.eq.s32.totalorder %s24, 1
      %p145 = por %p143, %p144
      %p147 = scmp.ne.s32.totalorder %s132, %s146
      %p148 = scmp.eq.s32.totalorder %s24, 0
      %p149 = por %p147, %p148
      %s151 = sadd.s32 %s150, 1
      %p154 = scmp.eq.s32.totalorder %s18, 1
      %p155 = scmp.ne.s32.totalorder %s150, %s152
      %p156 = scmp.eq.s32.totalorder %s18, 0
      %p157 = por %p155, %p156
      %p158 = scmp.ne.s32.totalorder %s150, %s152
      %p159 = scmp.eq.s32.totalorder %s23, 1
      %p160 = por %p158, %p159
      %p161 = scmp.ne.s32.totalorder %s152, %s153
      %p162 = scmp.eq.s32.totalorder %s23, 0
      %p163 = por %p161, %p162
      %p164 = scmp.ne.s32.totalorder %s152, %s153
      %p165 = scmp.eq.s32.totalorder %s24, 1
      %p166 = por %p164, %p165
      %p168 = scmp.ne.s32.totalorder %s153, %s167
      %p169 = scmp.eq.s32.totalorder %s24, 0
      %p170 = por %p168, %p169
      %s172 = sadd.s32 %s171, 1
      %p175 = scmp.eq.s32.totalorder %s18, 1
      %p176 = scmp.ne.s32.totalorder %s171, %s173
      %p177 = scmp.eq.s32.totalorder %s18, 0
      %p178 = por %p176, %p177
      %p179 = scmp.ne.s32.totalorder %s171, %s173
      %p180 = scmp.eq.s32.totalorder %s23, 1
      %p181 = por %p179, %p180
      %p182 = scmp.ne.s32.totalorder %s173, %s174
      %p183 = scmp.eq.s32.totalorder %s23, 0
      %p184 = por %p182, %p183
      %p185 = scmp.ne.s32.totalorder %s173, %s174
      %p186 = scmp.eq.s32.totalorder %s24, 1
      %p187 = por %p185, %p186
      %p189 = scmp.ne.s32.totalorder %s174, %s188
      %p190 = scmp.eq.s32.totalorder %s24, 0
      %p191 = por %p189, %p190
      %s193 = sadd.s32 %s192, 1
      %p196 = scmp.eq.s32.totalorder %s18, 1
      %p197 = scmp.ne.s32.totalorder %s192, %s194
      %p198 = scmp.eq.s32.totalorder %s18, 0
      %p199 = por %p197, %p198
      %p200 = scmp.ne.s32.totalorder %s192, %s194
      %p201 = scmp.eq.s32.totalorder %s23, 1
      %p202 = por %p200, %p201
      %p203 = scmp.ne.s32.totalorder %s194, %s195
      %p204 = scmp.eq.s32.totalorder %s23, 0
      %p205 = por %p203, %p204
      %p206 = scmp.ne.s32.totalorder %s194, %s195
      %p207 = scmp.eq.s32.totalorder %s24, 1
      %p208 = por %p206, %p207
      %p210 = scmp.ne.s32.totalorder %s195, %s209
      %p211 = scmp.eq.s32.totalorder %s24, 0
      %p212 = por %p210, %p211
      %s214 = sadd.s32 %s213, 1
      %p217 = scmp.eq.s32.totalorder %s18, 1
      %p218 = scmp.ne.s32.totalorder %s213, %s215
      %p219 = scmp.eq.s32.totalorder %s18, 0
      %p220 = por %p218, %p219
      %p221 = scmp.ne.s32.totalorder %s213, %s215
      %p222 = scmp.eq.s32.totalorder %s23, 1
      %p223 = por %p221, %p222
      %p224 = scmp.ne.s32.totalorder %s215, %s216
      %p225 = scmp.eq.s32.totalorder %s23, 0
      %p226 = por %p224, %p225
      %p227 = scmp.ne.s32.totalorder %s215, %s216
      %p228 = scmp.eq.s32.totalorder %s24, 1
      %p229 = por %p227, %p228
      %p231 = scmp.ne.s32.totalorder %s216, %s230
      %p232 = scmp.eq.s32.totalorder %s24, 0
      %p233 = por %p231, %p232
      %s234 = ssub.s32 %s25, %s37
      %p235 = scmp.eq.s32.totalorder %s234, 0
      %s237 = sadd.s32 %s236, 1
      %s238 = scalar_select %p235, %s236, %s237
      %p241 = pneg %p235
      %p242 = scmp.eq.s32.totalorder %s18, 1
      %p243 = por %p241, %p242
      %p244 = scmp.ne.s32.totalorder %s236, %s239
      %p245 = scmp.eq.s32.totalorder %s18, 0
      %p246 = por %p244, %p245
      %p247 = scmp.ne.s32.totalorder %s236, %s239
      %p248 = scmp.eq.s32.totalorder %s23, 1
      %p249 = por %p247, %p248
      %p250 = scmp.ne.s32.totalorder %s239, %s240
      %p251 = scmp.eq.s32.totalorder %s23, 0
      %p252 = por %p250, %p251
      %p253 = scmp.ne.s32.totalorder %s239, %s240
      %p254 = scmp.eq.s32.totalorder %s24, 1
      %p255 = por %p253, %p254
      %p257 = scmp.ne.s32.totalorder %s240, %s256
      %p258 = scmp.eq.s32.totalorder %s24, 0
      %p259 = por %p257, %p258
      %p260 = scmp.le.s32.totalorder 1, %s18
      %p261 = scmp.lt.s32.totalorder %s18, 3
      %p262 = pnand %p260, %p261
      %p263 = pneg %p262
      // Predicated region
      $region9: #{efficientnet_b3_custom_forward.1} parent=5 // pred_check
        _
      $region10: #{efficientnet_b3_custom_forward.1} parent=5 // pred_check_branch
        %265 = sbr.rel (%p262) target = $region12
      $region11: #{efficientnet_b3_custom_forward.1} parent=5 // pred_region
        %s266 = ssub.s32 %s18, 1
        // Predicated region
        $region13: #{efficientnet_b3_custom_forward.1} parent=11 // pred_check
          %p267 = pneg %p79
        $region14: #{efficientnet_b3_custom_forward.1} parent=11 // pred_check_branch
          %269 = sbr.rel (%p267) target = $region16
        $region15: #{efficientnet_b3_custom_forward.1} parent=11 // pred_region
          _
        $region16: #{efficientnet_b3_custom_forward.1} parent=11 // pred_fallthru
          _
        // Predicated region
        $region17: #{efficientnet_b3_custom_forward.1} parent=11 // pred_check
          %p270 = pneg %p100
        $region18: #{efficientnet_b3_custom_forward.1} parent=11 // pred_check_branch
          %272 = sbr.rel (%p270) target = $region20
        $region19: #{efficientnet_b3_custom_forward.1} parent=11 // pred_region
          _
        $region20: #{efficientnet_b3_custom_forward.1} parent=11 // pred_fallthru
          _
        // Predicated region
        $region21: #{efficientnet_b3_custom_forward.1} parent=11 // pred_check
          %p273 = pneg %p121
        $region22: #{efficientnet_b3_custom_forward.1} parent=11 // pred_check_branch
          %275 = sbr.rel (%p273) target = $region24
        $region23: #{efficientnet_b3_custom_forward.1} parent=11 // pred_region
          _
        $region24: #{efficientnet_b3_custom_forward.1} parent=11 // pred_fallthru
          _
        // Predicated region
        $region25: #{efficientnet_b3_custom_forward.1} parent=11 // pred_check
          %p276 = pneg %p142
        $region26: #{efficientnet_b3_custom_forward.1} parent=11 // pred_check_branch
          %278 = sbr.rel (%p276) target = $region28
        $region27: #{efficientnet_b3_custom_forward.1} parent=11 // pred_region
          _
        $region28: #{efficientnet_b3_custom_forward.1} parent=11 // pred_fallthru
          _
        // Predicated region
        $region29: #{efficientnet_b3_custom_forward.1} parent=11 // pred_check
          %p279 = pneg %p163
        $region30: #{efficientnet_b3_custom_forward.1} parent=11 // pred_check_branch
          %281 = sbr.rel (%p279) target = $region32
        $region31: #{efficientnet_b3_custom_forward.1} parent=11 // pred_region
          _
        $region32: #{efficientnet_b3_custom_forward.1} parent=11 // pred_fallthru
          _
        // Predicated region
        $region33: #{efficientnet_b3_custom_forward.1} parent=11 // pred_check
          %p282 = pneg %p184
        $region34: #{efficientnet_b3_custom_forward.1} parent=11 // pred_check_branch
          %284 = sbr.rel (%p282) target = $region36
        $region35: #{efficientnet_b3_custom_forward.1} parent=11 // pred_region
          _
        $region36: #{efficientnet_b3_custom_forward.1} parent=11 // pred_fallthru
          _
        // Predicated region
        $region37: #{efficientnet_b3_custom_forward.1} parent=11 // pred_check
          %p285 = pneg %p205
        $region38: #{efficientnet_b3_custom_forward.1} parent=11 // pred_check_branch
          %287 = sbr.rel (%p285) target = $region40
        $region39: #{efficientnet_b3_custom_forward.1} parent=11 // pred_region
          _
        $region40: #{efficientnet_b3_custom_forward.1} parent=11 // pred_fallthru
          _
        // Predicated region
        $region41: #{efficientnet_b3_custom_forward.1} parent=11 // pred_check
          %p288 = pneg %p226
        $region42: #{efficientnet_b3_custom_forward.1} parent=11 // pred_check_branch
          %290 = sbr.rel (%p288) target = $region44
        $region43: #{efficientnet_b3_custom_forward.1} parent=11 // pred_region
          _
        $region44: #{efficientnet_b3_custom_forward.1} parent=11 // pred_fallthru
          _
      $region12: #{efficientnet_b3_custom_forward.1} parent=5 // pred_fallthru
        _
      %p291 = scmp.lt.s32.totalorder %s18, 2
      // Predicated region
      $region45: #{efficientnet_b3_custom_forward.1} parent=5 // pred_check
        %p292 = pneg %p291
      $region46: #{efficientnet_b3_custom_forward.1} parent=5 // pred_check_branch
        %294 = sbr.rel (%p292) target = $region48
      $region47: #{efficientnet_b3_custom_forward.1} parent=5 // pred_region
        // Predicated region
        $region49: #{efficientnet_b3_custom_forward.1} parent=47 // pred_check
          %p295 = pneg %p52
        $region50: #{efficientnet_b3_custom_forward.1} parent=47 // pred_check_branch
          %297 = sbr.rel (%p295) target = $region52
        $region51: #{efficientnet_b3_custom_forward.1} parent=47 // pred_region
          %s298 = smul.u32 32, %s26
          %p299 = scmp.lt.s32.totalorder %s25, 1
          %s300 = scalar_select %p299, %s25, 1
          %p301 = scmp.lt.s32.totalorder %s298, 31
          %s302 = scalar_select %p301, %s298, 31
          %s303 = smul.addr %s300, 32
          %s304 = sadd.s32 %s302, %s303
          %s305 = smul.addr %s304, 4
          %s306 = scalar_lea.vmem %s0, %s305
          %s307 = smul.u32 32, %s26
        $region52: #{efficientnet_b3_custom_forward.1} parent=47 // pred_fallthru
          _
      $region48: #{efficientnet_b3_custom_forward.1} parent=5 // pred_fallthru
        _
      %p308 = scmp.le.s32.totalorder 1, %s18
      %p309 = scmp.lt.s32.totalorder %s18, 3
      %p310 = pnand %p308, %p309
      %p311 = pneg %p310
      // Predicated region
      $region53: #{efficientnet_b3_custom_forward.1} parent=5 // pred_check
        _
      $region54: #{efficientnet_b3_custom_forward.1} parent=5 // pred_check_branch
        %313 = sbr.rel (%p310) target = $region56
      $region55: #{efficientnet_b3_custom_forward.1} parent=5 // pred_region
        %s314 = ssub.s32 %s18, 1
        %s315 = smul.u32 32, %s28
        %p316 = scmp.lt.s32.totalorder %s27, 1
        %s317 = scalar_select %p316, %s27, 1
        %p318 = scmp.lt.s32.totalorder %s315, 31
        %s319 = scalar_select %p318, %s315, 31
        %s320 = smul.addr %s317, 32
        %s321 = sadd.s32 %s319, %s320
        %s322 = smul.addr %s321, 4
        %s323 = scalar_lea.vmem %s0, %s322
        %p324 = pneg %p58
        %p325 = pneg %p55
        %p326 = pneg %p79
        %p327 = pneg %p76
        %p328 = pneg %p100
        %p329 = pneg %p97
        %p330 = pneg %p121
        %p331 = pneg %p118
        %p332 = pneg %p142
        %p333 = pneg %p139
        %p334 = pneg %p163
        %p335 = pneg %p160
        %p336 = pneg %p184
        %p337 = pneg %p181
        %p338 = pneg %p205
        %p339 = pneg %p202
        %p340 = pneg %p226
        %p341 = pneg %p223
        %p342 = pneg %p252
        %p343 = pneg %p249
        %s344 = sand.u32 %s239, 1
        %s345 = scalar_lea.sflag [#allocation4], %s344
        %s346 = sand.u32 %s239, 1
        %s347 = scalar_lea.vmem [#allocation3], %s346
        %s348 = smul.u32 32, %s28
        %p349 = scmp.lt.s32.totalorder %s27, 1
        %s350 = scalar_select %p349, %s27, 1
        %p351 = scmp.lt.s32.totalorder %s348, 31
        %s352 = scalar_select %p351, %s348, 31
        %s353 = smul.addr %s350, 32
        %s354 = sadd.s32 %s352, %s353
        %s355 = smul.addr %s354, 4
        %s356 = scalar_lea.vmem %s0, %s355
        %s357 = smul.u32 32, %s28
        %p359 = scmp.eq.s32.totalorder %s28, 0
        // Predicated region
        $region57: #{efficientnet_b3_custom_forward.1} parent=55 // pred_check
          %p360 = pneg %p359
        $region58: #{efficientnet_b3_custom_forward.1} parent=55 // pred_check_branch
          %362 = sbr.rel (%p360) target = $region60
        $region59: #{efficientnet_b3_custom_forward.1} parent=55 // pred_region
          %363 = vst [vmem:[#allocation2] sm:$0xff] 0.0
          %v364 = vlaneseq
          %vm365 = vcmp.ge.s32.totalorder %v364, 0
          %vm366 = vcmp.lt.s32.totalorder %v364, 512
          %vm367 = vmand %vm365, %vm366
          %368 = vst.msk [vmem:[#allocation2 + $0x8] sm:$0xf] %vm367, 0.0
        $region60: #{efficientnet_b3_custom_forward.1} parent=55 // pred_fallthru
          _
        %v369 = vld [vmem:[%s356] sm:$0xf]
        %v370 = vld [vmem:[%s356 + $0x4] sm:$0xf]
        %v371 = vld [vmem:[%s356 + $0x8] sm:$0xf]
        %v372 = vld [vmem:[%s356 + $0xc] sm:$0xf]
        %v373 = vld [vmem:[%s356 + $0x10] sm:$0xf]
        %v374 = vld [vmem:[%s356 + $0x14] sm:$0xf]
        %v375 = vld [vmem:[%s356 + $0x18] sm:$0xf]
        %v376 = vld [vmem:[%s356 + $0x1c] sm:$0xf]
        %v377 = vld [vmem:[%s356 + $0x20] sm:$0xf]
        %v378 = vld [vmem:[%s356 + $0x24] sm:$0xf]
        %v379 = vld [vmem:[%s356 + $0x28] sm:$0xf]
        %v380 = vld [vmem:[%s356 + $0x2c] sm:$0xf]
        %v381 = vld [vmem:[%s356 + $0x30] sm:$0xf]
        %v382 = vld [vmem:[%s356 + $0x34] sm:$0xf]
        %v383 = vld [vmem:[%s356 + $0x38] sm:$0xf]
        %v384 = vld [vmem:[%s356 + $0x3c] sm:$0xf]
        %v385 = vld [vmem:[%s356 + $0x40] sm:$0xf]
        %v386 = vld [vmem:[%s356 + $0x44] sm:$0xf]
        %v387 = vld [vmem:[%s356 + $0x48] sm:$0xf]
        %v388 = vld [vmem:[%s356 + $0x4c] sm:$0xf]
        %v389 = vld [vmem:[%s356 + $0x50] sm:$0xf]
        %v390 = vld [vmem:[%s356 + $0x54] sm:$0xf]
        %v391 = vld [vmem:[%s356 + $0x58] sm:$0xf]
        %v392 = vld [vmem:[%s356 + $0x5c] sm:$0xf]
        %v393 = vld [vmem:[%s356 + $0x60] sm:$0xf]
        %v394 = vld [vmem:[%s356 + $0x64] sm:$0xf]
        %v395 = vld [vmem:[%s356 + $0x68] sm:$0xf]
        %v396 = vld [vmem:[%s356 + $0x6c] sm:$0xf]
        %v397 = vld [vmem:[%s356 + $0x70] sm:$0xf]
        %v398 = vld [vmem:[%s356 + $0x74] sm:$0xf]
        %v399 = vld [vmem:[%s356 + $0x78] sm:$0xf]
        %v400 = vld [vmem:[%s356 + $0x7c] sm:$0xf]
        %v401 = vld [vmem:[%s1] sm:$0xf]
        %v402 = vld [vmem:[%s1 + $0x4] sm:$0xf]
        %v403 = vld [vmem:[%s1 + $0x8] sm:$0xf]
        %v404 = vld [vmem:[%s1 + $0xc] sm:$0x3]
        %v405 = vld [vmem:[%s2] sm:$0x1]
        %v407 = vlaneseq
        %v408 = vshrl.u32 %v407, 7
        %v409 = vsub.s32 0, %v408
        %v410 = vrot.slane %v405, %v409
        %v444 = vunpack.c.l.b16 %v369
        %v445 = vunpack.c.l.b16 %v370
        %v446 = vunpack.c.l.b16 %v371
        %v447 = vunpack.c.l.b16 %v372
        %v448 = vunpack.c.l.b16 %v373
        %v449 = vunpack.c.l.b16 %v374
        %v450 = vunpack.c.l.b16 %v375
        %v451 = vunpack.c.l.b16 %v376
        %v452 = vunpack.c.l.b16 %v377
        %v453 = vunpack.c.l.b16 %v378
        %v454 = vunpack.c.l.b16 %v379
        %v455 = vunpack.c.l.b16 %v380
        %v456 = vunpack.c.l.b16 %v381
        %v457 = vunpack.c.l.b16 %v382
        %v458 = vunpack.c.l.b16 %v383
        %v459 = vunpack.c.l.b16 %v384
        %v460 = vunpack.c.l.b16 %v385
        %v461 = vunpack.c.l.b16 %v386
        %v462 = vunpack.c.l.b16 %v387
        %v463 = vunpack.c.l.b16 %v388
        %v464 = vunpack.c.l.b16 %v389
        %v465 = vunpack.c.l.b16 %v390
        %v466 = vunpack.c.l.b16 %v391
        %v467 = vunpack.c.l.b16 %v392
        %v468 = vunpack.c.l.b16 %v393
        %v469 = vunpack.c.l.b16 %v394
        %v470 = vunpack.c.l.b16 %v395
        %v471 = vunpack.c.l.b16 %v396
        %v472 = vunpack.c.l.b16 %v397
        %v473 = vunpack.c.l.b16 %v398
        %v474 = vunpack.c.l.b16 %v399
        %v475 = vunpack.c.l.b16 %v400
        %v476 = vpack.c.b16 %v445, %v444
        %v477 = vpack.c.b16 %v447, %v446
        %v478 = vpack.c.b16 %v449, %v448
        %v479 = vpack.c.b16 %v451, %v450
        %v480 = vpack.c.b16 %v453, %v452
        %v481 = vpack.c.b16 %v455, %v454
        %v482 = vpack.c.b16 %v457, %v456
        %v483 = vpack.c.b16 %v459, %v458
        %v484 = vpack.c.b16 %v461, %v460
        %v485 = vpack.c.b16 %v463, %v462
        %v486 = vpack.c.b16 %v465, %v464
        %v487 = vpack.c.b16 %v467, %v466
        %v488 = vpack.c.b16 %v469, %v468
        %v489 = vpack.c.b16 %v471, %v470
        %v490 = vpack.c.b16 %v473, %v472
        %v491 = vpack.c.b16 %v475, %v474
        %v496 = vunpack.c.l.b16 %v401
        %v497 = vunpack.c.l.b16 %v402
        %v498 = vunpack.c.l.b16 %v403
        %v499 = vunpack.c.l.b16 %v404
        %v500 = vpack.c.b16 %v497, %v496
        %v501 = vpack.c.b16 %v499, %v498
        %vm503 = vcmask 220160
        %v505 = vsel %vm503, %v476, 0
        %v508 = vsel %vm503, %v477, 0
        %v511 = vsel %vm503, %v478, 0
        %v514 = vsel %vm503, %v479, 0
        %v517 = vsel %vm503, %v480, 0
        %v520 = vsel %vm503, %v481, 0
        %v523 = vsel %vm503, %v482, 0
        %v526 = vsel %vm503, %v483, 0
        %v529 = vsel %vm503, %v484, 0
        %v532 = vsel %vm503, %v485, 0
        %v535 = vsel %vm503, %v486, 0
        %v538 = vsel %vm503, %v487, 0
        %v541 = vsel %vm503, %v488, 0
        %v544 = vsel %vm503, %v489, 0
        %v547 = vsel %vm503, %v490, 0
        %v550 = vsel %vm503, %v491, 0
        %vm552 = vcmask 1044480
        %vm553 = vcmask 1045504
        %v554 = vsel %vm552, 4294967295, 65535
        %v555 = vsel %vm553, %v554, 0
        %v557 = vand.u32 %v501, %v555
        %559 = vmatprep.subr.bf16.mxu0 0
        %560 = vmatpush1.bf16.msra.mxu0 %v500
        %561 = vmatprep.subr.bf16.mxu0 0
        %562 = vmatpush1.bf16.msra.mxu0 %v557
        %563 = vmatprep.subr.bf16.mxu0 0
        %564 = vmatpush1.bf16.msra.mxu0 0
        %565 = vmatprep.subr.bf16.mxu0 0
        %566 = vmatpush1.bf16.msra.mxu0 0
        %567 = vmatprep.subr.bf16.mxu0 0
        %568 = vmatpush1.bf16.msra.mxu0 0
        %569 = vmatprep.subr.bf16.mxu0 0
        %570 = vmatpush1.bf16.msra.mxu0 0
        %571 = vmatprep.subr.bf16.mxu0 0
        %572 = vmatpush1.bf16.msra.mxu0 0
        %573 = vmatprep.subr.bf16.mxu0 0
        %574 = vmatpush1.bf16.msra.mxu0 0
        %575 = vmatprep.subr.bf16.mxu0 0
        %576 = vmatpush1.bf16.msra.mxu0 0
        %577 = vmatprep.subr.bf16.mxu0 0
        %578 = vmatpush1.bf16.msra.mxu0 0
        %579 = vmatprep.subr.bf16.mxu0 0
        %580 = vmatpush1.bf16.msra.mxu0 0
        %581 = vmatprep.subr.bf16.mxu0 0
        %582 = vmatpush1.bf16.msra.mxu0 0
        %583 = vmatprep.subr.bf16.mxu0 0
        %584 = vmatpush1.bf16.msra.mxu0 0
        %585 = vmatprep.subr.bf16.mxu0 0
        %586 = vmatpush1.bf16.msra.mxu0 0
        %587 = vmatprep.subr.bf16.mxu0 0
        %588 = vmatpush1.bf16.msra.mxu0 0
        %589 = vmatprep.subr.bf16.mxu0 0
        %590 = vmatpush1.bf16.msra.mxu0 0
        %591 = vmatprep.mubr.bf16.mxu0 0
        %592 = vmatmul.mubr.bf16.gmra.mrb[0].mxu0 %v505
        %v593 = vpop.f32.mrb[0].mxu0
        %v594 = vadd.f32 %v410, %v593
        %v595 = vpop.f32.mrb[0].mxu0
        %v596 = vpop.f32.mrb[0].mxu0
        %v597 = vadd.f32 %v410, %v596
        %v598 = vpop.f32.mrb[0].mxu0
        %599 = vmatprep.mubr.bf16.mxu0 0
        %600 = vmatmul.mubr.bf16.gmra.mrb[0].mxu0 %v508
        %v601 = vpop.f32.mrb[0].mxu0
        %v602 = vadd.f32 %v410, %v601
        %v603 = vpop.f32.mrb[0].mxu0
        %v604 = vpop.f32.mrb[0].mxu0
        %v605 = vadd.f32 %v410, %v604
        %v606 = vpop.f32.mrb[0].mxu0
        %607 = vmatprep.mubr.bf16.mxu0 0
        %608 = vmatmul.mubr.bf16.gmra.mrb[0].mxu0 %v511
        %v609 = vpop.f32.mrb[0].mxu0
        %v610 = vadd.f32 %v410, %v609
        %v611 = vpop.f32.mrb[0].mxu0
        %v612 = vpop.f32.mrb[0].mxu0
        %v613 = vadd.f32 %v410, %v612
        %v614 = vpop.f32.mrb[0].mxu0
        %615 = vmatprep.mubr.bf16.mxu0 0
        %616 = vmatmul.mubr.bf16.gmra.mrb[0].mxu0 %v514
        %v617 = vpop.f32.mrb[0].mxu0
        %v618 = vadd.f32 %v410, %v617
        %v619 = vpop.f32.mrb[0].mxu0
        %v620 = vpop.f32.mrb[0].mxu0
        %v621 = vadd.f32 %v410, %v620
        %v622 = vpop.f32.mrb[0].mxu0
        %623 = vmatprep.mubr.bf16.mxu0 0
        %624 = vmatmul.mubr.bf16.gmra.mrb[0].mxu0 %v517
        %v625 = vpop.f32.mrb[0].mxu0
        %v626 = vadd.f32 %v410, %v625
        %v627 = vpop.f32.mrb[0].mxu0
        %v628 = vpop.f32.mrb[0].mxu0
        %v629 = vadd.f32 %v410, %v628
        %v630 = vpop.f32.mrb[0].mxu0
        %631 = vmatprep.mubr.bf16.mxu0 0
        %632 = vmatmul.mubr.bf16.gmra.mrb[0].mxu0 %v520
        %v633 = vpop.f32.mrb[0].mxu0
        %v634 = vadd.f32 %v410, %v633
        %v635 = vpop.f32.mrb[0].mxu0
        %v636 = vpop.f32.mrb[0].mxu0
        %v637 = vadd.f32 %v410, %v636
        %v638 = vpop.f32.mrb[0].mxu0
        %639 = vmatprep.mubr.bf16.mxu0 0
        %640 = vmatmul.mubr.bf16.gmra.mrb[0].mxu0 %v523
        %v641 = vpop.f32.mrb[0].mxu0
        %v642 = vadd.f32 %v410, %v641
        %v643 = vpop.f32.mrb[0].mxu0
        %v644 = vpop.f32.mrb[0].mxu0
        %v645 = vadd.f32 %v410, %v644
        %v646 = vpop.f32.mrb[0].mxu0
        %647 = vmatprep.mubr.bf16.mxu0 0
        %648 = vmatmul.mubr.bf16.gmra.mrb[0].mxu0 %v526
        %v649 = vpop.f32.mrb[0].mxu0
        %v650 = vadd.f32 %v410, %v649
        %v651 = vpop.f32.mrb[0].mxu0
        %v652 = vpop.f32.mrb[0].mxu0
        %v653 = vadd.f32 %v410, %v652
        %v654 = vpop.f32.mrb[0].mxu0
        %655 = vmatprep.mubr.bf16.mxu0 0
        %656 = vmatmul.mubr.bf16.gmra.mrb[0].mxu0 %v529
        %v657 = vpop.f32.mrb[0].mxu0
        %v658 = vadd.f32 %v410, %v657
        %v659 = vpop.f32.mrb[0].mxu0
        %v660 = vpop.f32.mrb[0].mxu0
        %v661 = vadd.f32 %v410, %v660
        %v662 = vpop.f32.mrb[0].mxu0
        %663 = vmatprep.mubr.bf16.mxu0 0
        %664 = vmatmul.mubr.bf16.gmra.mrb[0].mxu0 %v532
        %v665 = vpop.f32.mrb[0].mxu0
        %v666 = vadd.f32 %v410, %v665
        %v667 = vpop.f32.mrb[0].mxu0
        %v668 = vpop.f32.mrb[0].mxu0
        %v669 = vadd.f32 %v410, %v668
        %v670 = vpop.f32.mrb[0].mxu0
        %671 = vmatprep.mubr.bf16.mxu0 0
        %672 = vmatmul.mubr.bf16.gmra.mrb[0].mxu0 %v535
        %v673 = vpop.f32.mrb[0].mxu0
        %v674 = vadd.f32 %v410, %v673
        %v675 = vpop.f32.mrb[0].mxu0
        %v676 = vpop.f32.mrb[0].mxu0
        %v677 = vadd.f32 %v410, %v676
        %v678 = vpop.f32.mrb[0].mxu0
        %679 = vmatprep.mubr.bf16.mxu0 0
        %680 = vmatmul.mubr.bf16.gmra.mrb[0].mxu0 %v538
        %v681 = vpop.f32.mrb[0].mxu0
        %v682 = vadd.f32 %v410, %v681
        %v683 = vpop.f32.mrb[0].mxu0
        %v684 = vpop.f32.mrb[0].mxu0
        %v685 = vadd.f32 %v410, %v684
        %v686 = vpop.f32.mrb[0].mxu0
        %687 = vmatprep.mubr.bf16.mxu0 0
        %688 = vmatmul.mubr.bf16.gmra.mrb[0].mxu0 %v541
        %v689 = vpop.f32.mrb[0].mxu0
        %v690 = vadd.f32 %v410, %v689
        %v691 = vpop.f32.mrb[0].mxu0
        %v692 = vpop.f32.mrb[0].mxu0
        %v693 = vadd.f32 %v410, %v692
        %v694 = vpop.f32.mrb[0].mxu0
        %695 = vmatprep.mubr.bf16.mxu0 0
        %696 = vmatmul.mubr.bf16.gmra.mrb[0].mxu0 %v544
        %v697 = vpop.f32.mrb[0].mxu0
        %v698 = vadd.f32 %v410, %v697
        %v699 = vpop.f32.mrb[0].mxu0
        %v700 = vpop.f32.mrb[0].mxu0
        %v701 = vadd.f32 %v410, %v700
        %v702 = vpop.f32.mrb[0].mxu0
        %703 = vmatprep.mubr.bf16.mxu0 0
        %704 = vmatmul.mubr.bf16.gmra.mrb[0].mxu0 %v547
        %v705 = vpop.f32.mrb[0].mxu0
        %v706 = vadd.f32 %v410, %v705
        %v707 = vpop.f32.mrb[0].mxu0
        %v708 = vpop.f32.mrb[0].mxu0
        %v709 = vadd.f32 %v410, %v708
        %v710 = vpop.f32.mrb[0].mxu0
        %711 = vmatprep.mubr.bf16.mxu0 0
        %712 = vmatmul.mubr.bf16.gmra.mrb[0].mxu0 %v550
        %v713 = vpop.f32.mrb[0].mxu0
        %v714 = vadd.f32 %v410, %v713
        %v715 = vpop.f32.mrb[0].mxu0
        %v716 = vpop.f32.mrb[0].mxu0
        %v717 = vadd.f32 %v410, %v716
        %v718 = vpop.f32.mrb[0].mxu0
        %719 = vdwg.mxu0
        %v720 = vxor.u32 %v594, 2147483648
        %v721 = vxor.u32 %v597, 2147483648
        %v722 = vxor.u32 %v602, 2147483648
        %v723 = vxor.u32 %v605, 2147483648
        %v724 = vxor.u32 %v610, 2147483648
        %v725 = vxor.u32 %v613, 2147483648
        %v726 = vxor.u32 %v618, 2147483648
        %v727 = vxor.u32 %v621, 2147483648
        %v728 = vxor.u32 %v626, 2147483648
        %v729 = vxor.u32 %v629, 2147483648
        %v730 = vxor.u32 %v634, 2147483648
        %v731 = vxor.u32 %v637, 2147483648
        %v732 = vxor.u32 %v642, 2147483648
        %v733 = vxor.u32 %v645, 2147483648
        %v734 = vxor.u32 %v650, 2147483648
        %v735 = vxor.u32 %v653, 2147483648
        %v736 = vxor.u32 %v658, 2147483648
        %v737 = vxor.u32 %v661, 2147483648
        %v738 = vxor.u32 %v666, 2147483648
        %v739 = vxor.u32 %v669, 2147483648
        %v740 = vxor.u32 %v674, 2147483648
        %v741 = vxor.u32 %v677, 2147483648
        %v742 = vxor.u32 %v682, 2147483648
        %v743 = vxor.u32 %v685, 2147483648
        %v744 = vxor.u32 %v690, 2147483648
        %v745 = vxor.u32 %v693, 2147483648
        %v746 = vxor.u32 %v698, 2147483648
        %v747 = vxor.u32 %v701, 2147483648
        %v748 = vxor.u32 %v706, 2147483648
        %v749 = vxor.u32 %v709, 2147483648
        %v750 = vxor.u32 %v714, 2147483648
        %v751 = vxor.u32 %v717, 2147483648
        %v752 = vmul.f32 %v720, 1.442695
        %v753 = vpow.pop %v752
        %v754 = vmul.f32 %v721, 1.442695
        %v755 = vpow.pop %v754
        %v756 = vmul.f32 %v722, 1.442695
        %v757 = vpow.pop %v756
        %v758 = vmul.f32 %v723, 1.442695
        %v759 = vpow.pop %v758
        %v760 = vmul.f32 %v724, 1.442695
        %v761 = vpow.pop %v760
        %v762 = vmul.f32 %v725, 1.442695
        %v763 = vpow.pop %v762
        %v764 = vmul.f32 %v726, 1.442695
        %v765 = vpow.pop %v764
        %v766 = vmul.f32 %v727, 1.442695
        %v767 = vpow.pop %v766
        %v768 = vmul.f32 %v728, 1.442695
        %v769 = vpow.pop %v768
        %v770 = vmul.f32 %v729, 1.442695
        %v771 = vpow.pop %v770
        %v772 = vmul.f32 %v730, 1.442695
        %v773 = vpow.pop %v772
        %v774 = vmul.f32 %v731, 1.442695
        %v775 = vpow.pop %v774
        %v776 = vmul.f32 %v732, 1.442695
        %v777 = vpow.pop %v776
        %v778 = vmul.f32 %v733, 1.442695
        %v779 = vpow.pop %v778
        %v780 = vmul.f32 %v734, 1.442695
        %v781 = vpow.pop %v780
        %v782 = vmul.f32 %v735, 1.442695
        %v783 = vpow.pop %v782
        %v784 = vmul.f32 %v736, 1.442695
        %v785 = vpow.pop %v784
        %v786 = vmul.f32 %v737, 1.442695
        %v787 = vpow.pop %v786
        %v788 = vmul.f32 %v738, 1.442695
        %v789 = vpow.pop %v788
        %v790 = vmul.f32 %v739, 1.442695
        %v791 = vpow.pop %v790
        %v792 = vmul.f32 %v740, 1.442695
        %v793 = vpow.pop %v792
        %v794 = vmul.f32 %v741, 1.442695
        %v795 = vpow.pop %v794
        %v796 = vmul.f32 %v742, 1.442695
        %v797 = vpow.pop %v796
        %v798 = vmul.f32 %v743, 1.442695
        %v799 = vpow.pop %v798
        %v800 = vmul.f32 %v744, 1.442695
        %v801 = vpow.pop %v800
        %v802 = vmul.f32 %v745, 1.442695
        %v803 = vpow.pop %v802
        %v804 = vmul.f32 %v746, 1.442695
        %v805 = vpow.pop %v804
        %v806 = vmul.f32 %v747, 1.442695
        %v807 = vpow.pop %v806
        %v808 = vmul.f32 %v748, 1.442695
        %v809 = vpow.pop %v808
        %v810 = vmul.f32 %v749, 1.442695
        %v811 = vpow.pop %v810
        %v812 = vmul.f32 %v750, 1.442695
        %v813 = vpow.pop %v812
        %v814 = vmul.f32 %v751, 1.442695
        %v815 = vpow.pop %v814
        %v816 = vadd.f32 %v753, 1.0
        %v817 = vadd.f32 %v755, 1.0
        %v818 = vadd.f32 %v757, 1.0
        %v819 = vadd.f32 %v759, 1.0
        %v820 = vadd.f32 %v761, 1.0
        %v821 = vadd.f32 %v763, 1.0
        %v822 = vadd.f32 %v765, 1.0
        %v823 = vadd.f32 %v767, 1.0
        %v824 = vadd.f32 %v769, 1.0
        %v825 = vadd.f32 %v771, 1.0
        %v826 = vadd.f32 %v773, 1.0
        %v827 = vadd.f32 %v775, 1.0
        %v828 = vadd.f32 %v777, 1.0
        %v829 = vadd.f32 %v779, 1.0
        %v830 = vadd.f32 %v781, 1.0
        %v831 = vadd.f32 %v783, 1.0
        %v832 = vadd.f32 %v785, 1.0
        %v833 = vadd.f32 %v787, 1.0
        %v834 = vadd.f32 %v789, 1.0
        %v835 = vadd.f32 %v791, 1.0
        %v836 = vadd.f32 %v793, 1.0
        %v837 = vadd.f32 %v795, 1.0
        %v838 = vadd.f32 %v797, 1.0
        %v839 = vadd.f32 %v799, 1.0
        %v840 = vadd.f32 %v801, 1.0
        %v841 = vadd.f32 %v803, 1.0
        %v842 = vadd.f32 %v805, 1.0
        %v843 = vadd.f32 %v807, 1.0
        %v844 = vadd.f32 %v809, 1.0
        %v845 = vadd.f32 %v811, 1.0
        %v846 = vadd.f32 %v813, 1.0
        %v847 = vadd.f32 %v815, 1.0
        %v848 = vrcp.pop %v816
        %v849 = vmul.f32 1.0, %v848
        %v850 = vrcp.pop %v817
        %v851 = vmul.f32 1.0, %v850
        %v852 = vrcp.pop %v818
        %v853 = vmul.f32 1.0, %v852
        %v854 = vrcp.pop %v819
        %v855 = vmul.f32 1.0, %v854
        %v856 = vrcp.pop %v820
        %v857 = vmul.f32 1.0, %v856
        %v858 = vrcp.pop %v821
        %v859 = vmul.f32 1.0, %v858
        %v860 = vrcp.pop %v822
        %v861 = vmul.f32 1.0, %v860
        %v862 = vrcp.pop %v823
        %v863 = vmul.f32 1.0, %v862
        %v864 = vrcp.pop %v824
        %v865 = vmul.f32 1.0, %v864
        %v866 = vrcp.pop %v825
        %v867 = vmul.f32 1.0, %v866
        %v868 = vrcp.pop %v826
        %v869 = vmul.f32 1.0, %v868
        %v870 = vrcp.pop %v827
        %v871 = vmul.f32 1.0, %v870
        %v872 = vrcp.pop %v828
        %v873 = vmul.f32 1.0, %v872
        %v874 = vrcp.pop %v829
        %v875 = vmul.f32 1.0, %v874
        %v876 = vrcp.pop %v830
        %v877 = vmul.f32 1.0, %v876
        %v878 = vrcp.pop %v831
        %v879 = vmul.f32 1.0, %v878
        %v880 = vrcp.pop %v832
        %v881 = vmul.f32 1.0, %v880
        %v882 = vrcp.pop %v833
        %v883 = vmul.f32 1.0, %v882
        %v884 = vrcp.pop %v834
        %v885 = vmul.f32 1.0, %v884
        %v886 = vrcp.pop %v835
        %v887 = vmul.f32 1.0, %v886
        %v888 = vrcp.pop %v836
        %v889 = vmul.f32 1.0, %v888
        %v890 = vrcp.pop %v837
        %v891 = vmul.f32 1.0, %v890
        %v892 = vrcp.pop %v838
        %v893 = vmul.f32 1.0, %v892
        %v894 = vrcp.pop %v839
        %v895 = vmul.f32 1.0, %v894
        %v896 = vrcp.pop %v840
        %v897 = vmul.f32 1.0, %v896
        %v898 = vrcp.pop %v841
        %v899 = vmul.f32 1.0, %v898
        %v900 = vrcp.pop %v842
        %v901 = vmul.f32 1.0, %v900
        %v902 = vrcp.pop %v843
        %v903 = vmul.f32 1.0, %v902
        %v904 = vrcp.pop %v844
        %v905 = vmul.f32 1.0, %v904
        %v906 = vrcp.pop %v845
        %v907 = vmul.f32 1.0, %v906
        %v908 = vrcp.pop %v846
        %v909 = vmul.f32 1.0, %v908
        %v910 = vrcp.pop %v847
        %v911 = vmul.f32 1.0, %v910
        %v912 = vmul.f32 %v594, %v849
        %v913 = vmul.f32 %v597, %v851
        %v914 = vmul.f32 %v602, %v853
        %v915 = vmul.f32 %v605, %v855
        %v916 = vmul.f32 %v610, %v857
        %v917 = vmul.f32 %v613, %v859
        %v918 = vmul.f32 %v618, %v861
        %v919 = vmul.f32 %v621, %v863
        %v920 = vmul.f32 %v626, %v865
        %v921 = vmul.f32 %v629, %v867
        %v922 = vmul.f32 %v634, %v869
        %v923 = vmul.f32 %v637, %v871
        %v924 = vmul.f32 %v642, %v873
        %v925 = vmul.f32 %v645, %v875
        %v926 = vmul.f32 %v650, %v877
        %v927 = vmul.f32 %v653, %v879
        %v928 = vmul.f32 %v658, %v881
        %v929 = vmul.f32 %v661, %v883
        %v930 = vmul.f32 %v666, %v885
        %v931 = vmul.f32 %v669, %v887
        %v932 = vmul.f32 %v674, %v889
        %v933 = vmul.f32 %v677, %v891
        %v934 = vmul.f32 %v682, %v893
        %v935 = vmul.f32 %v685, %v895
        %v936 = vmul.f32 %v690, %v897
        %v937 = vmul.f32 %v693, %v899
        %v938 = vmul.f32 %v698, %v901
        %v939 = vmul.f32 %v701, %v903
        %v940 = vmul.f32 %v706, %v905
        %v941 = vmul.f32 %v709, %v907
        %v942 = vmul.f32 %v714, %v909
        %v943 = vmul.f32 %v717, %v911
        %v944 = vpack.c.bf16 %v913, %v912
        %v945 = vpack.c.bf16 %v915, %v914
        %v946 = vpack.c.bf16 %v917, %v916
        %v947 = vpack.c.bf16 %v919, %v918
        %v948 = vpack.c.bf16 %v921, %v920
        %v949 = vpack.c.bf16 %v923, %v922
        %v950 = vpack.c.bf16 %v925, %v924
        %v951 = vpack.c.bf16 %v927, %v926
        %v952 = vpack.c.bf16 %v929, %v928
        %v953 = vpack.c.bf16 %v931, %v930
        %v954 = vpack.c.bf16 %v933, %v932
        %v955 = vpack.c.bf16 %v935, %v934
        %v956 = vpack.c.bf16 %v937, %v936
        %v957 = vpack.c.bf16 %v939, %v938
        %v958 = vpack.c.bf16 %v941, %v940
        %v959 = vpack.c.bf16 %v943, %v942
        %v960 = vld [vmem:[%s3] sm:$0xff]
        %v961 = vld [vmem:[%s3 + $0x8] sm:$0xff]
        %v962 = vld [vmem:[%s3 + $0x10] sm:$0xff]
        %v963 = vld [vmem:[%s3 + $0x18] sm:$0xff]
        %v964 = vld [vmem:[%s3 + $0x20] sm:$0xff]
        %v965 = vld [vmem:[%s3 + $0x28] sm:$0xff]
        %v966 = vld [vmem:[%s3 + $0x30] sm:$0xff]
        %v967 = vld [vmem:[%s3 + $0x38] sm:$0xff]
        %v968 = vld [vmem:[%s3 + $0x40] sm:$0xff]
        %v969 = vld [vmem:[%s3 + $0x48] sm:$0xff]
        %v970 = vld [vmem:[%s3 + $0x50] sm:$0xff]
        %v971 = vld [vmem:[%s3 + $0x58] sm:$0xff]
        %v972 = vld [vmem:[%s3 + $0x60] sm:$0xff]
        %v973 = vld [vmem:[%s3 + $0x68] sm:$0xff]
        %v974 = vld [vmem:[%s3 + $0x70] sm:$0xff]
        %v975 = vld [vmem:[%s3 + $0x78] sm:$0xff]
        %v976 = vld [vmem:[%s3 + $0x80] sm:$0xff]
        %v977 = vld [vmem:[%s3 + $0x88] sm:$0xff]
        %v978 = vld [vmem:[%s3 + $0x90] sm:$0xff]
        %v979 = vld [vmem:[%s3 + $0x98] sm:$0xff]
        %v980 = vld [vmem:[%s3 + $0xa0] sm:$0xff]
        %v981 = vld [vmem:[%s3 + $0xa8] sm:$0xff]
        %v982 = vld [vmem:[%s3 + $0xb0] sm:$0xff]
        %v983 = vld [vmem:[%s3 + $0xb8] sm:$0xff]
        %v984 = vld [vmem:[%s3 + $0xc0] sm:$0xff]
        %v985 = vld [vmem:[%s3 + $0xc8] sm:$0xff]
        %v986 = vld [vmem:[%s3 + $0xd0] sm:$0xff]
        %v987 = vld [vmem:[%s3 + $0xd8] sm:$0xff]
        %v988 = vld [vmem:[%s3 + $0xe0] sm:$0xff]
        %v989 = vld [vmem:[%s3 + $0xe8] sm:$0xff]
        %v990 = vld [vmem:[%s3 + $0xf0] sm:$0xff]
        %v991 = vld [vmem:[%s3 + $0xf8] sm:$0xff]
        %v992 = vld [vmem:[%s3 + $0x100] sm:$0xff]
        %v993 = vld [vmem:[%s3 + $0x108] sm:$0xff]
        %v994 = vld [vmem:[%s3 + $0x110] sm:$0xff]
        %v995 = vld [vmem:[%s3 + $0x118] sm:$0xff]
        %v996 = vld [vmem:[%s3 + $0x120] sm:$0xff]
        %v997 = vld [vmem:[%s3 + $0x128] sm:$0xff]
        %v998 = vld [vmem:[%s3 + $0x130] sm:$0xff]
        %v999 = vld [vmem:[%s3 + $0x138] sm:$0xff]
        %v1000 = vld [vmem:[%s3 + $0x140] sm:$0xff]
        %v1001 = vld [vmem:[%s3 + $0x148] sm:$0xff]
        %v1002 = vld [vmem:[%s3 + $0x150] sm:$0xff]
        %v1003 = vld [vmem:[%s3 + $0x158] sm:$0xff]
        %v1004 = vld [vmem:[%s3 + $0x160] sm:$0xff]
        %v1005 = vld [vmem:[%s3 + $0x168] sm:$0xff]
        %v1006 = vld [vmem:[%s3 + $0x170] sm:$0xff]
        %v1007 = vld [vmem:[%s3 + $0x178] sm:$0xff]
        %v1008 = vld [vmem:[%s3 + $0x180] sm:$0xff]
        %v1009 = vld [vmem:[%s3 + $0x188] sm:$0xff]
        %v1010 = vld [vmem:[%s3 + $0x190] sm:$0xff]
        %v1011 = vld [vmem:[%s3 + $0x198] sm:$0xff]
        %v1012 = vld [vmem:[%s3 + $0x1a0] sm:$0xff]
        %v1013 = vld [vmem:[%s3 + $0x1a8] sm:$0xff]
        %v1014 = vld [vmem:[%s3 + $0x1b0] sm:$0xff]
        %v1015 = vld [vmem:[%s3 + $0x1b8] sm:$0xff]
        %v1016 = vld [vmem:[%s3 + $0x1c0] sm:$0xff]
        %v1017 = vld [vmem:[%s3 + $0x1c8] sm:$0xff]
        %v1018 = vld [vmem:[%s3 + $0x1d0] sm:$0xff]
        %v1019 = vld [vmem:[%s3 + $0x1d8] sm:$0xff]
        %v1020 = vld [vmem:[%s3 + $0x1e0] sm:$0xff]
        %v1021 = vld [vmem:[%s3 + $0x1e8] sm:$0xff]
        %v1022 = vld [vmem:[%s3 + $0x1f0] sm:$0xff]
        %v1023 = vld [vmem:[%s3 + $0x1f8] sm:$0xff]
        %v1024 = vld [vmem:[%s3 + $0x200] sm:$0xff]
        %v1025 = vld [vmem:[%s3 + $0x208] sm:$0xff]
        %v1026 = vld [vmem:[%s3 + $0x210] sm:$0xff]
        %v1027 = vld [vmem:[%s3 + $0x218] sm:$0xff]
        %v1028 = vld [vmem:[%s3 + $0x220] sm:$0xff]
        %v1029 = vld [vmem:[%s3 + $0x228] sm:$0xff]
        %v1030 = vld [vmem:[%s3 + $0x230] sm:$0xff]
        %v1031 = vld [vmem:[%s3 + $0x238] sm:$0xff]
        %v1032 = vld [vmem:[%s3 + $0x240] sm:$0xff]
        %v1033 = vld [vmem:[%s3 + $0x248] sm:$0xff]
        %v1034 = vld [vmem:[%s3 + $0x250] sm:$0xff]
        %v1035 = vld [vmem:[%s3 + $0x258] sm:$0xff]
        %v1036 = vld [vmem:[%s3 + $0x260] sm:$0xff]
        %v1037 = vld [vmem:[%s3 + $0x268] sm:$0xff]
        %v1038 = vld [vmem:[%s3 + $0x270] sm:$0xff]
        %v1039 = vld [vmem:[%s3 + $0x278] sm:$0xff]
        %v1040 = vld [vmem:[%s3 + $0x280] sm:$0xff]
        %v1041 = vld [vmem:[%s3 + $0x288] sm:$0xff]
        %v1042 = vld [vmem:[%s3 + $0x290] sm:$0xff]
        %v1043 = vld [vmem:[%s3 + $0x298] sm:$0xff]
        %v1044 = vld [vmem:[%s3 + $0x2a0] sm:$0xff]
        %v1045 = vld [vmem:[%s3 + $0x2a8] sm:$0xff]
        %v1046 = vld [vmem:[%s3 + $0x2b0] sm:$0xff]
        %v1047 = vld [vmem:[%s3 + $0x2b8] sm:$0xff]
        %v1048 = vld [vmem:[%s3 + $0x2c0] sm:$0xff]
        %v1049 = vld [vmem:[%s3 + $0x2c8] sm:$0xff]
        %v1050 = vld [vmem:[%s3 + $0x2d0] sm:$0xff]
        %v1051 = vld [vmem:[%s3 + $0x2d8] sm:$0xff]
        %v1052 = vld [vmem:[%s3 + $0x2e0] sm:$0xff]
        %v1053 = vld [vmem:[%s3 + $0x2e8] sm:$0xff]
        %v1054 = vld [vmem:[%s3 + $0x2f0] sm:$0xff]
        %v1055 = vld [vmem:[%s3 + $0x2f8] sm:$0xff]
        %v1056 = vld [vmem:[%s4] sm:$0xff]
        %v1057 = vld [vmem:[%s4 + $0x8] sm:$0xf]
        %v1060 = vlaneseq
        %v1061 = vshrl.u32 %v1060, 7
        %v1062 = vsub.s32 0, %v1061
        %v1063 = vrot.slane %v1056, %v1062
        %v1064 = vlaneseq
        %v1065 = vshrl.u32 %v1064, 7
        %v1066 = vsub.s32 1, %v1065
        %v1067 = vrot.slane %v1056, %v1066
        %v1068 = vlaneseq
        %v1069 = vshrl.u32 %v1068, 7
        %v1070 = vsub.s32 2, %v1069
        %v1071 = vrot.slane %v1056, %v1070
        %v1072 = vlaneseq
        %v1073 = vshrl.u32 %v1072, 7
        %v1074 = vsub.s32 3, %v1073
        %v1075 = vrot.slane %v1056, %v1074
        %v1076 = vlaneseq
        %v1077 = vshrl.u32 %v1076, 7
        %v1078 = vsub.s32 4, %v1077
        %v1079 = vrot.slane %v1056, %v1078
        %v1080 = vlaneseq
        %v1081 = vshrl.u32 %v1080, 7
        %v1082 = vsub.s32 5, %v1081
        %v1083 = vrot.slane %v1056, %v1082
        %v1084 = vlaneseq
        %v1085 = vshrl.u32 %v1084, 7
        %v1086 = vsub.s32 6, %v1085
        %v1087 = vrot.slane %v1056, %v1086
        %v1088 = vlaneseq
        %v1089 = vshrl.u32 %v1088, 7
        %v1090 = vsub.s32 7, %v1089
        %v1091 = vrot.slane %v1056, %v1090
        %v1092 = vlaneseq
        %v1093 = vshrl.u32 %v1092, 7
        %v1094 = vsub.s32 0, %v1093
        %v1095 = vrot.slane %v1057, %v1094
        %v1096 = vlaneseq
        %v1097 = vshrl.u32 %v1096, 7
        %v1098 = vsub.s32 1, %v1097
        %v1099 = vrot.slane %v1057, %v1098
        %v1100 = vlaneseq
        %v1101 = vshrl.u32 %v1100, 7
        %v1102 = vsub.s32 2, %v1101
        %v1103 = vrot.slane %v1057, %v1102
        %v1104 = vlaneseq
        %v1105 = vshrl.u32 %v1104, 7
        %v1106 = vsub.s32 3, %v1105
        %v1107 = vrot.slane %v1057, %v1106
        %v1216 = vunpack.c.l.b16 %v960
        %v1217 = vunpack.c.h.b16 %v960
        %v1218 = vunpack.c.l.b16 %v961
        %v1219 = vunpack.c.h.b16 %v961
        %v1220 = vunpack.c.l.b16 %v962
        %v1221 = vunpack.c.h.b16 %v962
        %v1222 = vunpack.c.l.b16 %v963
        %v1223 = vunpack.c.h.b16 %v963
        %v1224 = vunpack.c.l.b16 %v964
        %v1225 = vunpack.c.h.b16 %v964
        %v1226 = vunpack.c.l.b16 %v965
        %v1227 = vunpack.c.h.b16 %v965
        %v1228 = vunpack.c.l.b16 %v966
        %v1229 = vunpack.c.h.b16 %v966
        %v1230 = vunpack.c.l.b16 %v967
        %v1231 = vunpack.c.h.b16 %v967
        %v1232 = vunpack.c.l.b16 %v968
        %v1233 = vunpack.c.h.b16 %v968
        %v1234 = vunpack.c.l.b16 %v969
        %v1235 = vunpack.c.h.b16 %v969
        %v1236 = vunpack.c.l.b16 %v970
        %v1237 = vunpack.c.h.b16 %v970
        %v1238 = vunpack.c.l.b16 %v971
        %v1239 = vunpack.c.h.b16 %v971
        %v1240 = vunpack.c.l.b16 %v972
        %v1241 = vunpack.c.h.b16 %v972
        %v1242 = vunpack.c.l.b16 %v973
        %v1243 = vunpack.c.h.b16 %v973
        %v1244 = vunpack.c.l.b16 %v974
        %v1245 = vunpack.c.h.b16 %v974
        %v1246 = vunpack.c.l.b16 %v975
        %v1247 = vunpack.c.h.b16 %v975
        %v1248 = vunpack.c.l.b16 %v976
        %v1249 = vunpack.c.h.b16 %v976
        %v1250 = vunpack.c.l.b16 %v977
        %v1251 = vunpack.c.h.b16 %v977
        %v1252 = vunpack.c.l.b16 %v978
        %v1253 = vunpack.c.h.b16 %v978
        %v1254 = vunpack.c.l.b16 %v979
        %v1255 = vunpack.c.h.b16 %v979
        %v1256 = vunpack.c.l.b16 %v980
        %v1257 = vunpack.c.h.b16 %v980
        %v1258 = vunpack.c.l.b16 %v981
        %v1259 = vunpack.c.h.b16 %v981
        %v1260 = vunpack.c.l.b16 %v982
        %v1261 = vunpack.c.h.b16 %v982
        %v1262 = vunpack.c.l.b16 %v983
        %v1263 = vunpack.c.h.b16 %v983
        %v1264 = vunpack.c.l.b16 %v984
        %v1265 = vunpack.c.h.b16 %v984
        %v1266 = vunpack.c.l.b16 %v985
        %v1267 = vunpack.c.h.b16 %v985
        %v1268 = vunpack.c.l.b16 %v986
        %v1269 = vunpack.c.h.b16 %v986
        %v1270 = vunpack.c.l.b16 %v987
        %v1271 = vunpack.c.h.b16 %v987
        %v1272 = vunpack.c.l.b16 %v988
        %v1273 = vunpack.c.h.b16 %v988
        %v1274 = vunpack.c.l.b16 %v989
        %v1275 = vunpack.c.h.b16 %v989
        %v1276 = vunpack.c.l.b16 %v990
        %v1277 = vunpack.c.h.b16 %v990
        %v1278 = vunpack.c.l.b16 %v991
        %v1279 = vunpack.c.h.b16 %v991
        %v1280 = vunpack.c.l.b16 %v992
        %v1281 = vunpack.c.h.b16 %v992
        %v1282 = vunpack.c.l.b16 %v993
        %v1283 = vunpack.c.h.b16 %v993
        %v1284 = vunpack.c.l.b16 %v994
        %v1285 = vunpack.c.h.b16 %v994
        %v1286 = vunpack.c.l.b16 %v995
        %v1287 = vunpack.c.h.b16 %v995
        %v1288 = vunpack.c.l.b16 %v996
        %v1289 = vunpack.c.h.b16 %v996
        %v1290 = vunpack.c.l.b16 %v997
        %v1291 = vunpack.c.h.b16 %v997
        %v1292 = vunpack.c.l.b16 %v998
        %v1293 = vunpack.c.h.b16 %v998
        %v1294 = vunpack.c.l.b16 %v999
        %v1295 = vunpack.c.h.b16 %v999
        %v1296 = vunpack.c.l.b16 %v1000
        %v1297 = vunpack.c.h.b16 %v1000
        %v1298 = vunpack.c.l.b16 %v1001
        %v1299 = vunpack.c.h.b16 %v1001
        %v1300 = vunpack.c.l.b16 %v1002
        %v1301 = vunpack.c.h.b16 %v1002
        %v1302 = vunpack.c.l.b16 %v1003
        %v1303 = vunpack.c.h.b16 %v1003
        %v1304 = vunpack.c.l.b16 %v1004
        %v1305 = vunpack.c.h.b16 %v1004
        %v1306 = vunpack.c.l.b16 %v1005
        %v1307 = vunpack.c.h.b16 %v1005
        %v1308 = vunpack.c.l.b16 %v1006
        %v1309 = vunpack.c.h.b16 %v1006
        %v1310 = vunpack.c.l.b16 %v1007
        %v1311 = vunpack.c.h.b16 %v1007
        %v1312 = vunpack.c.l.b16 %v1008
        %v1313 = vunpack.c.h.b16 %v1008
        %v1314 = vunpack.c.l.b16 %v1009
        %v1315 = vunpack.c.h.b16 %v1009
        %v1316 = vunpack.c.l.b16 %v1010
        %v1317 = vunpack.c.h.b16 %v1010
        %v1318 = vunpack.c.l.b16 %v1011
        %v1319 = vunpack.c.h.b16 %v1011
        %v1320 = vunpack.c.l.b16 %v1012
        %v1321 = vunpack.c.h.b16 %v1012
        %v1322 = vunpack.c.l.b16 %v1013
        %v1323 = vunpack.c.h.b16 %v1013
        %v1324 = vunpack.c.l.b16 %v1014
        %v1325 = vunpack.c.h.b16 %v1014
        %v1326 = vunpack.c.l.b16 %v1015
        %v1327 = vunpack.c.h.b16 %v1015
        %v1328 = vunpack.c.l.b16 %v1016
        %v1329 = vunpack.c.h.b16 %v1016
        %v1330 = vunpack.c.l.b16 %v1017
        %v1331 = vunpack.c.h.b16 %v1017
        %v1332 = vunpack.c.l.b16 %v1018
        %v1333 = vunpack.c.h.b16 %v1018
        %v1334 = vunpack.c.l.b16 %v1019
        %v1335 = vunpack.c.h.b16 %v1019
        %v1336 = vunpack.c.l.b16 %v1020
        %v1337 = vunpack.c.h.b16 %v1020
        %v1338 = vunpack.c.l.b16 %v1021
        %v1339 = vunpack.c.h.b16 %v1021
        %v1340 = vunpack.c.l.b16 %v1022
        %v1341 = vunpack.c.h.b16 %v1022
        %v1342 = vunpack.c.l.b16 %v1023
        %v1343 = vunpack.c.h.b16 %v1023
        %v1344 = vunpack.c.l.b16 %v1024
        %v1345 = vunpack.c.h.b16 %v1024
        %v1346 = vunpack.c.l.b16 %v1025
        %v1347 = vunpack.c.h.b16 %v1025
        %v1348 = vunpack.c.l.b16 %v1026
        %v1349 = vunpack.c.h.b16 %v1026
        %v1350 = vunpack.c.l.b16 %v1027
        %v1351 = vunpack.c.h.b16 %v1027
        %v1352 = vunpack.c.l.b16 %v1028
        %v1353 = vunpack.c.h.b16 %v1028
        %v1354 = vunpack.c.l.b16 %v1029
        %v1355 = vunpack.c.h.b16 %v1029
        %v1356 = vunpack.c.l.b16 %v1030
        %v1357 = vunpack.c.h.b16 %v1030
        %v1358 = vunpack.c.l.b16 %v1031
        %v1359 = vunpack.c.h.b16 %v1031
        %v1360 = vunpack.c.l.b16 %v1032
        %v1361 = vunpack.c.h.b16 %v1032
        %v1362 = vunpack.c.l.b16 %v1033
        %v1363 = vunpack.c.h.b16 %v1033
        %v1364 = vunpack.c.l.b16 %v1034
        %v1365 = vunpack.c.h.b16 %v1034
        %v1366 = vunpack.c.l.b16 %v1035
        %v1367 = vunpack.c.h.b16 %v1035
        %v1368 = vunpack.c.l.b16 %v1036
        %v1369 = vunpack.c.h.b16 %v1036
        %v1370 = vunpack.c.l.b16 %v1037
        %v1371 = vunpack.c.h.b16 %v1037
        %v1372 = vunpack.c.l.b16 %v1038
        %v1373 = vunpack.c.h.b16 %v1038
        %v1374 = vunpack.c.l.b16 %v1039
        %v1375 = vunpack.c.h.b16 %v1039
        %v1376 = vunpack.c.l.b16 %v1040
        %v1377 = vunpack.c.h.b16 %v1040
        %v1378 = vunpack.c.l.b16 %v1041
        %v1379 = vunpack.c.h.b16 %v1041
        %v1380 = vunpack.c.l.b16 %v1042
        %v1381 = vunpack.c.h.b16 %v1042
        %v1382 = vunpack.c.l.b16 %v1043
        %v1383 = vunpack.c.h.b16 %v1043
        %v1384 = vunpack.c.l.b16 %v1044
        %v1385 = vunpack.c.h.b16 %v1044
        %v1386 = vunpack.c.l.b16 %v1045
        %v1387 = vunpack.c.h.b16 %v1045
        %v1388 = vunpack.c.l.b16 %v1046
        %v1389 = vunpack.c.h.b16 %v1046
        %v1390 = vunpack.c.l.b16 %v1047
        %v1391 = vunpack.c.h.b16 %v1047
        %v1392 = vunpack.c.l.b16 %v1048
        %v1393 = vunpack.c.h.b16 %v1048
        %v1394 = vunpack.c.l.b16 %v1049
        %v1395 = vunpack.c.h.b16 %v1049
        %v1396 = vunpack.c.l.b16 %v1050
        %v1397 = vunpack.c.h.b16 %v1050
        %v1398 = vunpack.c.l.b16 %v1051
        %v1399 = vunpack.c.h.b16 %v1051
        %v1400 = vunpack.c.l.b16 %v1052
        %v1401 = vunpack.c.h.b16 %v1052
        %v1402 = vunpack.c.l.b16 %v1053
        %v1403 = vunpack.c.h.b16 %v1053
        %v1404 = vunpack.c.l.b16 %v1054
        %v1405 = vunpack.c.h.b16 %v1054
        %v1406 = vunpack.c.l.b16 %v1055
        %v1407 = vunpack.c.h.b16 %v1055
        %v1408 = vpack.c.b16 %v1228, %v1216
        %v1409 = vpack.c.b16 %v1229, %v1217
        %v1410 = vpack.c.b16 %v1230, %v1218
        %v1411 = vpack.c.b16 %v1231, %v1219
        %v1412 = vpack.c.b16 %v1232, %v1220
        %v1413 = vpack.c.b16 %v1233, %v1221
        %v1414 = vpack.c.b16 %v1234, %v1222
        %v1415 = vpack.c.b16 %v1235, %v1223
        %v1416 = vpack.c.b16 %v1236, %v1224
        %v1417 = vpack.c.b16 %v1237, %v1225
        %v1418 = vpack.c.b16 %v1238, %v1226
        %v1419 = vpack.c.b16 %v1239, %v1227
        %v1420 = vpack.c.b16 %v1252, %v1240
        %v1421 = vpack.c.b16 %v1253, %v1241
        %v1422 = vpack.c.b16 %v1254, %v1242
        %v1423 = vpack.c.b16 %v1255, %v1243
        %v1424 = vpack.c.b16 %v1256, %v1244
        %v1425 = vpack.c.b16 %v1257, %v1245
        %v1426 = vpack.c.b16 %v1258, %v1246
        %v1427 = vpack.c.b16 %v1259, %v1247
        %v1428 = vpack.c.b16 %v1260, %v1248
        %v1429 = vpack.c.b16 %v1261, %v1249
        %v1430 = vpack.c.b16 %v1262, %v1250
        %v1431 = vpack.c.b16 %v1263, %v1251
        %v1432 = vpack.c.b16 %v1276, %v1264
        %v1433 = vpack.c.b16 %v1277, %v1265
        %v1434 = vpack.c.b16 %v1278, %v1266
        %v1435 = vpack.c.b16 %v1279, %v1267
        %v1436 = vpack.c.b16 %v1280, %v1268
        %v1437 = vpack.c.b16 %v1281, %v1269
        %v1438 = vpack.c.b16 %v1282, %v1270
        %v1439 = vpack.c.b16 %v1283, %v1271
        %v1440 = vpack.c.b16 %v1284, %v1272
        %v1441 = vpack.c.b16 %v1285, %v1273
        %v1442 = vpack.c.b16 %v1286, %v1274
        %v1443 = vpack.c.b16 %v1287, %v1275
        %v1444 = vpack.c.b16 %v1300, %v1288
        %v1445 = vpack.c.b16 %v1301, %v1289
        %v1446 = vpack.c.b16 %v1302, %v1290
        %v1447 = vpack.c.b16 %v1303, %v1291
        %v1448 = vpack.c.b16 %v1304, %v1292
        %v1449 = vpack.c.b16 %v1305, %v1293
        %v1450 = vpack.c.b16 %v1306, %v1294
        %v1451 = vpack.c.b16 %v1307, %v1295
        %v1452 = vpack.c.b16 %v1308, %v1296
        %v1453 = vpack.c.b16 %v1309, %v1297
        %v1454 = vpack.c.b16 %v1310, %v1298
        %v1455 = vpack.c.b16 %v1311, %v1299
        %v1456 = vpack.c.b16 %v1324, %v1312
        %v1457 = vpack.c.b16 %v1325, %v1313
        %v1458 = vpack.c.b16 %v1326, %v1314
        %v1459 = vpack.c.b16 %v1327, %v1315
        %v1460 = vpack.c.b16 %v1328, %v1316
        %v1461 = vpack.c.b16 %v1329, %v1317
        %v1462 = vpack.c.b16 %v1330, %v1318
        %v1463 = vpack.c.b16 %v1331, %v1319
        %v1464 = vpack.c.b16 %v1332, %v1320
        %v1465 = vpack.c.b16 %v1333, %v1321
        %v1466 = vpack.c.b16 %v1334, %v1322
        %v1467 = vpack.c.b16 %v1335, %v1323
        %v1468 = vpack.c.b16 %v1348, %v1336
        %v1469 = vpack.c.b16 %v1349, %v1337
        %v1470 = vpack.c.b16 %v1350, %v1338
        %v1471 = vpack.c.b16 %v1351, %v1339
        %v1472 = vpack.c.b16 %v1352, %v1340
        %v1473 = vpack.c.b16 %v1353, %v1341
        %v1474 = vpack.c.b16 %v1354, %v1342
        %v1475 = vpack.c.b16 %v1355, %v1343
        %v1476 = vpack.c.b16 %v1356, %v1344
        %v1477 = vpack.c.b16 %v1357, %v1345
        %v1478 = vpack.c.b16 %v1358, %v1346
        %v1479 = vpack.c.b16 %v1359, %v1347
        %v1480 = vpack.c.b16 %v1372, %v1360
        %v1481 = vpack.c.b16 %v1373, %v1361
        %v1482 = vpack.c.b16 %v1374, %v1362
        %v1483 = vpack.c.b16 %v1375, %v1363
        %v1484 = vpack.c.b16 %v1376, %v1364
        %v1485 = vpack.c.b16 %v1377, %v1365
        %v1486 = vpack.c.b16 %v1378, %v1366
        %v1487 = vpack.c.b16 %v1379, %v1367
        %v1488 = vpack.c.b16 %v1380, %v1368
        %v1489 = vpack.c.b16 %v1381, %v1369
        %v1490 = vpack.c.b16 %v1382, %v1370
        %v1491 = vpack.c.b16 %v1383, %v1371
        %v1492 = vpack.c.b16 %v1396, %v1384
        %v1493 = vpack.c.b16 %v1397, %v1385
        %v1494 = vpack.c.b16 %v1398, %v1386
        %v1495 = vpack.c.b16 %v1399, %v1387
        %v1496 = vpack.c.b16 %v1400, %v1388
        %v1497 = vpack.c.b16 %v1401, %v1389
        %v1498 = vpack.c.b16 %v1402, %v1390
        %v1499 = vpack.c.b16 %v1403, %v1391
        %v1500 = vpack.c.b16 %v1404, %v1392
        %v1501 = vpack.c.b16 %v1405, %v1393
        %v1502 = vpack.c.b16 %v1406, %v1394
        %v1503 = vpack.c.b16 %v1407, %v1395
        %1600 = vmatprep.subr.bf16.mxu0 %v1409
        %1601 = vmatpush1.bf16.msra.mxu0 %v1408
        %1602 = vmatprep.subr.bf16.mxu0 %v1421
        %1603 = vmatpush1.bf16.msra.mxu0 %v1420
        %1604 = vmatprep.subr.bf16.mxu0 %v1433
        %1605 = vmatpush1.bf16.msra.mxu0 %v1432
        %1606 = vmatprep.subr.bf16.mxu0 %v1445
        %1607 = vmatpush1.bf16.msra.mxu0 %v1444
        %1608 = vmatprep.subr.bf16.mxu0 %v1457
        %1609 = vmatpush1.bf16.msra.mxu0 %v1456
        %1610 = vmatprep.subr.bf16.mxu0 %v1469
        %1611 = vmatpush1.bf16.msra.mxu0 %v1468
        %1612 = vmatprep.subr.bf16.mxu0 %v1481
        %1613 = vmatpush1.bf16.msra.mxu0 %v1480
        %1614 = vmatprep.subr.bf16.mxu0 %v1493
        %1615 = vmatpush1.bf16.msra.mxu0 %v1492
        %1616 = vmatprep.subr.bf16.mxu0 0
        %1617 = vmatpush1.bf16.msra.mxu0 0
        %1618 = vmatprep.subr.bf16.mxu0 0
        %1619 = vmatpush1.bf16.msra.mxu0 0
        %1620 = vmatprep.subr.bf16.mxu0 0
        %1621 = vmatpush1.bf16.msra.mxu0 0
        %1622 = vmatprep.subr.bf16.mxu0 0
        %1623 = vmatpush1.bf16.msra.mxu0 0
        %1624 = vmatprep.subr.bf16.mxu0 0
        %1625 = vmatpush1.bf16.msra.mxu0 0
        %1626 = vmatprep.subr.bf16.mxu0 0
        %1627 = vmatpush1.bf16.msra.mxu0 0
        %1628 = vmatprep.subr.bf16.mxu0 0
        %1629 = vmatpush1.bf16.msra.mxu0 0
        %1630 = vmatprep.subr.bf16.mxu0 0
        %1631 = vmatpush1.bf16.msra.mxu0 0
        %1632 = vmatprep.mubr.bf16.mxu0 0
        %1633 = vmatmul.mubr.bf16.gmra.mrb[0].mxu0 %v944
        %v1634 = vpop.f32.mrb[0].mxu0
        %v1635 = vadd.f32 %v1063, %v1634
        %v1636 = vpop.f32.mrb[0].mxu0
        %v1637 = vadd.f32 %v1067, %v1636
        %v1638 = vpop.f32.mrb[0].mxu0
        %v1639 = vadd.f32 %v1063, %v1638
        %v1640 = vpop.f32.mrb[0].mxu0
        %v1641 = vadd.f32 %v1067, %v1640
        %1642 = vmatprep.mubr.bf16.mxu0 0
        %1643 = vmatmul.mubr.bf16.gmra.mrb[0].mxu0 %v945
        %v1644 = vpop.f32.mrb[0].mxu0
        %v1645 = vadd.f32 %v1063, %v1644
        %v1646 = vpop.f32.mrb[0].mxu0
        %v1647 = vadd.f32 %v1067, %v1646
        %v1648 = vpop.f32.mrb[0].mxu0
        %v1649 = vadd.f32 %v1063, %v1648
        %v1650 = vpop.f32.mrb[0].mxu0
        %v1651 = vadd.f32 %v1067, %v1650
        %1652 = vmatprep.mubr.bf16.mxu0 0
        %1653 = vmatmul.mubr.bf16.gmra.mrb[0].mxu0 %v946
        %v1654 = vpop.f32.mrb[0].mxu0
        %v1655 = vadd.f32 %v1063, %v1654
        %v1656 = vpop.f32.mrb[0].mxu0
        %v1657 = vadd.f32 %v1067, %v1656
        %v1658 = vpop.f32.mrb[0].mxu0
        %v1659 = vadd.f32 %v1063, %v1658
        %v1660 = vpop.f32.mrb[0].mxu0
        %v1661 = vadd.f32 %v1067, %v1660
        %1662 = vmatprep.mubr.bf16.mxu0 0
        %1663 = vmatmul.mubr.bf16.gmra.mrb[0].mxu0 %v947
        %v1664 = vpop.f32.mrb[0].mxu0
        %v1665 = vadd.f32 %v1063, %v1664
        %v1666 = vpop.f32.mrb[0].mxu0
        %v1667 = vadd.f32 %v1067, %v1666
        %v1668 = vpop.f32.mrb[0].mxu0
        %v1669 = vadd.f32 %v1063, %v1668
        %v1670 = vpop.f32.mrb[0].mxu0
        %v1671 = vadd.f32 %v1067, %v1670
        %1672 = vmatprep.mubr.bf16.mxu0 0
        %1673 = vmatmul.mubr.bf16.gmra.mrb[0].mxu0 %v948
        %v1674 = vpop.f32.mrb[0].mxu0
        %v1675 = vadd.f32 %v1063, %v1674
        %v1676 = vpop.f32.mrb[0].mxu0
        %v1677 = vadd.f32 %v1067, %v1676
        %v1678 = vpop.f32.mrb[0].mxu0
        %v1679 = vadd.f32 %v1063, %v1678
        %v1680 = vpop.f32.mrb[0].mxu0
        %v1681 = vadd.f32 %v1067, %v1680
        %1682 = vmatprep.mubr.bf16.mxu0 0
        %1683 = vmatmul.mubr.bf16.gmra.mrb[0].mxu0 %v949
        %v1684 = vpop.f32.mrb[0].mxu0
        %v1685 = vadd.f32 %v1063, %v1684
        %v1686 = vpop.f32.mrb[0].mxu0
        %v1687 = vadd.f32 %v1067, %v1686
        %v1688 = vpop.f32.mrb[0].mxu0
        %v1689 = vadd.f32 %v1063, %v1688
        %v1690 = vpop.f32.mrb[0].mxu0
        %v1691 = vadd.f32 %v1067, %v1690
        %1692 = vmatprep.mubr.bf16.mxu0 0
        %1693 = vmatmul.mubr.bf16.gmra.mrb[0].mxu0 %v950
        %v1694 = vpop.f32.mrb[0].mxu0
        %v1695 = vadd.f32 %v1063, %v1694
        %v1696 = vpop.f32.mrb[0].mxu0
        %v1697 = vadd.f32 %v1067, %v1696
        %v1698 = vpop.f32.mrb[0].mxu0
        %v1699 = vadd.f32 %v1063, %v1698
        %v1700 = vpop.f32.mrb[0].mxu0
        %v1701 = vadd.f32 %v1067, %v1700
        %1702 = vmatprep.mubr.bf16.mxu0 0
        %1703 = vmatmul.mubr.bf16.gmra.mrb[0].mxu0 %v951
        %v1704 = vpop.f32.mrb[0].mxu0
        %v1705 = vadd.f32 %v1063, %v1704
        %v1706 = vpop.f32.mrb[0].mxu0
        %v1707 = vadd.f32 %v1067, %v1706
        %v1708 = vpop.f32.mrb[0].mxu0
        %v1709 = vadd.f32 %v1063, %v1708
        %v1710 = vpop.f32.mrb[0].mxu0
        %v1711 = vadd.f32 %v1067, %v1710
        %1712 = vmatprep.mubr.bf16.mxu0 0
        %1713 = vmatmul.mubr.bf16.gmra.mrb[0].mxu0 %v952
        %v1714 = vpop.f32.mrb[0].mxu0
        %v1715 = vadd.f32 %v1063, %v1714
        %v1716 = vpop.f32.mrb[0].mxu0
        %v1717 = vadd.f32 %v1067, %v1716
        %v1718 = vpop.f32.mrb[0].mxu0
        %v1719 = vadd.f32 %v1063, %v1718
        %v1720 = vpop.f32.mrb[0].mxu0
        %v1721 = vadd.f32 %v1067, %v1720
        %1722 = vmatprep.mubr.bf16.mxu0 0
        %1723 = vmatmul.mubr.bf16.gmra.mrb[0].mxu0 %v953
        %v1724 = vpop.f32.mrb[0].mxu0
        %v1725 = vadd.f32 %v1063, %v1724
        %v1726 = vpop.f32.mrb[0].mxu0
        %v1727 = vadd.f32 %v1067, %v1726
        %v1728 = vpop.f32.mrb[0].mxu0
        %v1729 = vadd.f32 %v1063, %v1728
        %v1730 = vpop.f32.mrb[0].mxu0
        %v1731 = vadd.f32 %v1067, %v1730
        %1732 = vmatprep.mubr.bf16.mxu0 0
        %1733 = vmatmul.mubr.bf16.gmra.mrb[0].mxu0 %v954
        %v1734 = vpop.f32.mrb[0].mxu0
        %v1735 = vadd.f32 %v1063, %v1734
        %v1736 = vpop.f32.mrb[0].mxu0
        %v1737 = vadd.f32 %v1067, %v1736
        %v1738 = vpop.f32.mrb[0].mxu0
        %v1739 = vadd.f32 %v1063, %v1738
        %v1740 = vpop.f32.mrb[0].mxu0
        %v1741 = vadd.f32 %v1067, %v1740
        %1742 = vmatprep.mubr.bf16.mxu0 0
        %1743 = vmatmul.mubr.bf16.gmra.mrb[0].mxu0 %v955
        %v1744 = vpop.f32.mrb[0].mxu0
        %v1745 = vadd.f32 %v1063, %v1744
        %v1746 = vpop.f32.mrb[0].mxu0
        %v1747 = vadd.f32 %v1067, %v1746
        %v1748 = vpop.f32.mrb[0].mxu0
        %v1749 = vadd.f32 %v1063, %v1748
        %v1750 = vpop.f32.mrb[0].mxu0
        %v1751 = vadd.f32 %v1067, %v1750
        %1752 = vmatprep.mubr.bf16.mxu0 0
        %1753 = vmatmul.mubr.bf16.gmra.mrb[0].mxu0 %v956
        %v1754 = vpop.f32.mrb[0].mxu0
        %v1755 = vadd.f32 %v1063, %v1754
        %v1756 = vpop.f32.mrb[0].mxu0
        %v1757 = vadd.f32 %v1067, %v1756
        %v1758 = vpop.f32.mrb[0].mxu0
        %v1759 = vadd.f32 %v1063, %v1758
        %v1760 = vpop.f32.mrb[0].mxu0
        %v1761 = vadd.f32 %v1067, %v1760
        %1762 = vmatprep.mubr.bf16.mxu0 0
        %1763 = vmatmul.mubr.bf16.gmra.mrb[0].mxu0 %v957
        %v1764 = vpop.f32.mrb[0].mxu0
        %v1765 = vadd.f32 %v1063, %v1764
        %v1766 = vpop.f32.mrb[0].mxu0
        %v1767 = vadd.f32 %v1067, %v1766
        %v1768 = vpop.f32.mrb[0].mxu0
        %v1769 = vadd.f32 %v1063, %v1768
        %v1770 = vpop.f32.mrb[0].mxu0
        %v1771 = vadd.f32 %v1067, %v1770
        %1772 = vmatprep.mubr.bf16.mxu0 0
        %1773 = vmatmul.mubr.bf16.gmra.mrb[0].mxu0 %v958
        %v1774 = vpop.f32.mrb[0].mxu0
        %v1775 = vadd.f32 %v1063, %v1774
        %v1776 = vpop.f32.mrb[0].mxu0
        %v1777 = vadd.f32 %v1067, %v1776
        %v1778 = vpop.f32.mrb[0].mxu0
        %v1779 = vadd.f32 %v1063, %v1778
        %v1780 = vpop.f32.mrb[0].mxu0
        %v1781 = vadd.f32 %v1067, %v1780
        %1782 = vmatprep.mubr.bf16.mxu0 0
        %1783 = vmatmul.mubr.bf16.gmra.mrb[0].mxu0 %v959
        %v1784 = vpop.f32.mrb[0].mxu0
        %v1785 = vadd.f32 %v1063, %v1784
        %v1786 = vpop.f32.mrb[0].mxu0
        %v1787 = vadd.f32 %v1067, %v1786
        %v1788 = vpop.f32.mrb[0].mxu0
        %v1789 = vadd.f32 %v1063, %v1788
        %v1790 = vpop.f32.mrb[0].mxu0
        %v1791 = vadd.f32 %v1067, %v1790
        %1792 = vdwg.mxu0
        %1793 = vmatprep.subr.bf16.mxu0 %v1411
        %1794 = vmatpush1.bf16.msra.mxu0 %v1410
        %1795 = vmatprep.subr.bf16.mxu0 %v1423
        %1796 = vmatpush1.bf16.msra.mxu0 %v1422
        %1797 = vmatprep.subr.bf16.mxu0 %v1435
        %1798 = vmatpush1.bf16.msra.mxu0 %v1434
        %1799 = vmatprep.subr.bf16.mxu0 %v1447
        %1800 = vmatpush1.bf16.msra.mxu0 %v1446
        %1801 = vmatprep.subr.bf16.mxu0 %v1459
        %1802 = vmatpush1.bf16.msra.mxu0 %v1458
        %1803 = vmatprep.subr.bf16.mxu0 %v1471
        %1804 = vmatpush1.bf16.msra.mxu0 %v1470
        %1805 = vmatprep.subr.bf16.mxu0 %v1483
        %1806 = vmatpush1.bf16.msra.mxu0 %v1482
        %1807 = vmatprep.subr.bf16.mxu0 %v1495
        %1808 = vmatpush1.bf16.msra.mxu0 %v1494
        %1809 = vmatprep.subr.bf16.mxu0 0
        %1810 = vmatpush1.bf16.msra.mxu0 0
        %1811 = vmatprep.subr.bf16.mxu0 0
        %1812 = vmatpush1.bf16.msra.mxu0 0
        %1813 = vmatprep.subr.bf16.mxu0 0
        %1814 = vmatpush1.bf16.msra.mxu0 0
        %1815 = vmatprep.subr.bf16.mxu0 0
        %1816 = vmatpush1.bf16.msra.mxu0 0
        %1817 = vmatprep.subr.bf16.mxu0 0
        %1818 = vmatpush1.bf16.msra.mxu0 0
        %1819 = vmatprep.subr.bf16.mxu0 0
        %1820 = vmatpush1.bf16.msra.mxu0 0
        %1821 = vmatprep.subr.bf16.mxu0 0
        %1822 = vmatpush1.bf16.msra.mxu0 0
        %1823 = vmatprep.subr.bf16.mxu0 0
        %1824 = vmatpush1.bf16.msra.mxu0 0
        %1825 = vmatprep.mubr.bf16.mxu0 0
        %1826 = vmatmul.mubr.bf16.gmra.mrb[0].mxu0 %v944
        %v1827 = vpop.f32.mrb[0].mxu0
        %v1828 = vadd.f32 %v1071, %v1827
        %v1829 = vpop.f32.mrb[0].mxu0
        %v1830 = vadd.f32 %v1075, %v1829
        %v1831 = vpop.f32.mrb[0].mxu0
        %v1832 = vadd.f32 %v1071, %v1831
        %v1833 = vpop.f32.mrb[0].mxu0
        %v1834 = vadd.f32 %v1075, %v1833
        %1835 = vmatprep.mubr.bf16.mxu0 0
        %1836 = vmatmul.mubr.bf16.gmra.mrb[0].mxu0 %v945
        %v1837 = vpop.f32.mrb[0].mxu0
        %v1838 = vadd.f32 %v1071, %v1837
        %v1839 = vpop.f32.mrb[0].mxu0
        %v1840 = vadd.f32 %v1075, %v1839
        %v1841 = vpop.f32.mrb[0].mxu0
        %v1842 = vadd.f32 %v1071, %v1841
        %v1843 = vpop.f32.mrb[0].mxu0
        %v1844 = vadd.f32 %v1075, %v1843
        %1845 = vmatprep.mubr.bf16.mxu0 0
        %1846 = vmatmul.mubr.bf16.gmra.mrb[0].mxu0 %v946
        %v1847 = vpop.f32.mrb[0].mxu0
        %v1848 = vadd.f32 %v1071, %v1847
        %v1849 = vpop.f32.mrb[0].mxu0
        %v1850 = vadd.f32 %v1075, %v1849
        %v1851 = vpop.f32.mrb[0].mxu0
        %v1852 = vadd.f32 %v1071, %v1851
        %v1853 = vpop.f32.mrb[0].mxu0
        %v1854 = vadd.f32 %v1075, %v1853
        %1855 = vmatprep.mubr.bf16.mxu0 0
        %1856 = vmatmul.mubr.bf16.gmra.mrb[0].mxu0 %v947
        %v1857 = vpop.f32.mrb[0].mxu0
        %v1858 = vadd.f32 %v1071, %v1857
        %v1859 = vpop.f32.mrb[0].mxu0
        %v1860 = vadd.f32 %v1075, %v1859
        %v1861 = vpop.f32.mrb[0].mxu0
        %v1862 = vadd.f32 %v1071, %v1861
        %v1863 = vpop.f32.mrb[0].mxu0
        %v1864 = vadd.f32 %v1075, %v1863
        %1865 = vmatprep.mubr.bf16.mxu0 0
        %1866 = vmatmul.mubr.bf16.gmra.mrb[0].mxu0 %v948
        %v1867 = vpop.f32.mrb[0].mxu0
        %v1868 = vadd.f32 %v1071, %v1867
        %v1869 = vpop.f32.mrb[0].mxu0
        %v1870 = vadd.f32 %v1075, %v1869
        %v1871 = vpop.f32.mrb[0].mxu0
        %v1872 = vadd.f32 %v1071, %v1871
        %v1873 = vpop.f32.mrb[0].mxu0
        %v1874 = vadd.f32 %v1075, %v1873
        %1875 = vmatprep.mubr.bf16.mxu0 0
        %1876 = vmatmul.mubr.bf16.gmra.mrb[0].mxu0 %v949
        %v1877 = vpop.f32.mrb[0].mxu0
        %v1878 = vadd.f32 %v1071, %v1877
        %v1879 = vpop.f32.mrb[0].mxu0
        %v1880 = vadd.f32 %v1075, %v1879
        %v1881 = vpop.f32.mrb[0].mxu0
        %v1882 = vadd.f32 %v1071, %v1881
        %v1883 = vpop.f32.mrb[0].mxu0
        %v1884 = vadd.f32 %v1075, %v1883
        %1885 = vmatprep.mubr.bf16.mxu0 0
        %1886 = vmatmul.mubr.bf16.gmra.mrb[0].mxu0 %v950
        %v1887 = vpop.f32.mrb[0].mxu0
        %v1888 = vadd.f32 %v1071, %v1887
        %v1889 = vpop.f32.mrb[0].mxu0
        %v1890 = vadd.f32 %v1075, %v1889
        %v1891 = vpop.f32.mrb[0].mxu0
        %v1892 = vadd.f32 %v1071, %v1891
        %v1893 = vpop.f32.mrb[0].mxu0
        %v1894 = vadd.f32 %v1075, %v1893
        %1895 = vmatprep.mubr.bf16.mxu0 0
        %1896 = vmatmul.mubr.bf16.gmra.mrb[0].mxu0 %v951
        %v1897 = vpop.f32.mrb[0].mxu0
        %v1898 = vadd.f32 %v1071, %v1897
        %v1899 = vpop.f32.mrb[0].mxu0
        %v1900 = vadd.f32 %v1075, %v1899
        %v1901 = vpop.f32.mrb[0].mxu0
        %v1902 = vadd.f32 %v1071, %v1901
        %v1903 = vpop.f32.mrb[0].mxu0
        %v1904 = vadd.f32 %v1075, %v1903
        %1905 = vmatprep.mubr.bf16.mxu0 0
        %1906 = vmatmul.mubr.bf16.gmra.mrb[0].mxu0 %v952
        %v1907 = vpop.f32.mrb[0].mxu0
        %v1908 = vadd.f32 %v1071, %v1907
        %v1909 = vpop.f32.mrb[0].mxu0
        %v1910 = vadd.f32 %v1075, %v1909
        %v1911 = vpop.f32.mrb[0].mxu0
        %v1912 = vadd.f32 %v1071, %v1911
        %v1913 = vpop.f32.mrb[0].mxu0
        %v1914 = vadd.f32 %v1075, %v1913
        %1915 = vmatprep.mubr.bf16.mxu0 0
        %1916 = vmatmul.mubr.bf16.gmra.mrb[0].mxu0 %v953
        %v1917 = vpop.f32.mrb[0].mxu0
        %v1918 = vadd.f32 %v1071, %v1917
        %v1919 = vpop.f32.mrb[0].mxu0
        %v1920 = vadd.f32 %v1075, %v1919
        %v1921 = vpop.f32.mrb[0].mxu0
        %v1922 = vadd.f32 %v1071, %v1921
        %v1923 = vpop.f32.mrb[0].mxu0
        %v1924 = vadd.f32 %v1075, %v1923
        %1925 = vmatprep.mubr.bf16.mxu0 0
        %1926 = vmatmul.mubr.bf16.gmra.mrb[0].mxu0 %v954
        %v1927 = vpop.f32.mrb[0].mxu0
        %v1928 = vadd.f32 %v1071, %v1927
        %v1929 = vpop.f32.mrb[0].mxu0
        %v1930 = vadd.f32 %v1075, %v1929
        %v1931 = vpop.f32.mrb[0].mxu0
        %v1932 = vadd.f32 %v1071, %v1931
        %v1933 = vpop.f32.mrb[0].mxu0
        %v1934 = vadd.f32 %v1075, %v1933
        %1935 = vmatprep.mubr.bf16.mxu0 0
        %1936 = vmatmul.mubr.bf16.gmra.mrb[0].mxu0 %v955
        %v1937 = vpop.f32.mrb[0].mxu0
        %v1938 = vadd.f32 %v1071, %v1937
        %v1939 = vpop.f32.mrb[0].mxu0
        %v1940 = vadd.f32 %v1075, %v1939
        %v1941 = vpop.f32.mrb[0].mxu0
        %v1942 = vadd.f32 %v1071, %v1941
        %v1943 = vpop.f32.mrb[0].mxu0
        %v1944 = vadd.f32 %v1075, %v1943
        %1945 = vmatprep.mubr.bf16.mxu0 0
        %1946 = vmatmul.mubr.bf16.gmra.mrb[0].mxu0 %v956
        %v1947 = vpop.f32.mrb[0].mxu0
        %v1948 = vadd.f32 %v1071, %v1947
        %v1949 = vpop.f32.mrb[0].mxu0
        %v1950 = vadd.f32 %v1075, %v1949
        %v1951 = vpop.f32.mrb[0].mxu0
        %v1952 = vadd.f32 %v1071, %v1951
        %v1953 = vpop.f32.mrb[0].mxu0
        %v1954 = vadd.f32 %v1075, %v1953
        %1955 = vmatprep.mubr.bf16.mxu0 0
        %1956 = vmatmul.mubr.bf16.gmra.mrb[0].mxu0 %v957
        %v1957 = vpop.f32.mrb[0].mxu0
        %v1958 = vadd.f32 %v1071, %v1957
        %v1959 = vpop.f32.mrb[0].mxu0
        %v1960 = vadd.f32 %v1075, %v1959
        %v1961 = vpop.f32.mrb[0].mxu0
        %v1962 = vadd.f32 %v1071, %v1961
        %v1963 = vpop.f32.mrb[0].mxu0
        %v1964 = vadd.f32 %v1075, %v1963
        %1965 = vmatprep.mubr.bf16.mxu0 0
        %1966 = vmatmul.mubr.bf16.gmra.mrb[0].mxu0 %v958
        %v1967 = vpop.f32.mrb[0].mxu0
        %v1968 = vadd.f32 %v1071, %v1967
        %v1969 = vpop.f32.mrb[0].mxu0
        %v1970 = vadd.f32 %v1075, %v1969
        %v1971 = vpop.f32.mrb[0].mxu0
        %v1972 = vadd.f32 %v1071, %v1971
        %v1973 = vpop.f32.mrb[0].mxu0
        %v1974 = vadd.f32 %v1075, %v1973
        %1975 = vmatprep.mubr.bf16.mxu0 0
        %1976 = vmatmul.mubr.bf16.gmra.mrb[0].mxu0 %v959
        %v1977 = vpop.f32.mrb[0].mxu0
        %v1978 = vadd.f32 %v1071, %v1977
        %v1979 = vpop.f32.mrb[0].mxu0
        %v1980 = vadd.f32 %v1075, %v1979
        %v1981 = vpop.f32.mrb[0].mxu0
        %v1982 = vadd.f32 %v1071, %v1981
        %v1983 = vpop.f32.mrb[0].mxu0
        %v1984 = vadd.f32 %v1075, %v1983
        %1985 = vdwg.mxu0
        %1986 = vmatprep.subr.bf16.mxu0 %v1413
        %1987 = vmatpush1.bf16.msra.mxu0 %v1412
        %1988 = vmatprep.subr.bf16.mxu0 %v1425
        %1989 = vmatpush1.bf16.msra.mxu0 %v1424
        %1990 = vmatprep.subr.bf16.mxu0 %v1437
        %1991 = vmatpush1.bf16.msra.mxu0 %v1436
        %1992 = vmatprep.subr.bf16.mxu0 %v1449
        %1993 = vmatpush1.bf16.msra.mxu0 %v1448
        %1994 = vmatprep.subr.bf16.mxu0 %v1461
        %1995 = vmatpush1.bf16.msra.mxu0 %v1460
        %1996 = vmatprep.subr.bf16.mxu0 %v1473
        %1997 = vmatpush1.bf16.msra.mxu0 %v1472
        %1998 = vmatprep.subr.bf16.mxu0 %v1485
        %1999 = vmatpush1.bf16.msra.mxu0 %v1484
        %2000 = vmatprep.subr.bf16.mxu0 %v1497
        %2001 = vmatpush1.bf16.msra.mxu0 %v1496
        %2002 = vmatprep.subr.bf16.mxu0 0
        %2003 = vmatpush1.bf16.msra.mxu0 0
        %2004 = vmatprep.subr.bf16.mxu0 0
        %2005 = vmatpush1.bf16.msra.mxu0 0
        %2006 = vmatprep.subr.bf16.mxu0 0
        %2007 = vmatpush1.bf16.msra.mxu0 0
        %2008 = vmatprep.subr.bf16.mxu0 0
        %2009 = vmatpush1.bf16.msra.mxu0 0
        %2010 = vmatprep.subr.bf16.mxu0 0
        %2011 = vmatpush1.bf16.msra.mxu0 0
        %2012 = vmatprep.subr.bf16.mxu0 0
        %2013 = vmatpush1.bf16.msra.mxu0 0
        %2014 = vmatprep.subr.bf16.mxu0 0
        %2015 = vmatpush1.bf16.msra.mxu0 0
        %2016 = vmatprep.subr.bf16.mxu0 0
        %2017 = vmatpush1.bf16.msra.mxu0 0
        %2018 = vmatprep.mubr.bf16.mxu0 0
        %2019 = vmatmul.mubr.bf16.gmra.mrb[0].mxu0 %v944
        %v2020 = vpop.f32.mrb[0].mxu0
        %v2021 = vadd.f32 %v1079, %v2020
        %v2022 = vpop.f32.mrb[0].mxu0
        %v2023 = vadd.f32 %v1083, %v2022
        %v2024 = vpop.f32.mrb[0].mxu0
        %v2025 = vadd.f32 %v1079, %v2024
        %v2026 = vpop.f32.mrb[0].mxu0
        %v2027 = vadd.f32 %v1083, %v2026
        %2028 = vmatprep.mubr.bf16.mxu0 0
        %2029 = vmatmul.mubr.bf16.gmra.mrb[0].mxu0 %v945
        %v2030 = vpop.f32.mrb[0].mxu0
        %v2031 = vadd.f32 %v1079, %v2030
        %v2032 = vpop.f32.mrb[0].mxu0
        %v2033 = vadd.f32 %v1083, %v2032
        %v2034 = vpop.f32.mrb[0].mxu0
        %v2035 = vadd.f32 %v1079, %v2034
        %v2036 = vpop.f32.mrb[0].mxu0
        %v2037 = vadd.f32 %v1083, %v2036
        %2038 = vmatprep.mubr.bf16.mxu0 0
        %2039 = vmatmul.mubr.bf16.gmra.mrb[0].mxu0 %v946
        %v2040 = vpop.f32.mrb[0].mxu0
        %v2041 = vadd.f32 %v1079, %v2040
        %v2042 = vpop.f32.mrb[0].mxu0
        %v2043 = vadd.f32 %v1083, %v2042
        %v2044 = vpop.f32.mrb[0].mxu0
        %v2045 = vadd.f32 %v1079, %v2044
        %v2046 = vpop.f32.mrb[0].mxu0
        %v2047 = vadd.f32 %v1083, %v2046
        %2048 = vmatprep.mubr.bf16.mxu0 0
        %2049 = vmatmul.mubr.bf16.gmra.mrb[0].mxu0 %v947
        %v2050 = vpop.f32.mrb[0].mxu0
        %v2051 = vadd.f32 %v1079, %v2050
        %v2052 = vpop.f32.mrb[0].mxu0
        %v2053 = vadd.f32 %v1083, %v2052
        %v2054 = vpop.f32.mrb[0].mxu0
        %v2055 = vadd.f32 %v1079, %v2054
        %v2056 = vpop.f32.mrb[0].mxu0
        %v2057 = vadd.f32 %v1083, %v2056
        %2058 = vmatprep.mubr.bf16.mxu0 0
        %2059 = vmatmul.mubr.bf16.gmra.mrb[0].mxu0 %v948
        %v2060 = vpop.f32.mrb[0].mxu0
        %v2061 = vadd.f32 %v1079, %v2060
        %v2062 = vpop.f32.mrb[0].mxu0
        %v2063 = vadd.f32 %v1083, %v2062
        %v2064 = vpop.f32.mrb[0].mxu0
        %v2065 = vadd.f32 %v1079, %v2064
        %v2066 = vpop.f32.mrb[0].mxu0
        %v2067 = vadd.f32 %v1083, %v2066
        %2068 = vmatprep.mubr.bf16.mxu0 0
        %2069 = vmatmul.mubr.bf16.gmra.mrb[0].mxu0 %v949
        %v2070 = vpop.f32.mrb[0].mxu0
        %v2071 = vadd.f32 %v1079, %v2070
        %v2072 = vpop.f32.mrb[0].mxu0
        %v2073 = vadd.f32 %v1083, %v2072
        %v2074 = vpop.f32.mrb[0].mxu0
        %v2075 = vadd.f32 %v1079, %v2074
        %v2076 = vpop.f32.mrb[0].mxu0
        %v2077 = vadd.f32 %v1083, %v2076
        %2078 = vmatprep.mubr.bf16.mxu0 0
        %2079 = vmatmul.mubr.bf16.gmra.mrb[0].mxu0 %v950
        %v2080 = vpop.f32.mrb[0].mxu0
        %v2081 = vadd.f32 %v1079, %v2080
        %v2082 = vpop.f32.mrb[0].mxu0
        %v2083 = vadd.f32 %v1083, %v2082
        %v2084 = vpop.f32.mrb[0].mxu0
        %v2085 = vadd.f32 %v1079, %v2084
        %v2086 = vpop.f32.mrb[0].mxu0
        %v2087 = vadd.f32 %v1083, %v2086
        %2088 = vmatprep.mubr.bf16.mxu0 0
        %2089 = vmatmul.mubr.bf16.gmra.mrb[0].mxu0 %v951
        %v2090 = vpop.f32.mrb[0].mxu0
        %v2091 = vadd.f32 %v1079, %v2090
        %v2092 = vpop.f32.mrb[0].mxu0
        %v2093 = vadd.f32 %v1083, %v2092
        %v2094 = vpop.f32.mrb[0].mxu0
        %v2095 = vadd.f32 %v1079, %v2094
        %v2096 = vpop.f32.mrb[0].mxu0
        %v2097 = vadd.f32 %v1083, %v2096
        %2098 = vmatprep.mubr.bf16.mxu0 0
        %2099 = vmatmul.mubr.bf16.gmra.mrb[0].mxu0 %v952
        %v2100 = vpop.f32.mrb[0].mxu0
        %v2101 = vadd.f32 %v1079, %v2100
        %v2102 = vpop.f32.mrb[0].mxu0
        %v2103 = vadd.f32 %v1083, %v2102
        %v2104 = vpop.f32.mrb[0].mxu0
        %v2105 = vadd.f32 %v1079, %v2104
        %v2106 = vpop.f32.mrb[0].mxu0
        %v2107 = vadd.f32 %v1083, %v2106
        %2108 = vmatprep.mubr.bf16.mxu0 0
        %2109 = vmatmul.mubr.bf16.gmra.mrb[0].mxu0 %v953
        %v2110 = vpop.f32.mrb[0].mxu0
        %v2111 = vadd.f32 %v1079, %v2110
        %v2112 = vpop.f32.mrb[0].mxu0
        %v2113 = vadd.f32 %v1083, %v2112
        %v2114 = vpop.f32.mrb[0].mxu0
        %v2115 = vadd.f32 %v1079, %v2114
        %v2116 = vpop.f32.mrb[0].mxu0
        %v2117 = vadd.f32 %v1083, %v2116
        %2118 = vmatprep.mubr.bf16.mxu0 0
        %2119 = vmatmul.mubr.bf16.gmra.mrb[0].mxu0 %v954
        %v2120 = vpop.f32.mrb[0].mxu0
        %v2121 = vadd.f32 %v1079, %v2120
        %v2122 = vpop.f32.mrb[0].mxu0
        %v2123 = vadd.f32 %v1083, %v2122
        %v2124 = vpop.f32.mrb[0].mxu0
        %v2125 = vadd.f32 %v1079, %v2124
        %v2126 = vpop.f32.mrb[0].mxu0
        %v2127 = vadd.f32 %v1083, %v2126
        %2128 = vmatprep.mubr.bf16.mxu0 0
        %2129 = vmatmul.mubr.bf16.gmra.mrb[0].mxu0 %v955
        %v2130 = vpop.f32.mrb[0].mxu0
        %v2131 = vadd.f32 %v1079, %v2130
        %v2132 = vpop.f32.mrb[0].mxu0
        %v2133 = vadd.f32 %v1083, %v2132
        %v2134 = vpop.f32.mrb[0].mxu0
        %v2135 = vadd.f32 %v1079, %v2134
        %v2136 = vpop.f32.mrb[0].mxu0
        %v2137 = vadd.f32 %v1083, %v2136
        %2138 = vmatprep.mubr.bf16.mxu0 0
        %2139 = vmatmul.mubr.bf16.gmra.mrb[0].mxu0 %v956
        %v2140 = vpop.f32.mrb[0].mxu0
        %v2141 = vadd.f32 %v1079, %v2140
        %v2142 = vpop.f32.mrb[0].mxu0
        %v2143 = vadd.f32 %v1083, %v2142
        %v2144 = vpop.f32.mrb[0].mxu0
        %v2145 = vadd.f32 %v1079, %v2144
        %v2146 = vpop.f32.mrb[0].mxu0
        %v2147 = vadd.f32 %v1083, %v2146
        %2148 = vmatprep.mubr.bf16.mxu0 0
        %2149 = vmatmul.mubr.bf16.gmra.mrb[0].mxu0 %v957
        %v2150 = vpop.f32.mrb[0].mxu0
        %v2151 = vadd.f32 %v1079, %v2150
        %v2152 = vpop.f32.mrb[0].mxu0
        %v2153 = vadd.f32 %v1083, %v2152
        %v2154 = vpop.f32.mrb[0].mxu0
        %v2155 = vadd.f32 %v1079, %v2154
        %v2156 = vpop.f32.mrb[0].mxu0
        %v2157 = vadd.f32 %v1083, %v2156
        %2158 = vmatprep.mubr.bf16.mxu0 0
        %2159 = vmatmul.mubr.bf16.gmra.mrb[0].mxu0 %v958
        %v2160 = vpop.f32.mrb[0].mxu0
        %v2161 = vadd.f32 %v1079, %v2160
        %v2162 = vpop.f32.mrb[0].mxu0
        %v2163 = vadd.f32 %v1083, %v2162
        %v2164 = vpop.f32.mrb[0].mxu0
        %v2165 = vadd.f32 %v1079, %v2164
        %v2166 = vpop.f32.mrb[0].mxu0
        %v2167 = vadd.f32 %v1083, %v2166
        %2168 = vmatprep.mubr.bf16.mxu0 0
        %2169 = vmatmul.mubr.bf16.gmra.mrb[0].mxu0 %v959
        %v2170 = vpop.f32.mrb[0].mxu0
        %v2171 = vadd.f32 %v1079, %v2170
        %v2172 = vpop.f32.mrb[0].mxu0
        %v2173 = vadd.f32 %v1083, %v2172
        %v2174 = vpop.f32.mrb[0].mxu0
        %v2175 = vadd.f32 %v1079, %v2174
        %v2176 = vpop.f32.mrb[0].mxu0
        %v2177 = vadd.f32 %v1083, %v2176
        %2178 = vdwg.mxu0
        %2179 = vmatprep.subr.bf16.mxu0 %v1415
        %2180 = vmatpush1.bf16.msra.mxu0 %v1414
        %2181 = vmatprep.subr.bf16.mxu0 %v1427
        %2182 = vmatpush1.bf16.msra.mxu0 %v1426
        %2183 = vmatprep.subr.bf16.mxu0 %v1439
        %2184 = vmatpush1.bf16.msra.mxu0 %v1438
        %2185 = vmatprep.subr.bf16.mxu0 %v1451
        %2186 = vmatpush1.bf16.msra.mxu0 %v1450
        %2187 = vmatprep.subr.bf16.mxu0 %v1463
        %2188 = vmatpush1.bf16.msra.mxu0 %v1462
        %2189 = vmatprep.subr.bf16.mxu0 %v1475
        %2190 = vmatpush1.bf16.msra.mxu0 %v1474
        %2191 = vmatprep.subr.bf16.mxu0 %v1487
        %2192 = vmatpush1.bf16.msra.mxu0 %v1486
        %2193 = vmatprep.subr.bf16.mxu0 %v1499
        %2194 = vmatpush1.bf16.msra.mxu0 %v1498
        %2195 = vmatprep.subr.bf16.mxu0 0
        %2196 = vmatpush1.bf16.msra.mxu0 0
        %2197 = vmatprep.subr.bf16.mxu0 0
        %2198 = vmatpush1.bf16.msra.mxu0 0
        %2199 = vmatprep.subr.bf16.mxu0 0
        %2200 = vmatpush1.bf16.msra.mxu0 0
        %2201 = vmatprep.subr.bf16.mxu0 0
        %2202 = vmatpush1.bf16.msra.mxu0 0
        %2203 = vmatprep.subr.bf16.mxu0 0
        %2204 = vmatpush1.bf16.msra.mxu0 0
        %2205 = vmatprep.subr.bf16.mxu0 0
        %2206 = vmatpush1.bf16.msra.mxu0 0
        %2207 = vmatprep.subr.bf16.mxu0 0
        %2208 = vmatpush1.bf16.msra.mxu0 0
        %2209 = vmatprep.subr.bf16.mxu0 0
        %2210 = vmatpush1.bf16.msra.mxu0 0
        %2211 = vmatprep.mubr.bf16.mxu0 0
        %2212 = vmatmul.mubr.bf16.gmra.mrb[0].mxu0 %v944
        %v2213 = vpop.f32.mrb[0].mxu0
        %v2214 = vadd.f32 %v1087, %v2213
        %v2215 = vpop.f32.mrb[0].mxu0
        %v2216 = vadd.f32 %v1091, %v2215
        %v2217 = vpop.f32.mrb[0].mxu0
        %v2218 = vadd.f32 %v1087, %v2217
        %v2219 = vpop.f32.mrb[0].mxu0
        %v2220 = vadd.f32 %v1091, %v2219
        %2221 = vmatprep.mubr.bf16.mxu0 0
        %2222 = vmatmul.mubr.bf16.gmra.mrb[0].mxu0 %v945
        %v2223 = vpop.f32.mrb[0].mxu0
        %v2224 = vadd.f32 %v1087, %v2223
        %v2225 = vpop.f32.mrb[0].mxu0
        %v2226 = vadd.f32 %v1091, %v2225
        %v2227 = vpop.f32.mrb[0].mxu0
        %v2228 = vadd.f32 %v1087, %v2227
        %v2229 = vpop.f32.mrb[0].mxu0
        %v2230 = vadd.f32 %v1091, %v2229
        %2231 = vmatprep.mubr.bf16.mxu0 0
        %2232 = vmatmul.mubr.bf16.gmra.mrb[0].mxu0 %v946
        %v2233 = vpop.f32.mrb[0].mxu0
        %v2234 = vadd.f32 %v1087, %v2233
        %v2235 = vpop.f32.mrb[0].mxu0
        %v2236 = vadd.f32 %v1091, %v2235
        %v2237 = vpop.f32.mrb[0].mxu0
        %v2238 = vadd.f32 %v1087, %v2237
        %v2239 = vpop.f32.mrb[0].mxu0
        %v2240 = vadd.f32 %v1091, %v2239
        %2241 = vmatprep.mubr.bf16.mxu0 0
        %2242 = vmatmul.mubr.bf16.gmra.mrb[0].mxu0 %v947
        %v2243 = vpop.f32.mrb[0].mxu0
        %v2244 = vadd.f32 %v1087, %v2243
        %v2245 = vpop.f32.mrb[0].mxu0
        %v2246 = vadd.f32 %v1091, %v2245
        %v2247 = vpop.f32.mrb[0].mxu0
        %v2248 = vadd.f32 %v1087, %v2247
        %v2249 = vpop.f32.mrb[0].mxu0
        %v2250 = vadd.f32 %v1091, %v2249
        %2251 = vmatprep.mubr.bf16.mxu0 0
        %2252 = vmatmul.mubr.bf16.gmra.mrb[0].mxu0 %v948
        %v2253 = vpop.f32.mrb[0].mxu0
        %v2254 = vadd.f32 %v1087, %v2253
        %v2255 = vpop.f32.mrb[0].mxu0
        %v2256 = vadd.f32 %v1091, %v2255
        %v2257 = vpop.f32.mrb[0].mxu0
        %v2258 = vadd.f32 %v1087, %v2257
        %v2259 = vpop.f32.mrb[0].mxu0
        %v2260 = vadd.f32 %v1091, %v2259
        %2261 = vmatprep.mubr.bf16.mxu0 0
        %2262 = vmatmul.mubr.bf16.gmra.mrb[0].mxu0 %v949
        %v2263 = vpop.f32.mrb[0].mxu0
        %v2264 = vadd.f32 %v1087, %v2263
        %v2265 = vpop.f32.mrb[0].mxu0
        %v2266 = vadd.f32 %v1091, %v2265
        %v2267 = vpop.f32.mrb[0].mxu0
        %v2268 = vadd.f32 %v1087, %v2267
        %v2269 = vpop.f32.mrb[0].mxu0
        %v2270 = vadd.f32 %v1091, %v2269
        %2271 = vmatprep.mubr.bf16.mxu0 0
        %2272 = vmatmul.mubr.bf16.gmra.mrb[0].mxu0 %v950
        %v2273 = vpop.f32.mrb[0].mxu0
        %v2274 = vadd.f32 %v1087, %v2273
        %v2275 = vpop.f32.mrb[0].mxu0
        %v2276 = vadd.f32 %v1091, %v2275
        %v2277 = vpop.f32.mrb[0].mxu0
        %v2278 = vadd.f32 %v1087, %v2277
        %v2279 = vpop.f32.mrb[0].mxu0
        %v2280 = vadd.f32 %v1091, %v2279
        %2281 = vmatprep.mubr.bf16.mxu0 0
        %2282 = vmatmul.mubr.bf16.gmra.mrb[0].mxu0 %v951
        %v2283 = vpop.f32.mrb[0].mxu0
        %v2284 = vadd.f32 %v1087, %v2283
        %v2285 = vpop.f32.mrb[0].mxu0
        %v2286 = vadd.f32 %v1091, %v2285
        %v2287 = vpop.f32.mrb[0].mxu0
        %v2288 = vadd.f32 %v1087, %v2287
        %v2289 = vpop.f32.mrb[0].mxu0
        %v2290 = vadd.f32 %v1091, %v2289
        %2291 = vmatprep.mubr.bf16.mxu0 0
        %2292 = vmatmul.mubr.bf16.gmra.mrb[0].mxu0 %v952
        %v2293 = vpop.f32.mrb[0].mxu0
        %v2294 = vadd.f32 %v1087, %v2293
        %v2295 = vpop.f32.mrb[0].mxu0
        %v2296 = vadd.f32 %v1091, %v2295
        %v2297 = vpop.f32.mrb[0].mxu0
        %v2298 = vadd.f32 %v1087, %v2297
        %v2299 = vpop.f32.mrb[0].mxu0
        %v2300 = vadd.f32 %v1091, %v2299
        %2301 = vmatprep.mubr.bf16.mxu0 0
        %2302 = vmatmul.mubr.bf16.gmra.mrb[0].mxu0 %v953
        %v2303 = vpop.f32.mrb[0].mxu0
        %v2304 = vadd.f32 %v1087, %v2303
        %v2305 = vpop.f32.mrb[0].mxu0
        %v2306 = vadd.f32 %v1091, %v2305
        %v2307 = vpop.f32.mrb[0].mxu0
        %v2308 = vadd.f32 %v1087, %v2307
        %v2309 = vpop.f32.mrb[0].mxu0
        %v2310 = vadd.f32 %v1091, %v2309
        %2311 = vmatprep.mubr.bf16.mxu0 0
        %2312 = vmatmul.mubr.bf16.gmra.mrb[0].mxu0 %v954
        %v2313 = vpop.f32.mrb[0].mxu0
        %v2314 = vadd.f32 %v1087, %v2313
        %v2315 = vpop.f32.mrb[0].mxu0
        %v2316 = vadd.f32 %v1091, %v2315
        %v2317 = vpop.f32.mrb[0].mxu0
        %v2318 = vadd.f32 %v1087, %v2317
        %v2319 = vpop.f32.mrb[0].mxu0
        %v2320 = vadd.f32 %v1091, %v2319
        %2321 = vmatprep.mubr.bf16.mxu0 0
        %2322 = vmatmul.mubr.bf16.gmra.mrb[0].mxu0 %v955
        %v2323 = vpop.f32.mrb[0].mxu0
        %v2324 = vadd.f32 %v1087, %v2323
        %v2325 = vpop.f32.mrb[0].mxu0
        %v2326 = vadd.f32 %v1091, %v2325
        %v2327 = vpop.f32.mrb[0].mxu0
        %v2328 = vadd.f32 %v1087, %v2327
        %v2329 = vpop.f32.mrb[0].mxu0
        %v2330 = vadd.f32 %v1091, %v2329
        %2331 = vmatprep.mubr.bf16.mxu0 0
        %2332 = vmatmul.mubr.bf16.gmra.mrb[0].mxu0 %v956
        %v2333 = vpop.f32.mrb[0].mxu0
        %v2334 = vadd.f32 %v1087, %v2333
        %v2335 = vpop.f32.mrb[0].mxu0
        %v2336 = vadd.f32 %v1091, %v2335
        %v2337 = vpop.f32.mrb[0].mxu0
        %v2338 = vadd.f32 %v1087, %v2337
        %v2339 = vpop.f32.mrb[0].mxu0
        %v2340 = vadd.f32 %v1091, %v2339
        %2341 = vmatprep.mubr.bf16.mxu0 0
        %2342 = vmatmul.mubr.bf16.gmra.mrb[0].mxu0 %v957
        %v2343 = vpop.f32.mrb[0].mxu0
        %v2344 = vadd.f32 %v1087, %v2343
        %v2345 = vpop.f32.mrb[0].mxu0
        %v2346 = vadd.f32 %v1091, %v2345
        %v2347 = vpop.f32.mrb[0].mxu0
        %v2348 = vadd.f32 %v1087, %v2347
        %v2349 = vpop.f32.mrb[0].mxu0
        %v2350 = vadd.f32 %v1091, %v2349
        %2351 = vmatprep.mubr.bf16.mxu0 0
        %2352 = vmatmul.mubr.bf16.gmra.mrb[0].mxu0 %v958
        %v2353 = vpop.f32.mrb[0].mxu0
        %v2354 = vadd.f32 %v1087, %v2353
        %v2355 = vpop.f32.mrb[0].mxu0
        %v2356 = vadd.f32 %v1091, %v2355
        %v2357 = vpop.f32.mrb[0].mxu0
        %v2358 = vadd.f32 %v1087, %v2357
        %v2359 = vpop.f32.mrb[0].mxu0
        %v2360 = vadd.f32 %v1091, %v2359
        %2361 = vmatprep.mubr.bf16.mxu0 0
        %2362 = vmatmul.mubr.bf16.gmra.mrb[0].mxu0 %v959
        %v2363 = vpop.f32.mrb[0].mxu0
        %v2364 = vadd.f32 %v1087, %v2363
        %v2365 = vpop.f32.mrb[0].mxu0
        %v2366 = vadd.f32 %v1091, %v2365
        %v2367 = vpop.f32.mrb[0].mxu0
        %v2368 = vadd.f32 %v1087, %v2367
        %v2369 = vpop.f32.mrb[0].mxu0
        %v2370 = vadd.f32 %v1091, %v2369
        %2371 = vdwg.mxu0
        %2372 = vmatprep.subr.bf16.mxu0 %v1417
        %2373 = vmatpush1.bf16.msra.mxu0 %v1416
        %2374 = vmatprep.subr.bf16.mxu0 %v1429
        %2375 = vmatpush1.bf16.msra.mxu0 %v1428
        %2376 = vmatprep.subr.bf16.mxu0 %v1441
        %2377 = vmatpush1.bf16.msra.mxu0 %v1440
        %2378 = vmatprep.subr.bf16.mxu0 %v1453
        %2379 = vmatpush1.bf16.msra.mxu0 %v1452
        %2380 = vmatprep.subr.bf16.mxu0 %v1465
        %2381 = vmatpush1.bf16.msra.mxu0 %v1464
        %2382 = vmatprep.subr.bf16.mxu0 %v1477
        %2383 = vmatpush1.bf16.msra.mxu0 %v1476
        %2384 = vmatprep.subr.bf16.mxu0 %v1489
        %2385 = vmatpush1.bf16.msra.mxu0 %v1488
        %2386 = vmatprep.subr.bf16.mxu0 %v1501
        %2387 = vmatpush1.bf16.msra.mxu0 %v1500
        %2388 = vmatprep.subr.bf16.mxu0 0
        %2389 = vmatpush1.bf16.msra.mxu0 0
        %2390 = vmatprep.subr.bf16.mxu0 0
        %2391 = vmatpush1.bf16.msra.mxu0 0
        %2392 = vmatprep.subr.bf16.mxu0 0
        %2393 = vmatpush1.bf16.msra.mxu0 0
        %2394 = vmatprep.subr.bf16.mxu0 0
        %2395 = vmatpush1.bf16.msra.mxu0 0
        %2396 = vmatprep.subr.bf16.mxu0 0
        %2397 = vmatpush1.bf16.msra.mxu0 0
        %2398 = vmatprep.subr.bf16.mxu0 0
        %2399 = vmatpush1.bf16.msra.mxu0 0
        %2400 = vmatprep.subr.bf16.mxu0 0
        %2401 = vmatpush1.bf16.msra.mxu0 0
        %2402 = vmatprep.subr.bf16.mxu0 0
        %2403 = vmatpush1.bf16.msra.mxu0 0
        %2404 = vmatprep.mubr.bf16.mxu0 0
        %2405 = vmatmul.mubr.bf16.gmra.mrb[0].mxu0 %v944
        %v2406 = vpop.f32.mrb[0].mxu0
        %v2407 = vadd.f32 %v1095, %v2406
        %v2408 = vpop.f32.mrb[0].mxu0
        %v2409 = vadd.f32 %v1099, %v2408
        %v2410 = vpop.f32.mrb[0].mxu0
        %v2411 = vadd.f32 %v1095, %v2410
        %v2412 = vpop.f32.mrb[0].mxu0
        %v2413 = vadd.f32 %v1099, %v2412
        %2414 = vmatprep.mubr.bf16.mxu0 0
        %2415 = vmatmul.mubr.bf16.gmra.mrb[0].mxu0 %v945
        %v2416 = vpop.f32.mrb[0].mxu0
        %v2417 = vadd.f32 %v1095, %v2416
        %v2418 = vpop.f32.mrb[0].mxu0
        %v2419 = vadd.f32 %v1099, %v2418
        %v2420 = vpop.f32.mrb[0].mxu0
        %v2421 = vadd.f32 %v1095, %v2420
        %v2422 = vpop.f32.mrb[0].mxu0
        %v2423 = vadd.f32 %v1099, %v2422
        %2424 = vmatprep.mubr.bf16.mxu0 0
        %2425 = vmatmul.mubr.bf16.gmra.mrb[0].mxu0 %v946
        %v2426 = vpop.f32.mrb[0].mxu0
        %v2427 = vadd.f32 %v1095, %v2426
        %v2428 = vpop.f32.mrb[0].mxu0
        %v2429 = vadd.f32 %v1099, %v2428
        %v2430 = vpop.f32.mrb[0].mxu0
        %v2431 = vadd.f32 %v1095, %v2430
        %v2432 = vpop.f32.mrb[0].mxu0
        %v2433 = vadd.f32 %v1099, %v2432
        %2434 = vmatprep.mubr.bf16.mxu0 0
        %2435 = vmatmul.mubr.bf16.gmra.mrb[0].mxu0 %v947
        %v2436 = vpop.f32.mrb[0].mxu0
        %v2437 = vadd.f32 %v1095, %v2436
        %v2438 = vpop.f32.mrb[0].mxu0
        %v2439 = vadd.f32 %v1099, %v2438
        %v2440 = vpop.f32.mrb[0].mxu0
        %v2441 = vadd.f32 %v1095, %v2440
        %v2442 = vpop.f32.mrb[0].mxu0
        %v2443 = vadd.f32 %v1099, %v2442
        %2444 = vmatprep.mubr.bf16.mxu0 0
        %2445 = vmatmul.mubr.bf16.gmra.mrb[0].mxu0 %v948
        %v2446 = vpop.f32.mrb[0].mxu0
        %v2447 = vadd.f32 %v1095, %v2446
        %v2448 = vpop.f32.mrb[0].mxu0
        %v2449 = vadd.f32 %v1099, %v2448
        %v2450 = vpop.f32.mrb[0].mxu0
        %v2451 = vadd.f32 %v1095, %v2450
        %v2452 = vpop.f32.mrb[0].mxu0
        %v2453 = vadd.f32 %v1099, %v2452
        %2454 = vmatprep.mubr.bf16.mxu0 0
        %2455 = vmatmul.mubr.bf16.gmra.mrb[0].mxu0 %v949
        %v2456 = vpop.f32.mrb[0].mxu0
        %v2457 = vadd.f32 %v1095, %v2456
        %v2458 = vpop.f32.mrb[0].mxu0
        %v2459 = vadd.f32 %v1099, %v2458
        %v2460 = vpop.f32.mrb[0].mxu0
        %v2461 = vadd.f32 %v1095, %v2460
        %v2462 = vpop.f32.mrb[0].mxu0
        %v2463 = vadd.f32 %v1099, %v2462
        %2464 = vmatprep.mubr.bf16.mxu0 0
        %2465 = vmatmul.mubr.bf16.gmra.mrb[0].mxu0 %v950
        %v2466 = vpop.f32.mrb[0].mxu0
        %v2467 = vadd.f32 %v1095, %v2466
        %v2468 = vpop.f32.mrb[0].mxu0
        %v2469 = vadd.f32 %v1099, %v2468
        %v2470 = vpop.f32.mrb[0].mxu0
        %v2471 = vadd.f32 %v1095, %v2470
        %v2472 = vpop.f32.mrb[0].mxu0
        %v2473 = vadd.f32 %v1099, %v2472
        %2474 = vmatprep.mubr.bf16.mxu0 0
        %2475 = vmatmul.mubr.bf16.gmra.mrb[0].mxu0 %v951
        %v2476 = vpop.f32.mrb[0].mxu0
        %v2477 = vadd.f32 %v1095, %v2476
        %v2478 = vpop.f32.mrb[0].mxu0
        %v2479 = vadd.f32 %v1099, %v2478
        %v2480 = vpop.f32.mrb[0].mxu0
        %v2481 = vadd.f32 %v1095, %v2480
        %v2482 = vpop.f32.mrb[0].mxu0
        %v2483 = vadd.f32 %v1099, %v2482
        %2484 = vmatprep.mubr.bf16.mxu0 0
        %2485 = vmatmul.mubr.bf16.gmra.mrb[0].mxu0 %v952
        %v2486 = vpop.f32.mrb[0].mxu0
        %v2487 = vadd.f32 %v1095, %v2486
        %v2488 = vpop.f32.mrb[0].mxu0
        %v2489 = vadd.f32 %v1099, %v2488
        %v2490 = vpop.f32.mrb[0].mxu0
        %v2491 = vadd.f32 %v1095, %v2490
        %v2492 = vpop.f32.mrb[0].mxu0
        %v2493 = vadd.f32 %v1099, %v2492
        %2494 = vmatprep.mubr.bf16.mxu0 0
        %2495 = vmatmul.mubr.bf16.gmra.mrb[0].mxu0 %v953
        %v2496 = vpop.f32.mrb[0].mxu0
        %v2497 = vadd.f32 %v1095, %v2496
        %v2498 = vpop.f32.mrb[0].mxu0
        %v2499 = vadd.f32 %v1099, %v2498
        %v2500 = vpop.f32.mrb[0].mxu0
        %v2501 = vadd.f32 %v1095, %v2500
        %v2502 = vpop.f32.mrb[0].mxu0
        %v2503 = vadd.f32 %v1099, %v2502
        %2504 = vmatprep.mubr.bf16.mxu0 0
        %2505 = vmatmul.mubr.bf16.gmra.mrb[0].mxu0 %v954
        %v2506 = vpop.f32.mrb[0].mxu0
        %v2507 = vadd.f32 %v1095, %v2506
        %v2508 = vpop.f32.mrb[0].mxu0
        %v2509 = vadd.f32 %v1099, %v2508
        %v2510 = vpop.f32.mrb[0].mxu0
        %v2511 = vadd.f32 %v1095, %v2510
        %v2512 = vpop.f32.mrb[0].mxu0
        %v2513 = vadd.f32 %v1099, %v2512
        %2514 = vmatprep.mubr.bf16.mxu0 0
        %2515 = vmatmul.mubr.bf16.gmra.mrb[0].mxu0 %v955
        %v2516 = vpop.f32.mrb[0].mxu0
        %v2517 = vadd.f32 %v1095, %v2516
        %v2518 = vpop.f32.mrb[0].mxu0
        %v2519 = vadd.f32 %v1099, %v2518
        %v2520 = vpop.f32.mrb[0].mxu0
        %v2521 = vadd.f32 %v1095, %v2520
        %v2522 = vpop.f32.mrb[0].mxu0
        %v2523 = vadd.f32 %v1099, %v2522
        %2524 = vmatprep.mubr.bf16.mxu0 0
        %2525 = vmatmul.mubr.bf16.gmra.mrb[0].mxu0 %v956
        %v2526 = vpop.f32.mrb[0].mxu0
        %v2527 = vadd.f32 %v1095, %v2526
        %v2528 = vpop.f32.mrb[0].mxu0
        %v2529 = vadd.f32 %v1099, %v2528
        %v2530 = vpop.f32.mrb[0].mxu0
        %v2531 = vadd.f32 %v1095, %v2530
        %v2532 = vpop.f32.mrb[0].mxu0
        %v2533 = vadd.f32 %v1099, %v2532
        %2534 = vmatprep.mubr.bf16.mxu0 0
        %2535 = vmatmul.mubr.bf16.gmra.mrb[0].mxu0 %v957
        %v2536 = vpop.f32.mrb[0].mxu0
        %v2537 = vadd.f32 %v1095, %v2536
        %v2538 = vpop.f32.mrb[0].mxu0
        %v2539 = vadd.f32 %v1099, %v2538
        %v2540 = vpop.f32.mrb[0].mxu0
        %v2541 = vadd.f32 %v1095, %v2540
        %v2542 = vpop.f32.mrb[0].mxu0
        %v2543 = vadd.f32 %v1099, %v2542
        %2544 = vmatprep.mubr.bf16.mxu0 0
        %2545 = vmatmul.mubr.bf16.gmra.mrb[0].mxu0 %v958
        %v2546 = vpop.f32.mrb[0].mxu0
        %v2547 = vadd.f32 %v1095, %v2546
        %v2548 = vpop.f32.mrb[0].mxu0
        %v2549 = vadd.f32 %v1099, %v2548
        %v2550 = vpop.f32.mrb[0].mxu0
        %v2551 = vadd.f32 %v1095, %v2550
        %v2552 = vpop.f32.mrb[0].mxu0
        %v2553 = vadd.f32 %v1099, %v2552
        %2554 = vmatprep.mubr.bf16.mxu0 0
        %2555 = vmatmul.mubr.bf16.gmra.mrb[0].mxu0 %v959
        %v2556 = vpop.f32.mrb[0].mxu0
        %v2557 = vadd.f32 %v1095, %v2556
        %v2558 = vpop.f32.mrb[0].mxu0
        %v2559 = vadd.f32 %v1099, %v2558
        %v2560 = vpop.f32.mrb[0].mxu0
        %v2561 = vadd.f32 %v1095, %v2560
        %v2562 = vpop.f32.mrb[0].mxu0
        %v2563 = vadd.f32 %v1099, %v2562
        %2564 = vdwg.mxu0
        %2565 = vmatprep.subr.bf16.mxu0 %v1419
        %2566 = vmatpush1.bf16.msra.mxu0 %v1418
        %2567 = vmatprep.subr.bf16.mxu0 %v1431
        %2568 = vmatpush1.bf16.msra.mxu0 %v1430
        %2569 = vmatprep.subr.bf16.mxu0 %v1443
        %2570 = vmatpush1.bf16.msra.mxu0 %v1442
        %2571 = vmatprep.subr.bf16.mxu0 %v1455
        %2572 = vmatpush1.bf16.msra.mxu0 %v1454
        %2573 = vmatprep.subr.bf16.mxu0 %v1467
        %2574 = vmatpush1.bf16.msra.mxu0 %v1466
        %2575 = vmatprep.subr.bf16.mxu0 %v1479
        %2576 = vmatpush1.bf16.msra.mxu0 %v1478
        %2577 = vmatprep.subr.bf16.mxu0 %v1491
        %2578 = vmatpush1.bf16.msra.mxu0 %v1490
        %2579 = vmatprep.subr.bf16.mxu0 %v1503
        %2580 = vmatpush1.bf16.msra.mxu0 %v1502
        %2581 = vmatprep.subr.bf16.mxu0 0
        %2582 = vmatpush1.bf16.msra.mxu0 0
        %2583 = vmatprep.subr.bf16.mxu0 0
        %2584 = vmatpush1.bf16.msra.mxu0 0
        %2585 = vmatprep.subr.bf16.mxu0 0
        %2586 = vmatpush1.bf16.msra.mxu0 0
        %2587 = vmatprep.subr.bf16.mxu0 0
        %2588 = vmatpush1.bf16.msra.mxu0 0
        %2589 = vmatprep.subr.bf16.mxu0 0
        %2590 = vmatpush1.bf16.msra.mxu0 0
        %2591 = vmatprep.subr.bf16.mxu0 0
        %2592 = vmatpush1.bf16.msra.mxu0 0
        %2593 = vmatprep.subr.bf16.mxu0 0
        %2594 = vmatpush1.bf16.msra.mxu0 0
        %2595 = vmatprep.subr.bf16.mxu0 0
        %2596 = vmatpush1.bf16.msra.mxu0 0
        %2597 = vmatprep.mubr.bf16.mxu0 0
        %2598 = vmatmul.mubr.bf16.gmra.mrb[0].mxu0 %v944
        %v2599 = vpop.f32.mrb[0].mxu0
        %v2600 = vadd.f32 %v1103, %v2599
        %v2601 = vpop.f32.mrb[0].mxu0
        %v2602 = vadd.f32 %v1107, %v2601
        %v2603 = vpop.f32.mrb[0].mxu0
        %v2604 = vadd.f32 %v1103, %v2603
        %v2605 = vpop.f32.mrb[0].mxu0
        %v2606 = vadd.f32 %v1107, %v2605
        %2607 = vmatprep.mubr.bf16.mxu0 0
        %2608 = vmatmul.mubr.bf16.gmra.mrb[0].mxu0 %v945
        %v2609 = vpop.f32.mrb[0].mxu0
        %v2610 = vadd.f32 %v1103, %v2609
        %v2611 = vpop.f32.mrb[0].mxu0
        %v2612 = vadd.f32 %v1107, %v2611
        %v2613 = vpop.f32.mrb[0].mxu0
        %v2614 = vadd.f32 %v1103, %v2613
        %v2615 = vpop.f32.mrb[0].mxu0
        %v2616 = vadd.f32 %v1107, %v2615
        %2617 = vmatprep.mubr.bf16.mxu0 0
        %2618 = vmatmul.mubr.bf16.gmra.mrb[0].mxu0 %v946
        %v2619 = vpop.f32.mrb[0].mxu0
        %v2620 = vadd.f32 %v1103, %v2619
        %v2621 = vpop.f32.mrb[0].mxu0
        %v2622 = vadd.f32 %v1107, %v2621
        %v2623 = vpop.f32.mrb[0].mxu0
        %v2624 = vadd.f32 %v1103, %v2623
        %v2625 = vpop.f32.mrb[0].mxu0
        %v2626 = vadd.f32 %v1107, %v2625
        %2627 = vmatprep.mubr.bf16.mxu0 0
        %2628 = vmatmul.mubr.bf16.gmra.mrb[0].mxu0 %v947
        %v2629 = vpop.f32.mrb[0].mxu0
        %v2630 = vadd.f32 %v1103, %v2629
        %v2631 = vpop.f32.mrb[0].mxu0
        %v2632 = vadd.f32 %v1107, %v2631
        %v2633 = vpop.f32.mrb[0].mxu0
        %v2634 = vadd.f32 %v1103, %v2633
        %v2635 = vpop.f32.mrb[0].mxu0
        %v2636 = vadd.f32 %v1107, %v2635
        %2637 = vmatprep.mubr.bf16.mxu0 0
        %2638 = vmatmul.mubr.bf16.gmra.mrb[0].mxu0 %v948
        %v2639 = vpop.f32.mrb[0].mxu0
        %v2640 = vadd.f32 %v1103, %v2639
        %v2641 = vpop.f32.mrb[0].mxu0
        %v2642 = vadd.f32 %v1107, %v2641
        %v2643 = vpop.f32.mrb[0].mxu0
        %v2644 = vadd.f32 %v1103, %v2643
        %v2645 = vpop.f32.mrb[0].mxu0
        %v2646 = vadd.f32 %v1107, %v2645
        %2647 = vmatprep.mubr.bf16.mxu0 0
        %2648 = vmatmul.mubr.bf16.gmra.mrb[0].mxu0 %v949
        %v2649 = vpop.f32.mrb[0].mxu0
        %v2650 = vadd.f32 %v1103, %v2649
        %v2651 = vpop.f32.mrb[0].mxu0
        %v2652 = vadd.f32 %v1107, %v2651
        %v2653 = vpop.f32.mrb[0].mxu0
        %v2654 = vadd.f32 %v1103, %v2653
        %v2655 = vpop.f32.mrb[0].mxu0
        %v2656 = vadd.f32 %v1107, %v2655
        %2657 = vmatprep.mubr.bf16.mxu0 0
        %2658 = vmatmul.mubr.bf16.gmra.mrb[0].mxu0 %v950
        %v2659 = vpop.f32.mrb[0].mxu0
        %v2660 = vadd.f32 %v1103, %v2659
        %v2661 = vpop.f32.mrb[0].mxu0
        %v2662 = vadd.f32 %v1107, %v2661
        %v2663 = vpop.f32.mrb[0].mxu0
        %v2664 = vadd.f32 %v1103, %v2663
        %v2665 = vpop.f32.mrb[0].mxu0
        %v2666 = vadd.f32 %v1107, %v2665
        %2667 = vmatprep.mubr.bf16.mxu0 0
        %2668 = vmatmul.mubr.bf16.gmra.mrb[0].mxu0 %v951
        %v2669 = vpop.f32.mrb[0].mxu0
        %v2670 = vadd.f32 %v1103, %v2669
        %v2671 = vpop.f32.mrb[0].mxu0
        %v2672 = vadd.f32 %v1107, %v2671
        %v2673 = vpop.f32.mrb[0].mxu0
        %v2674 = vadd.f32 %v1103, %v2673
        %v2675 = vpop.f32.mrb[0].mxu0
        %v2676 = vadd.f32 %v1107, %v2675
        %2677 = vmatprep.mubr.bf16.mxu0 0
        %2678 = vmatmul.mubr.bf16.gmra.mrb[0].mxu0 %v952
        %v2679 = vpop.f32.mrb[0].mxu0
        %v2680 = vadd.f32 %v1103, %v2679
        %v2681 = vpop.f32.mrb[0].mxu0
        %v2682 = vadd.f32 %v1107, %v2681
        %v2683 = vpop.f32.mrb[0].mxu0
        %v2684 = vadd.f32 %v1103, %v2683
        %v2685 = vpop.f32.mrb[0].mxu0
        %v2686 = vadd.f32 %v1107, %v2685
        %2687 = vmatprep.mubr.bf16.mxu0 0
        %2688 = vmatmul.mubr.bf16.gmra.mrb[0].mxu0 %v953
        %v2689 = vpop.f32.mrb[0].mxu0
        %v2690 = vadd.f32 %v1103, %v2689
        %v2691 = vpop.f32.mrb[0].mxu0
        %v2692 = vadd.f32 %v1107, %v2691
        %v2693 = vpop.f32.mrb[0].mxu0
        %v2694 = vadd.f32 %v1103, %v2693
        %v2695 = vpop.f32.mrb[0].mxu0
        %v2696 = vadd.f32 %v1107, %v2695
        %2697 = vmatprep.mubr.bf16.mxu0 0
        %2698 = vmatmul.mubr.bf16.gmra.mrb[0].mxu0 %v954
        %v2699 = vpop.f32.mrb[0].mxu0
        %v2700 = vadd.f32 %v1103, %v2699
        %v2701 = vpop.f32.mrb[0].mxu0
        %v2702 = vadd.f32 %v1107, %v2701
        %v2703 = vpop.f32.mrb[0].mxu0
        %v2704 = vadd.f32 %v1103, %v2703
        %v2705 = vpop.f32.mrb[0].mxu0
        %v2706 = vadd.f32 %v1107, %v2705
        %2707 = vmatprep.mubr.bf16.mxu0 0
        %2708 = vmatmul.mubr.bf16.gmra.mrb[0].mxu0 %v955
        %v2709 = vpop.f32.mrb[0].mxu0
        %v2710 = vadd.f32 %v1103, %v2709
        %v2711 = vpop.f32.mrb[0].mxu0
        %v2712 = vadd.f32 %v1107, %v2711
        %v2713 = vpop.f32.mrb[0].mxu0
        %v2714 = vadd.f32 %v1103, %v2713
        %v2715 = vpop.f32.mrb[0].mxu0
        %v2716 = vadd.f32 %v1107, %v2715
        %2717 = vmatprep.mubr.bf16.mxu0 0
        %2718 = vmatmul.mubr.bf16.gmra.mrb[0].mxu0 %v956
        %v2719 = vpop.f32.mrb[0].mxu0
        %v2720 = vadd.f32 %v1103, %v2719
        %v2721 = vpop.f32.mrb[0].mxu0
        %v2722 = vadd.f32 %v1107, %v2721
        %v2723 = vpop.f32.mrb[0].mxu0
        %v2724 = vadd.f32 %v1103, %v2723
        %v2725 = vpop.f32.mrb[0].mxu0
        %v2726 = vadd.f32 %v1107, %v2725
        %2727 = vmatprep.mubr.bf16.mxu0 0
        %2728 = vmatmul.mubr.bf16.gmra.mrb[0].mxu0 %v957
        %v2729 = vpop.f32.mrb[0].mxu0
        %v2730 = vadd.f32 %v1103, %v2729
        %v2731 = vpop.f32.mrb[0].mxu0
        %v2732 = vadd.f32 %v1107, %v2731
        %v2733 = vpop.f32.mrb[0].mxu0
        %v2734 = vadd.f32 %v1103, %v2733
        %v2735 = vpop.f32.mrb[0].mxu0
        %v2736 = vadd.f32 %v1107, %v2735
        %2737 = vmatprep.mubr.bf16.mxu0 0
        %2738 = vmatmul.mubr.bf16.gmra.mrb[0].mxu0 %v958
        %v2739 = vpop.f32.mrb[0].mxu0
        %v2740 = vadd.f32 %v1103, %v2739
        %v2741 = vpop.f32.mrb[0].mxu0
        %v2742 = vadd.f32 %v1107, %v2741
        %v2743 = vpop.f32.mrb[0].mxu0
        %v2744 = vadd.f32 %v1103, %v2743
        %v2745 = vpop.f32.mrb[0].mxu0
        %v2746 = vadd.f32 %v1107, %v2745
        %2747 = vmatprep.mubr.bf16.mxu0 0
        %2748 = vmatmul.mubr.bf16.gmra.mrb[0].mxu0 %v959
        %v2749 = vpop.f32.mrb[0].mxu0
        %v2750 = vadd.f32 %v1103, %v2749
        %v2751 = vpop.f32.mrb[0].mxu0
        %v2752 = vadd.f32 %v1107, %v2751
        %v2753 = vpop.f32.mrb[0].mxu0
        %v2754 = vadd.f32 %v1103, %v2753
        %v2755 = vpop.f32.mrb[0].mxu0
        %v2756 = vadd.f32 %v1107, %v2755
        %2757 = vdwg.mxu0
        %v2758 = vxor.u32 %v1635, 2147483648
        %v2759 = vxor.u32 %v1637, 2147483648
        %v2760 = vxor.u32 %v1828, 2147483648
        %v2761 = vxor.u32 %v1830, 2147483648
        %v2762 = vxor.u32 %v2021, 2147483648
        %v2763 = vxor.u32 %v2023, 2147483648
        %v2764 = vxor.u32 %v2214, 2147483648
        %v2765 = vxor.u32 %v2216, 2147483648
        %v2766 = vxor.u32 %v2407, 2147483648
        %v2767 = vxor.u32 %v2409, 2147483648
        %v2768 = vxor.u32 %v2600, 2147483648
        %v2769 = vxor.u32 %v2602, 2147483648
        %v2770 = vxor.u32 %v1639, 2147483648
        %v2771 = vxor.u32 %v1641, 2147483648
        %v2772 = vxor.u32 %v1832, 2147483648
        %v2773 = vxor.u32 %v1834, 2147483648
        %v2774 = vxor.u32 %v2025, 2147483648
        %v2775 = vxor.u32 %v2027, 2147483648
        %v2776 = vxor.u32 %v2218, 2147483648
        %v2777 = vxor.u32 %v2220, 2147483648
        %v2778 = vxor.u32 %v2411, 2147483648
        %v2779 = vxor.u32 %v2413, 2147483648
        %v2780 = vxor.u32 %v2604, 2147483648
        %v2781 = vxor.u32 %v2606, 2147483648
        %v2782 = vxor.u32 %v1645, 2147483648
        %v2783 = vxor.u32 %v1647, 2147483648
        %v2784 = vxor.u32 %v1838, 2147483648
        %v2785 = vxor.u32 %v1840, 2147483648
        %v2786 = vxor.u32 %v2031, 2147483648
        %v2787 = vxor.u32 %v2033, 2147483648
        %v2788 = vxor.u32 %v2224, 2147483648
        %v2789 = vxor.u32 %v2226, 2147483648
        %v2790 = vxor.u32 %v2417, 2147483648
        %v2791 = vxor.u32 %v2419, 2147483648
        %v2792 = vxor.u32 %v2610, 2147483648
        %v2793 = vxor.u32 %v2612, 2147483648
        %v2794 = vxor.u32 %v1649, 2147483648
        %v2795 = vxor.u32 %v1651, 2147483648
        %v2796 = vxor.u32 %v1842, 2147483648
        %v2797 = vxor.u32 %v1844, 2147483648
        %v2798 = vxor.u32 %v2035, 2147483648
        %v2799 = vxor.u32 %v2037, 2147483648
        %v2800 = vxor.u32 %v2228, 2147483648
        %v2801 = vxor.u32 %v2230, 2147483648
        %v2802 = vxor.u32 %v2421, 2147483648
        %v2803 = vxor.u32 %v2423, 2147483648
        %v2804 = vxor.u32 %v2614, 2147483648
        %v2805 = vxor.u32 %v2616, 2147483648
        %v2806 = vxor.u32 %v1655, 2147483648
        %v2807 = vxor.u32 %v1657, 2147483648
        %v2808 = vxor.u32 %v1848, 2147483648
        %v2809 = vxor.u32 %v1850, 2147483648
        %v2810 = vxor.u32 %v2041, 2147483648
        %v2811 = vxor.u32 %v2043, 2147483648
        %v2812 = vxor.u32 %v2234, 2147483648
        %v2813 = vxor.u32 %v2236, 2147483648
        %v2814 = vxor.u32 %v2427, 2147483648
        %v2815 = vxor.u32 %v2429, 2147483648
        %v2816 = vxor.u32 %v2620, 2147483648
        %v2817 = vxor.u32 %v2622, 2147483648
        %v2818 = vxor.u32 %v1659, 2147483648
        %v2819 = vxor.u32 %v1661, 2147483648
        %v2820 = vxor.u32 %v1852, 2147483648
        %v2821 = vxor.u32 %v1854, 2147483648
        %v2822 = vxor.u32 %v2045, 2147483648
        %v2823 = vxor.u32 %v2047, 2147483648
        %v2824 = vxor.u32 %v2238, 2147483648
        %v2825 = vxor.u32 %v2240, 2147483648
        %v2826 = vxor.u32 %v2431, 2147483648
        %v2827 = vxor.u32 %v2433, 2147483648
        %v2828 = vxor.u32 %v2624, 2147483648
        %v2829 = vxor.u32 %v2626, 2147483648
        %v2830 = vxor.u32 %v1665, 2147483648
        %v2831 = vxor.u32 %v1667, 2147483648
        %v2832 = vxor.u32 %v1858, 2147483648
        %v2833 = vxor.u32 %v1860, 2147483648
        %v2834 = vxor.u32 %v2051, 2147483648
        %v2835 = vxor.u32 %v2053, 2147483648
        %v2836 = vxor.u32 %v2244, 2147483648
        %v2837 = vxor.u32 %v2246, 2147483648
        %v2838 = vxor.u32 %v2437, 2147483648
        %v2839 = vxor.u32 %v2439, 2147483648
        %v2840 = vxor.u32 %v2630, 2147483648
        %v2841 = vxor.u32 %v2632, 2147483648
        %v2842 = vxor.u32 %v1669, 2147483648
        %v2843 = vxor.u32 %v1671, 2147483648
        %v2844 = vxor.u32 %v1862, 2147483648
        %v2845 = vxor.u32 %v1864, 2147483648
        %v2846 = vxor.u32 %v2055, 2147483648
        %v2847 = vxor.u32 %v2057, 2147483648
        %v2848 = vxor.u32 %v2248, 2147483648
        %v2849 = vxor.u32 %v2250, 2147483648
        %v2850 = vxor.u32 %v2441, 2147483648
        %v2851 = vxor.u32 %v2443, 2147483648
        %v2852 = vxor.u32 %v2634, 2147483648
        %v2853 = vxor.u32 %v2636, 2147483648
        %v2854 = vxor.u32 %v1675, 2147483648
        %v2855 = vxor.u32 %v1677, 2147483648
        %v2856 = vxor.u32 %v1868, 2147483648
        %v2857 = vxor.u32 %v1870, 2147483648
        %v2858 = vxor.u32 %v2061, 2147483648
        %v2859 = vxor.u32 %v2063, 2147483648
        %v2860 = vxor.u32 %v2254, 2147483648
        %v2861 = vxor.u32 %v2256, 2147483648
        %v2862 = vxor.u32 %v2447, 2147483648
        %v2863 = vxor.u32 %v2449, 2147483648
        %v2864 = vxor.u32 %v2640, 2147483648
        %v2865 = vxor.u32 %v2642, 2147483648
        %v2866 = vxor.u32 %v1679, 2147483648
        %v2867 = vxor.u32 %v1681, 2147483648
        %v2868 = vxor.u32 %v1872, 2147483648
        %v2869 = vxor.u32 %v1874, 2147483648
        %v2870 = vxor.u32 %v2065, 2147483648
        %v2871 = vxor.u32 %v2067, 2147483648
        %v2872 = vxor.u32 %v2258, 2147483648
        %v2873 = vxor.u32 %v2260, 2147483648
        %v2874 = vxor.u32 %v2451, 2147483648
        %v2875 = vxor.u32 %v2453, 2147483648
        %v2876 = vxor.u32 %v2644, 2147483648
        %v2877 = vxor.u32 %v2646, 2147483648
        %v2878 = vxor.u32 %v1685, 2147483648
        %v2879 = vxor.u32 %v1687, 2147483648
        %v2880 = vxor.u32 %v1878, 2147483648
        %v2881 = vxor.u32 %v1880, 2147483648
        %v2882 = vxor.u32 %v2071, 2147483648
        %v2883 = vxor.u32 %v2073, 2147483648
        %v2884 = vxor.u32 %v2264, 2147483648
        %v2885 = vxor.u32 %v2266, 2147483648
        %v2886 = vxor.u32 %v2457, 2147483648
        %v2887 = vxor.u32 %v2459, 2147483648
        %v2888 = vxor.u32 %v2650, 2147483648
        %v2889 = vxor.u32 %v2652, 2147483648
        %v2890 = vxor.u32 %v1689, 2147483648
        %v2891 = vxor.u32 %v1691, 2147483648
        %v2892 = vxor.u32 %v1882, 2147483648
        %v2893 = vxor.u32 %v1884, 2147483648
        %v2894 = vxor.u32 %v2075, 2147483648
        %v2895 = vxor.u32 %v2077, 2147483648
        %v2896 = vxor.u32 %v2268, 2147483648
        %v2897 = vxor.u32 %v2270, 2147483648
        %v2898 = vxor.u32 %v2461, 2147483648
        %v2899 = vxor.u32 %v2463, 2147483648
        %v2900 = vxor.u32 %v2654, 2147483648
        %v2901 = vxor.u32 %v2656, 2147483648
        %v2902 = vxor.u32 %v1695, 2147483648
        %v2903 = vxor.u32 %v1697, 2147483648
        %v2904 = vxor.u32 %v1888, 2147483648
        %v2905 = vxor.u32 %v1890, 2147483648
        %v2906 = vxor.u32 %v2081, 2147483648
        %v2907 = vxor.u32 %v2083, 2147483648
        %v2908 = vxor.u32 %v2274, 2147483648
        %v2909 = vxor.u32 %v2276, 2147483648
        %v2910 = vxor.u32 %v2467, 2147483648
        %v2911 = vxor.u32 %v2469, 2147483648
        %v2912 = vxor.u32 %v2660, 2147483648
        %v2913 = vxor.u32 %v2662, 2147483648
        %v2914 = vxor.u32 %v1699, 2147483648
        %v2915 = vxor.u32 %v1701, 2147483648
        %v2916 = vxor.u32 %v1892, 2147483648
        %v2917 = vxor.u32 %v1894, 2147483648
        %v2918 = vxor.u32 %v2085, 2147483648
        %v2919 = vxor.u32 %v2087, 2147483648
        %v2920 = vxor.u32 %v2278, 2147483648
        %v2921 = vxor.u32 %v2280, 2147483648
        %v2922 = vxor.u32 %v2471, 2147483648
        %v2923 = vxor.u32 %v2473, 2147483648
        %v2924 = vxor.u32 %v2664, 2147483648
        %v2925 = vxor.u32 %v2666, 2147483648
        %v2926 = vxor.u32 %v1705, 2147483648
        %v2927 = vxor.u32 %v1707, 2147483648
        %v2928 = vxor.u32 %v1898, 2147483648
        %v2929 = vxor.u32 %v1900, 2147483648
        %v2930 = vxor.u32 %v2091, 2147483648
        %v2931 = vxor.u32 %v2093, 2147483648
        %v2932 = vxor.u32 %v2284, 2147483648
        %v2933 = vxor.u32 %v2286, 2147483648
        %v2934 = vxor.u32 %v2477, 2147483648
        %v2935 = vxor.u32 %v2479, 2147483648
        %v2936 = vxor.u32 %v2670, 2147483648
        %v2937 = vxor.u32 %v2672, 2147483648
        %v2938 = vxor.u32 %v1709, 2147483648
        %v2939 = vxor.u32 %v1711, 2147483648
        %v2940 = vxor.u32 %v1902, 2147483648
        %v2941 = vxor.u32 %v1904, 2147483648
        %v2942 = vxor.u32 %v2095, 2147483648
        %v2943 = vxor.u32 %v2097, 2147483648
        %v2944 = vxor.u32 %v2288, 2147483648
        %v2945 = vxor.u32 %v2290, 2147483648
        %v2946 = vxor.u32 %v2481, 2147483648
        %v2947 = vxor.u32 %v2483, 2147483648
        %v2948 = vxor.u32 %v2674, 2147483648
        %v2949 = vxor.u32 %v2676, 2147483648
        %v2950 = vxor.u32 %v1715, 2147483648
        %v2951 = vxor.u32 %v1717, 2147483648
        %v2952 = vxor.u32 %v1908, 2147483648
        %v2953 = vxor.u32 %v1910, 2147483648
        %v2954 = vxor.u32 %v2101, 2147483648
        %v2955 = vxor.u32 %v2103, 2147483648
        %v2956 = vxor.u32 %v2294, 2147483648
        %v2957 = vxor.u32 %v2296, 2147483648
        %v2958 = vxor.u32 %v2487, 2147483648
        %v2959 = vxor.u32 %v2489, 2147483648
        %v2960 = vxor.u32 %v2680, 2147483648
        %v2961 = vxor.u32 %v2682, 2147483648
        %v2962 = vxor.u32 %v1719, 2147483648
        %v2963 = vxor.u32 %v1721, 2147483648
        %v2964 = vxor.u32 %v1912, 2147483648
        %v2965 = vxor.u32 %v1914, 2147483648
        %v2966 = vxor.u32 %v2105, 2147483648
        %v2967 = vxor.u32 %v2107, 2147483648
        %v2968 = vxor.u32 %v2298, 2147483648
        %v2969 = vxor.u32 %v2300, 2147483648
        %v2970 = vxor.u32 %v2491, 2147483648
        %v2971 = vxor.u32 %v2493, 2147483648
        %v2972 = vxor.u32 %v2684, 2147483648
        %v2973 = vxor.u32 %v2686, 2147483648
        %v2974 = vxor.u32 %v1725, 2147483648
        %v2975 = vxor.u32 %v1727, 2147483648
        %v2976 = vxor.u32 %v1918, 2147483648
        %v2977 = vxor.u32 %v1920, 2147483648
        %v2978 = vxor.u32 %v2111, 2147483648
        %v2979 = vxor.u32 %v2113, 2147483648
        %v2980 = vxor.u32 %v2304, 2147483648
        %v2981 = vxor.u32 %v2306, 2147483648
        %v2982 = vxor.u32 %v2497, 2147483648
        %v2983 = vxor.u32 %v2499, 2147483648
        %v2984 = vxor.u32 %v2690, 2147483648
        %v2985 = vxor.u32 %v2692, 2147483648
        %v2986 = vxor.u32 %v1729, 2147483648
        %v2987 = vxor.u32 %v1731, 2147483648
        %v2988 = vxor.u32 %v1922, 2147483648
        %v2989 = vxor.u32 %v1924, 2147483648
        %v2990 = vxor.u32 %v2115, 2147483648
        %v2991 = vxor.u32 %v2117, 2147483648
        %v2992 = vxor.u32 %v2308, 2147483648
        %v2993 = vxor.u32 %v2310, 2147483648
        %v2994 = vxor.u32 %v2501, 2147483648
        %v2995 = vxor.u32 %v2503, 2147483648
        %v2996 = vxor.u32 %v2694, 2147483648
        %v2997 = vxor.u32 %v2696, 2147483648
        %v2998 = vxor.u32 %v1735, 2147483648
        %v2999 = vxor.u32 %v1737, 2147483648
        %v3000 = vxor.u32 %v1928, 2147483648
        %v3001 = vxor.u32 %v1930, 2147483648
        %v3002 = vxor.u32 %v2121, 2147483648
        %v3003 = vxor.u32 %v2123, 2147483648
        %v3004 = vxor.u32 %v2314, 2147483648
        %v3005 = vxor.u32 %v2316, 2147483648
        %v3006 = vxor.u32 %v2507, 2147483648
        %v3007 = vxor.u32 %v2509, 2147483648
        %v3008 = vxor.u32 %v2700, 2147483648
        %v3009 = vxor.u32 %v2702, 2147483648
        %v3010 = vxor.u32 %v1739, 2147483648
        %v3011 = vxor.u32 %v1741, 2147483648
        %v3012 = vxor.u32 %v1932, 2147483648
        %v3013 = vxor.u32 %v1934, 2147483648
        %v3014 = vxor.u32 %v2125, 2147483648
        %v3015 = vxor.u32 %v2127, 2147483648
        %v3016 = vxor.u32 %v2318, 2147483648
        %v3017 = vxor.u32 %v2320, 2147483648
        %v3018 = vxor.u32 %v2511, 2147483648
        %v3019 = vxor.u32 %v2513, 2147483648
        %v3020 = vxor.u32 %v2704, 2147483648
        %v3021 = vxor.u32 %v2706, 2147483648
        %v3022 = vxor.u32 %v1745, 2147483648
        %v3023 = vxor.u32 %v1747, 2147483648
        %v3024 = vxor.u32 %v1938, 2147483648
        %v3025 = vxor.u32 %v1940, 2147483648
        %v3026 = vxor.u32 %v2131, 2147483648
        %v3027 = vxor.u32 %v2133, 2147483648
        %v3028 = vxor.u32 %v2324, 2147483648
        %v3029 = vxor.u32 %v2326, 2147483648
        %v3030 = vxor.u32 %v2517, 2147483648
        %v3031 = vxor.u32 %v2519, 2147483648
        %v3032 = vxor.u32 %v2710, 2147483648
        %v3033 = vxor.u32 %v2712, 2147483648
        %v3034 = vxor.u32 %v1749, 2147483648
        %v3035 = vxor.u32 %v1751, 2147483648
        %v3036 = vxor.u32 %v1942, 2147483648
        %v3037 = vxor.u32 %v1944, 2147483648
        %v3038 = vxor.u32 %v2135, 2147483648
        %v3039 = vxor.u32 %v2137, 2147483648
        %v3040 = vxor.u32 %v2328, 2147483648
        %v3041 = vxor.u32 %v2330, 2147483648
        %v3042 = vxor.u32 %v2521, 2147483648
        %v3043 = vxor.u32 %v2523, 2147483648
        %v3044 = vxor.u32 %v2714, 2147483648
        %v3045 = vxor.u32 %v2716, 2147483648
        %v3046 = vxor.u32 %v1755, 2147483648
        %v3047 = vxor.u32 %v1757, 2147483648
        %v3048 = vxor.u32 %v1948, 2147483648
        %v3049 = vxor.u32 %v1950, 2147483648
        %v3050 = vxor.u32 %v2141, 2147483648
        %v3051 = vxor.u32 %v2143, 2147483648
        %v3052 = vxor.u32 %v2334, 2147483648
        %v3053 = vxor.u32 %v2336, 2147483648
        %v3054 = vxor.u32 %v2527, 2147483648
        %v3055 = vxor.u32 %v2529, 2147483648
        %v3056 = vxor.u32 %v2720, 2147483648
        %v3057 = vxor.u32 %v2722, 2147483648
        %v3058 = vxor.u32 %v1759, 2147483648
        %v3059 = vxor.u32 %v1761, 2147483648
        %v3060 = vxor.u32 %v1952, 2147483648
        %v3061 = vxor.u32 %v1954, 2147483648
        %v3062 = vxor.u32 %v2145, 2147483648
        %v3063 = vxor.u32 %v2147, 2147483648
        %v3064 = vxor.u32 %v2338, 2147483648
        %v3065 = vxor.u32 %v2340, 2147483648
        %v3066 = vxor.u32 %v2531, 2147483648
        %v3067 = vxor.u32 %v2533, 2147483648
        %v3068 = vxor.u32 %v2724, 2147483648
        %v3069 = vxor.u32 %v2726, 2147483648
        %v3070 = vxor.u32 %v1765, 2147483648
        %v3071 = vxor.u32 %v1767, 2147483648
        %v3072 = vxor.u32 %v1958, 2147483648
        %v3073 = vxor.u32 %v1960, 2147483648
        %v3074 = vxor.u32 %v2151, 2147483648
        %v3075 = vxor.u32 %v2153, 2147483648
        %v3076 = vxor.u32 %v2344, 2147483648
        %v3077 = vxor.u32 %v2346, 2147483648
        %v3078 = vxor.u32 %v2537, 2147483648
        %v3079 = vxor.u32 %v2539, 2147483648
        %v3080 = vxor.u32 %v2730, 2147483648
        %v3081 = vxor.u32 %v2732, 2147483648
        %v3082 = vxor.u32 %v1769, 2147483648
        %v3083 = vxor.u32 %v1771, 2147483648
        %v3084 = vxor.u32 %v1962, 2147483648
        %v3085 = vxor.u32 %v1964, 2147483648
        %v3086 = vxor.u32 %v2155, 2147483648
        %v3087 = vxor.u32 %v2157, 2147483648
        %v3088 = vxor.u32 %v2348, 2147483648
        %v3089 = vxor.u32 %v2350, 2147483648
        %v3090 = vxor.u32 %v2541, 2147483648
        %v3091 = vxor.u32 %v2543, 2147483648
        %v3092 = vxor.u32 %v2734, 2147483648
        %v3093 = vxor.u32 %v2736, 2147483648
        %v3094 = vxor.u32 %v1775, 2147483648
        %v3095 = vxor.u32 %v1777, 2147483648
        %v3096 = vxor.u32 %v1968, 2147483648
        %v3097 = vxor.u32 %v1970, 2147483648
        %v3098 = vxor.u32 %v2161, 2147483648
        %v3099 = vxor.u32 %v2163, 2147483648
        %v3100 = vxor.u32 %v2354, 2147483648
        %v3101 = vxor.u32 %v2356, 2147483648
        %v3102 = vxor.u32 %v2547, 2147483648
        %v3103 = vxor.u32 %v2549, 2147483648
        %v3104 = vxor.u32 %v2740, 2147483648
        %v3105 = vxor.u32 %v2742, 2147483648
        %v3106 = vxor.u32 %v1779, 2147483648
        %v3107 = vxor.u32 %v1781, 2147483648
        %v3108 = vxor.u32 %v1972, 2147483648
        %v3109 = vxor.u32 %v1974, 2147483648
        %v3110 = vxor.u32 %v2165, 2147483648
        %v3111 = vxor.u32 %v2167, 2147483648
        %v3112 = vxor.u32 %v2358, 2147483648
        %v3113 = vxor.u32 %v2360, 2147483648
        %v3114 = vxor.u32 %v2551, 2147483648
        %v3115 = vxor.u32 %v2553, 2147483648
        %v3116 = vxor.u32 %v2744, 2147483648
        %v3117 = vxor.u32 %v2746, 2147483648
        %v3118 = vxor.u32 %v1785, 2147483648
        %v3119 = vxor.u32 %v1787, 2147483648
        %v3120 = vxor.u32 %v1978, 2147483648
        %v3121 = vxor.u32 %v1980, 2147483648
        %v3122 = vxor.u32 %v2171, 2147483648
        %v3123 = vxor.u32 %v2173, 2147483648
        %v3124 = vxor.u32 %v2364, 2147483648
        %v3125 = vxor.u32 %v2366, 2147483648
        %v3126 = vxor.u32 %v2557, 2147483648
        %v3127 = vxor.u32 %v2559, 2147483648
        %v3128 = vxor.u32 %v2750, 2147483648
        %v3129 = vxor.u32 %v2752, 2147483648
        %v3130 = vxor.u32 %v1789, 2147483648
        %v3131 = vxor.u32 %v1791, 2147483648
        %v3132 = vxor.u32 %v1982, 2147483648
        %v3133 = vxor.u32 %v1984, 2147483648
        %v3134 = vxor.u32 %v2175, 2147483648
        %v3135 = vxor.u32 %v2177, 2147483648
        %v3136 = vxor.u32 %v2368, 2147483648
        %v3137 = vxor.u32 %v2370, 2147483648
        %v3138 = vxor.u32 %v2561, 2147483648
        %v3139 = vxor.u32 %v2563, 2147483648
        %v3140 = vxor.u32 %v2754, 2147483648
        %v3141 = vxor.u32 %v2756, 2147483648
        %v3142 = vmul.f32 %v2758, 1.442695
        %v3143 = vpow.pop %v3142
        %v3144 = vmul.f32 %v2759, 1.442695
        %v3145 = vpow.pop %v3144
        %v3146 = vmul.f32 %v2760, 1.442695
        %v3147 = vpow.pop %v3146
        %v3148 = vmul.f32 %v2761, 1.442695
        %v3149 = vpow.pop %v3148
        %v3150 = vmul.f32 %v2762, 1.442695
        %v3151 = vpow.pop %v3150
        %v3152 = vmul.f32 %v2763, 1.442695
        %v3153 = vpow.pop %v3152
        %v3154 = vmul.f32 %v2764, 1.442695
        %v3155 = vpow.pop %v3154
        %v3156 = vmul.f32 %v2765, 1.442695
        %v3157 = vpow.pop %v3156
        %v3158 = vmul.f32 %v2766, 1.442695
        %v3159 = vpow.pop %v3158
        %v3160 = vmul.f32 %v2767, 1.442695
        %v3161 = vpow.pop %v3160
        %v3162 = vmul.f32 %v2768, 1.442695
        %v3163 = vpow.pop %v3162
        %v3164 = vmul.f32 %v2769, 1.442695
        %v3165 = vpow.pop %v3164
        %v3166 = vmul.f32 %v2770, 1.442695
        %v3167 = vpow.pop %v3166
        %v3168 = vmul.f32 %v2771, 1.442695
        %v3169 = vpow.pop %v3168
        %v3170 = vmul.f32 %v2772, 1.442695
        %v3171 = vpow.pop %v3170
        %v3172 = vmul.f32 %v2773, 1.442695
        %v3173 = vpow.pop %v3172
        %v3174 = vmul.f32 %v2774, 1.442695
        %v3175 = vpow.pop %v3174
        %v3176 = vmul.f32 %v2775, 1.442695
        %v3177 = vpow.pop %v3176
        %v3178 = vmul.f32 %v2776, 1.442695
        %v3179 = vpow.pop %v3178
        %v3180 = vmul.f32 %v2777, 1.442695
        %v3181 = vpow.pop %v3180
        %v3182 = vmul.f32 %v2778, 1.442695
        %v3183 = vpow.pop %v3182
        %v3184 = vmul.f32 %v2779, 1.442695
        %v3185 = vpow.pop %v3184
        %v3186 = vmul.f32 %v2780, 1.442695
        %v3187 = vpow.pop %v3186
        %v3188 = vmul.f32 %v2781, 1.442695
        %v3189 = vpow.pop %v3188
        %v3190 = vmul.f32 %v2782, 1.442695
        %v3191 = vpow.pop %v3190
        %v3192 = vmul.f32 %v2783, 1.442695
        %v3193 = vpow.pop %v3192
        %v3194 = vmul.f32 %v2784, 1.442695
        %v3195 = vpow.pop %v3194
        %v3196 = vmul.f32 %v2785, 1.442695
        %v3197 = vpow.pop %v3196
        %v3198 = vmul.f32 %v2786, 1.442695
        %v3199 = vpow.pop %v3198
        %v3200 = vmul.f32 %v2787, 1.442695
        %v3201 = vpow.pop %v3200
        %v3202 = vmul.f32 %v2788, 1.442695
        %v3203 = vpow.pop %v3202
        %v3204 = vmul.f32 %v2789, 1.442695
        %v3205 = vpow.pop %v3204
        %v3206 = vmul.f32 %v2790, 1.442695
        %v3207 = vpow.pop %v3206
        %v3208 = vmul.f32 %v2791, 1.442695
        %v3209 = vpow.pop %v3208
        %v3210 = vmul.f32 %v2792, 1.442695
        %v3211 = vpow.pop %v3210
        %v3212 = vmul.f32 %v2793, 1.442695
        %v3213 = vpow.pop %v3212
        %v3214 = vmul.f32 %v2794, 1.442695
        %v3215 = vpow.pop %v3214
        %v3216 = vmul.f32 %v2795, 1.442695
        %v3217 = vpow.pop %v3216
        %v3218 = vmul.f32 %v2796, 1.442695
        %v3219 = vpow.pop %v3218
        %v3220 = vmul.f32 %v2797, 1.442695
        %v3221 = vpow.pop %v3220
        %v3222 = vmul.f32 %v2798, 1.442695
        %v3223 = vpow.pop %v3222
        %v3224 = vmul.f32 %v2799, 1.442695
        %v3225 = vpow.pop %v3224
        %v3226 = vmul.f32 %v2800, 1.442695
        %v3227 = vpow.pop %v3226
        %v3228 = vmul.f32 %v2801, 1.442695
        %v3229 = vpow.pop %v3228
        %v3230 = vmul.f32 %v2802, 1.442695
        %v3231 = vpow.pop %v3230
        %v3232 = vmul.f32 %v2803, 1.442695
        %v3233 = vpow.pop %v3232
        %v3234 = vmul.f32 %v2804, 1.442695
        %v3235 = vpow.pop %v3234
        %v3236 = vmul.f32 %v2805, 1.442695
        %v3237 = vpow.pop %v3236
        %v3238 = vmul.f32 %v2806, 1.442695
        %v3239 = vpow.pop %v3238
        %v3240 = vmul.f32 %v2807, 1.442695
        %v3241 = vpow.pop %v3240
        %v3242 = vmul.f32 %v2808, 1.442695
        %v3243 = vpow.pop %v3242
        %v3244 = vmul.f32 %v2809, 1.442695
        %v3245 = vpow.pop %v3244
        %v3246 = vmul.f32 %v2810, 1.442695
        %v3247 = vpow.pop %v3246
        %v3248 = vmul.f32 %v2811, 1.442695
        %v3249 = vpow.pop %v3248
        %v3250 = vmul.f32 %v2812, 1.442695
        %v3251 = vpow.pop %v3250
        %v3252 = vmul.f32 %v2813, 1.442695
        %v3253 = vpow.pop %v3252
        %v3254 = vmul.f32 %v2814, 1.442695
        %v3255 = vpow.pop %v3254
        %v3256 = vmul.f32 %v2815, 1.442695
        %v3257 = vpow.pop %v3256
        %v3258 = vmul.f32 %v2816, 1.442695
        %v3259 = vpow.pop %v3258
        %v3260 = vmul.f32 %v2817, 1.442695
        %v3261 = vpow.pop %v3260
        %v3262 = vmul.f32 %v2818, 1.442695
        %v3263 = vpow.pop %v3262
        %v3264 = vmul.f32 %v2819, 1.442695
        %v3265 = vpow.pop %v3264
        %v3266 = vmul.f32 %v2820, 1.442695
        %v3267 = vpow.pop %v3266
        %v3268 = vmul.f32 %v2821, 1.442695
        %v3269 = vpow.pop %v3268
        %v3270 = vmul.f32 %v2822, 1.442695
        %v3271 = vpow.pop %v3270
        %v3272 = vmul.f32 %v2823, 1.442695
        %v3273 = vpow.pop %v3272
        %v3274 = vmul.f32 %v2824, 1.442695
        %v3275 = vpow.pop %v3274
        %v3276 = vmul.f32 %v2825, 1.442695
        %v3277 = vpow.pop %v3276
        %v3278 = vmul.f32 %v2826, 1.442695
        %v3279 = vpow.pop %v3278
        %v3280 = vmul.f32 %v2827, 1.442695
        %v3281 = vpow.pop %v3280
        %v3282 = vmul.f32 %v2828, 1.442695
        %v3283 = vpow.pop %v3282
        %v3284 = vmul.f32 %v2829, 1.442695
        %v3285 = vpow.pop %v3284
        %v3286 = vmul.f32 %v2830, 1.442695
        %v3287 = vpow.pop %v3286
        %v3288 = vmul.f32 %v2831, 1.442695
        %v3289 = vpow.pop %v3288
        %v3290 = vmul.f32 %v2832, 1.442695
        %v3291 = vpow.pop %v3290
        %v3292 = vmul.f32 %v2833, 1.442695
        %v3293 = vpow.pop %v3292
        %v3294 = vmul.f32 %v2834, 1.442695
        %v3295 = vpow.pop %v3294
        %v3296 = vmul.f32 %v2835, 1.442695
        %v3297 = vpow.pop %v3296
        %v3298 = vmul.f32 %v2836, 1.442695
        %v3299 = vpow.pop %v3298
        %v3300 = vmul.f32 %v2837, 1.442695
        %v3301 = vpow.pop %v3300
        %v3302 = vmul.f32 %v2838, 1.442695
        %v3303 = vpow.pop %v3302
        %v3304 = vmul.f32 %v2839, 1.442695
        %v3305 = vpow.pop %v3304
        %v3306 = vmul.f32 %v2840, 1.442695
        %v3307 = vpow.pop %v3306
        %v3308 = vmul.f32 %v2841, 1.442695
        %v3309 = vpow.pop %v3308
        %v3310 = vmul.f32 %v2842, 1.442695
        %v3311 = vpow.pop %v3310
        %v3312 = vmul.f32 %v2843, 1.442695
        %v3313 = vpow.pop %v3312
        %v3314 = vmul.f32 %v2844, 1.442695
        %v3315 = vpow.pop %v3314
        %v3316 = vmul.f32 %v2845, 1.442695
        %v3317 = vpow.pop %v3316
        %v3318 = vmul.f32 %v2846, 1.442695
        %v3319 = vpow.pop %v3318
        %v3320 = vmul.f32 %v2847, 1.442695
        %v3321 = vpow.pop %v3320
        %v3322 = vmul.f32 %v2848, 1.442695
        %v3323 = vpow.pop %v3322
        %v3324 = vmul.f32 %v2849, 1.442695
        %v3325 = vpow.pop %v3324
        %v3326 = vmul.f32 %v2850, 1.442695
        %v3327 = vpow.pop %v3326
        %v3328 = vmul.f32 %v2851, 1.442695
        %v3329 = vpow.pop %v3328
        %v3330 = vmul.f32 %v2852, 1.442695
        %v3331 = vpow.pop %v3330
        %v3332 = vmul.f32 %v2853, 1.442695
        %v3333 = vpow.pop %v3332
        %v3334 = vmul.f32 %v2854, 1.442695
        %v3335 = vpow.pop %v3334
        %v3336 = vmul.f32 %v2855, 1.442695
        %v3337 = vpow.pop %v3336
        %v3338 = vmul.f32 %v2856, 1.442695
        %v3339 = vpow.pop %v3338
        %v3340 = vmul.f32 %v2857, 1.442695
        %v3341 = vpow.pop %v3340
        %v3342 = vmul.f32 %v2858, 1.442695
        %v3343 = vpow.pop %v3342
        %v3344 = vmul.f32 %v2859, 1.442695
        %v3345 = vpow.pop %v3344
        %v3346 = vmul.f32 %v2860, 1.442695
        %v3347 = vpow.pop %v3346
        %v3348 = vmul.f32 %v2861, 1.442695
        %v3349 = vpow.pop %v3348
        %v3350 = vmul.f32 %v2862, 1.442695
        %v3351 = vpow.pop %v3350
        %v3352 = vmul.f32 %v2863, 1.442695
        %v3353 = vpow.pop %v3352
        %v3354 = vmul.f32 %v2864, 1.442695
        %v3355 = vpow.pop %v3354
        %v3356 = vmul.f32 %v2865, 1.442695
        %v3357 = vpow.pop %v3356
        %v3358 = vmul.f32 %v2866, 1.442695
        %v3359 = vpow.pop %v3358
        %v3360 = vmul.f32 %v2867, 1.442695
        %v3361 = vpow.pop %v3360
        %v3362 = vmul.f32 %v2868, 1.442695
        %v3363 = vpow.pop %v3362
        %v3364 = vmul.f32 %v2869, 1.442695
        %v3365 = vpow.pop %v3364
        %v3366 = vmul.f32 %v2870, 1.442695
        %v3367 = vpow.pop %v3366
        %v3368 = vmul.f32 %v2871, 1.442695
        %v3369 = vpow.pop %v3368
        %v3370 = vmul.f32 %v2872, 1.442695
        %v3371 = vpow.pop %v3370
        %v3372 = vmul.f32 %v2873, 1.442695
        %v3373 = vpow.pop %v3372
        %v3374 = vmul.f32 %v2874, 1.442695
        %v3375 = vpow.pop %v3374
        %v3376 = vmul.f32 %v2875, 1.442695
        %v3377 = vpow.pop %v3376
        %v3378 = vmul.f32 %v2876, 1.442695
        %v3379 = vpow.pop %v3378
        %v3380 = vmul.f32 %v2877, 1.442695
        %v3381 = vpow.pop %v3380
        %v3382 = vmul.f32 %v2878, 1.442695
        %v3383 = vpow.pop %v3382
        %v3384 = vmul.f32 %v2879, 1.442695
        %v3385 = vpow.pop %v3384
        %v3386 = vmul.f32 %v2880, 1.442695
        %v3387 = vpow.pop %v3386
        %v3388 = vmul.f32 %v2881, 1.442695
        %v3389 = vpow.pop %v3388
        %v3390 = vmul.f32 %v2882, 1.442695
        %v3391 = vpow.pop %v3390
        %v3392 = vmul.f32 %v2883, 1.442695
        %v3393 = vpow.pop %v3392
        %v3394 = vmul.f32 %v2884, 1.442695
        %v3395 = vpow.pop %v3394
        %v3396 = vmul.f32 %v2885, 1.442695
        %v3397 = vpow.pop %v3396
        %v3398 = vmul.f32 %v2886, 1.442695
        %v3399 = vpow.pop %v3398
        %v3400 = vmul.f32 %v2887, 1.442695
        %v3401 = vpow.pop %v3400
        %v3402 = vmul.f32 %v2888, 1.442695
        %v3403 = vpow.pop %v3402
        %v3404 = vmul.f32 %v2889, 1.442695
        %v3405 = vpow.pop %v3404
        %v3406 = vmul.f32 %v2890, 1.442695
        %v3407 = vpow.pop %v3406
        %v3408 = vmul.f32 %v2891, 1.442695
        %v3409 = vpow.pop %v3408
        %v3410 = vmul.f32 %v2892, 1.442695
        %v3411 = vpow.pop %v3410
        %v3412 = vmul.f32 %v2893, 1.442695
        %v3413 = vpow.pop %v3412
        %v3414 = vmul.f32 %v2894, 1.442695
        %v3415 = vpow.pop %v3414
        %v3416 = vmul.f32 %v2895, 1.442695
        %v3417 = vpow.pop %v3416
        %v3418 = vmul.f32 %v2896, 1.442695
        %v3419 = vpow.pop %v3418
        %v3420 = vmul.f32 %v2897, 1.442695
        %v3421 = vpow.pop %v3420
        %v3422 = vmul.f32 %v2898, 1.442695
        %v3423 = vpow.pop %v3422
        %v3424 = vmul.f32 %v2899, 1.442695
        %v3425 = vpow.pop %v3424
        %v3426 = vmul.f32 %v2900, 1.442695
        %v3427 = vpow.pop %v3426
        %v3428 = vmul.f32 %v2901, 1.442695
        %v3429 = vpow.pop %v3428
        %v3430 = vmul.f32 %v2902, 1.442695
        %v3431 = vpow.pop %v3430
        %v3432 = vmul.f32 %v2903, 1.442695
        %v3433 = vpow.pop %v3432
        %v3434 = vmul.f32 %v2904, 1.442695
        %v3435 = vpow.pop %v3434
        %v3436 = vmul.f32 %v2905, 1.442695
        %v3437 = vpow.pop %v3436
        %v3438 = vmul.f32 %v2906, 1.442695
        %v3439 = vpow.pop %v3438
        %v3440 = vmul.f32 %v2907, 1.442695
        %v3441 = vpow.pop %v3440
        %v3442 = vmul.f32 %v2908, 1.442695
        %v3443 = vpow.pop %v3442
        %v3444 = vmul.f32 %v2909, 1.442695
        %v3445 = vpow.pop %v3444
        %v3446 = vmul.f32 %v2910, 1.442695
        %v3447 = vpow.pop %v3446
        %v3448 = vmul.f32 %v2911, 1.442695
        %v3449 = vpow.pop %v3448
        %v3450 = vmul.f32 %v2912, 1.442695
        %v3451 = vpow.pop %v3450
        %v3452 = vmul.f32 %v2913, 1.442695
        %v3453 = vpow.pop %v3452
        %v3454 = vmul.f32 %v2914, 1.442695
        %v3455 = vpow.pop %v3454
        %v3456 = vmul.f32 %v2915, 1.442695
        %v3457 = vpow.pop %v3456
        %v3458 = vmul.f32 %v2916, 1.442695
        %v3459 = vpow.pop %v3458
        %v3460 = vmul.f32 %v2917, 1.442695
        %v3461 = vpow.pop %v3460
        %v3462 = vmul.f32 %v2918, 1.442695
        %v3463 = vpow.pop %v3462
        %v3464 = vmul.f32 %v2919, 1.442695
        %v3465 = vpow.pop %v3464
        %v3466 = vmul.f32 %v2920, 1.442695
        %v3467 = vpow.pop %v3466
        %v3468 = vmul.f32 %v2921, 1.442695
        %v3469 = vpow.pop %v3468
        %v3470 = vmul.f32 %v2922, 1.442695
        %v3471 = vpow.pop %v3470
        %v3472 = vmul.f32 %v2923, 1.442695
        %v3473 = vpow.pop %v3472
        %v3474 = vmul.f32 %v2924, 1.442695
        %v3475 = vpow.pop %v3474
        %v3476 = vmul.f32 %v2925, 1.442695
        %v3477 = vpow.pop %v3476
        %v3478 = vmul.f32 %v2926, 1.442695
        %v3479 = vpow.pop %v3478
        %v3480 = vmul.f32 %v2927, 1.442695
        %v3481 = vpow.pop %v3480
        %v3482 = vmul.f32 %v2928, 1.442695
        %v3483 = vpow.pop %v3482
        %v3484 = vmul.f32 %v2929, 1.442695
        %v3485 = vpow.pop %v3484
        %v3486 = vmul.f32 %v2930, 1.442695
        %v3487 = vpow.pop %v3486
        %v3488 = vmul.f32 %v2931, 1.442695
        %v3489 = vpow.pop %v3488
        %v3490 = vmul.f32 %v2932, 1.442695
        %v3491 = vpow.pop %v3490
        %v3492 = vmul.f32 %v2933, 1.442695
        %v3493 = vpow.pop %v3492
        %v3494 = vmul.f32 %v2934, 1.442695
        %v3495 = vpow.pop %v3494
        %v3496 = vmul.f32 %v2935, 1.442695
        %v3497 = vpow.pop %v3496
        %v3498 = vmul.f32 %v2936, 1.442695
        %v3499 = vpow.pop %v3498
        %v3500 = vmul.f32 %v2937, 1.442695
        %v3501 = vpow.pop %v3500
        %v3502 = vmul.f32 %v2938, 1.442695
        %v3503 = vpow.pop %v3502
        %v3504 = vmul.f32 %v2939, 1.442695
        %v3505 = vpow.pop %v3504
        %v3506 = vmul.f32 %v2940, 1.442695
        %v3507 = vpow.pop %v3506
        %v3508 = vmul.f32 %v2941, 1.442695
        %v3509 = vpow.pop %v3508
        %v3510 = vmul.f32 %v2942, 1.442695
        %v3511 = vpow.pop %v3510
        %v3512 = vmul.f32 %v2943, 1.442695
        %v3513 = vpow.pop %v3512
        %v3514 = vmul.f32 %v2944, 1.442695
        %v3515 = vpow.pop %v3514
        %v3516 = vmul.f32 %v2945, 1.442695
        %v3517 = vpow.pop %v3516
        %v3518 = vmul.f32 %v2946, 1.442695
        %v3519 = vpow.pop %v3518
        %v3520 = vmul.f32 %v2947, 1.442695
        %v3521 = vpow.pop %v3520
        %v3522 = vmul.f32 %v2948, 1.442695
        %v3523 = vpow.pop %v3522
        %v3524 = vmul.f32 %v2949, 1.442695
        %v3525 = vpow.pop %v3524
        %v3526 = vmul.f32 %v2950, 1.442695
        %v3527 = vpow.pop %v3526
        %v3528 = vmul.f32 %v2951, 1.442695
        %v3529 = vpow.pop %v3528
        %v3530 = vmul.f32 %v2952, 1.442695
        %v3531 = vpow.pop %v3530
        %v3532 = vmul.f32 %v2953, 1.442695
        %v3533 = vpow.pop %v3532
        %v3534 = vmul.f32 %v2954, 1.442695
        %v3535 = vpow.pop %v3534
        %v3536 = vmul.f32 %v2955, 1.442695
        %v3537 = vpow.pop %v3536
        %v3538 = vmul.f32 %v2956, 1.442695
        %v3539 = vpow.pop %v3538
        %v3540 = vmul.f32 %v2957, 1.442695
        %v3541 = vpow.pop %v3540
        %v3542 = vmul.f32 %v2958, 1.442695
        %v3543 = vpow.pop %v3542
        %v3544 = vmul.f32 %v2959, 1.442695
        %v3545 = vpow.pop %v3544
        %v3546 = vmul.f32 %v2960, 1.442695
        %v3547 = vpow.pop %v3546
        %v3548 = vmul.f32 %v2961, 1.442695
        %v3549 = vpow.pop %v3548
        %v3550 = vmul.f32 %v2962, 1.442695
        %v3551 = vpow.pop %v3550
        %v3552 = vmul.f32 %v2963, 1.442695
        %v3553 = vpow.pop %v3552
        %v3554 = vmul.f32 %v2964, 1.442695
        %v3555 = vpow.pop %v3554
        %v3556 = vmul.f32 %v2965, 1.442695
        %v3557 = vpow.pop %v3556
        %v3558 = vmul.f32 %v2966, 1.442695
        %v3559 = vpow.pop %v3558
        %v3560 = vmul.f32 %v2967, 1.442695
        %v3561 = vpow.pop %v3560
        %v3562 = vmul.f32 %v2968, 1.442695
        %v3563 = vpow.pop %v3562
        %v3564 = vmul.f32 %v2969, 1.442695
        %v3565 = vpow.pop %v3564
        %v3566 = vmul.f32 %v2970, 1.442695
        %v3567 = vpow.pop %v3566
        %v3568 = vmul.f32 %v2971, 1.442695
        %v3569 = vpow.pop %v3568
        %v3570 = vmul.f32 %v2972, 1.442695
        %v3571 = vpow.pop %v3570
        %v3572 = vmul.f32 %v2973, 1.442695
        %v3573 = vpow.pop %v3572
        %v3574 = vmul.f32 %v2974, 1.442695
        %v3575 = vpow.pop %v3574
        %v3576 = vmul.f32 %v2975, 1.442695
        %v3577 = vpow.pop %v3576
        %v3578 = vmul.f32 %v2976, 1.442695
        %v3579 = vpow.pop %v3578
        %v3580 = vmul.f32 %v2977, 1.442695
        %v3581 = vpow.pop %v3580
        %v3582 = vmul.f32 %v2978, 1.442695
        %v3583 = vpow.pop %v3582
        %v3584 = vmul.f32 %v2979, 1.442695
        %v3585 = vpow.pop %v3584
        %v3586 = vmul.f32 %v2980, 1.442695
        %v3587 = vpow.pop %v3586
        %v3588 = vmul.f32 %v2981, 1.442695
        %v3589 = vpow.pop %v3588
        %v3590 = vmul.f32 %v2982, 1.442695
        %v3591 = vpow.pop %v3590
        %v3592 = vmul.f32 %v2983, 1.442695
        %v3593 = vpow.pop %v3592
        %v3594 = vmul.f32 %v2984, 1.442695
        %v3595 = vpow.pop %v3594
        %v3596 = vmul.f32 %v2985, 1.442695
        %v3597 = vpow.pop %v3596
        %v3598 = vmul.f32 %v2986, 1.442695
        %v3599 = vpow.pop %v3598
        %v3600 = vmul.f32 %v2987, 1.442695
        %v3601 = vpow.pop %v3600
        %v3602 = vmul.f32 %v2988, 1.442695
        %v3603 = vpow.pop %v3602
        %v3604 = vmul.f32 %v2989, 1.442695
        %v3605 = vpow.pop %v3604
        %v3606 = vmul.f32 %v2990, 1.442695
        %v3607 = vpow.pop %v3606
        %v3608 = vmul.f32 %v2991, 1.442695
        %v3609 = vpow.pop %v3608
        %v3610 = vmul.f32 %v2992, 1.442695
        %v3611 = vpow.pop %v3610
        %v3612 = vmul.f32 %v2993, 1.442695
        %v3613 = vpow.pop %v3612
        %v3614 = vmul.f32 %v2994, 1.442695
        %v3615 = vpow.pop %v3614
        %v3616 = vmul.f32 %v2995, 1.442695
        %v3617 = vpow.pop %v3616
        %v3618 = vmul.f32 %v2996, 1.442695
        %v3619 = vpow.pop %v3618
        %v3620 = vmul.f32 %v2997, 1.442695
        %v3621 = vpow.pop %v3620
        %v3622 = vmul.f32 %v2998, 1.442695
        %v3623 = vpow.pop %v3622
        %v3624 = vmul.f32 %v2999, 1.442695
        %v3625 = vpow.pop %v3624
        %v3626 = vmul.f32 %v3000, 1.442695
        %v3627 = vpow.pop %v3626
        %v3628 = vmul.f32 %v3001, 1.442695
        %v3629 = vpow.pop %v3628
        %v3630 = vmul.f32 %v3002, 1.442695
        %v3631 = vpow.pop %v3630
        %v3632 = vmul.f32 %v3003, 1.442695
        %v3633 = vpow.pop %v3632
        %v3634 = vmul.f32 %v3004, 1.442695
        %v3635 = vpow.pop %v3634
        %v3636 = vmul.f32 %v3005, 1.442695
        %v3637 = vpow.pop %v3636
        %v3638 = vmul.f32 %v3006, 1.442695
        %v3639 = vpow.pop %v3638
        %v3640 = vmul.f32 %v3007, 1.442695
        %v3641 = vpow.pop %v3640
        %v3642 = vmul.f32 %v3008, 1.442695
        %v3643 = vpow.pop %v3642
        %v3644 = vmul.f32 %v3009, 1.442695
        %v3645 = vpow.pop %v3644
        %v3646 = vmul.f32 %v3010, 1.442695
        %v3647 = vpow.pop %v3646
        %v3648 = vmul.f32 %v3011, 1.442695
        %v3649 = vpow.pop %v3648
        %v3650 = vmul.f32 %v3012, 1.442695
        %v3651 = vpow.pop %v3650
        %v3652 = vmul.f32 %v3013, 1.442695
        %v3653 = vpow.pop %v3652
        %v3654 = vmul.f32 %v3014, 1.442695
        %v3655 = vpow.pop %v3654
        %v3656 = vmul.f32 %v3015, 1.442695
        %v3657 = vpow.pop %v3656
        %v3658 = vmul.f32 %v3016, 1.442695
        %v3659 = vpow.pop %v3658
        %v3660 = vmul.f32 %v3017, 1.442695
        %v3661 = vpow.pop %v3660
        %v3662 = vmul.f32 %v3018, 1.442695
        %v3663 = vpow.pop %v3662
        %v3664 = vmul.f32 %v3019, 1.442695
        %v3665 = vpow.pop %v3664
        %v3666 = vmul.f32 %v3020, 1.442695
        %v3667 = vpow.pop %v3666
        %v3668 = vmul.f32 %v3021, 1.442695
        %v3669 = vpow.pop %v3668
        %v3670 = vmul.f32 %v3022, 1.442695
        %v3671 = vpow.pop %v3670
        %v3672 = vmul.f32 %v3023, 1.442695
        %v3673 = vpow.pop %v3672
        %v3674 = vmul.f32 %v3024, 1.442695
        %v3675 = vpow.pop %v3674
        %v3676 = vmul.f32 %v3025, 1.442695
        %v3677 = vpow.pop %v3676
        %v3678 = vmul.f32 %v3026, 1.442695
        %v3679 = vpow.pop %v3678
        %v3680 = vmul.f32 %v3027, 1.442695
        %v3681 = vpow.pop %v3680
        %v3682 = vmul.f32 %v3028, 1.442695
        %v3683 = vpow.pop %v3682
        %v3684 = vmul.f32 %v3029, 1.442695
        %v3685 = vpow.pop %v3684
        %v3686 = vmul.f32 %v3030, 1.442695
        %v3687 = vpow.pop %v3686
        %v3688 = vmul.f32 %v3031, 1.442695
        %v3689 = vpow.pop %v3688
        %v3690 = vmul.f32 %v3032, 1.442695
        %v3691 = vpow.pop %v3690
        %v3692 = vmul.f32 %v3033, 1.442695
        %v3693 = vpow.pop %v3692
        %v3694 = vmul.f32 %v3034, 1.442695
        %v3695 = vpow.pop %v3694
        %v3696 = vmul.f32 %v3035, 1.442695
        %v3697 = vpow.pop %v3696
        %v3698 = vmul.f32 %v3036, 1.442695
        %v3699 = vpow.pop %v3698
        %v3700 = vmul.f32 %v3037, 1.442695
        %v3701 = vpow.pop %v3700
        %v3702 = vmul.f32 %v3038, 1.442695
        %v3703 = vpow.pop %v3702
        %v3704 = vmul.f32 %v3039, 1.442695
        %v3705 = vpow.pop %v3704
        %v3706 = vmul.f32 %v3040, 1.442695
        %v3707 = vpow.pop %v3706
        %v3708 = vmul.f32 %v3041, 1.442695
        %v3709 = vpow.pop %v3708
        %v3710 = vmul.f32 %v3042, 1.442695
        %v3711 = vpow.pop %v3710
        %v3712 = vmul.f32 %v3043, 1.442695
        %v3713 = vpow.pop %v3712
        %v3714 = vmul.f32 %v3044, 1.442695
        %v3715 = vpow.pop %v3714
        %v3716 = vmul.f32 %v3045, 1.442695
        %v3717 = vpow.pop %v3716
        %v3718 = vmul.f32 %v3046, 1.442695
        %v3719 = vpow.pop %v3718
        %v3720 = vmul.f32 %v3047, 1.442695
        %v3721 = vpow.pop %v3720
        %v3722 = vmul.f32 %v3048, 1.442695
        %v3723 = vpow.pop %v3722
        %v3724 = vmul.f32 %v3049, 1.442695
        %v3725 = vpow.pop %v3724
        %v3726 = vmul.f32 %v3050, 1.442695
        %v3727 = vpow.pop %v3726
        %v3728 = vmul.f32 %v3051, 1.442695
        %v3729 = vpow.pop %v3728
        %v3730 = vmul.f32 %v3052, 1.442695
        %v3731 = vpow.pop %v3730
        %v3732 = vmul.f32 %v3053, 1.442695
        %v3733 = vpow.pop %v3732
        %v3734 = vmul.f32 %v3054, 1.442695
        %v3735 = vpow.pop %v3734
        %v3736 = vmul.f32 %v3055, 1.442695
        %v3737 = vpow.pop %v3736
        %v3738 = vmul.f32 %v3056, 1.442695
        %v3739 = vpow.pop %v3738
        %v3740 = vmul.f32 %v3057, 1.442695
        %v3741 = vpow.pop %v3740
        %v3742 = vmul.f32 %v3058, 1.442695
        %v3743 = vpow.pop %v3742
        %v3744 = vmul.f32 %v3059, 1.442695
        %v3745 = vpow.pop %v3744
        %v3746 = vmul.f32 %v3060, 1.442695
        %v3747 = vpow.pop %v3746
        %v3748 = vmul.f32 %v3061, 1.442695
        %v3749 = vpow.pop %v3748
        %v3750 = vmul.f32 %v3062, 1.442695
        %v3751 = vpow.pop %v3750
        %v3752 = vmul.f32 %v3063, 1.442695
        %v3753 = vpow.pop %v3752
        %v3754 = vmul.f32 %v3064, 1.442695
        %v3755 = vpow.pop %v3754
        %v3756 = vmul.f32 %v3065, 1.442695
        %v3757 = vpow.pop %v3756
        %v3758 = vmul.f32 %v3066, 1.442695
        %v3759 = vpow.pop %v3758
        %v3760 = vmul.f32 %v3067, 1.442695
        %v3761 = vpow.pop %v3760
        %v3762 = vmul.f32 %v3068, 1.442695
        %v3763 = vpow.pop %v3762
        %v3764 = vmul.f32 %v3069, 1.442695
        %v3765 = vpow.pop %v3764
        %v3766 = vmul.f32 %v3070, 1.442695
        %v3767 = vpow.pop %v3766
        %v3768 = vmul.f32 %v3071, 1.442695
        %v3769 = vpow.pop %v3768
        %v3770 = vmul.f32 %v3072, 1.442695
        %v3771 = vpow.pop %v3770
        %v3772 = vmul.f32 %v3073, 1.442695
        %v3773 = vpow.pop %v3772
        %v3774 = vmul.f32 %v3074, 1.442695
        %v3775 = vpow.pop %v3774
        %v3776 = vmul.f32 %v3075, 1.442695
        %v3777 = vpow.pop %v3776
        %v3778 = vmul.f32 %v3076, 1.442695
        %v3779 = vpow.pop %v3778
        %v3780 = vmul.f32 %v3077, 1.442695
        %v3781 = vpow.pop %v3780
        %v3782 = vmul.f32 %v3078, 1.442695
        %v3783 = vpow.pop %v3782
        %v3784 = vmul.f32 %v3079, 1.442695
        %v3785 = vpow.pop %v3784
        %v3786 = vmul.f32 %v3080, 1.442695
        %v3787 = vpow.pop %v3786
        %v3788 = vmul.f32 %v3081, 1.442695
        %v3789 = vpow.pop %v3788
        %v3790 = vmul.f32 %v3082, 1.442695
        %v3791 = vpow.pop %v3790
        %v3792 = vmul.f32 %v3083, 1.442695
        %v3793 = vpow.pop %v3792
        %v3794 = vmul.f32 %v3084, 1.442695
        %v3795 = vpow.pop %v3794
        %v3796 = vmul.f32 %v3085, 1.442695
        %v3797 = vpow.pop %v3796
        %v3798 = vmul.f32 %v3086, 1.442695
        %v3799 = vpow.pop %v3798
        %v3800 = vmul.f32 %v3087, 1.442695
        %v3801 = vpow.pop %v3800
        %v3802 = vmul.f32 %v3088, 1.442695
        %v3803 = vpow.pop %v3802
        %v3804 = vmul.f32 %v3089, 1.442695
        %v3805 = vpow.pop %v3804
        %v3806 = vmul.f32 %v3090, 1.442695
        %v3807 = vpow.pop %v3806
        %v3808 = vmul.f32 %v3091, 1.442695
        %v3809 = vpow.pop %v3808
        %v3810 = vmul.f32 %v3092, 1.442695
        %v3811 = vpow.pop %v3810
        %v3812 = vmul.f32 %v3093, 1.442695
        %v3813 = vpow.pop %v3812
        %v3814 = vmul.f32 %v3094, 1.442695
        %v3815 = vpow.pop %v3814
        %v3816 = vmul.f32 %v3095, 1.442695
        %v3817 = vpow.pop %v3816
        %v3818 = vmul.f32 %v3096, 1.442695
        %v3819 = vpow.pop %v3818
        %v3820 = vmul.f32 %v3097, 1.442695
        %v3821 = vpow.pop %v3820
        %v3822 = vmul.f32 %v3098, 1.442695
        %v3823 = vpow.pop %v3822
        %v3824 = vmul.f32 %v3099, 1.442695
        %v3825 = vpow.pop %v3824
        %v3826 = vmul.f32 %v3100, 1.442695
        %v3827 = vpow.pop %v3826
        %v3828 = vmul.f32 %v3101, 1.442695
        %v3829 = vpow.pop %v3828
        %v3830 = vmul.f32 %v3102, 1.442695
        %v3831 = vpow.pop %v3830
        %v3832 = vmul.f32 %v3103, 1.442695
        %v3833 = vpow.pop %v3832
        %v3834 = vmul.f32 %v3104, 1.442695
        %v3835 = vpow.pop %v3834
        %v3836 = vmul.f32 %v3105, 1.442695
        %v3837 = vpow.pop %v3836
        %v3838 = vmul.f32 %v3106, 1.442695
        %v3839 = vpow.pop %v3838
        %v3840 = vmul.f32 %v3107, 1.442695
        %v3841 = vpow.pop %v3840
        %v3842 = vmul.f32 %v3108, 1.442695
        %v3843 = vpow.pop %v3842
        %v3844 = vmul.f32 %v3109, 1.442695
        %v3845 = vpow.pop %v3844
        %v3846 = vmul.f32 %v3110, 1.442695
        %v3847 = vpow.pop %v3846
        %v3848 = vmul.f32 %v3111, 1.442695
        %v3849 = vpow.pop %v3848
        %v3850 = vmul.f32 %v3112, 1.442695
        %v3851 = vpow.pop %v3850
        %v3852 = vmul.f32 %v3113, 1.442695
        %v3853 = vpow.pop %v3852
        %v3854 = vmul.f32 %v3114, 1.442695
        %v3855 = vpow.pop %v3854
        %v3856 = vmul.f32 %v3115, 1.442695
        %v3857 = vpow.pop %v3856
        %v3858 = vmul.f32 %v3116, 1.442695
        %v3859 = vpow.pop %v3858
        %v3860 = vmul.f32 %v3117, 1.442695
        %v3861 = vpow.pop %v3860
        %v3862 = vmul.f32 %v3118, 1.442695
        %v3863 = vpow.pop %v3862
        %v3864 = vmul.f32 %v3119, 1.442695
        %v3865 = vpow.pop %v3864
        %v3866 = vmul.f32 %v3120, 1.442695
        %v3867 = vpow.pop %v3866
        %v3868 = vmul.f32 %v3121, 1.442695
        %v3869 = vpow.pop %v3868
        %v3870 = vmul.f32 %v3122, 1.442695
        %v3871 = vpow.pop %v3870
        %v3872 = vmul.f32 %v3123, 1.442695
        %v3873 = vpow.pop %v3872
        %v3874 = vmul.f32 %v3124, 1.442695
        %v3875 = vpow.pop %v3874
        %v3876 = vmul.f32 %v3125, 1.442695
        %v3877 = vpow.pop %v3876
        %v3878 = vmul.f32 %v3126, 1.442695
        %v3879 = vpow.pop %v3878
        %v3880 = vmul.f32 %v3127, 1.442695
        %v3881 = vpow.pop %v3880
        %v3882 = vmul.f32 %v3128, 1.442695
        %v3883 = vpow.pop %v3882
        %v3884 = vmul.f32 %v3129, 1.442695
        %v3885 = vpow.pop %v3884
        %v3886 = vmul.f32 %v3130, 1.442695
        %v3887 = vpow.pop %v3886
        %v3888 = vmul.f32 %v3131, 1.442695
        %v3889 = vpow.pop %v3888
        %v3890 = vmul.f32 %v3132, 1.442695
        %v3891 = vpow.pop %v3890
        %v3892 = vmul.f32 %v3133, 1.442695
        %v3893 = vpow.pop %v3892
        %v3894 = vmul.f32 %v3134, 1.442695
        %v3895 = vpow.pop %v3894
        %v3896 = vmul.f32 %v3135, 1.442695
        %v3897 = vpow.pop %v3896
        %v3898 = vmul.f32 %v3136, 1.442695
        %v3899 = vpow.pop %v3898
        %v3900 = vmul.f32 %v3137, 1.442695
        %v3901 = vpow.pop %v3900
        %v3902 = vmul.f32 %v3138, 1.442695
        %v3903 = vpow.pop %v3902
        %v3904 = vmul.f32 %v3139, 1.442695
        %v3905 = vpow.pop %v3904
        %v3906 = vmul.f32 %v3140, 1.442695
        %v3907 = vpow.pop %v3906
        %v3908 = vmul.f32 %v3141, 1.442695
        %v3909 = vpow.pop %v3908
        %v3910 = vadd.f32 %v3143, 1.0
        %v3911 = vadd.f32 %v3145, 1.0
        %v3912 = vadd.f32 %v3147, 1.0
        %v3913 = vadd.f32 %v3149, 1.0
        %v3914 = vadd.f32 %v3151, 1.0
        %v3915 = vadd.f32 %v3153, 1.0
        %v3916 = vadd.f32 %v3155, 1.0
        %v3917 = vadd.f32 %v3157, 1.0
        %v3918 = vadd.f32 %v3159, 1.0
        %v3919 = vadd.f32 %v3161, 1.0
        %v3920 = vadd.f32 %v3163, 1.0
        %v3921 = vadd.f32 %v3165, 1.0
        %v3922 = vadd.f32 %v3167, 1.0
        %v3923 = vadd.f32 %v3169, 1.0
        %v3924 = vadd.f32 %v3171, 1.0
        %v3925 = vadd.f32 %v3173, 1.0
        %v3926 = vadd.f32 %v3175, 1.0
        %v3927 = vadd.f32 %v3177, 1.0
        %v3928 = vadd.f32 %v3179, 1.0
        %v3929 = vadd.f32 %v3181, 1.0
        %v3930 = vadd.f32 %v3183, 1.0
        %v3931 = vadd.f32 %v3185, 1.0
        %v3932 = vadd.f32 %v3187, 1.0
        %v3933 = vadd.f32 %v3189, 1.0
        %v3934 = vadd.f32 %v3191, 1.0
        %v3935 = vadd.f32 %v3193, 1.0
        %v3936 = vadd.f32 %v3195, 1.0
        %v3937 = vadd.f32 %v3197, 1.0
        %v3938 = vadd.f32 %v3199, 1.0
        %v3939 = vadd.f32 %v3201, 1.0
        %v3940 = vadd.f32 %v3203, 1.0
        %v3941 = vadd.f32 %v3205, 1.0
        %v3942 = vadd.f32 %v3207, 1.0
        %v3943 = vadd.f32 %v3209, 1.0
        %v3944 = vadd.f32 %v3211, 1.0
        %v3945 = vadd.f32 %v3213, 1.0
        %v3946 = vadd.f32 %v3215, 1.0
        %v3947 = vadd.f32 %v3217, 1.0
        %v3948 = vadd.f32 %v3219, 1.0
        %v3949 = vadd.f32 %v3221, 1.0
        %v3950 = vadd.f32 %v3223, 1.0
        %v3951 = vadd.f32 %v3225, 1.0
        %v3952 = vadd.f32 %v3227, 1.0
        %v3953 = vadd.f32 %v3229, 1.0
        %v3954 = vadd.f32 %v3231, 1.0
        %v3955 = vadd.f32 %v3233, 1.0
        %v3956 = vadd.f32 %v3235, 1.0
        %v3957 = vadd.f32 %v3237, 1.0
        %v3958 = vadd.f32 %v3239, 1.0
        %v3959 = vadd.f32 %v3241, 1.0
        %v3960 = vadd.f32 %v3243, 1.0
        %v3961 = vadd.f32 %v3245, 1.0
        %v3962 = vadd.f32 %v3247, 1.0
        %v3963 = vadd.f32 %v3249, 1.0
        %v3964 = vadd.f32 %v3251, 1.0
        %v3965 = vadd.f32 %v3253, 1.0
        %v3966 = vadd.f32 %v3255, 1.0
        %v3967 = vadd.f32 %v3257, 1.0
        %v3968 = vadd.f32 %v3259, 1.0
        %v3969 = vadd.f32 %v3261, 1.0
        %v3970 = vadd.f32 %v3263, 1.0
        %v3971 = vadd.f32 %v3265, 1.0
        %v3972 = vadd.f32 %v3267, 1.0
        %v3973 = vadd.f32 %v3269, 1.0
        %v3974 = vadd.f32 %v3271, 1.0
        %v3975 = vadd.f32 %v3273, 1.0
        %v3976 = vadd.f32 %v3275, 1.0
        %v3977 = vadd.f32 %v3277, 1.0
        %v3978 = vadd.f32 %v3279, 1.0
        %v3979 = vadd.f32 %v3281, 1.0
        %v3980 = vadd.f32 %v3283, 1.0
        %v3981 = vadd.f32 %v3285, 1.0
        %v3982 = vadd.f32 %v3287, 1.0
        %v3983 = vadd.f32 %v3289, 1.0
        %v3984 = vadd.f32 %v3291, 1.0
        %v3985 = vadd.f32 %v3293, 1.0
        %v3986 = vadd.f32 %v3295, 1.0
        %v3987 = vadd.f32 %v3297, 1.0
        %v3988 = vadd.f32 %v3299, 1.0
        %v3989 = vadd.f32 %v3301, 1.0
        %v3990 = vadd.f32 %v3303, 1.0
        %v3991 = vadd.f32 %v3305, 1.0
        %v3992 = vadd.f32 %v3307, 1.0
        %v3993 = vadd.f32 %v3309, 1.0
        %v3994 = vadd.f32 %v3311, 1.0
        %v3995 = vadd.f32 %v3313, 1.0
        %v3996 = vadd.f32 %v3315, 1.0
        %v3997 = vadd.f32 %v3317, 1.0
        %v3998 = vadd.f32 %v3319, 1.0
        %v3999 = vadd.f32 %v3321, 1.0
        %v4000 = vadd.f32 %v3323, 1.0
        %v4001 = vadd.f32 %v3325, 1.0
        %v4002 = vadd.f32 %v3327, 1.0
        %v4003 = vadd.f32 %v3329, 1.0
        %v4004 = vadd.f32 %v3331, 1.0
        %v4005 = vadd.f32 %v3333, 1.0
        %v4006 = vadd.f32 %v3335, 1.0
        %v4007 = vadd.f32 %v3337, 1.0
        %v4008 = vadd.f32 %v3339, 1.0
        %v4009 = vadd.f32 %v3341, 1.0
        %v4010 = vadd.f32 %v3343, 1.0
        %v4011 = vadd.f32 %v3345, 1.0
        %v4012 = vadd.f32 %v3347, 1.0
        %v4013 = vadd.f32 %v3349, 1.0
        %v4014 = vadd.f32 %v3351, 1.0
        %v4015 = vadd.f32 %v3353, 1.0
        %v4016 = vadd.f32 %v3355, 1.0
        %v4017 = vadd.f32 %v3357, 1.0
        %v4018 = vadd.f32 %v3359, 1.0
        %v4019 = vadd.f32 %v3361, 1.0
        %v4020 = vadd.f32 %v3363, 1.0
        %v4021 = vadd.f32 %v3365, 1.0
        %v4022 = vadd.f32 %v3367, 1.0
        %v4023 = vadd.f32 %v3369, 1.0
        %v4024 = vadd.f32 %v3371, 1.0
        %v4025 = vadd.f32 %v3373, 1.0
        %v4026 = vadd.f32 %v3375, 1.0
        %v4027 = vadd.f32 %v3377, 1.0
        %v4028 = vadd.f32 %v3379, 1.0
        %v4029 = vadd.f32 %v3381, 1.0
        %v4030 = vadd.f32 %v3383, 1.0
        %v4031 = vadd.f32 %v3385, 1.0
        %v4032 = vadd.f32 %v3387, 1.0
        %v4033 = vadd.f32 %v3389, 1.0
        %v4034 = vadd.f32 %v3391, 1.0
        %v4035 = vadd.f32 %v3393, 1.0
        %v4036 = vadd.f32 %v3395, 1.0
        %v4037 = vadd.f32 %v3397, 1.0
        %v4038 = vadd.f32 %v3399, 1.0
        %v4039 = vadd.f32 %v3401, 1.0
        %v4040 = vadd.f32 %v3403, 1.0
        %v4041 = vadd.f32 %v3405, 1.0
        %v4042 = vadd.f32 %v3407, 1.0
        %v4043 = vadd.f32 %v3409, 1.0
        %v4044 = vadd.f32 %v3411, 1.0
        %v4045 = vadd.f32 %v3413, 1.0
        %v4046 = vadd.f32 %v3415, 1.0
        %v4047 = vadd.f32 %v3417, 1.0
        %v4048 = vadd.f32 %v3419, 1.0
        %v4049 = vadd.f32 %v3421, 1.0
        %v4050 = vadd.f32 %v3423, 1.0
        %v4051 = vadd.f32 %v3425, 1.0
        %v4052 = vadd.f32 %v3427, 1.0
        %v4053 = vadd.f32 %v3429, 1.0
        %v4054 = vadd.f32 %v3431, 1.0
        %v4055 = vadd.f32 %v3433, 1.0
        %v4056 = vadd.f32 %v3435, 1.0
        %v4057 = vadd.f32 %v3437, 1.0
        %v4058 = vadd.f32 %v3439, 1.0
        %v4059 = vadd.f32 %v3441, 1.0
        %v4060 = vadd.f32 %v3443, 1.0
        %v4061 = vadd.f32 %v3445, 1.0
        %v4062 = vadd.f32 %v3447, 1.0
        %v4063 = vadd.f32 %v3449, 1.0
        %v4064 = vadd.f32 %v3451, 1.0
        %v4065 = vadd.f32 %v3453, 1.0
        %v4066 = vadd.f32 %v3455, 1.0
        %v4067 = vadd.f32 %v3457, 1.0
        %v4068 = vadd.f32 %v3459, 1.0
        %v4069 = vadd.f32 %v3461, 1.0
        %v4070 = vadd.f32 %v3463, 1.0
        %v4071 = vadd.f32 %v3465, 1.0
        %v4072 = vadd.f32 %v3467, 1.0
        %v4073 = vadd.f32 %v3469, 1.0
        %v4074 = vadd.f32 %v3471, 1.0
        %v4075 = vadd.f32 %v3473, 1.0
        %v4076 = vadd.f32 %v3475, 1.0
        %v4077 = vadd.f32 %v3477, 1.0
        %v4078 = vadd.f32 %v3479, 1.0
        %v4079 = vadd.f32 %v3481, 1.0
        %v4080 = vadd.f32 %v3483, 1.0
        %v4081 = vadd.f32 %v3485, 1.0
        %v4082 = vadd.f32 %v3487, 1.0
        %v4083 = vadd.f32 %v3489, 1.0
        %v4084 = vadd.f32 %v3491, 1.0
        %v4085 = vadd.f32 %v3493, 1.0
        %v4086 = vadd.f32 %v3495, 1.0
        %v4087 = vadd.f32 %v3497, 1.0
        %v4088 = vadd.f32 %v3499, 1.0
        %v4089 = vadd.f32 %v3501, 1.0
        %v4090 = vadd.f32 %v3503, 1.0
        %v4091 = vadd.f32 %v3505, 1.0
        %v4092 = vadd.f32 %v3507, 1.0
        %v4093 = vadd.f32 %v3509, 1.0
        %v4094 = vadd.f32 %v3511, 1.0
        %v4095 = vadd.f32 %v3513, 1.0
        %v4096 = vadd.f32 %v3515, 1.0
        %v4097 = vadd.f32 %v3517, 1.0
        %v4098 = vadd.f32 %v3519, 1.0
        %v4099 = vadd.f32 %v3521, 1.0
        %v4100 = vadd.f32 %v3523, 1.0
        %v4101 = vadd.f32 %v3525, 1.0
        %v4102 = vadd.f32 %v3527, 1.0
        %v4103 = vadd.f32 %v3529, 1.0
        %v4104 = vadd.f32 %v3531, 1.0
        %v4105 = vadd.f32 %v3533, 1.0
        %v4106 = vadd.f32 %v3535, 1.0
        %v4107 = vadd.f32 %v3537, 1.0
        %v4108 = vadd.f32 %v3539, 1.0
        %v4109 = vadd.f32 %v3541, 1.0
        %v4110 = vadd.f32 %v3543, 1.0
        %v4111 = vadd.f32 %v3545, 1.0
        %v4112 = vadd.f32 %v3547, 1.0
        %v4113 = vadd.f32 %v3549, 1.0
        %v4114 = vadd.f32 %v3551, 1.0
        %v4115 = vadd.f32 %v3553, 1.0
        %v4116 = vadd.f32 %v3555, 1.0
        %v4117 = vadd.f32 %v3557, 1.0
        %v4118 = vadd.f32 %v3559, 1.0
        %v4119 = vadd.f32 %v3561, 1.0
        %v4120 = vadd.f32 %v3563, 1.0
        %v4121 = vadd.f32 %v3565, 1.0
        %v4122 = vadd.f32 %v3567, 1.0
        %v4123 = vadd.f32 %v3569, 1.0
        %v4124 = vadd.f32 %v3571, 1.0
        %v4125 = vadd.f32 %v3573, 1.0
        %v4126 = vadd.f32 %v3575, 1.0
        %v4127 = vadd.f32 %v3577, 1.0
        %v4128 = vadd.f32 %v3579, 1.0
        %v4129 = vadd.f32 %v3581, 1.0
        %v4130 = vadd.f32 %v3583, 1.0
        %v4131 = vadd.f32 %v3585, 1.0
        %v4132 = vadd.f32 %v3587, 1.0
        %v4133 = vadd.f32 %v3589, 1.0
        %v4134 = vadd.f32 %v3591, 1.0
        %v4135 = vadd.f32 %v3593, 1.0
        %v4136 = vadd.f32 %v3595, 1.0
        %v4137 = vadd.f32 %v3597, 1.0
        %v4138 = vadd.f32 %v3599, 1.0
        %v4139 = vadd.f32 %v3601, 1.0
        %v4140 = vadd.f32 %v3603, 1.0
        %v4141 = vadd.f32 %v3605, 1.0
        %v4142 = vadd.f32 %v3607, 1.0
        %v4143 = vadd.f32 %v3609, 1.0
        %v4144 = vadd.f32 %v3611, 1.0
        %v4145 = vadd.f32 %v3613, 1.0
        %v4146 = vadd.f32 %v3615, 1.0
        %v4147 = vadd.f32 %v3617, 1.0
        %v4148 = vadd.f32 %v3619, 1.0
        %v4149 = vadd.f32 %v3621, 1.0
        %v4150 = vadd.f32 %v3623, 1.0
        %v4151 = vadd.f32 %v3625, 1.0
        %v4152 = vadd.f32 %v3627, 1.0
        %v4153 = vadd.f32 %v3629, 1.0
        %v4154 = vadd.f32 %v3631, 1.0
        %v4155 = vadd.f32 %v3633, 1.0
        %v4156 = vadd.f32 %v3635, 1.0
        %v4157 = vadd.f32 %v3637, 1.0
        %v4158 = vadd.f32 %v3639, 1.0
        %v4159 = vadd.f32 %v3641, 1.0
        %v4160 = vadd.f32 %v3643, 1.0
        %v4161 = vadd.f32 %v3645, 1.0
        %v4162 = vadd.f32 %v3647, 1.0
        %v4163 = vadd.f32 %v3649, 1.0
        %v4164 = vadd.f32 %v3651, 1.0
        %v4165 = vadd.f32 %v3653, 1.0
        %v4166 = vadd.f32 %v3655, 1.0
        %v4167 = vadd.f32 %v3657, 1.0
        %v4168 = vadd.f32 %v3659, 1.0
        %v4169 = vadd.f32 %v3661, 1.0
        %v4170 = vadd.f32 %v3663, 1.0
        %v4171 = vadd.f32 %v3665, 1.0
        %v4172 = vadd.f32 %v3667, 1.0
        %v4173 = vadd.f32 %v3669, 1.0
        %v4174 = vadd.f32 %v3671, 1.0
        %v4175 = vadd.f32 %v3673, 1.0
        %v4176 = vadd.f32 %v3675, 1.0
        %v4177 = vadd.f32 %v3677, 1.0
        %v4178 = vadd.f32 %v3679, 1.0
        %v4179 = vadd.f32 %v3681, 1.0
        %v4180 = vadd.f32 %v3683, 1.0
        %v4181 = vadd.f32 %v3685, 1.0
        %v4182 = vadd.f32 %v3687, 1.0
        %v4183 = vadd.f32 %v3689, 1.0
        %v4184 = vadd.f32 %v3691, 1.0
        %v4185 = vadd.f32 %v3693, 1.0
        %v4186 = vadd.f32 %v3695, 1.0
        %v4187 = vadd.f32 %v3697, 1.0
        %v4188 = vadd.f32 %v3699, 1.0
        %v4189 = vadd.f32 %v3701, 1.0
        %v4190 = vadd.f32 %v3703, 1.0
        %v4191 = vadd.f32 %v3705, 1.0
        %v4192 = vadd.f32 %v3707, 1.0
        %v4193 = vadd.f32 %v3709, 1.0
        %v4194 = vadd.f32 %v3711, 1.0
        %v4195 = vadd.f32 %v3713, 1.0
        %v4196 = vadd.f32 %v3715, 1.0
        %v4197 = vadd.f32 %v3717, 1.0
        %v4198 = vadd.f32 %v3719, 1.0
        %v4199 = vadd.f32 %v3721, 1.0
        %v4200 = vadd.f32 %v3723, 1.0
        %v4201 = vadd.f32 %v3725, 1.0
        %v4202 = vadd.f32 %v3727, 1.0
        %v4203 = vadd.f32 %v3729, 1.0
        %v4204 = vadd.f32 %v3731, 1.0
        %v4205 = vadd.f32 %v3733, 1.0
        %v4206 = vadd.f32 %v3735, 1.0
        %v4207 = vadd.f32 %v3737, 1.0
        %v4208 = vadd.f32 %v3739, 1.0
        %v4209 = vadd.f32 %v3741, 1.0
        %v4210 = vadd.f32 %v3743, 1.0
        %v4211 = vadd.f32 %v3745, 1.0
        %v4212 = vadd.f32 %v3747, 1.0
        %v4213 = vadd.f32 %v3749, 1.0
        %v4214 = vadd.f32 %v3751, 1.0
        %v4215 = vadd.f32 %v3753, 1.0
        %v4216 = vadd.f32 %v3755, 1.0
        %v4217 = vadd.f32 %v3757, 1.0
        %v4218 = vadd.f32 %v3759, 1.0
        %v4219 = vadd.f32 %v3761, 1.0
        %v4220 = vadd.f32 %v3763, 1.0
        %v4221 = vadd.f32 %v3765, 1.0
        %v4222 = vadd.f32 %v3767, 1.0
        %v4223 = vadd.f32 %v3769, 1.0
        %v4224 = vadd.f32 %v3771, 1.0
        %v4225 = vadd.f32 %v3773, 1.0
        %v4226 = vadd.f32 %v3775, 1.0
        %v4227 = vadd.f32 %v3777, 1.0
        %v4228 = vadd.f32 %v3779, 1.0
        %v4229 = vadd.f32 %v3781, 1.0
        %v4230 = vadd.f32 %v3783, 1.0
        %v4231 = vadd.f32 %v3785, 1.0
        %v4232 = vadd.f32 %v3787, 1.0
        %v4233 = vadd.f32 %v3789, 1.0
        %v4234 = vadd.f32 %v3791, 1.0
        %v4235 = vadd.f32 %v3793, 1.0
        %v4236 = vadd.f32 %v3795, 1.0
        %v4237 = vadd.f32 %v3797, 1.0
        %v4238 = vadd.f32 %v3799, 1.0
        %v4239 = vadd.f32 %v3801, 1.0
        %v4240 = vadd.f32 %v3803, 1.0
        %v4241 = vadd.f32 %v3805, 1.0
        %v4242 = vadd.f32 %v3807, 1.0
        %v4243 = vadd.f32 %v3809, 1.0
        %v4244 = vadd.f32 %v3811, 1.0
        %v4245 = vadd.f32 %v3813, 1.0
        %v4246 = vadd.f32 %v3815, 1.0
        %v4247 = vadd.f32 %v3817, 1.0
        %v4248 = vadd.f32 %v3819, 1.0
        %v4249 = vadd.f32 %v3821, 1.0
        %v4250 = vadd.f32 %v3823, 1.0
        %v4251 = vadd.f32 %v3825, 1.0
        %v4252 = vadd.f32 %v3827, 1.0
        %v4253 = vadd.f32 %v3829, 1.0
        %v4254 = vadd.f32 %v3831, 1.0
        %v4255 = vadd.f32 %v3833, 1.0
        %v4256 = vadd.f32 %v3835, 1.0
        %v4257 = vadd.f32 %v3837, 1.0
        %v4258 = vadd.f32 %v3839, 1.0
        %v4259 = vadd.f32 %v3841, 1.0
        %v4260 = vadd.f32 %v3843, 1.0
        %v4261 = vadd.f32 %v3845, 1.0
        %v4262 = vadd.f32 %v3847, 1.0
        %v4263 = vadd.f32 %v3849, 1.0
        %v4264 = vadd.f32 %v3851, 1.0
        %v4265 = vadd.f32 %v3853, 1.0
        %v4266 = vadd.f32 %v3855, 1.0
        %v4267 = vadd.f32 %v3857, 1.0
        %v4268 = vadd.f32 %v3859, 1.0
        %v4269 = vadd.f32 %v3861, 1.0
        %v4270 = vadd.f32 %v3863, 1.0
        %v4271 = vadd.f32 %v3865, 1.0
        %v4272 = vadd.f32 %v3867, 1.0
        %v4273 = vadd.f32 %v3869, 1.0
        %v4274 = vadd.f32 %v3871, 1.0
        %v4275 = vadd.f32 %v3873, 1.0
        %v4276 = vadd.f32 %v3875, 1.0
        %v4277 = vadd.f32 %v3877, 1.0
        %v4278 = vadd.f32 %v3879, 1.0
        %v4279 = vadd.f32 %v3881, 1.0
        %v4280 = vadd.f32 %v3883, 1.0
        %v4281 = vadd.f32 %v3885, 1.0
        %v4282 = vadd.f32 %v3887, 1.0
        %v4283 = vadd.f32 %v3889, 1.0
        %v4284 = vadd.f32 %v3891, 1.0
        %v4285 = vadd.f32 %v3893, 1.0
        %v4286 = vadd.f32 %v3895, 1.0
        %v4287 = vadd.f32 %v3897, 1.0
        %v4288 = vadd.f32 %v3899, 1.0
        %v4289 = vadd.f32 %v3901, 1.0
        %v4290 = vadd.f32 %v3903, 1.0
        %v4291 = vadd.f32 %v3905, 1.0
        %v4292 = vadd.f32 %v3907, 1.0
        %v4293 = vadd.f32 %v3909, 1.0
        %v4294 = vrcp.pop %v3910
        %v4295 = vmul.f32 1.0, %v4294
        %v4296 = vrcp.pop %v3911
        %v4297 = vmul.f32 1.0, %v4296
        %v4298 = vrcp.pop %v3912
        %v4299 = vmul.f32 1.0, %v4298
        %v4300 = vrcp.pop %v3913
        %v4301 = vmul.f32 1.0, %v4300
        %v4302 = vrcp.pop %v3914
        %v4303 = vmul.f32 1.0, %v4302
        %v4304 = vrcp.pop %v3915
        %v4305 = vmul.f32 1.0, %v4304
        %v4306 = vrcp.pop %v3916
        %v4307 = vmul.f32 1.0, %v4306
        %v4308 = vrcp.pop %v3917
        %v4309 = vmul.f32 1.0, %v4308
        %v4310 = vrcp.pop %v3918
        %v4311 = vmul.f32 1.0, %v4310
        %v4312 = vrcp.pop %v3919
        %v4313 = vmul.f32 1.0, %v4312
        %v4314 = vrcp.pop %v3920
        %v4315 = vmul.f32 1.0, %v4314
        %v4316 = vrcp.pop %v3921
        %v4317 = vmul.f32 1.0, %v4316
        %v4318 = vrcp.pop %v3922
        %v4319 = vmul.f32 1.0, %v4318
        %v4320 = vrcp.pop %v3923
        %v4321 = vmul.f32 1.0, %v4320
        %v4322 = vrcp.pop %v3924
        %v4323 = vmul.f32 1.0, %v4322
        %v4324 = vrcp.pop %v3925
        %v4325 = vmul.f32 1.0, %v4324
        %v4326 = vrcp.pop %v3926
        %v4327 = vmul.f32 1.0, %v4326
        %v4328 = vrcp.pop %v3927
        %v4329 = vmul.f32 1.0, %v4328
        %v4330 = vrcp.pop %v3928
        %v4331 = vmul.f32 1.0, %v4330
        %v4332 = vrcp.pop %v3929
        %v4333 = vmul.f32 1.0, %v4332
        %v4334 = vrcp.pop %v3930
        %v4335 = vmul.f32 1.0, %v4334
        %v4336 = vrcp.pop %v3931
        %v4337 = vmul.f32 1.0, %v4336
        %v4338 = vrcp.pop %v3932
        %v4339 = vmul.f32 1.0, %v4338
        %v4340 = vrcp.pop %v3933
        %v4341 = vmul.f32 1.0, %v4340
        %v4342 = vrcp.pop %v3934
        %v4343 = vmul.f32 1.0, %v4342
        %v4344 = vrcp.pop %v3935
        %v4345 = vmul.f32 1.0, %v4344
        %v4346 = vrcp.pop %v3936
        %v4347 = vmul.f32 1.0, %v4346
        %v4348 = vrcp.pop %v3937
        %v4349 = vmul.f32 1.0, %v4348
        %v4350 = vrcp.pop %v3938
        %v4351 = vmul.f32 1.0, %v4350
        %v4352 = vrcp.pop %v3939
        %v4353 = vmul.f32 1.0, %v4352
        %v4354 = vrcp.pop %v3940
        %v4355 = vmul.f32 1.0, %v4354
        %v4356 = vrcp.pop %v3941
        %v4357 = vmul.f32 1.0, %v4356
        %v4358 = vrcp.pop %v3942
        %v4359 = vmul.f32 1.0, %v4358
        %v4360 = vrcp.pop %v3943
        %v4361 = vmul.f32 1.0, %v4360
        %v4362 = vrcp.pop %v3944
        %v4363 = vmul.f32 1.0, %v4362
        %v4364 = vrcp.pop %v3945
        %v4365 = vmul.f32 1.0, %v4364
        %v4366 = vrcp.pop %v3946
        %v4367 = vmul.f32 1.0, %v4366
        %v4368 = vrcp.pop %v3947
        %v4369 = vmul.f32 1.0, %v4368
        %v4370 = vrcp.pop %v3948
        %v4371 = vmul.f32 1.0, %v4370
        %v4372 = vrcp.pop %v3949
        %v4373 = vmul.f32 1.0, %v4372
        %v4374 = vrcp.pop %v3950
        %v4375 = vmul.f32 1.0, %v4374
        %v4376 = vrcp.pop %v3951
        %v4377 = vmul.f32 1.0, %v4376
        %v4378 = vrcp.pop %v3952
        %v4379 = vmul.f32 1.0, %v4378
        %v4380 = vrcp.pop %v3953
        %v4381 = vmul.f32 1.0, %v4380
        %v4382 = vrcp.pop %v3954
        %v4383 = vmul.f32 1.0, %v4382
        %v4384 = vrcp.pop %v3955
        %v4385 = vmul.f32 1.0, %v4384
        %v4386 = vrcp.pop %v3956
        %v4387 = vmul.f32 1.0, %v4386
        %v4388 = vrcp.pop %v3957
        %v4389 = vmul.f32 1.0, %v4388
        %v4390 = vrcp.pop %v3958
        %v4391 = vmul.f32 1.0, %v4390
        %v4392 = vrcp.pop %v3959
        %v4393 = vmul.f32 1.0, %v4392
        %v4394 = vrcp.pop %v3960
        %v4395 = vmul.f32 1.0, %v4394
        %v4396 = vrcp.pop %v3961
        %v4397 = vmul.f32 1.0, %v4396
        %v4398 = vrcp.pop %v3962
        %v4399 = vmul.f32 1.0, %v4398
        %v4400 = vrcp.pop %v3963
        %v4401 = vmul.f32 1.0, %v4400
        %v4402 = vrcp.pop %v3964
        %v4403 = vmul.f32 1.0, %v4402
        %v4404 = vrcp.pop %v3965
        %v4405 = vmul.f32 1.0, %v4404
        %v4406 = vrcp.pop %v3966
        %v4407 = vmul.f32 1.0, %v4406
        %v4408 = vrcp.pop %v3967
        %v4409 = vmul.f32 1.0, %v4408
        %v4410 = vrcp.pop %v3968
        %v4411 = vmul.f32 1.0, %v4410
        %v4412 = vrcp.pop %v3969
        %v4413 = vmul.f32 1.0, %v4412
        %v4414 = vrcp.pop %v3970
        %v4415 = vmul.f32 1.0, %v4414
        %v4416 = vrcp.pop %v3971
        %v4417 = vmul.f32 1.0, %v4416
        %v4418 = vrcp.pop %v3972
        %v4419 = vmul.f32 1.0, %v4418
        %v4420 = vrcp.pop %v3973
        %v4421 = vmul.f32 1.0, %v4420
        %v4422 = vrcp.pop %v3974
        %v4423 = vmul.f32 1.0, %v4422
        %v4424 = vrcp.pop %v3975
        %v4425 = vmul.f32 1.0, %v4424
        %v4426 = vrcp.pop %v3976
        %v4427 = vmul.f32 1.0, %v4426
        %v4428 = vrcp.pop %v3977
        %v4429 = vmul.f32 1.0, %v4428
        %v4430 = vrcp.pop %v3978
        %v4431 = vmul.f32 1.0, %v4430
        %v4432 = vrcp.pop %v3979
        %v4433 = vmul.f32 1.0, %v4432
        %v4434 = vrcp.pop %v3980
        %v4435 = vmul.f32 1.0, %v4434
        %v4436 = vrcp.pop %v3981
        %v4437 = vmul.f32 1.0, %v4436
        %v4438 = vrcp.pop %v3982
        %v4439 = vmul.f32 1.0, %v4438
        %v4440 = vrcp.pop %v3983
        %v4441 = vmul.f32 1.0, %v4440
        %v4442 = vrcp.pop %v3984
        %v4443 = vmul.f32 1.0, %v4442
        %v4444 = vrcp.pop %v3985
        %v4445 = vmul.f32 1.0, %v4444
        %v4446 = vrcp.pop %v3986
        %v4447 = vmul.f32 1.0, %v4446
        %v4448 = vrcp.pop %v3987
        %v4449 = vmul.f32 1.0, %v4448
        %v4450 = vrcp.pop %v3988
        %v4451 = vmul.f32 1.0, %v4450
        %v4452 = vrcp.pop %v3989
        %v4453 = vmul.f32 1.0, %v4452
        %v4454 = vrcp.pop %v3990
        %v4455 = vmul.f32 1.0, %v4454
        %v4456 = vrcp.pop %v3991
        %v4457 = vmul.f32 1.0, %v4456
        %v4458 = vrcp.pop %v3992
        %v4459 = vmul.f32 1.0, %v4458
        %v4460 = vrcp.pop %v3993
        %v4461 = vmul.f32 1.0, %v4460
        %v4462 = vrcp.pop %v3994
        %v4463 = vmul.f32 1.0, %v4462
        %v4464 = vrcp.pop %v3995
        %v4465 = vmul.f32 1.0, %v4464
        %v4466 = vrcp.pop %v3996
        %v4467 = vmul.f32 1.0, %v4466
        %v4468 = vrcp.pop %v3997
        %v4469 = vmul.f32 1.0, %v4468
        %v4470 = vrcp.pop %v3998
        %v4471 = vmul.f32 1.0, %v4470
        %v4472 = vrcp.pop %v3999
        %v4473 = vmul.f32 1.0, %v4472
        %v4474 = vrcp.pop %v4000
        %v4475 = vmul.f32 1.0, %v4474
        %v4476 = vrcp.pop %v4001
        %v4477 = vmul.f32 1.0, %v4476
        %v4478 = vrcp.pop %v4002
        %v4479 = vmul.f32 1.0, %v4478
        %v4480 = vrcp.pop %v4003
        %v4481 = vmul.f32 1.0, %v4480
        %v4482 = vrcp.pop %v4004
        %v4483 = vmul.f32 1.0, %v4482
        %v4484 = vrcp.pop %v4005
        %v4485 = vmul.f32 1.0, %v4484
        %v4486 = vrcp.pop %v4006
        %v4487 = vmul.f32 1.0, %v4486
        %v4488 = vrcp.pop %v4007
        %v4489 = vmul.f32 1.0, %v4488
        %v4490 = vrcp.pop %v4008
        %v4491 = vmul.f32 1.0, %v4490
        %v4492 = vrcp.pop %v4009
        %v4493 = vmul.f32 1.0, %v4492
        %v4494 = vrcp.pop %v4010
        %v4495 = vmul.f32 1.0, %v4494
        %v4496 = vrcp.pop %v4011
        %v4497 = vmul.f32 1.0, %v4496
        %v4498 = vrcp.pop %v4012
        %v4499 = vmul.f32 1.0, %v4498
        %v4500 = vrcp.pop %v4013
        %v4501 = vmul.f32 1.0, %v4500
        %v4502 = vrcp.pop %v4014
        %v4503 = vmul.f32 1.0, %v4502
        %v4504 = vrcp.pop %v4015
        %v4505 = vmul.f32 1.0, %v4504
        %v4506 = vrcp.pop %v4016
        %v4507 = vmul.f32 1.0, %v4506
        %v4508 = vrcp.pop %v4017
        %v4509 = vmul.f32 1.0, %v4508
        %v4510 = vrcp.pop %v4018
        %v4511 = vmul.f32 1.0, %v4510
        %v4512 = vrcp.pop %v4019
        %v4513 = vmul.f32 1.0, %v4512
        %v4514 = vrcp.pop %v4020
        %v4515 = vmul.f32 1.0, %v4514
        %v4516 = vrcp.pop %v4021
        %v4517 = vmul.f32 1.0, %v4516
        %v4518 = vrcp.pop %v4022
        %v4519 = vmul.f32 1.0, %v4518
        %v4520 = vrcp.pop %v4023
        %v4521 = vmul.f32 1.0, %v4520
        %v4522 = vrcp.pop %v4024
        %v4523 = vmul.f32 1.0, %v4522
        %v4524 = vrcp.pop %v4025
        %v4525 = vmul.f32 1.0, %v4524
        %v4526 = vrcp.pop %v4026
        %v4527 = vmul.f32 1.0, %v4526
        %v4528 = vrcp.pop %v4027
        %v4529 = vmul.f32 1.0, %v4528
        %v4530 = vrcp.pop %v4028
        %v4531 = vmul.f32 1.0, %v4530
        %v4532 = vrcp.pop %v4029
        %v4533 = vmul.f32 1.0, %v4532
        %v4534 = vrcp.pop %v4030
        %v4535 = vmul.f32 1.0, %v4534
        %v4536 = vrcp.pop %v4031
        %v4537 = vmul.f32 1.0, %v4536
        %v4538 = vrcp.pop %v4032
        %v4539 = vmul.f32 1.0, %v4538
        %v4540 = vrcp.pop %v4033
        %v4541 = vmul.f32 1.0, %v4540
        %v4542 = vrcp.pop %v4034
        %v4543 = vmul.f32 1.0, %v4542
        %v4544 = vrcp.pop %v4035
        %v4545 = vmul.f32 1.0, %v4544
        %v4546 = vrcp.pop %v4036
        %v4547 = vmul.f32 1.0, %v4546
        %v4548 = vrcp.pop %v4037
        %v4549 = vmul.f32 1.0, %v4548
        %v4550 = vrcp.pop %v4038
        %v4551 = vmul.f32 1.0, %v4550
        %v4552 = vrcp.pop %v4039
        %v4553 = vmul.f32 1.0, %v4552
        %v4554 = vrcp.pop %v4040
        %v4555 = vmul.f32 1.0, %v4554
        %v4556 = vrcp.pop %v4041
        %v4557 = vmul.f32 1.0, %v4556
        %v4558 = vrcp.pop %v4042
        %v4559 = vmul.f32 1.0, %v4558
        %v4560 = vrcp.pop %v4043
        %v4561 = vmul.f32 1.0, %v4560
        %v4562 = vrcp.pop %v4044
        %v4563 = vmul.f32 1.0, %v4562
        %v4564 = vrcp.pop %v4045
        %v4565 = vmul.f32 1.0, %v4564
        %v4566 = vrcp.pop %v4046
        %v4567 = vmul.f32 1.0, %v4566
        %v4568 = vrcp.pop %v4047
        %v4569 = vmul.f32 1.0, %v4568
        %v4570 = vrcp.pop %v4048
        %v4571 = vmul.f32 1.0, %v4570
        %v4572 = vrcp.pop %v4049
        %v4573 = vmul.f32 1.0, %v4572
        %v4574 = vrcp.pop %v4050
        %v4575 = vmul.f32 1.0, %v4574
        %v4576 = vrcp.pop %v4051
        %v4577 = vmul.f32 1.0, %v4576
        %v4578 = vrcp.pop %v4052
        %v4579 = vmul.f32 1.0, %v4578
        %v4580 = vrcp.pop %v4053
        %v4581 = vmul.f32 1.0, %v4580
        %v4582 = vrcp.pop %v4054
        %v4583 = vmul.f32 1.0, %v4582
        %v4584 = vrcp.pop %v4055
        %v4585 = vmul.f32 1.0, %v4584
        %v4586 = vrcp.pop %v4056
        %v4587 = vmul.f32 1.0, %v4586
        %v4588 = vrcp.pop %v4057
        %v4589 = vmul.f32 1.0, %v4588
        %v4590 = vrcp.pop %v4058
        %v4591 = vmul.f32 1.0, %v4590
        %v4592 = vrcp.pop %v4059
        %v4593 = vmul.f32 1.0, %v4592
        %v4594 = vrcp.pop %v4060
        %v4595 = vmul.f32 1.0, %v4594
        %v4596 = vrcp.pop %v4061
        %v4597 = vmul.f32 1.0, %v4596
        %v4598 = vrcp.pop %v4062
        %v4599 = vmul.f32 1.0, %v4598
        %v4600 = vrcp.pop %v4063
        %v4601 = vmul.f32 1.0, %v4600
        %v4602 = vrcp.pop %v4064
        %v4603 = vmul.f32 1.0, %v4602
        %v4604 = vrcp.pop %v4065
        %v4605 = vmul.f32 1.0, %v4604
        %v4606 = vrcp.pop %v4066
        %v4607 = vmul.f32 1.0, %v4606
        %v4608 = vrcp.pop %v4067
        %v4609 = vmul.f32 1.0, %v4608
        %v4610 = vrcp.pop %v4068
        %v4611 = vmul.f32 1.0, %v4610
        %v4612 = vrcp.pop %v4069
        %v4613 = vmul.f32 1.0, %v4612
        %v4614 = vrcp.pop %v4070
        %v4615 = vmul.f32 1.0, %v4614
        %v4616 = vrcp.pop %v4071
        %v4617 = vmul.f32 1.0, %v4616
        %v4618 = vrcp.pop %v4072
        %v4619 = vmul.f32 1.0, %v4618
        %v4620 = vrcp.pop %v4073
        %v4621 = vmul.f32 1.0, %v4620
        %v4622 = vrcp.pop %v4074
        %v4623 = vmul.f32 1.0, %v4622
        %v4624 = vrcp.pop %v4075
        %v4625 = vmul.f32 1.0, %v4624
        %v4626 = vrcp.pop %v4076
        %v4627 = vmul.f32 1.0, %v4626
        %v4628 = vrcp.pop %v4077
        %v4629 = vmul.f32 1.0, %v4628
        %v4630 = vrcp.pop %v4078
        %v4631 = vmul.f32 1.0, %v4630
        %v4632 = vrcp.pop %v4079
        %v4633 = vmul.f32 1.0, %v4632
        %v4634 = vrcp.pop %v4080
        %v4635 = vmul.f32 1.0, %v4634
        %v4636 = vrcp.pop %v4081
        %v4637 = vmul.f32 1.0, %v4636
        %v4638 = vrcp.pop %v4082
        %v4639 = vmul.f32 1.0, %v4638
        %v4640 = vrcp.pop %v4083
        %v4641 = vmul.f32 1.0, %v4640
        %v4642 = vrcp.pop %v4084
        %v4643 = vmul.f32 1.0, %v4642
        %v4644 = vrcp.pop %v4085
        %v4645 = vmul.f32 1.0, %v4644
        %v4646 = vrcp.pop %v4086
        %v4647 = vmul.f32 1.0, %v4646
        %v4648 = vrcp.pop %v4087
        %v4649 = vmul.f32 1.0, %v4648
        %v4650 = vrcp.pop %v4088
        %v4651 = vmul.f32 1.0, %v4650
        %v4652 = vrcp.pop %v4089
        %v4653 = vmul.f32 1.0, %v4652
        %v4654 = vrcp.pop %v4090
        %v4655 = vmul.f32 1.0, %v4654
        %v4656 = vrcp.pop %v4091
        %v4657 = vmul.f32 1.0, %v4656
        %v4658 = vrcp.pop %v4092
        %v4659 = vmul.f32 1.0, %v4658
        %v4660 = vrcp.pop %v4093
        %v4661 = vmul.f32 1.0, %v4660
        %v4662 = vrcp.pop %v4094
        %v4663 = vmul.f32 1.0, %v4662
        %v4664 = vrcp.pop %v4095
        %v4665 = vmul.f32 1.0, %v4664
        %v4666 = vrcp.pop %v4096
        %v4667 = vmul.f32 1.0, %v4666
        %v4668 = vrcp.pop %v4097
        %v4669 = vmul.f32 1.0, %v4668
        %v4670 = vrcp.pop %v4098
        %v4671 = vmul.f32 1.0, %v4670
        %v4672 = vrcp.pop %v4099
        %v4673 = vmul.f32 1.0, %v4672
        %v4674 = vrcp.pop %v4100
        %v4675 = vmul.f32 1.0, %v4674
        %v4676 = vrcp.pop %v4101
        %v4677 = vmul.f32 1.0, %v4676
        %v4678 = vrcp.pop %v4102
        %v4679 = vmul.f32 1.0, %v4678
        %v4680 = vrcp.pop %v4103
        %v4681 = vmul.f32 1.0, %v4680
        %v4682 = vrcp.pop %v4104
        %v4683 = vmul.f32 1.0, %v4682
        %v4684 = vrcp.pop %v4105
        %v4685 = vmul.f32 1.0, %v4684
        %v4686 = vrcp.pop %v4106
        %v4687 = vmul.f32 1.0, %v4686
        %v4688 = vrcp.pop %v4107
        %v4689 = vmul.f32 1.0, %v4688
        %v4690 = vrcp.pop %v4108
        %v4691 = vmul.f32 1.0, %v4690
        %v4692 = vrcp.pop %v4109
        %v4693 = vmul.f32 1.0, %v4692
        %v4694 = vrcp.pop %v4110
        %v4695 = vmul.f32 1.0, %v4694
        %v4696 = vrcp.pop %v4111
        %v4697 = vmul.f32 1.0, %v4696
        %v4698 = vrcp.pop %v4112
        %v4699 = vmul.f32 1.0, %v4698
        %v4700 = vrcp.pop %v4113
        %v4701 = vmul.f32 1.0, %v4700
        %v4702 = vrcp.pop %v4114
        %v4703 = vmul.f32 1.0, %v4702
        %v4704 = vrcp.pop %v4115
        %v4705 = vmul.f32 1.0, %v4704
        %v4706 = vrcp.pop %v4116
        %v4707 = vmul.f32 1.0, %v4706
        %v4708 = vrcp.pop %v4117
        %v4709 = vmul.f32 1.0, %v4708
        %v4710 = vrcp.pop %v4118
        %v4711 = vmul.f32 1.0, %v4710
        %v4712 = vrcp.pop %v4119
        %v4713 = vmul.f32 1.0, %v4712
        %v4714 = vrcp.pop %v4120
        %v4715 = vmul.f32 1.0, %v4714
        %v4716 = vrcp.pop %v4121
        %v4717 = vmul.f32 1.0, %v4716
        %v4718 = vrcp.pop %v4122
        %v4719 = vmul.f32 1.0, %v4718
        %v4720 = vrcp.pop %v4123
        %v4721 = vmul.f32 1.0, %v4720
        %v4722 = vrcp.pop %v4124
        %v4723 = vmul.f32 1.0, %v4722
        %v4724 = vrcp.pop %v4125
        %v4725 = vmul.f32 1.0, %v4724
        %v4726 = vrcp.pop %v4126
        %v4727 = vmul.f32 1.0, %v4726
        %v4728 = vrcp.pop %v4127
        %v4729 = vmul.f32 1.0, %v4728
        %v4730 = vrcp.pop %v4128
        %v4731 = vmul.f32 1.0, %v4730
        %v4732 = vrcp.pop %v4129
        %v4733 = vmul.f32 1.0, %v4732
        %v4734 = vrcp.pop %v4130
        %v4735 = vmul.f32 1.0, %v4734
        %v4736 = vrcp.pop %v4131
        %v4737 = vmul.f32 1.0, %v4736
        %v4738 = vrcp.pop %v4132
        %v4739 = vmul.f32 1.0, %v4738
        %v4740 = vrcp.pop %v4133
        %v4741 = vmul.f32 1.0, %v4740
        %v4742 = vrcp.pop %v4134
        %v4743 = vmul.f32 1.0, %v4742
        %v4744 = vrcp.pop %v4135
        %v4745 = vmul.f32 1.0, %v4744
        %v4746 = vrcp.pop %v4136
        %v4747 = vmul.f32 1.0, %v4746
        %v4748 = vrcp.pop %v4137
        %v4749 = vmul.f32 1.0, %v4748
        %v4750 = vrcp.pop %v4138
        %v4751 = vmul.f32 1.0, %v4750
        %v4752 = vrcp.pop %v4139
        %v4753 = vmul.f32 1.0, %v4752
        %v4754 = vrcp.pop %v4140
        %v4755 = vmul.f32 1.0, %v4754
        %v4756 = vrcp.pop %v4141
        %v4757 = vmul.f32 1.0, %v4756
        %v4758 = vrcp.pop %v4142
        %v4759 = vmul.f32 1.0, %v4758
        %v4760 = vrcp.pop %v4143
        %v4761 = vmul.f32 1.0, %v4760
        %v4762 = vrcp.pop %v4144
        %v4763 = vmul.f32 1.0, %v4762
        %v4764 = vrcp.pop %v4145
        %v4765 = vmul.f32 1.0, %v4764
        %v4766 = vrcp.pop %v4146
        %v4767 = vmul.f32 1.0, %v4766
        %v4768 = vrcp.pop %v4147
        %v4769 = vmul.f32 1.0, %v4768
        %v4770 = vrcp.pop %v4148
        %v4771 = vmul.f32 1.0, %v4770
        %v4772 = vrcp.pop %v4149
        %v4773 = vmul.f32 1.0, %v4772
        %v4774 = vrcp.pop %v4150
        %v4775 = vmul.f32 1.0, %v4774
        %v4776 = vrcp.pop %v4151
        %v4777 = vmul.f32 1.0, %v4776
        %v4778 = vrcp.pop %v4152
        %v4779 = vmul.f32 1.0, %v4778
        %v4780 = vrcp.pop %v4153
        %v4781 = vmul.f32 1.0, %v4780
        %v4782 = vrcp.pop %v4154
        %v4783 = vmul.f32 1.0, %v4782
        %v4784 = vrcp.pop %v4155
        %v4785 = vmul.f32 1.0, %v4784
        %v4786 = vrcp.pop %v4156
        %v4787 = vmul.f32 1.0, %v4786
        %v4788 = vrcp.pop %v4157
        %v4789 = vmul.f32 1.0, %v4788
        %v4790 = vrcp.pop %v4158
        %v4791 = vmul.f32 1.0, %v4790
        %v4792 = vrcp.pop %v4159
        %v4793 = vmul.f32 1.0, %v4792
        %v4794 = vrcp.pop %v4160
        %v4795 = vmul.f32 1.0, %v4794
        %v4796 = vrcp.pop %v4161
        %v4797 = vmul.f32 1.0, %v4796
        %v4798 = vrcp.pop %v4162
        %v4799 = vmul.f32 1.0, %v4798
        %v4800 = vrcp.pop %v4163
        %v4801 = vmul.f32 1.0, %v4800
        %v4802 = vrcp.pop %v4164
        %v4803 = vmul.f32 1.0, %v4802
        %v4804 = vrcp.pop %v4165
        %v4805 = vmul.f32 1.0, %v4804
        %v4806 = vrcp.pop %v4166
        %v4807 = vmul.f32 1.0, %v4806
        %v4808 = vrcp.pop %v4167
        %v4809 = vmul.f32 1.0, %v4808
        %v4810 = vrcp.pop %v4168
        %v4811 = vmul.f32 1.0, %v4810
        %v4812 = vrcp.pop %v4169
        %v4813 = vmul.f32 1.0, %v4812
        %v4814 = vrcp.pop %v4170
        %v4815 = vmul.f32 1.0, %v4814
        %v4816 = vrcp.pop %v4171
        %v4817 = vmul.f32 1.0, %v4816
        %v4818 = vrcp.pop %v4172
        %v4819 = vmul.f32 1.0, %v4818
        %v4820 = vrcp.pop %v4173
        %v4821 = vmul.f32 1.0, %v4820
        %v4822 = vrcp.pop %v4174
        %v4823 = vmul.f32 1.0, %v4822
        %v4824 = vrcp.pop %v4175
        %v4825 = vmul.f32 1.0, %v4824
        %v4826 = vrcp.pop %v4176
        %v4827 = vmul.f32 1.0, %v4826
        %v4828 = vrcp.pop %v4177
        %v4829 = vmul.f32 1.0, %v4828
        %v4830 = vrcp.pop %v4178
        %v4831 = vmul.f32 1.0, %v4830
        %v4832 = vrcp.pop %v4179
        %v4833 = vmul.f32 1.0, %v4832
        %v4834 = vrcp.pop %v4180
        %v4835 = vmul.f32 1.0, %v4834
        %v4836 = vrcp.pop %v4181
        %v4837 = vmul.f32 1.0, %v4836
        %v4838 = vrcp.pop %v4182
        %v4839 = vmul.f32 1.0, %v4838
        %v4840 = vrcp.pop %v4183
        %v4841 = vmul.f32 1.0, %v4840
        %v4842 = vrcp.pop %v4184
        %v4843 = vmul.f32 1.0, %v4842
        %v4844 = vrcp.pop %v4185
        %v4845 = vmul.f32 1.0, %v4844
        %v4846 = vrcp.pop %v4186
        %v4847 = vmul.f32 1.0, %v4846
        %v4848 = vrcp.pop %v4187
        %v4849 = vmul.f32 1.0, %v4848
        %v4850 = vrcp.pop %v4188
        %v4851 = vmul.f32 1.0, %v4850
        %v4852 = vrcp.pop %v4189
        %v4853 = vmul.f32 1.0, %v4852
        %v4854 = vrcp.pop %v4190
        %v4855 = vmul.f32 1.0, %v4854
        %v4856 = vrcp.pop %v4191
        %v4857 = vmul.f32 1.0, %v4856
        %v4858 = vrcp.pop %v4192
        %v4859 = vmul.f32 1.0, %v4858
        %v4860 = vrcp.pop %v4193
        %v4861 = vmul.f32 1.0, %v4860
        %v4862 = vrcp.pop %v4194
        %v4863 = vmul.f32 1.0, %v4862
        %v4864 = vrcp.pop %v4195
        %v4865 = vmul.f32 1.0, %v4864
        %v4866 = vrcp.pop %v4196
        %v4867 = vmul.f32 1.0, %v4866
        %v4868 = vrcp.pop %v4197
        %v4869 = vmul.f32 1.0, %v4868
        %v4870 = vrcp.pop %v4198
        %v4871 = vmul.f32 1.0, %v4870
        %v4872 = vrcp.pop %v4199
        %v4873 = vmul.f32 1.0, %v4872
        %v4874 = vrcp.pop %v4200
        %v4875 = vmul.f32 1.0, %v4874
        %v4876 = vrcp.pop %v4201
        %v4877 = vmul.f32 1.0, %v4876
        %v4878 = vrcp.pop %v4202
        %v4879 = vmul.f32 1.0, %v4878
        %v4880 = vrcp.pop %v4203
        %v4881 = vmul.f32 1.0, %v4880
        %v4882 = vrcp.pop %v4204
        %v4883 = vmul.f32 1.0, %v4882
        %v4884 = vrcp.pop %v4205
        %v4885 = vmul.f32 1.0, %v4884
        %v4886 = vrcp.pop %v4206
        %v4887 = vmul.f32 1.0, %v4886
        %v4888 = vrcp.pop %v4207
        %v4889 = vmul.f32 1.0, %v4888
        %v4890 = vrcp.pop %v4208
        %v4891 = vmul.f32 1.0, %v4890
        %v4892 = vrcp.pop %v4209
        %v4893 = vmul.f32 1.0, %v4892
        %v4894 = vrcp.pop %v4210
        %v4895 = vmul.f32 1.0, %v4894
        %v4896 = vrcp.pop %v4211
        %v4897 = vmul.f32 1.0, %v4896
        %v4898 = vrcp.pop %v4212
        %v4899 = vmul.f32 1.0, %v4898
        %v4900 = vrcp.pop %v4213
        %v4901 = vmul.f32 1.0, %v4900
        %v4902 = vrcp.pop %v4214
        %v4903 = vmul.f32 1.0, %v4902
        %v4904 = vrcp.pop %v4215
        %v4905 = vmul.f32 1.0, %v4904
        %v4906 = vrcp.pop %v4216
        %v4907 = vmul.f32 1.0, %v4906
        %v4908 = vrcp.pop %v4217
        %v4909 = vmul.f32 1.0, %v4908
        %v4910 = vrcp.pop %v4218
        %v4911 = vmul.f32 1.0, %v4910
        %v4912 = vrcp.pop %v4219
        %v4913 = vmul.f32 1.0, %v4912
        %v4914 = vrcp.pop %v4220
        %v4915 = vmul.f32 1.0, %v4914
        %v4916 = vrcp.pop %v4221
        %v4917 = vmul.f32 1.0, %v4916
        %v4918 = vrcp.pop %v4222
        %v4919 = vmul.f32 1.0, %v4918
        %v4920 = vrcp.pop %v4223
        %v4921 = vmul.f32 1.0, %v4920
        %v4922 = vrcp.pop %v4224
        %v4923 = vmul.f32 1.0, %v4922
        %v4924 = vrcp.pop %v4225
        %v4925 = vmul.f32 1.0, %v4924
        %v4926 = vrcp.pop %v4226
        %v4927 = vmul.f32 1.0, %v4926
        %v4928 = vrcp.pop %v4227
        %v4929 = vmul.f32 1.0, %v4928
        %v4930 = vrcp.pop %v4228
        %v4931 = vmul.f32 1.0, %v4930
        %v4932 = vrcp.pop %v4229
        %v4933 = vmul.f32 1.0, %v4932
        %v4934 = vrcp.pop %v4230
        %v4935 = vmul.f32 1.0, %v4934
        %v4936 = vrcp.pop %v4231
        %v4937 = vmul.f32 1.0, %v4936
        %v4938 = vrcp.pop %v4232
        %v4939 = vmul.f32 1.0, %v4938
        %v4940 = vrcp.pop %v4233
        %v4941 = vmul.f32 1.0, %v4940
        %v4942 = vrcp.pop %v4234
        %v4943 = vmul.f32 1.0, %v4942
        %v4944 = vrcp.pop %v4235
        %v4945 = vmul.f32 1.0, %v4944
        %v4946 = vrcp.pop %v4236
        %v4947 = vmul.f32 1.0, %v4946
        %v4948 = vrcp.pop %v4237
        %v4949 = vmul.f32 1.0, %v4948
        %v4950 = vrcp.pop %v4238
        %v4951 = vmul.f32 1.0, %v4950
        %v4952 = vrcp.pop %v4239
        %v4953 = vmul.f32 1.0, %v4952
        %v4954 = vrcp.pop %v4240
        %v4955 = vmul.f32 1.0, %v4954
        %v4956 = vrcp.pop %v4241
        %v4957 = vmul.f32 1.0, %v4956
        %v4958 = vrcp.pop %v4242
        %v4959 = vmul.f32 1.0, %v4958
        %v4960 = vrcp.pop %v4243
        %v4961 = vmul.f32 1.0, %v4960
        %v4962 = vrcp.pop %v4244
        %v4963 = vmul.f32 1.0, %v4962
        %v4964 = vrcp.pop %v4245
        %v4965 = vmul.f32 1.0, %v4964
        %v4966 = vrcp.pop %v4246
        %v4967 = vmul.f32 1.0, %v4966
        %v4968 = vrcp.pop %v4247
        %v4969 = vmul.f32 1.0, %v4968
        %v4970 = vrcp.pop %v4248
        %v4971 = vmul.f32 1.0, %v4970
        %v4972 = vrcp.pop %v4249
        %v4973 = vmul.f32 1.0, %v4972
        %v4974 = vrcp.pop %v4250
        %v4975 = vmul.f32 1.0, %v4974
        %v4976 = vrcp.pop %v4251
        %v4977 = vmul.f32 1.0, %v4976
        %v4978 = vrcp.pop %v4252
        %v4979 = vmul.f32 1.0, %v4978
        %v4980 = vrcp.pop %v4253
        %v4981 = vmul.f32 1.0, %v4980
        %v4982 = vrcp.pop %v4254
        %v4983 = vmul.f32 1.0, %v4982
        %v4984 = vrcp.pop %v4255
        %v4985 = vmul.f32 1.0, %v4984
        %v4986 = vrcp.pop %v4256
        %v4987 = vmul.f32 1.0, %v4986
        %v4988 = vrcp.pop %v4257
        %v4989 = vmul.f32 1.0, %v4988
        %v4990 = vrcp.pop %v4258
        %v4991 = vmul.f32 1.0, %v4990
        %v4992 = vrcp.pop %v4259
        %v4993 = vmul.f32 1.0, %v4992
        %v4994 = vrcp.pop %v4260
        %v4995 = vmul.f32 1.0, %v4994
        %v4996 = vrcp.pop %v4261
        %v4997 = vmul.f32 1.0, %v4996
        %v4998 = vrcp.pop %v4262
        %v4999 = vmul.f32 1.0, %v4998
        %v5000 = vrcp.pop %v4263
        %v5001 = vmul.f32 1.0, %v5000
        %v5002 = vrcp.pop %v4264
        %v5003 = vmul.f32 1.0, %v5002
        %v5004 = vrcp.pop %v4265
        %v5005 = vmul.f32 1.0, %v5004
        %v5006 = vrcp.pop %v4266
        %v5007 = vmul.f32 1.0, %v5006
        %v5008 = vrcp.pop %v4267
        %v5009 = vmul.f32 1.0, %v5008
        %v5010 = vrcp.pop %v4268
        %v5011 = vmul.f32 1.0, %v5010
        %v5012 = vrcp.pop %v4269
        %v5013 = vmul.f32 1.0, %v5012
        %v5014 = vrcp.pop %v4270
        %v5015 = vmul.f32 1.0, %v5014
        %v5016 = vrcp.pop %v4271
        %v5017 = vmul.f32 1.0, %v5016
        %v5018 = vrcp.pop %v4272
        %v5019 = vmul.f32 1.0, %v5018
        %v5020 = vrcp.pop %v4273
        %v5021 = vmul.f32 1.0, %v5020
        %v5022 = vrcp.pop %v4274
        %v5023 = vmul.f32 1.0, %v5022
        %v5024 = vrcp.pop %v4275
        %v5025 = vmul.f32 1.0, %v5024
        %v5026 = vrcp.pop %v4276
        %v5027 = vmul.f32 1.0, %v5026
        %v5028 = vrcp.pop %v4277
        %v5029 = vmul.f32 1.0, %v5028
        %v5030 = vrcp.pop %v4278
        %v5031 = vmul.f32 1.0, %v5030
        %v5032 = vrcp.pop %v4279
        %v5033 = vmul.f32 1.0, %v5032
        %v5034 = vrcp.pop %v4280
        %v5035 = vmul.f32 1.0, %v5034
        %v5036 = vrcp.pop %v4281
        %v5037 = vmul.f32 1.0, %v5036
        %v5038 = vrcp.pop %v4282
        %v5039 = vmul.f32 1.0, %v5038
        %v5040 = vrcp.pop %v4283
        %v5041 = vmul.f32 1.0, %v5040
        %v5042 = vrcp.pop %v4284
        %v5043 = vmul.f32 1.0, %v5042
        %v5044 = vrcp.pop %v4285
        %v5045 = vmul.f32 1.0, %v5044
        %v5046 = vrcp.pop %v4286
        %v5047 = vmul.f32 1.0, %v5046
        %v5048 = vrcp.pop %v4287
        %v5049 = vmul.f32 1.0, %v5048
        %v5050 = vrcp.pop %v4288
        %v5051 = vmul.f32 1.0, %v5050
        %v5052 = vrcp.pop %v4289
        %v5053 = vmul.f32 1.0, %v5052
        %v5054 = vrcp.pop %v4290
        %v5055 = vmul.f32 1.0, %v5054
        %v5056 = vrcp.pop %v4291
        %v5057 = vmul.f32 1.0, %v5056
        %v5058 = vrcp.pop %v4292
        %v5059 = vmul.f32 1.0, %v5058
        %v5060 = vrcp.pop %v4293
        %v5061 = vmul.f32 1.0, %v5060
        %v5062 = vmul.f32 %v1635, %v4295
        %v5063 = vmul.f32 %v1637, %v4297
        %v5064 = vmul.f32 %v1828, %v4299
        %v5065 = vmul.f32 %v1830, %v4301
        %v5066 = vmul.f32 %v2021, %v4303
        %v5067 = vmul.f32 %v2023, %v4305
        %v5068 = vmul.f32 %v2214, %v4307
        %v5069 = vmul.f32 %v2216, %v4309
        %v5070 = vmul.f32 %v2407, %v4311
        %v5071 = vmul.f32 %v2409, %v4313
        %v5072 = vmul.f32 %v2600, %v4315
        %v5073 = vmul.f32 %v2602, %v4317
        %v5074 = vmul.f32 %v1639, %v4319
        %v5075 = vmul.f32 %v1641, %v4321
        %v5076 = vmul.f32 %v1832, %v4323
        %v5077 = vmul.f32 %v1834, %v4325
        %v5078 = vmul.f32 %v2025, %v4327
        %v5079 = vmul.f32 %v2027, %v4329
        %v5080 = vmul.f32 %v2218, %v4331
        %v5081 = vmul.f32 %v2220, %v4333
        %v5082 = vmul.f32 %v2411, %v4335
        %v5083 = vmul.f32 %v2413, %v4337
        %v5084 = vmul.f32 %v2604, %v4339
        %v5085 = vmul.f32 %v2606, %v4341
        %v5086 = vmul.f32 %v1645, %v4343
        %v5087 = vmul.f32 %v1647, %v4345
        %v5088 = vmul.f32 %v1838, %v4347
        %v5089 = vmul.f32 %v1840, %v4349
        %v5090 = vmul.f32 %v2031, %v4351
        %v5091 = vmul.f32 %v2033, %v4353
        %v5092 = vmul.f32 %v2224, %v4355
        %v5093 = vmul.f32 %v2226, %v4357
        %v5094 = vmul.f32 %v2417, %v4359
        %v5095 = vmul.f32 %v2419, %v4361
        %v5096 = vmul.f32 %v2610, %v4363
        %v5097 = vmul.f32 %v2612, %v4365
        %v5098 = vmul.f32 %v1649, %v4367
        %v5099 = vmul.f32 %v1651, %v4369
        %v5100 = vmul.f32 %v1842, %v4371
        %v5101 = vmul.f32 %v1844, %v4373
        %v5102 = vmul.f32 %v2035, %v4375
        %v5103 = vmul.f32 %v2037, %v4377
        %v5104 = vmul.f32 %v2228, %v4379
        %v5105 = vmul.f32 %v2230, %v4381
        %v5106 = vmul.f32 %v2421, %v4383
        %v5107 = vmul.f32 %v2423, %v4385
        %v5108 = vmul.f32 %v2614, %v4387
        %v5109 = vmul.f32 %v2616, %v4389
        %v5110 = vmul.f32 %v1655, %v4391
        %v5111 = vmul.f32 %v1657, %v4393
        %v5112 = vmul.f32 %v1848, %v4395
        %v5113 = vmul.f32 %v1850, %v4397
        %v5114 = vmul.f32 %v2041, %v4399
        %v5115 = vmul.f32 %v2043, %v4401
        %v5116 = vmul.f32 %v2234, %v4403
        %v5117 = vmul.f32 %v2236, %v4405
        %v5118 = vmul.f32 %v2427, %v4407
        %v5119 = vmul.f32 %v2429, %v4409
        %v5120 = vmul.f32 %v2620, %v4411
        %v5121 = vmul.f32 %v2622, %v4413
        %v5122 = vmul.f32 %v1659, %v4415
        %v5123 = vmul.f32 %v1661, %v4417
        %v5124 = vmul.f32 %v1852, %v4419
        %v5125 = vmul.f32 %v1854, %v4421
        %v5126 = vmul.f32 %v2045, %v4423
        %v5127 = vmul.f32 %v2047, %v4425
        %v5128 = vmul.f32 %v2238, %v4427
        %v5129 = vmul.f32 %v2240, %v4429
        %v5130 = vmul.f32 %v2431, %v4431
        %v5131 = vmul.f32 %v2433, %v4433
        %v5132 = vmul.f32 %v2624, %v4435
        %v5133 = vmul.f32 %v2626, %v4437
        %v5134 = vmul.f32 %v1665, %v4439
        %v5135 = vmul.f32 %v1667, %v4441
        %v5136 = vmul.f32 %v1858, %v4443
        %v5137 = vmul.f32 %v1860, %v4445
        %v5138 = vmul.f32 %v2051, %v4447
        %v5139 = vmul.f32 %v2053, %v4449
        %v5140 = vmul.f32 %v2244, %v4451
        %v5141 = vmul.f32 %v2246, %v4453
        %v5142 = vmul.f32 %v2437, %v4455
        %v5143 = vmul.f32 %v2439, %v4457
        %v5144 = vmul.f32 %v2630, %v4459
        %v5145 = vmul.f32 %v2632, %v4461
        %v5146 = vmul.f32 %v1669, %v4463
        %v5147 = vmul.f32 %v1671, %v4465
        %v5148 = vmul.f32 %v1862, %v4467
        %v5149 = vmul.f32 %v1864, %v4469
        %v5150 = vmul.f32 %v2055, %v4471
        %v5151 = vmul.f32 %v2057, %v4473
        %v5152 = vmul.f32 %v2248, %v4475
        %v5153 = vmul.f32 %v2250, %v4477
        %v5154 = vmul.f32 %v2441, %v4479
        %v5155 = vmul.f32 %v2443, %v4481
        %v5156 = vmul.f32 %v2634, %v4483
        %v5157 = vmul.f32 %v2636, %v4485
        %v5158 = vmul.f32 %v1675, %v4487
        %v5159 = vmul.f32 %v1677, %v4489
        %v5160 = vmul.f32 %v1868, %v4491
        %v5161 = vmul.f32 %v1870, %v4493
        %v5162 = vmul.f32 %v2061, %v4495
        %v5163 = vmul.f32 %v2063, %v4497
        %v5164 = vmul.f32 %v2254, %v4499
        %v5165 = vmul.f32 %v2256, %v4501
        %v5166 = vmul.f32 %v2447, %v4503
        %v5167 = vmul.f32 %v2449, %v4505
        %v5168 = vmul.f32 %v2640, %v4507
        %v5169 = vmul.f32 %v2642, %v4509
        %v5170 = vmul.f32 %v1679, %v4511
        %v5171 = vmul.f32 %v1681, %v4513
        %v5172 = vmul.f32 %v1872, %v4515
        %v5173 = vmul.f32 %v1874, %v4517
        %v5174 = vmul.f32 %v2065, %v4519
        %v5175 = vmul.f32 %v2067, %v4521
        %v5176 = vmul.f32 %v2258, %v4523
        %v5177 = vmul.f32 %v2260, %v4525
        %v5178 = vmul.f32 %v2451, %v4527
        %v5179 = vmul.f32 %v2453, %v4529
        %v5180 = vmul.f32 %v2644, %v4531
        %v5181 = vmul.f32 %v2646, %v4533
        %v5182 = vmul.f32 %v1685, %v4535
        %v5183 = vmul.f32 %v1687, %v4537
        %v5184 = vmul.f32 %v1878, %v4539
        %v5185 = vmul.f32 %v1880, %v4541
        %v5186 = vmul.f32 %v2071, %v4543
        %v5187 = vmul.f32 %v2073, %v4545
        %v5188 = vmul.f32 %v2264, %v4547
        %v5189 = vmul.f32 %v2266, %v4549
        %v5190 = vmul.f32 %v2457, %v4551
        %v5191 = vmul.f32 %v2459, %v4553
        %v5192 = vmul.f32 %v2650, %v4555
        %v5193 = vmul.f32 %v2652, %v4557
        %v5194 = vmul.f32 %v1689, %v4559
        %v5195 = vmul.f32 %v1691, %v4561
        %v5196 = vmul.f32 %v1882, %v4563
        %v5197 = vmul.f32 %v1884, %v4565
        %v5198 = vmul.f32 %v2075, %v4567
        %v5199 = vmul.f32 %v2077, %v4569
        %v5200 = vmul.f32 %v2268, %v4571
        %v5201 = vmul.f32 %v2270, %v4573
        %v5202 = vmul.f32 %v2461, %v4575
        %v5203 = vmul.f32 %v2463, %v4577
        %v5204 = vmul.f32 %v2654, %v4579
        %v5205 = vmul.f32 %v2656, %v4581
        %v5206 = vmul.f32 %v1695, %v4583
        %v5207 = vmul.f32 %v1697, %v4585
        %v5208 = vmul.f32 %v1888, %v4587
        %v5209 = vmul.f32 %v1890, %v4589
        %v5210 = vmul.f32 %v2081, %v4591
        %v5211 = vmul.f32 %v2083, %v4593
        %v5212 = vmul.f32 %v2274, %v4595
        %v5213 = vmul.f32 %v2276, %v4597
        %v5214 = vmul.f32 %v2467, %v4599
        %v5215 = vmul.f32 %v2469, %v4601
        %v5216 = vmul.f32 %v2660, %v4603
        %v5217 = vmul.f32 %v2662, %v4605
        %v5218 = vmul.f32 %v1699, %v4607
        %v5219 = vmul.f32 %v1701, %v4609
        %v5220 = vmul.f32 %v1892, %v4611
        %v5221 = vmul.f32 %v1894, %v4613
        %v5222 = vmul.f32 %v2085, %v4615
        %v5223 = vmul.f32 %v2087, %v4617
        %v5224 = vmul.f32 %v2278, %v4619
        %v5225 = vmul.f32 %v2280, %v4621
        %v5226 = vmul.f32 %v2471, %v4623
        %v5227 = vmul.f32 %v2473, %v4625
        %v5228 = vmul.f32 %v2664, %v4627
        %v5229 = vmul.f32 %v2666, %v4629
        %v5230 = vmul.f32 %v1705, %v4631
        %v5231 = vmul.f32 %v1707, %v4633
        %v5232 = vmul.f32 %v1898, %v4635
        %v5233 = vmul.f32 %v1900, %v4637
        %v5234 = vmul.f32 %v2091, %v4639
        %v5235 = vmul.f32 %v2093, %v4641
        %v5236 = vmul.f32 %v2284, %v4643
        %v5237 = vmul.f32 %v2286, %v4645
        %v5238 = vmul.f32 %v2477, %v4647
        %v5239 = vmul.f32 %v2479, %v4649
        %v5240 = vmul.f32 %v2670, %v4651
        %v5241 = vmul.f32 %v2672, %v4653
        %v5242 = vmul.f32 %v1709, %v4655
        %v5243 = vmul.f32 %v1711, %v4657
        %v5244 = vmul.f32 %v1902, %v4659
        %v5245 = vmul.f32 %v1904, %v4661
        %v5246 = vmul.f32 %v2095, %v4663
        %v5247 = vmul.f32 %v2097, %v4665
        %v5248 = vmul.f32 %v2288, %v4667
        %v5249 = vmul.f32 %v2290, %v4669
        %v5250 = vmul.f32 %v2481, %v4671
        %v5251 = vmul.f32 %v2483, %v4673
        %v5252 = vmul.f32 %v2674, %v4675
        %v5253 = vmul.f32 %v2676, %v4677
        %v5254 = vmul.f32 %v1715, %v4679
        %v5255 = vmul.f32 %v1717, %v4681
        %v5256 = vmul.f32 %v1908, %v4683
        %v5257 = vmul.f32 %v1910, %v4685
        %v5258 = vmul.f32 %v2101, %v4687
        %v5259 = vmul.f32 %v2103, %v4689
        %v5260 = vmul.f32 %v2294, %v4691
        %v5261 = vmul.f32 %v2296, %v4693
        %v5262 = vmul.f32 %v2487, %v4695
        %v5263 = vmul.f32 %v2489, %v4697
        %v5264 = vmul.f32 %v2680, %v4699
        %v5265 = vmul.f32 %v2682, %v4701
        %v5266 = vmul.f32 %v1719, %v4703
        %v5267 = vmul.f32 %v1721, %v4705
        %v5268 = vmul.f32 %v1912, %v4707
        %v5269 = vmul.f32 %v1914, %v4709
        %v5270 = vmul.f32 %v2105, %v4711
        %v5271 = vmul.f32 %v2107, %v4713
        %v5272 = vmul.f32 %v2298, %v4715
        %v5273 = vmul.f32 %v2300, %v4717
        %v5274 = vmul.f32 %v2491, %v4719
        %v5275 = vmul.f32 %v2493, %v4721
        %v5276 = vmul.f32 %v2684, %v4723
        %v5277 = vmul.f32 %v2686, %v4725
        %v5278 = vmul.f32 %v1725, %v4727
        %v5279 = vmul.f32 %v1727, %v4729
        %v5280 = vmul.f32 %v1918, %v4731
        %v5281 = vmul.f32 %v1920, %v4733
        %v5282 = vmul.f32 %v2111, %v4735
        %v5283 = vmul.f32 %v2113, %v4737
        %v5284 = vmul.f32 %v2304, %v4739
        %v5285 = vmul.f32 %v2306, %v4741
        %v5286 = vmul.f32 %v2497, %v4743
        %v5287 = vmul.f32 %v2499, %v4745
        %v5288 = vmul.f32 %v2690, %v4747
        %v5289 = vmul.f32 %v2692, %v4749
        %v5290 = vmul.f32 %v1729, %v4751
        %v5291 = vmul.f32 %v1731, %v4753
        %v5292 = vmul.f32 %v1922, %v4755
        %v5293 = vmul.f32 %v1924, %v4757
        %v5294 = vmul.f32 %v2115, %v4759
        %v5295 = vmul.f32 %v2117, %v4761
        %v5296 = vmul.f32 %v2308, %v4763
        %v5297 = vmul.f32 %v2310, %v4765
        %v5298 = vmul.f32 %v2501, %v4767
        %v5299 = vmul.f32 %v2503, %v4769
        %v5300 = vmul.f32 %v2694, %v4771
        %v5301 = vmul.f32 %v2696, %v4773
        %v5302 = vmul.f32 %v1735, %v4775
        %v5303 = vmul.f32 %v1737, %v4777
        %v5304 = vmul.f32 %v1928, %v4779
        %v5305 = vmul.f32 %v1930, %v4781
        %v5306 = vmul.f32 %v2121, %v4783
        %v5307 = vmul.f32 %v2123, %v4785
        %v5308 = vmul.f32 %v2314, %v4787
        %v5309 = vmul.f32 %v2316, %v4789
        %v5310 = vmul.f32 %v2507, %v4791
        %v5311 = vmul.f32 %v2509, %v4793
        %v5312 = vmul.f32 %v2700, %v4795
        %v5313 = vmul.f32 %v2702, %v4797
        %v5314 = vmul.f32 %v1739, %v4799
        %v5315 = vmul.f32 %v1741, %v4801
        %v5316 = vmul.f32 %v1932, %v4803
        %v5317 = vmul.f32 %v1934, %v4805
        %v5318 = vmul.f32 %v2125, %v4807
        %v5319 = vmul.f32 %v2127, %v4809
        %v5320 = vmul.f32 %v2318, %v4811
        %v5321 = vmul.f32 %v2320, %v4813
        %v5322 = vmul.f32 %v2511, %v4815
        %v5323 = vmul.f32 %v2513, %v4817
        %v5324 = vmul.f32 %v2704, %v4819
        %v5325 = vmul.f32 %v2706, %v4821
        %v5326 = vmul.f32 %v1745, %v4823
        %v5327 = vmul.f32 %v1747, %v4825
        %v5328 = vmul.f32 %v1938, %v4827
        %v5329 = vmul.f32 %v1940, %v4829
        %v5330 = vmul.f32 %v2131, %v4831
        %v5331 = vmul.f32 %v2133, %v4833
        %v5332 = vmul.f32 %v2324, %v4835
        %v5333 = vmul.f32 %v2326, %v4837
        %v5334 = vmul.f32 %v2517, %v4839
        %v5335 = vmul.f32 %v2519, %v4841
        %v5336 = vmul.f32 %v2710, %v4843
        %v5337 = vmul.f32 %v2712, %v4845
        %v5338 = vmul.f32 %v1749, %v4847
        %v5339 = vmul.f32 %v1751, %v4849
        %v5340 = vmul.f32 %v1942, %v4851
        %v5341 = vmul.f32 %v1944, %v4853
        %v5342 = vmul.f32 %v2135, %v4855
        %v5343 = vmul.f32 %v2137, %v4857
        %v5344 = vmul.f32 %v2328, %v4859
        %v5345 = vmul.f32 %v2330, %v4861
        %v5346 = vmul.f32 %v2521, %v4863
        %v5347 = vmul.f32 %v2523, %v4865
        %v5348 = vmul.f32 %v2714, %v4867
        %v5349 = vmul.f32 %v2716, %v4869
        %v5350 = vmul.f32 %v1755, %v4871
        %v5351 = vmul.f32 %v1757, %v4873
        %v5352 = vmul.f32 %v1948, %v4875
        %v5353 = vmul.f32 %v1950, %v4877
        %v5354 = vmul.f32 %v2141, %v4879
        %v5355 = vmul.f32 %v2143, %v4881
        %v5356 = vmul.f32 %v2334, %v4883
        %v5357 = vmul.f32 %v2336, %v4885
        %v5358 = vmul.f32 %v2527, %v4887
        %v5359 = vmul.f32 %v2529, %v4889
        %v5360 = vmul.f32 %v2720, %v4891
        %v5361 = vmul.f32 %v2722, %v4893
        %v5362 = vmul.f32 %v1759, %v4895
        %v5363 = vmul.f32 %v1761, %v4897
        %v5364 = vmul.f32 %v1952, %v4899
        %v5365 = vmul.f32 %v1954, %v4901
        %v5366 = vmul.f32 %v2145, %v4903
        %v5367 = vmul.f32 %v2147, %v4905
        %v5368 = vmul.f32 %v2338, %v4907
        %v5369 = vmul.f32 %v2340, %v4909
        %v5370 = vmul.f32 %v2531, %v4911
        %v5371 = vmul.f32 %v2533, %v4913
        %v5372 = vmul.f32 %v2724, %v4915
        %v5373 = vmul.f32 %v2726, %v4917
        %v5374 = vmul.f32 %v1765, %v4919
        %v5375 = vmul.f32 %v1767, %v4921
        %v5376 = vmul.f32 %v1958, %v4923
        %v5377 = vmul.f32 %v1960, %v4925
        %v5378 = vmul.f32 %v2151, %v4927
        %v5379 = vmul.f32 %v2153, %v4929
        %v5380 = vmul.f32 %v2344, %v4931
        %v5381 = vmul.f32 %v2346, %v4933
        %v5382 = vmul.f32 %v2537, %v4935
        %v5383 = vmul.f32 %v2539, %v4937
        %v5384 = vmul.f32 %v2730, %v4939
        %v5385 = vmul.f32 %v2732, %v4941
        %v5386 = vmul.f32 %v1769, %v4943
        %v5387 = vmul.f32 %v1771, %v4945
        %v5388 = vmul.f32 %v1962, %v4947
        %v5389 = vmul.f32 %v1964, %v4949
        %v5390 = vmul.f32 %v2155, %v4951
        %v5391 = vmul.f32 %v2157, %v4953
        %v5392 = vmul.f32 %v2348, %v4955
        %v5393 = vmul.f32 %v2350, %v4957
        %v5394 = vmul.f32 %v2541, %v4959
        %v5395 = vmul.f32 %v2543, %v4961
        %v5396 = vmul.f32 %v2734, %v4963
        %v5397 = vmul.f32 %v2736, %v4965
        %v5398 = vmul.f32 %v1775, %v4967
        %v5399 = vmul.f32 %v1777, %v4969
        %v5400 = vmul.f32 %v1968, %v4971
        %v5401 = vmul.f32 %v1970, %v4973
        %v5402 = vmul.f32 %v2161, %v4975
        %v5403 = vmul.f32 %v2163, %v4977
        %v5404 = vmul.f32 %v2354, %v4979
        %v5405 = vmul.f32 %v2356, %v4981
        %v5406 = vmul.f32 %v2547, %v4983
        %v5407 = vmul.f32 %v2549, %v4985
        %v5408 = vmul.f32 %v2740, %v4987
        %v5409 = vmul.f32 %v2742, %v4989
        %v5410 = vmul.f32 %v1779, %v4991
        %v5411 = vmul.f32 %v1781, %v4993
        %v5412 = vmul.f32 %v1972, %v4995
        %v5413 = vmul.f32 %v1974, %v4997
        %v5414 = vmul.f32 %v2165, %v4999
        %v5415 = vmul.f32 %v2167, %v5001
        %v5416 = vmul.f32 %v2358, %v5003
        %v5417 = vmul.f32 %v2360, %v5005
        %v5418 = vmul.f32 %v2551, %v5007
        %v5419 = vmul.f32 %v2553, %v5009
        %v5420 = vmul.f32 %v2744, %v5011
        %v5421 = vmul.f32 %v2746, %v5013
        %v5422 = vmul.f32 %v1785, %v5015
        %v5423 = vmul.f32 %v1787, %v5017
        %v5424 = vmul.f32 %v1978, %v5019
        %v5425 = vmul.f32 %v1980, %v5021
        %v5426 = vmul.f32 %v2171, %v5023
        %v5427 = vmul.f32 %v2173, %v5025
        %v5428 = vmul.f32 %v2364, %v5027
        %v5429 = vmul.f32 %v2366, %v5029
        %v5430 = vmul.f32 %v2557, %v5031
        %v5431 = vmul.f32 %v2559, %v5033
        %v5432 = vmul.f32 %v2750, %v5035
        %v5433 = vmul.f32 %v2752, %v5037
        %v5434 = vmul.f32 %v1789, %v5039
        %v5435 = vmul.f32 %v1791, %v5041
        %v5436 = vmul.f32 %v1982, %v5043
        %v5437 = vmul.f32 %v1984, %v5045
        %v5438 = vmul.f32 %v2175, %v5047
        %v5439 = vmul.f32 %v2177, %v5049
        %v5440 = vmul.f32 %v2368, %v5051
        %v5441 = vmul.f32 %v2370, %v5053
        %v5442 = vmul.f32 %v2561, %v5055
        %v5443 = vmul.f32 %v2563, %v5057
        %v5444 = vmul.f32 %v2754, %v5059
        %v5445 = vmul.f32 %v2756, %v5061
        %v5446 = vld [vmem:[#allocation2] sm:$0xff]
        %v5447 = vld [vmem:[#allocation2 + $0x8] sm:$0xf]
        %v5448 = vadd.f32 %v5062, %v5074
        %v5449 = vadd.f32 %v5448, %v5086
        %v5450 = vadd.f32 %v5449, %v5098
        %v5451 = vadd.f32 %v5450, %v5110
        %v5452 = vadd.f32 %v5451, %v5122
        %v5453 = vadd.f32 %v5452, %v5134
        %v5454 = vadd.f32 %v5453, %v5146
        %v5455 = vadd.f32 %v5454, %v5158
        %v5456 = vadd.f32 %v5455, %v5170
        %v5457 = vadd.f32 %v5456, %v5182
        %v5458 = vadd.f32 %v5457, %v5194
        %v5459 = vadd.f32 %v5458, %v5206
        %v5460 = vadd.f32 %v5459, %v5218
        %v5461 = vadd.f32 %v5460, %v5230
        %v5462 = vadd.f32 %v5461, %v5242
        %v5463 = vadd.f32 %v5462, %v5254
        %v5464 = vadd.f32 %v5463, %v5266
        %v5465 = vadd.f32 %v5464, %v5278
        %v5466 = vadd.f32 %v5465, %v5290
        %v5467 = vadd.f32 %v5466, %v5302
        %v5468 = vadd.f32 %v5467, %v5314
        %v5469 = vadd.f32 %v5468, %v5326
        %v5470 = vadd.f32 %v5469, %v5338
        %v5471 = vadd.f32 %v5470, %v5350
        %v5472 = vadd.f32 %v5471, %v5362
        %v5473 = vadd.f32 %v5472, %v5374
        %v5474 = vadd.f32 %v5473, %v5386
        %v5475 = vadd.f32 %v5474, %v5398
        %v5476 = vadd.f32 %v5475, %v5410
        %v5477 = vadd.f32 %v5476, %v5422
        %v5478 = vadd.f32 %v5477, %v5434
        %v5479 = vrot.slane %v5478, 4
        %v5480 = vadd.f32 %v5478, %v5479
        %v5481 = vrot.slane %v5480, 2
        %v5482 = vadd.f32 %v5480, %v5481
        %v5483 = vrot.slane %v5482, 1
        %v5484 = vadd.f32 %v5482, %v5483
        %v5485 = vadd.f32 %v5063, %v5075
        %v5486 = vadd.f32 %v5485, %v5087
        %v5487 = vadd.f32 %v5486, %v5099
        %v5488 = vadd.f32 %v5487, %v5111
        %v5489 = vadd.f32 %v5488, %v5123
        %v5490 = vadd.f32 %v5489, %v5135
        %v5491 = vadd.f32 %v5490, %v5147
        %v5492 = vadd.f32 %v5491, %v5159
        %v5493 = vadd.f32 %v5492, %v5171
        %v5494 = vadd.f32 %v5493, %v5183
        %v5495 = vadd.f32 %v5494, %v5195
        %v5496 = vadd.f32 %v5495, %v5207
        %v5497 = vadd.f32 %v5496, %v5219
        %v5498 = vadd.f32 %v5497, %v5231
        %v5499 = vadd.f32 %v5498, %v5243
        %v5500 = vadd.f32 %v5499, %v5255
        %v5501 = vadd.f32 %v5500, %v5267
        %v5502 = vadd.f32 %v5501, %v5279
        %v5503 = vadd.f32 %v5502, %v5291
        %v5504 = vadd.f32 %v5503, %v5303
        %v5505 = vadd.f32 %v5504, %v5315
        %v5506 = vadd.f32 %v5505, %v5327
        %v5507 = vadd.f32 %v5506, %v5339
        %v5508 = vadd.f32 %v5507, %v5351
        %v5509 = vadd.f32 %v5508, %v5363
        %v5510 = vadd.f32 %v5509, %v5375
        %v5511 = vadd.f32 %v5510, %v5387
        %v5512 = vadd.f32 %v5511, %v5399
        %v5513 = vadd.f32 %v5512, %v5411
        %v5514 = vadd.f32 %v5513, %v5423
        %v5515 = vadd.f32 %v5514, %v5435
        %v5516 = vrot.slane %v5515, 4
        %v5517 = vadd.f32 %v5515, %v5516
        %v5518 = vrot.slane %v5517, 2
        %v5519 = vadd.f32 %v5517, %v5518
        %v5520 = vrot.slane %v5519, 1
        %v5521 = vadd.f32 %v5519, %v5520
        %v5522 = vadd.f32 %v5064, %v5076
        %v5523 = vadd.f32 %v5522, %v5088
        %v5524 = vadd.f32 %v5523, %v5100
        %v5525 = vadd.f32 %v5524, %v5112
        %v5526 = vadd.f32 %v5525, %v5124
        %v5527 = vadd.f32 %v5526, %v5136
        %v5528 = vadd.f32 %v5527, %v5148
        %v5529 = vadd.f32 %v5528, %v5160
        %v5530 = vadd.f32 %v5529, %v5172
        %v5531 = vadd.f32 %v5530, %v5184
        %v5532 = vadd.f32 %v5531, %v5196
        %v5533 = vadd.f32 %v5532, %v5208
        %v5534 = vadd.f32 %v5533, %v5220
        %v5535 = vadd.f32 %v5534, %v5232
        %v5536 = vadd.f32 %v5535, %v5244
        %v5537 = vadd.f32 %v5536, %v5256
        %v5538 = vadd.f32 %v5537, %v5268
        %v5539 = vadd.f32 %v5538, %v5280
        %v5540 = vadd.f32 %v5539, %v5292
        %v5541 = vadd.f32 %v5540, %v5304
        %v5542 = vadd.f32 %v5541, %v5316
        %v5543 = vadd.f32 %v5542, %v5328
        %v5544 = vadd.f32 %v5543, %v5340
        %v5545 = vadd.f32 %v5544, %v5352
        %v5546 = vadd.f32 %v5545, %v5364
        %v5547 = vadd.f32 %v5546, %v5376
        %v5548 = vadd.f32 %v5547, %v5388
        %v5549 = vadd.f32 %v5548, %v5400
        %v5550 = vadd.f32 %v5549, %v5412
        %v5551 = vadd.f32 %v5550, %v5424
        %v5552 = vadd.f32 %v5551, %v5436
        %v5553 = vrot.slane %v5552, 4
        %v5554 = vadd.f32 %v5552, %v5553
        %v5555 = vrot.slane %v5554, 2
        %v5556 = vadd.f32 %v5554, %v5555
        %v5557 = vrot.slane %v5556, 1
        %v5558 = vadd.f32 %v5556, %v5557
        %v5559 = vadd.f32 %v5065, %v5077
        %v5560 = vadd.f32 %v5559, %v5089
        %v5561 = vadd.f32 %v5560, %v5101
        %v5562 = vadd.f32 %v5561, %v5113
        %v5563 = vadd.f32 %v5562, %v5125
        %v5564 = vadd.f32 %v5563, %v5137
        %v5565 = vadd.f32 %v5564, %v5149
        %v5566 = vadd.f32 %v5565, %v5161
        %v5567 = vadd.f32 %v5566, %v5173
        %v5568 = vadd.f32 %v5567, %v5185
        %v5569 = vadd.f32 %v5568, %v5197
        %v5570 = vadd.f32 %v5569, %v5209
        %v5571 = vadd.f32 %v5570, %v5221
        %v5572 = vadd.f32 %v5571, %v5233
        %v5573 = vadd.f32 %v5572, %v5245
        %v5574 = vadd.f32 %v5573, %v5257
        %v5575 = vadd.f32 %v5574, %v5269
        %v5576 = vadd.f32 %v5575, %v5281
        %v5577 = vadd.f32 %v5576, %v5293
        %v5578 = vadd.f32 %v5577, %v5305
        %v5579 = vadd.f32 %v5578, %v5317
        %v5580 = vadd.f32 %v5579, %v5329
        %v5581 = vadd.f32 %v5580, %v5341
        %v5582 = vadd.f32 %v5581, %v5353
        %v5583 = vadd.f32 %v5582, %v5365
        %v5584 = vadd.f32 %v5583, %v5377
        %v5585 = vadd.f32 %v5584, %v5389
        %v5586 = vadd.f32 %v5585, %v5401
        %v5587 = vadd.f32 %v5586, %v5413
        %v5588 = vadd.f32 %v5587, %v5425
        %v5589 = vadd.f32 %v5588, %v5437
        %v5590 = vrot.slane %v5589, 4
        %v5591 = vadd.f32 %v5589, %v5590
        %v5592 = vrot.slane %v5591, 2
        %v5593 = vadd.f32 %v5591, %v5592
        %v5594 = vrot.slane %v5593, 1
        %v5595 = vadd.f32 %v5593, %v5594
        %v5596 = vadd.f32 %v5066, %v5078
        %v5597 = vadd.f32 %v5596, %v5090
        %v5598 = vadd.f32 %v5597, %v5102
        %v5599 = vadd.f32 %v5598, %v5114
        %v5600 = vadd.f32 %v5599, %v5126
        %v5601 = vadd.f32 %v5600, %v5138
        %v5602 = vadd.f32 %v5601, %v5150
        %v5603 = vadd.f32 %v5602, %v5162
        %v5604 = vadd.f32 %v5603, %v5174
        %v5605 = vadd.f32 %v5604, %v5186
        %v5606 = vadd.f32 %v5605, %v5198
        %v5607 = vadd.f32 %v5606, %v5210
        %v5608 = vadd.f32 %v5607, %v5222
        %v5609 = vadd.f32 %v5608, %v5234
        %v5610 = vadd.f32 %v5609, %v5246
        %v5611 = vadd.f32 %v5610, %v5258
        %v5612 = vadd.f32 %v5611, %v5270
        %v5613 = vadd.f32 %v5612, %v5282
        %v5614 = vadd.f32 %v5613, %v5294
        %v5615 = vadd.f32 %v5614, %v5306
        %v5616 = vadd.f32 %v5615, %v5318
        %v5617 = vadd.f32 %v5616, %v5330
        %v5618 = vadd.f32 %v5617, %v5342
        %v5619 = vadd.f32 %v5618, %v5354
        %v5620 = vadd.f32 %v5619, %v5366
        %v5621 = vadd.f32 %v5620, %v5378
        %v5622 = vadd.f32 %v5621, %v5390
        %v5623 = vadd.f32 %v5622, %v5402
        %v5624 = vadd.f32 %v5623, %v5414
        %v5625 = vadd.f32 %v5624, %v5426
        %v5626 = vadd.f32 %v5625, %v5438
        %v5627 = vrot.slane %v5626, 4
        %v5628 = vadd.f32 %v5626, %v5627
        %v5629 = vrot.slane %v5628, 2
        %v5630 = vadd.f32 %v5628, %v5629
        %v5631 = vrot.slane %v5630, 1
        %v5632 = vadd.f32 %v5630, %v5631
        %v5633 = vadd.f32 %v5067, %v5079
        %v5634 = vadd.f32 %v5633, %v5091
        %v5635 = vadd.f32 %v5634, %v5103
        %v5636 = vadd.f32 %v5635, %v5115
        %v5637 = vadd.f32 %v5636, %v5127
        %v5638 = vadd.f32 %v5637, %v5139
        %v5639 = vadd.f32 %v5638, %v5151
        %v5640 = vadd.f32 %v5639, %v5163
        %v5641 = vadd.f32 %v5640, %v5175
        %v5642 = vadd.f32 %v5641, %v5187
        %v5643 = vadd.f32 %v5642, %v5199
        %v5644 = vadd.f32 %v5643, %v5211
        %v5645 = vadd.f32 %v5644, %v5223
        %v5646 = vadd.f32 %v5645, %v5235
        %v5647 = vadd.f32 %v5646, %v5247
        %v5648 = vadd.f32 %v5647, %v5259
        %v5649 = vadd.f32 %v5648, %v5271
        %v5650 = vadd.f32 %v5649, %v5283
        %v5651 = vadd.f32 %v5650, %v5295
        %v5652 = vadd.f32 %v5651, %v5307
        %v5653 = vadd.f32 %v5652, %v5319
        %v5654 = vadd.f32 %v5653, %v5331
        %v5655 = vadd.f32 %v5654, %v5343
        %v5656 = vadd.f32 %v5655, %v5355
        %v5657 = vadd.f32 %v5656, %v5367
        %v5658 = vadd.f32 %v5657, %v5379
        %v5659 = vadd.f32 %v5658, %v5391
        %v5660 = vadd.f32 %v5659, %v5403
        %v5661 = vadd.f32 %v5660, %v5415
        %v5662 = vadd.f32 %v5661, %v5427
        %v5663 = vadd.f32 %v5662, %v5439
        %v5664 = vrot.slane %v5663, 4
        %v5665 = vadd.f32 %v5663, %v5664
        %v5666 = vrot.slane %v5665, 2
        %v5667 = vadd.f32 %v5665, %v5666
        %v5668 = vrot.slane %v5667, 1
        %v5669 = vadd.f32 %v5667, %v5668
        %v5670 = vadd.f32 %v5068, %v5080
        %v5671 = vadd.f32 %v5670, %v5092
        %v5672 = vadd.f32 %v5671, %v5104
        %v5673 = vadd.f32 %v5672, %v5116
        %v5674 = vadd.f32 %v5673, %v5128
        %v5675 = vadd.f32 %v5674, %v5140
        %v5676 = vadd.f32 %v5675, %v5152
        %v5677 = vadd.f32 %v5676, %v5164
        %v5678 = vadd.f32 %v5677, %v5176
        %v5679 = vadd.f32 %v5678, %v5188
        %v5680 = vadd.f32 %v5679, %v5200
        %v5681 = vadd.f32 %v5680, %v5212
        %v5682 = vadd.f32 %v5681, %v5224
        %v5683 = vadd.f32 %v5682, %v5236
        %v5684 = vadd.f32 %v5683, %v5248
        %v5685 = vadd.f32 %v5684, %v5260
        %v5686 = vadd.f32 %v5685, %v5272
        %v5687 = vadd.f32 %v5686, %v5284
        %v5688 = vadd.f32 %v5687, %v5296
        %v5689 = vadd.f32 %v5688, %v5308
        %v5690 = vadd.f32 %v5689, %v5320
        %v5691 = vadd.f32 %v5690, %v5332
        %v5692 = vadd.f32 %v5691, %v5344
        %v5693 = vadd.f32 %v5692, %v5356
        %v5694 = vadd.f32 %v5693, %v5368
        %v5695 = vadd.f32 %v5694, %v5380
        %v5696 = vadd.f32 %v5695, %v5392
        %v5697 = vadd.f32 %v5696, %v5404
        %v5698 = vadd.f32 %v5697, %v5416
        %v5699 = vadd.f32 %v5698, %v5428
        %v5700 = vadd.f32 %v5699, %v5440
        %v5701 = vrot.slane %v5700, 4
        %v5702 = vadd.f32 %v5700, %v5701
        %v5703 = vrot.slane %v5702, 2
        %v5704 = vadd.f32 %v5702, %v5703
        %v5705 = vrot.slane %v5704, 1
        %v5706 = vadd.f32 %v5704, %v5705
        %v5707 = vadd.f32 %v5069, %v5081
        %v5708 = vadd.f32 %v5707, %v5093
        %v5709 = vadd.f32 %v5708, %v5105
        %v5710 = vadd.f32 %v5709, %v5117
        %v5711 = vadd.f32 %v5710, %v5129
        %v5712 = vadd.f32 %v5711, %v5141
        %v5713 = vadd.f32 %v5712, %v5153
        %v5714 = vadd.f32 %v5713, %v5165
        %v5715 = vadd.f32 %v5714, %v5177
        %v5716 = vadd.f32 %v5715, %v5189
        %v5717 = vadd.f32 %v5716, %v5201
        %v5718 = vadd.f32 %v5717, %v5213
        %v5719 = vadd.f32 %v5718, %v5225
        %v5720 = vadd.f32 %v5719, %v5237
        %v5721 = vadd.f32 %v5720, %v5249
        %v5722 = vadd.f32 %v5721, %v5261
        %v5723 = vadd.f32 %v5722, %v5273
        %v5724 = vadd.f32 %v5723, %v5285
        %v5725 = vadd.f32 %v5724, %v5297
        %v5726 = vadd.f32 %v5725, %v5309
        %v5727 = vadd.f32 %v5726, %v5321
        %v5728 = vadd.f32 %v5727, %v5333
        %v5729 = vadd.f32 %v5728, %v5345
        %v5730 = vadd.f32 %v5729, %v5357
        %v5731 = vadd.f32 %v5730, %v5369
        %v5732 = vadd.f32 %v5731, %v5381
        %v5733 = vadd.f32 %v5732, %v5393
        %v5734 = vadd.f32 %v5733, %v5405
        %v5735 = vadd.f32 %v5734, %v5417
        %v5736 = vadd.f32 %v5735, %v5429
        %v5737 = vadd.f32 %v5736, %v5441
        %v5738 = vrot.slane %v5737, 4
        %v5739 = vadd.f32 %v5737, %v5738
        %v5740 = vrot.slane %v5739, 2
        %v5741 = vadd.f32 %v5739, %v5740
        %v5742 = vrot.slane %v5741, 1
        %v5743 = vadd.f32 %v5741, %v5742
        %v5744 = vadd.f32 %v5070, %v5082
        %v5745 = vadd.f32 %v5744, %v5094
        %v5746 = vadd.f32 %v5745, %v5106
        %v5747 = vadd.f32 %v5746, %v5118
        %v5748 = vadd.f32 %v5747, %v5130
        %v5749 = vadd.f32 %v5748, %v5142
        %v5750 = vadd.f32 %v5749, %v5154
        %v5751 = vadd.f32 %v5750, %v5166
        %v5752 = vadd.f32 %v5751, %v5178
        %v5753 = vadd.f32 %v5752, %v5190
        %v5754 = vadd.f32 %v5753, %v5202
        %v5755 = vadd.f32 %v5754, %v5214
        %v5756 = vadd.f32 %v5755, %v5226
        %v5757 = vadd.f32 %v5756, %v5238
        %v5758 = vadd.f32 %v5757, %v5250
        %v5759 = vadd.f32 %v5758, %v5262
        %v5760 = vadd.f32 %v5759, %v5274
        %v5761 = vadd.f32 %v5760, %v5286
        %v5762 = vadd.f32 %v5761, %v5298
        %v5763 = vadd.f32 %v5762, %v5310
        %v5764 = vadd.f32 %v5763, %v5322
        %v5765 = vadd.f32 %v5764, %v5334
        %v5766 = vadd.f32 %v5765, %v5346
        %v5767 = vadd.f32 %v5766, %v5358
        %v5768 = vadd.f32 %v5767, %v5370
        %v5769 = vadd.f32 %v5768, %v5382
        %v5770 = vadd.f32 %v5769, %v5394
        %v5771 = vadd.f32 %v5770, %v5406
        %v5772 = vadd.f32 %v5771, %v5418
        %v5773 = vadd.f32 %v5772, %v5430
        %v5774 = vadd.f32 %v5773, %v5442
        %v5775 = vrot.slane %v5774, 4
        %v5776 = vadd.f32 %v5774, %v5775
        %v5777 = vrot.slane %v5776, 2
        %v5778 = vadd.f32 %v5776, %v5777
        %v5779 = vrot.slane %v5778, 1
        %v5780 = vadd.f32 %v5778, %v5779
        %v5781 = vadd.f32 %v5071, %v5083
        %v5782 = vadd.f32 %v5781, %v5095
        %v5783 = vadd.f32 %v5782, %v5107
        %v5784 = vadd.f32 %v5783, %v5119
        %v5785 = vadd.f32 %v5784, %v5131
        %v5786 = vadd.f32 %v5785, %v5143
        %v5787 = vadd.f32 %v5786, %v5155
        %v5788 = vadd.f32 %v5787, %v5167
        %v5789 = vadd.f32 %v5788, %v5179
        %v5790 = vadd.f32 %v5789, %v5191
        %v5791 = vadd.f32 %v5790, %v5203
        %v5792 = vadd.f32 %v5791, %v5215
        %v5793 = vadd.f32 %v5792, %v5227
        %v5794 = vadd.f32 %v5793, %v5239
        %v5795 = vadd.f32 %v5794, %v5251
        %v5796 = vadd.f32 %v5795, %v5263
        %v5797 = vadd.f32 %v5796, %v5275
        %v5798 = vadd.f32 %v5797, %v5287
        %v5799 = vadd.f32 %v5798, %v5299
        %v5800 = vadd.f32 %v5799, %v5311
        %v5801 = vadd.f32 %v5800, %v5323
        %v5802 = vadd.f32 %v5801, %v5335
        %v5803 = vadd.f32 %v5802, %v5347
        %v5804 = vadd.f32 %v5803, %v5359
        %v5805 = vadd.f32 %v5804, %v5371
        %v5806 = vadd.f32 %v5805, %v5383
        %v5807 = vadd.f32 %v5806, %v5395
        %v5808 = vadd.f32 %v5807, %v5407
        %v5809 = vadd.f32 %v5808, %v5419
        %v5810 = vadd.f32 %v5809, %v5431
        %v5811 = vadd.f32 %v5810, %v5443
        %v5812 = vrot.slane %v5811, 4
        %v5813 = vadd.f32 %v5811, %v5812
        %v5814 = vrot.slane %v5813, 2
        %v5815 = vadd.f32 %v5813, %v5814
        %v5816 = vrot.slane %v5815, 1
        %v5817 = vadd.f32 %v5815, %v5816
        %v5818 = vadd.f32 %v5072, %v5084
        %v5819 = vadd.f32 %v5818, %v5096
        %v5820 = vadd.f32 %v5819, %v5108
        %v5821 = vadd.f32 %v5820, %v5120
        %v5822 = vadd.f32 %v5821, %v5132
        %v5823 = vadd.f32 %v5822, %v5144
        %v5824 = vadd.f32 %v5823, %v5156
        %v5825 = vadd.f32 %v5824, %v5168
        %v5826 = vadd.f32 %v5825, %v5180
        %v5827 = vadd.f32 %v5826, %v5192
        %v5828 = vadd.f32 %v5827, %v5204
        %v5829 = vadd.f32 %v5828, %v5216
        %v5830 = vadd.f32 %v5829, %v5228
        %v5831 = vadd.f32 %v5830, %v5240
        %v5832 = vadd.f32 %v5831, %v5252
        %v5833 = vadd.f32 %v5832, %v5264
        %v5834 = vadd.f32 %v5833, %v5276
        %v5835 = vadd.f32 %v5834, %v5288
        %v5836 = vadd.f32 %v5835, %v5300
        %v5837 = vadd.f32 %v5836, %v5312
        %v5838 = vadd.f32 %v5837, %v5324
        %v5839 = vadd.f32 %v5838, %v5336
        %v5840 = vadd.f32 %v5839, %v5348
        %v5841 = vadd.f32 %v5840, %v5360
        %v5842 = vadd.f32 %v5841, %v5372
        %v5843 = vadd.f32 %v5842, %v5384
        %v5844 = vadd.f32 %v5843, %v5396
        %v5845 = vadd.f32 %v5844, %v5408
        %v5846 = vadd.f32 %v5845, %v5420
        %v5847 = vadd.f32 %v5846, %v5432
        %v5848 = vadd.f32 %v5847, %v5444
        %v5849 = vrot.slane %v5848, 4
        %v5850 = vadd.f32 %v5848, %v5849
        %v5851 = vrot.slane %v5850, 2
        %v5852 = vadd.f32 %v5850, %v5851
        %v5853 = vrot.slane %v5852, 1
        %v5854 = vadd.f32 %v5852, %v5853
        %v5855 = vadd.f32 %v5073, %v5085
        %v5856 = vadd.f32 %v5855, %v5097
        %v5857 = vadd.f32 %v5856, %v5109
        %v5858 = vadd.f32 %v5857, %v5121
        %v5859 = vadd.f32 %v5858, %v5133
        %v5860 = vadd.f32 %v5859, %v5145
        %v5861 = vadd.f32 %v5860, %v5157
        %v5862 = vadd.f32 %v5861, %v5169
        %v5863 = vadd.f32 %v5862, %v5181
        %v5864 = vadd.f32 %v5863, %v5193
        %v5865 = vadd.f32 %v5864, %v5205
        %v5866 = vadd.f32 %v5865, %v5217
        %v5867 = vadd.f32 %v5866, %v5229
        %v5868 = vadd.f32 %v5867, %v5241
        %v5869 = vadd.f32 %v5868, %v5253
        %v5870 = vadd.f32 %v5869, %v5265
        %v5871 = vadd.f32 %v5870, %v5277
        %v5872 = vadd.f32 %v5871, %v5289
        %v5873 = vadd.f32 %v5872, %v5301
        %v5874 = vadd.f32 %v5873, %v5313
        %v5875 = vadd.f32 %v5874, %v5325
        %v5876 = vadd.f32 %v5875, %v5337
        %v5877 = vadd.f32 %v5876, %v5349
        %v5878 = vadd.f32 %v5877, %v5361
        %v5879 = vadd.f32 %v5878, %v5373
        %v5880 = vadd.f32 %v5879, %v5385
        %v5881 = vadd.f32 %v5880, %v5397
        %v5882 = vadd.f32 %v5881, %v5409
        %v5883 = vadd.f32 %v5882, %v5421
        %v5884 = vadd.f32 %v5883, %v5433
        %v5885 = vadd.f32 %v5884, %v5445
        %v5886 = vrot.slane %v5885, 4
        %v5887 = vadd.f32 %v5885, %v5886
        %v5888 = vrot.slane %v5887, 2
        %v5889 = vadd.f32 %v5887, %v5888
        %v5890 = vrot.slane %v5889, 1
        %v5891 = vadd.f32 %v5889, %v5890
        %v5904 = vcombine.low %v5484, %v5521
        %v5905 = vcombine.low %v5558, %v5595
        %v5906 = vcombine.low %v5632, %v5669
        %v5907 = vcombine.low %v5706, %v5743
        %v5909 = vunpack.c.l.s4 1966171168
        %v5910 = vunpack.c.0.s8 %v5909
        %v5911 = vlaneseq
        %v5912 = vshrl.u32 %v5911, 7
        %v5913 = vsub.s32 %v5910, %v5912
        %v5914 = vrot.slane %v5904, %v5913
        %v5916 = vunpack.c.l.s4 1966171168
        %v5917 = vunpack.c.0.s8 %v5916
        %v5918 = vlaneseq
        %v5919 = vshrl.u32 %v5918, 7
        %v5920 = vsub.s32 %v5917, %v5919
        %v5921 = vrot.slane %v5905, %v5920
        %v5923 = vunpack.c.l.s4 1966171168
        %v5924 = vunpack.c.0.s8 %v5923
        %v5925 = vlaneseq
        %v5926 = vshrl.u32 %v5925, 7
        %v5927 = vsub.s32 %v5924, %v5926
        %v5928 = vrot.slane %v5906, %v5927
        %v5930 = vunpack.c.l.s4 1966171168
        %v5931 = vunpack.c.0.s8 %v5930
        %v5932 = vlaneseq
        %v5933 = vshrl.u32 %v5932, 7
        %v5934 = vsub.s32 %v5931, %v5933
        %v5935 = vrot.slane %v5907, %v5934
        %v5936 = vcombine.low %v5914, %v5921
        %v5937 = vcombine.low %v5928, %v5935
        %v5939 = vunpack.c.l.s4 1966171168
        %v5940 = vunpack.c.0.s8 %v5939
        %v5941 = vlaneseq
        %v5942 = vshrl.u32 %v5941, 7
        %v5943 = vsub.s32 %v5940, %v5942
        %v5944 = vrot.slane %v5936, %v5943
        %v5946 = vunpack.c.l.s4 1966171168
        %v5947 = vunpack.c.0.s8 %v5946
        %v5948 = vlaneseq
        %v5949 = vshrl.u32 %v5948, 7
        %v5950 = vsub.s32 %v5947, %v5949
        %v5951 = vrot.slane %v5937, %v5950
        %v5952 = vcombine.low %v5944, %v5951
        %v5953 = vcombine.low %v5780, %v5817
        %v5954 = vcombine.low %v5854, %v5891
        %v5956 = vunpack.c.l.s4 1966171168
        %v5957 = vunpack.c.0.s8 %v5956
        %v5958 = vlaneseq
        %v5959 = vshrl.u32 %v5958, 7
        %v5960 = vsub.s32 %v5957, %v5959
        %v5961 = vrot.slane %v5953, %v5960
        %v5963 = vunpack.c.l.s4 1966171168
        %v5964 = vunpack.c.0.s8 %v5963
        %v5965 = vlaneseq
        %v5966 = vshrl.u32 %v5965, 7
        %v5967 = vsub.s32 %v5964, %v5966
        %v5968 = vrot.slane %v5954, %v5967
        %v5969 = vcombine.low %v5961, %v5968
        %v5971 = vunpack.c.l.s4 1966171168
        %v5972 = vunpack.c.0.s8 %v5971
        %v5973 = vlaneseq
        %v5974 = vshrl.u32 %v5973, 7
        %v5975 = vsub.s32 %v5972, %v5974
        %v5976 = vrot.slane %v5969, %v5975
        %v5979 = vadd.f32 %v5446, %v5952
        %v5980 = vadd.f32 %v5447, %v5976
        %5981 = vst [vmem:[#allocation2] sm:$0xff] %v5979
        %v5982 = vlaneseq
        %vm5983 = vcmp.ge.s32.totalorder %v5982, 0
        %vm5984 = vcmp.lt.s32.totalorder %v5982, 512
        %vm5985 = vmand %vm5983, %vm5984
        %5986 = vst.msk [vmem:[#allocation2 + $0x8] sm:$0xf] %vm5985, %v5980
        // Predicated region
        $region61: #{efficientnet_b3_custom_forward.1} parent=55 // pred_check
          %p5987 = pneg %p359
        $region62: #{efficientnet_b3_custom_forward.1} parent=55 // pred_check_branch
          %5989 = sbr.rel (%p5987) target = $region64
        $region63: #{efficientnet_b3_custom_forward.1} parent=55 // pred_region
          %v5990 = vld [vmem:[#allocation2] sm:$0xff]
          %v5991 = vld [vmem:[#allocation2 + $0x8] sm:$0xf]
          %v5992 = vmul.f32 %v5990, 0.00390625
          %v5993 = vmul.f32 %v5991, 0.00390625
          %v5996 = vlaneseq
          %v5997 = vshrl.u32 %v5996, 7
          %v5998 = vsub.s32 0, %v5997
          %v5999 = vrot.slane %v5992, %v5998
          %v6000 = vlaneseq
          %v6001 = vshrl.u32 %v6000, 7
          %v6002 = vsub.s32 1, %v6001
          %v6003 = vrot.slane %v5992, %v6002
          %v6004 = vlaneseq
          %v6005 = vshrl.u32 %v6004, 7
          %v6006 = vsub.s32 2, %v6005
          %v6007 = vrot.slane %v5992, %v6006
          %v6008 = vlaneseq
          %v6009 = vshrl.u32 %v6008, 7
          %v6010 = vsub.s32 3, %v6009
          %v6011 = vrot.slane %v5992, %v6010
          %v6012 = vlaneseq
          %v6013 = vshrl.u32 %v6012, 7
          %v6014 = vsub.s32 4, %v6013
          %v6015 = vrot.slane %v5992, %v6014
          %v6016 = vlaneseq
          %v6017 = vshrl.u32 %v6016, 7
          %v6018 = vsub.s32 5, %v6017
          %v6019 = vrot.slane %v5992, %v6018
          %v6020 = vlaneseq
          %v6021 = vshrl.u32 %v6020, 7
          %v6022 = vsub.s32 6, %v6021
          %v6023 = vrot.slane %v5992, %v6022
          %v6024 = vlaneseq
          %v6025 = vshrl.u32 %v6024, 7
          %v6026 = vsub.s32 7, %v6025
          %v6027 = vrot.slane %v5992, %v6026
          %v6028 = vlaneseq
          %v6029 = vshrl.u32 %v6028, 7
          %v6030 = vsub.s32 0, %v6029
          %v6031 = vrot.slane %v5993, %v6030
          %v6032 = vlaneseq
          %v6033 = vshrl.u32 %v6032, 7
          %v6034 = vsub.s32 1, %v6033
          %v6035 = vrot.slane %v5993, %v6034
          %v6036 = vlaneseq
          %v6037 = vshrl.u32 %v6036, 7
          %v6038 = vsub.s32 2, %v6037
          %v6039 = vrot.slane %v5993, %v6038
          %v6040 = vlaneseq
          %v6041 = vshrl.u32 %v6040, 7
          %v6042 = vsub.s32 3, %v6041
          %v6043 = vrot.slane %v5993, %v6042
          %v6056 = vpack.c.bf16 %v5999, %v5999
          %v6057 = vpack.c.bf16 %v6003, %v6003
          %v6058 = vpack.c.bf16 %v6007, %v6007
          %v6059 = vpack.c.bf16 %v6011, %v6011
          %v6060 = vpack.c.bf16 %v6015, %v6015
          %v6061 = vpack.c.bf16 %v6019, %v6019
          %v6062 = vpack.c.bf16 %v6023, %v6023
          %v6063 = vpack.c.bf16 %v6027, %v6027
          %v6064 = vpack.c.bf16 %v6031, %v6031
          %v6065 = vpack.c.bf16 %v6035, %v6035
          %v6066 = vpack.c.bf16 %v6039, %v6039
          %v6067 = vpack.c.bf16 %v6043, %v6043
          %v6068 = vld [vmem:[%s5] sm:$0xff]
          %v6069 = vld [vmem:[%s5 + $0x8] sm:$0xff]
          %v6070 = vld [vmem:[%s5 + $0x10] sm:$0xff]
          %v6071 = vld [vmem:[%s5 + $0x18] sm:$0xff]
          %v6072 = vld [vmem:[%s5 + $0x20] sm:$0xff]
          %v6073 = vld [vmem:[%s5 + $0x28] sm:$0xff]
          %v6074 = vld [vmem:[%s5 + $0x30] sm:$0xff]
          %v6075 = vld [vmem:[%s5 + $0x38] sm:$0xff]
          %v6076 = vld [vmem:[%s5 + $0x40] sm:$0xff]
          %v6077 = vld [vmem:[%s5 + $0x48] sm:$0xff]
          %v6078 = vld [vmem:[%s5 + $0x50] sm:$0xff]
          %v6079 = vld [vmem:[%s5 + $0x58] sm:$0xff]
          %v6080 = vld [vmem:[%s5 + $0x60] sm:$0xff]
          %v6081 = vld [vmem:[%s5 + $0x68] sm:$0xff]
          %v6082 = vld [vmem:[%s5 + $0x70] sm:$0xff]
          %v6083 = vld [vmem:[%s5 + $0x78] sm:$0xff]
          %v6084 = vld [vmem:[%s5 + $0x80] sm:$0xff]
          %v6085 = vld [vmem:[%s5 + $0x88] sm:$0xff]
          %v6086 = vld [vmem:[%s5 + $0x90] sm:$0xff]
          %v6087 = vld [vmem:[%s5 + $0x98] sm:$0xff]
          %v6088 = vld [vmem:[%s5 + $0xa0] sm:$0xff]
          %v6089 = vld [vmem:[%s5 + $0xa8] sm:$0xff]
          %v6090 = vld [vmem:[%s5 + $0xb0] sm:$0xff]
          %v6091 = vld [vmem:[%s5 + $0xb8] sm:$0xff]
          %v6092 = vld [vmem:[%s5 + $0xc0] sm:$0xff]
          %v6093 = vld [vmem:[%s5 + $0xc8] sm:$0xff]
          %v6094 = vld [vmem:[%s5 + $0xd0] sm:$0xff]
          %v6095 = vld [vmem:[%s5 + $0xd8] sm:$0xff]
          %v6096 = vld [vmem:[%s5 + $0xe0] sm:$0xff]
          %v6097 = vld [vmem:[%s5 + $0xe8] sm:$0xff]
          %v6098 = vld [vmem:[%s5 + $0xf0] sm:$0xff]
          %v6099 = vld [vmem:[%s5 + $0xf8] sm:$0xff]
          %v6100 = vld [vmem:[%s5 + $0x100] sm:$0xff]
          %v6101 = vld [vmem:[%s5 + $0x108] sm:$0xff]
          %v6102 = vld [vmem:[%s5 + $0x110] sm:$0xff]
          %v6103 = vld [vmem:[%s5 + $0x118] sm:$0xff]
          %v6104 = vld [vmem:[%s5 + $0x120] sm:$0xff]
          %v6105 = vld [vmem:[%s5 + $0x128] sm:$0xff]
          %v6106 = vld [vmem:[%s5 + $0x130] sm:$0xff]
          %v6107 = vld [vmem:[%s5 + $0x138] sm:$0xff]
          %v6108 = vld [vmem:[%s5 + $0x140] sm:$0xff]
          %v6109 = vld [vmem:[%s5 + $0x148] sm:$0xff]
          %v6110 = vld [vmem:[%s5 + $0x150] sm:$0xff]
          %v6111 = vld [vmem:[%s5 + $0x158] sm:$0xff]
          %v6112 = vld [vmem:[%s5 + $0x160] sm:$0xff]
          %v6113 = vld [vmem:[%s5 + $0x168] sm:$0xff]
          %v6114 = vld [vmem:[%s5 + $0x170] sm:$0xff]
          %v6115 = vld [vmem:[%s5 + $0x178] sm:$0xff]
          %v6116 = vld [vmem:[%s5 + $0x180] sm:$0xff]
          %v6117 = vld [vmem:[%s5 + $0x188] sm:$0xff]
          %v6118 = vld [vmem:[%s5 + $0x190] sm:$0xff]
          %v6119 = vld [vmem:[%s5 + $0x198] sm:$0xff]
          %v6120 = vld [vmem:[%s5 + $0x1a0] sm:$0xff]
          %v6121 = vld [vmem:[%s5 + $0x1a8] sm:$0xff]
          %v6122 = vld [vmem:[%s5 + $0x1b0] sm:$0xff]
          %v6123 = vld [vmem:[%s5 + $0x1b8] sm:$0xff]
          %v6124 = vld [vmem:[%s5 + $0x1c0] sm:$0xff]
          %v6125 = vld [vmem:[%s5 + $0x1c8] sm:$0xff]
          %v6126 = vld [vmem:[%s5 + $0x1d0] sm:$0xff]
          %v6127 = vld [vmem:[%s5 + $0x1d8] sm:$0xff]
          %v6128 = vld [vmem:[%s5 + $0x1e0] sm:$0xff]
          %v6129 = vld [vmem:[%s5 + $0x1e8] sm:$0xff]
          %v6130 = vld [vmem:[%s5 + $0x1f0] sm:$0xff]
          %v6131 = vld [vmem:[%s5 + $0x1f8] sm:$0xff]
          %v6132 = vld [vmem:[%s5 + $0x200] sm:$0xff]
          %v6133 = vld [vmem:[%s5 + $0x208] sm:$0xff]
          %v6134 = vld [vmem:[%s5 + $0x210] sm:$0xff]
          %v6135 = vld [vmem:[%s5 + $0x218] sm:$0xff]
          %v6136 = vld [vmem:[%s5 + $0x220] sm:$0xff]
          %v6137 = vld [vmem:[%s5 + $0x228] sm:$0xff]
          %v6138 = vld [vmem:[%s5 + $0x230] sm:$0xff]
          %v6139 = vld [vmem:[%s5 + $0x238] sm:$0xff]
          %v6140 = vld [vmem:[%s5 + $0x240] sm:$0xff]
          %v6141 = vld [vmem:[%s5 + $0x248] sm:$0xff]
          %v6142 = vld [vmem:[%s5 + $0x250] sm:$0xff]
          %v6143 = vld [vmem:[%s5 + $0x258] sm:$0xff]
          %v6144 = vld [vmem:[%s5 + $0x260] sm:$0xff]
          %v6145 = vld [vmem:[%s5 + $0x268] sm:$0xff]
          %v6146 = vld [vmem:[%s5 + $0x270] sm:$0xff]
          %v6147 = vld [vmem:[%s5 + $0x278] sm:$0xff]
          %v6148 = vld [vmem:[%s5 + $0x280] sm:$0xff]
          %v6149 = vld [vmem:[%s5 + $0x288] sm:$0xff]
          %v6150 = vld [vmem:[%s5 + $0x290] sm:$0xff]
          %v6151 = vld [vmem:[%s5 + $0x298] sm:$0xff]
          %v6152 = vld [vmem:[%s5 + $0x2a0] sm:$0xff]
          %v6153 = vld [vmem:[%s5 + $0x2a8] sm:$0xff]
          %v6154 = vld [vmem:[%s5 + $0x2b0] sm:$0xff]
          %v6155 = vld [vmem:[%s5 + $0x2b8] sm:$0xff]
          %v6156 = vld [vmem:[%s5 + $0x2c0] sm:$0xff]
          %v6157 = vld [vmem:[%s5 + $0x2c8] sm:$0xff]
          %v6158 = vld [vmem:[%s5 + $0x2d0] sm:$0xff]
          %v6159 = vld [vmem:[%s5 + $0x2d8] sm:$0xff]
          %v6160 = vld [vmem:[%s5 + $0x2e0] sm:$0xff]
          %v6161 = vld [vmem:[%s5 + $0x2e8] sm:$0xff]
          %v6162 = vld [vmem:[%s5 + $0x2f0] sm:$0xff]
          %v6163 = vld [vmem:[%s5 + $0x2f8] sm:$0xff]
          %v6164 = vld [vmem:[%s5 + $0x300] sm:$0xff]
          %v6165 = vld [vmem:[%s5 + $0x308] sm:$0xff]
          %v6166 = vld [vmem:[%s5 + $0x310] sm:$0xff]
          %v6167 = vld [vmem:[%s5 + $0x318] sm:$0xff]
          %v6168 = vld [vmem:[%s5 + $0x320] sm:$0xff]
          %v6169 = vld [vmem:[%s5 + $0x328] sm:$0xff]
          %v6170 = vld [vmem:[%s5 + $0x330] sm:$0xff]
          %v6171 = vld [vmem:[%s5 + $0x338] sm:$0xff]
          %v6172 = vld [vmem:[%s5 + $0x340] sm:$0xff]
          %v6173 = vld [vmem:[%s5 + $0x348] sm:$0xff]
          %v6174 = vld [vmem:[%s5 + $0x350] sm:$0xff]
          %v6175 = vld [vmem:[%s5 + $0x358] sm:$0xff]
          %v6176 = vld [vmem:[%s5 + $0x360] sm:$0xff]
          %v6177 = vld [vmem:[%s5 + $0x368] sm:$0xff]
          %v6178 = vld [vmem:[%s5 + $0x370] sm:$0xff]
          %v6179 = vld [vmem:[%s5 + $0x378] sm:$0xff]
          %v6180 = vld [vmem:[%s5 + $0x380] sm:$0xff]
          %v6181 = vld [vmem:[%s5 + $0x388] sm:$0xff]
          %v6182 = vld [vmem:[%s5 + $0x390] sm:$0xff]
          %v6183 = vld [vmem:[%s5 + $0x398] sm:$0xff]
          %v6184 = vld [vmem:[%s5 + $0x3a0] sm:$0xff]
          %v6185 = vld [vmem:[%s5 + $0x3a8] sm:$0xff]
          %v6186 = vld [vmem:[%s5 + $0x3b0] sm:$0xff]
          %v6187 = vld [vmem:[%s5 + $0x3b8] sm:$0xff]
          %v6188 = vld [vmem:[%s5 + $0x3c0] sm:$0xff]
          %v6189 = vld [vmem:[%s5 + $0x3c8] sm:$0xff]
          %v6190 = vld [vmem:[%s5 + $0x3d0] sm:$0xff]
          %v6191 = vld [vmem:[%s5 + $0x3d8] sm:$0xff]
          %v6192 = vld [vmem:[%s5 + $0x3e0] sm:$0xff]
          %v6193 = vld [vmem:[%s5 + $0x3e8] sm:$0xff]
          %v6194 = vld [vmem:[%s5 + $0x3f0] sm:$0xff]
          %v6195 = vld [vmem:[%s5 + $0x3f8] sm:$0xff]
          %v6196 = vld [vmem:[%s5 + $0x400] sm:$0xff]
          %v6197 = vld [vmem:[%s5 + $0x408] sm:$0xff]
          %v6198 = vld [vmem:[%s5 + $0x410] sm:$0xff]
          %v6199 = vld [vmem:[%s5 + $0x418] sm:$0xff]
          %v6200 = vld [vmem:[%s5 + $0x420] sm:$0xff]
          %v6201 = vld [vmem:[%s5 + $0x428] sm:$0xff]
          %v6202 = vld [vmem:[%s5 + $0x430] sm:$0xff]
          %v6203 = vld [vmem:[%s5 + $0x438] sm:$0xff]
          %v6204 = vld [vmem:[%s5 + $0x440] sm:$0xff]
          %v6205 = vld [vmem:[%s5 + $0x448] sm:$0xff]
          %v6206 = vld [vmem:[%s5 + $0x450] sm:$0xff]
          %v6207 = vld [vmem:[%s5 + $0x458] sm:$0xff]
          %v6208 = vld [vmem:[%s5 + $0x460] sm:$0xff]
          %v6209 = vld [vmem:[%s5 + $0x468] sm:$0xff]
          %v6210 = vld [vmem:[%s5 + $0x470] sm:$0xff]
          %v6211 = vld [vmem:[%s5 + $0x478] sm:$0xff]
          %v6212 = vld [vmem:[%s5 + $0x480] sm:$0xff]
          %v6213 = vld [vmem:[%s5 + $0x488] sm:$0xff]
          %v6214 = vld [vmem:[%s5 + $0x490] sm:$0xff]
          %v6215 = vld [vmem:[%s5 + $0x498] sm:$0xff]
          %v6216 = vld [vmem:[%s5 + $0x4a0] sm:$0xff]
          %v6217 = vld [vmem:[%s5 + $0x4a8] sm:$0xff]
          %v6218 = vld [vmem:[%s5 + $0x4b0] sm:$0xff]
          %v6219 = vld [vmem:[%s5 + $0x4b8] sm:$0xff]
          %v6220 = vld [vmem:[%s5 + $0x4c0] sm:$0xff]
          %v6221 = vld [vmem:[%s5 + $0x4c8] sm:$0xff]
          %v6222 = vld [vmem:[%s5 + $0x4d0] sm:$0xff]
          %v6223 = vld [vmem:[%s5 + $0x4d8] sm:$0xff]
          %v6224 = vld [vmem:[%s5 + $0x4e0] sm:$0xff]
          %v6225 = vld [vmem:[%s5 + $0x4e8] sm:$0xff]
          %v6226 = vld [vmem:[%s5 + $0x4f0] sm:$0xff]
          %v6227 = vld [vmem:[%s5 + $0x4f8] sm:$0xff]
          %v6228 = vld [vmem:[%s5 + $0x500] sm:$0xff]
          %v6229 = vld [vmem:[%s5 + $0x508] sm:$0xff]
          %v6230 = vld [vmem:[%s5 + $0x510] sm:$0xff]
          %v6231 = vld [vmem:[%s5 + $0x518] sm:$0xff]
          %v6232 = vld [vmem:[%s5 + $0x520] sm:$0xff]
          %v6233 = vld [vmem:[%s5 + $0x528] sm:$0xff]
          %v6234 = vld [vmem:[%s5 + $0x530] sm:$0xff]
          %v6235 = vld [vmem:[%s5 + $0x538] sm:$0xff]
          %v6236 = vld [vmem:[%s5 + $0x540] sm:$0xff]
          %v6237 = vld [vmem:[%s5 + $0x548] sm:$0xff]
          %v6238 = vld [vmem:[%s5 + $0x550] sm:$0xff]
          %v6239 = vld [vmem:[%s5 + $0x558] sm:$0xff]
          %v6240 = vld [vmem:[%s5 + $0x560] sm:$0xff]
          %v6241 = vld [vmem:[%s5 + $0x568] sm:$0xff]
          %v6242 = vld [vmem:[%s5 + $0x570] sm:$0xff]
          %v6243 = vld [vmem:[%s5 + $0x578] sm:$0xff]
          %v6244 = vld [vmem:[%s5 + $0x580] sm:$0xff]
          %v6245 = vld [vmem:[%s5 + $0x588] sm:$0xff]
          %v6246 = vld [vmem:[%s5 + $0x590] sm:$0xff]
          %v6247 = vld [vmem:[%s5 + $0x598] sm:$0xff]
          %v6248 = vld [vmem:[%s5 + $0x5a0] sm:$0xff]
          %v6249 = vld [vmem:[%s5 + $0x5a8] sm:$0xff]
          %v6250 = vld [vmem:[%s5 + $0x5b0] sm:$0xff]
          %v6251 = vld [vmem:[%s5 + $0x5b8] sm:$0xff]
          %v6252 = vld [vmem:[%s5 + $0x5c0] sm:$0xff]
          %v6253 = vld [vmem:[%s5 + $0x5c8] sm:$0xff]
          %v6254 = vld [vmem:[%s5 + $0x5d0] sm:$0xff]
          %v6255 = vld [vmem:[%s5 + $0x5d8] sm:$0xff]
          %v6256 = vld [vmem:[%s5 + $0x5e0] sm:$0xff]
          %v6257 = vld [vmem:[%s5 + $0x5e8] sm:$0xff]
          %v6258 = vld [vmem:[%s5 + $0x5f0] sm:$0xff]
          %v6259 = vld [vmem:[%s5 + $0x5f8] sm:$0xff]
          %v6260 = vld [vmem:[%s5 + $0x600] sm:$0xff]
          %v6261 = vld [vmem:[%s5 + $0x608] sm:$0xff]
          %v6262 = vld [vmem:[%s5 + $0x610] sm:$0xff]
          %v6263 = vld [vmem:[%s5 + $0x618] sm:$0xff]
          %v6264 = vld [vmem:[%s5 + $0x620] sm:$0xff]
          %v6265 = vld [vmem:[%s5 + $0x628] sm:$0xff]
          %v6266 = vld [vmem:[%s5 + $0x630] sm:$0xff]
          %v6267 = vld [vmem:[%s5 + $0x638] sm:$0xff]
          %v6268 = vld [vmem:[%s5 + $0x640] sm:$0xff]
          %v6269 = vld [vmem:[%s5 + $0x648] sm:$0xff]
          %v6270 = vld [vmem:[%s5 + $0x650] sm:$0xff]
          %v6271 = vld [vmem:[%s5 + $0x658] sm:$0xff]
          %v6272 = vld [vmem:[%s5 + $0x660] sm:$0xff]
          %v6273 = vld [vmem:[%s5 + $0x668] sm:$0xff]
          %v6274 = vld [vmem:[%s5 + $0x670] sm:$0xff]
          %v6275 = vld [vmem:[%s5 + $0x678] sm:$0xff]
          %v6276 = vld [vmem:[%s5 + $0x680] sm:$0xff]
          %v6277 = vld [vmem:[%s5 + $0x688] sm:$0xff]
          %v6278 = vld [vmem:[%s5 + $0x690] sm:$0xff]
          %v6279 = vld [vmem:[%s5 + $0x698] sm:$0xff]
          %v6280 = vld [vmem:[%s5 + $0x6a0] sm:$0xff]
          %v6281 = vld [vmem:[%s5 + $0x6a8] sm:$0xff]
          %v6282 = vld [vmem:[%s5 + $0x6b0] sm:$0xff]
          %v6283 = vld [vmem:[%s5 + $0x6b8] sm:$0xff]
          %v6284 = vld [vmem:[%s5 + $0x6c0] sm:$0xff]
          %v6285 = vld [vmem:[%s5 + $0x6c8] sm:$0xff]
          %v6286 = vld [vmem:[%s5 + $0x6d0] sm:$0xff]
          %v6287 = vld [vmem:[%s5 + $0x6d8] sm:$0xff]
          %v6288 = vld [vmem:[%s5 + $0x6e0] sm:$0xff]
          %v6289 = vld [vmem:[%s5 + $0x6e8] sm:$0xff]
          %v6290 = vld [vmem:[%s5 + $0x6f0] sm:$0xff]
          %v6291 = vld [vmem:[%s5 + $0x6f8] sm:$0xff]
          %v6292 = vld [vmem:[%s5 + $0x700] sm:$0xff]
          %v6293 = vld [vmem:[%s5 + $0x708] sm:$0xff]
          %v6294 = vld [vmem:[%s5 + $0x710] sm:$0xff]
          %v6295 = vld [vmem:[%s5 + $0x718] sm:$0xff]
          %v6296 = vld [vmem:[%s5 + $0x720] sm:$0xff]
          %v6297 = vld [vmem:[%s5 + $0x728] sm:$0xff]
          %v6298 = vld [vmem:[%s5 + $0x730] sm:$0xff]
          %v6299 = vld [vmem:[%s5 + $0x738] sm:$0xff]
          %v6300 = vld [vmem:[%s5 + $0x740] sm:$0xff]
          %v6301 = vld [vmem:[%s5 + $0x748] sm:$0xff]
          %v6302 = vld [vmem:[%s5 + $0x750] sm:$0xff]
          %v6303 = vld [vmem:[%s5 + $0x758] sm:$0xff]
          %v6304 = vld [vmem:[%s5 + $0x760] sm:$0xff]
          %v6305 = vld [vmem:[%s5 + $0x768] sm:$0xff]
          %v6306 = vld [vmem:[%s5 + $0x770] sm:$0xff]
          %v6307 = vld [vmem:[%s5 + $0x778] sm:$0xff]
          %v6308 = vld [vmem:[%s5 + $0x780] sm:$0xff]
          %v6309 = vld [vmem:[%s5 + $0x788] sm:$0xff]
          %v6310 = vld [vmem:[%s5 + $0x790] sm:$0xff]
          %v6311 = vld [vmem:[%s5 + $0x798] sm:$0xff]
          %v6312 = vld [vmem:[%s5 + $0x7a0] sm:$0xff]
          %v6313 = vld [vmem:[%s5 + $0x7a8] sm:$0xff]
          %v6314 = vld [vmem:[%s5 + $0x7b0] sm:$0xff]
          %v6315 = vld [vmem:[%s5 + $0x7b8] sm:$0xff]
          %v6316 = vld [vmem:[%s5 + $0x7c0] sm:$0xff]
          %v6317 = vld [vmem:[%s5 + $0x7c8] sm:$0xff]
          %v6318 = vld [vmem:[%s5 + $0x7d0] sm:$0xff]
          %v6319 = vld [vmem:[%s5 + $0x7d8] sm:$0xff]
          %v6320 = vld [vmem:[%s5 + $0x7e0] sm:$0xff]
          %v6321 = vld [vmem:[%s5 + $0x7e8] sm:$0xff]
          %v6322 = vld [vmem:[%s5 + $0x7f0] sm:$0xff]
          %v6323 = vld [vmem:[%s5 + $0x7f8] sm:$0xff]
          %v6324 = vld [vmem:[%s5 + $0x800] sm:$0xff]
          %v6325 = vld [vmem:[%s5 + $0x808] sm:$0xff]
          %v6326 = vld [vmem:[%s5 + $0x810] sm:$0xff]
          %v6327 = vld [vmem:[%s5 + $0x818] sm:$0xff]
          %v6328 = vld [vmem:[%s5 + $0x820] sm:$0xff]
          %v6329 = vld [vmem:[%s5 + $0x828] sm:$0xff]
          %v6330 = vld [vmem:[%s5 + $0x830] sm:$0xff]
          %v6331 = vld [vmem:[%s5 + $0x838] sm:$0xff]
          %v6332 = vld [vmem:[%s5 + $0x840] sm:$0xff]
          %v6333 = vld [vmem:[%s5 + $0x848] sm:$0xff]
          %v6334 = vld [vmem:[%s5 + $0x850] sm:$0xff]
          %v6335 = vld [vmem:[%s5 + $0x858] sm:$0xff]
          %v6336 = vld [vmem:[%s5 + $0x860] sm:$0xff]
          %v6337 = vld [vmem:[%s5 + $0x868] sm:$0xff]
          %v6338 = vld [vmem:[%s5 + $0x870] sm:$0xff]
          %v6339 = vld [vmem:[%s5 + $0x878] sm:$0xff]
          %v6340 = vld [vmem:[%s5 + $0x880] sm:$0xff]
          %v6341 = vld [vmem:[%s5 + $0x888] sm:$0xff]
          %v6342 = vld [vmem:[%s5 + $0x890] sm:$0xff]
          %v6343 = vld [vmem:[%s5 + $0x898] sm:$0xff]
          %v6344 = vld [vmem:[%s5 + $0x8a0] sm:$0xff]
          %v6345 = vld [vmem:[%s5 + $0x8a8] sm:$0xff]
          %v6346 = vld [vmem:[%s5 + $0x8b0] sm:$0xff]
          %v6347 = vld [vmem:[%s5 + $0x8b8] sm:$0xff]
          %v6348 = vld [vmem:[%s5 + $0x8c0] sm:$0xff]
          %v6349 = vld [vmem:[%s5 + $0x8c8] sm:$0xff]
          %v6350 = vld [vmem:[%s5 + $0x8d0] sm:$0xff]
          %v6351 = vld [vmem:[%s5 + $0x8d8] sm:$0xff]
          %v6352 = vld [vmem:[%s5 + $0x8e0] sm:$0xff]
          %v6353 = vld [vmem:[%s5 + $0x8e8] sm:$0xff]
          %v6354 = vld [vmem:[%s5 + $0x8f0] sm:$0xff]
          %v6355 = vld [vmem:[%s5 + $0x8f8] sm:$0xff]
          %v6356 = vld [vmem:[%s5 + $0x900] sm:$0xff]
          %v6357 = vld [vmem:[%s5 + $0x908] sm:$0xff]
          %v6358 = vld [vmem:[%s5 + $0x910] sm:$0xff]
          %v6359 = vld [vmem:[%s5 + $0x918] sm:$0xff]
          %v6360 = vld [vmem:[%s5 + $0x920] sm:$0xff]
          %v6361 = vld [vmem:[%s5 + $0x928] sm:$0xff]
          %v6362 = vld [vmem:[%s5 + $0x930] sm:$0xff]
          %v6363 = vld [vmem:[%s5 + $0x938] sm:$0xff]
          %v6364 = vld [vmem:[%s5 + $0x940] sm:$0xff]
          %v6365 = vld [vmem:[%s5 + $0x948] sm:$0xff]
          %v6366 = vld [vmem:[%s5 + $0x950] sm:$0xff]
          %v6367 = vld [vmem:[%s5 + $0x958] sm:$0xff]
          %v6368 = vld [vmem:[%s5 + $0x960] sm:$0xff]
          %v6369 = vld [vmem:[%s5 + $0x968] sm:$0xff]
          %v6370 = vld [vmem:[%s5 + $0x970] sm:$0xff]
          %v6371 = vld [vmem:[%s5 + $0x978] sm:$0xff]
          %v6372 = vld [vmem:[%s5 + $0x980] sm:$0xff]
          %v6373 = vld [vmem:[%s5 + $0x988] sm:$0xff]
          %v6374 = vld [vmem:[%s5 + $0x990] sm:$0xff]
          %v6375 = vld [vmem:[%s5 + $0x998] sm:$0xff]
          %v6376 = vld [vmem:[%s5 + $0x9a0] sm:$0xff]
          %v6377 = vld [vmem:[%s5 + $0x9a8] sm:$0xff]
          %v6378 = vld [vmem:[%s5 + $0x9b0] sm:$0xff]
          %v6379 = vld [vmem:[%s5 + $0x9b8] sm:$0xff]
          %v6380 = vld [vmem:[%s5 + $0x9c0] sm:$0xff]
          %v6381 = vld [vmem:[%s5 + $0x9c8] sm:$0xff]
          %v6382 = vld [vmem:[%s5 + $0x9d0] sm:$0xff]
          %v6383 = vld [vmem:[%s5 + $0x9d8] sm:$0xff]
          %v6384 = vld [vmem:[%s5 + $0x9e0] sm:$0xff]
          %v6385 = vld [vmem:[%s5 + $0x9e8] sm:$0xff]
          %v6386 = vld [vmem:[%s5 + $0x9f0] sm:$0xff]
          %v6387 = vld [vmem:[%s5 + $0x9f8] sm:$0xff]
          %v6388 = vld [vmem:[%s5 + $0xa00] sm:$0xff]
          %v6389 = vld [vmem:[%s5 + $0xa08] sm:$0xff]
          %v6390 = vld [vmem:[%s5 + $0xa10] sm:$0xff]
          %v6391 = vld [vmem:[%s5 + $0xa18] sm:$0xff]
          %v6392 = vld [vmem:[%s5 + $0xa20] sm:$0xff]
          %v6393 = vld [vmem:[%s5 + $0xa28] sm:$0xff]
          %v6394 = vld [vmem:[%s5 + $0xa30] sm:$0xff]
          %v6395 = vld [vmem:[%s5 + $0xa38] sm:$0xff]
          %v6396 = vld [vmem:[%s5 + $0xa40] sm:$0xff]
          %v6397 = vld [vmem:[%s5 + $0xa48] sm:$0xff]
          %v6398 = vld [vmem:[%s5 + $0xa50] sm:$0xff]
          %v6399 = vld [vmem:[%s5 + $0xa58] sm:$0xff]
          %v6400 = vld [vmem:[%s5 + $0xa60] sm:$0xff]
          %v6401 = vld [vmem:[%s5 + $0xa68] sm:$0xff]
          %v6402 = vld [vmem:[%s5 + $0xa70] sm:$0xff]
          %v6403 = vld [vmem:[%s5 + $0xa78] sm:$0xff]
          %v6404 = vld [vmem:[%s5 + $0xa80] sm:$0xff]
          %v6405 = vld [vmem:[%s5 + $0xa88] sm:$0xff]
          %v6406 = vld [vmem:[%s5 + $0xa90] sm:$0xff]
          %v6407 = vld [vmem:[%s5 + $0xa98] sm:$0xff]
          %v6408 = vld [vmem:[%s5 + $0xaa0] sm:$0xff]
          %v6409 = vld [vmem:[%s5 + $0xaa8] sm:$0xff]
          %v6410 = vld [vmem:[%s5 + $0xab0] sm:$0xff]
          %v6411 = vld [vmem:[%s5 + $0xab8] sm:$0xff]
          %v6412 = vld [vmem:[%s5 + $0xac0] sm:$0xff]
          %v6413 = vld [vmem:[%s5 + $0xac8] sm:$0xff]
          %v6414 = vld [vmem:[%s5 + $0xad0] sm:$0xff]
          %v6415 = vld [vmem:[%s5 + $0xad8] sm:$0xff]
          %v6416 = vld [vmem:[%s5 + $0xae0] sm:$0xff]
          %v6417 = vld [vmem:[%s5 + $0xae8] sm:$0xff]
          %v6418 = vld [vmem:[%s5 + $0xaf0] sm:$0xff]
          %v6419 = vld [vmem:[%s5 + $0xaf8] sm:$0xff]
          %v6420 = vld [vmem:[%s5 + $0xb00] sm:$0xff]
          %v6421 = vld [vmem:[%s5 + $0xb08] sm:$0xff]
          %v6422 = vld [vmem:[%s5 + $0xb10] sm:$0xff]
          %v6423 = vld [vmem:[%s5 + $0xb18] sm:$0xff]
          %v6424 = vld [vmem:[%s5 + $0xb20] sm:$0xff]
          %v6425 = vld [vmem:[%s5 + $0xb28] sm:$0xff]
          %v6426 = vld [vmem:[%s5 + $0xb30] sm:$0xff]
          %v6427 = vld [vmem:[%s5 + $0xb38] sm:$0xff]
          %v6428 = vld [vmem:[%s5 + $0xb40] sm:$0xff]
          %v6429 = vld [vmem:[%s5 + $0xb48] sm:$0xff]
          %v6430 = vld [vmem:[%s5 + $0xb50] sm:$0xff]
          %v6431 = vld [vmem:[%s5 + $0xb58] sm:$0xff]
          %v6432 = vld [vmem:[%s5 + $0xb60] sm:$0xff]
          %v6433 = vld [vmem:[%s5 + $0xb68] sm:$0xff]
          %v6434 = vld [vmem:[%s5 + $0xb70] sm:$0xff]
          %v6435 = vld [vmem:[%s5 + $0xb78] sm:$0xff]
          %v6436 = vld [vmem:[%s5 + $0xb80] sm:$0xff]
          %v6437 = vld [vmem:[%s5 + $0xb88] sm:$0xff]
          %v6438 = vld [vmem:[%s5 + $0xb90] sm:$0xff]
          %v6439 = vld [vmem:[%s5 + $0xb98] sm:$0xff]
          %v6440 = vld [vmem:[%s5 + $0xba0] sm:$0xff]
          %v6441 = vld [vmem:[%s5 + $0xba8] sm:$0xff]
          %v6442 = vld [vmem:[%s5 + $0xbb0] sm:$0xff]
          %v6443 = vld [vmem:[%s5 + $0xbb8] sm:$0xff]
          %v6444 = vld [vmem:[%s5 + $0xbc0] sm:$0xff]
          %v6445 = vld [vmem:[%s5 + $0xbc8] sm:$0xff]
          %v6446 = vld [vmem:[%s5 + $0xbd0] sm:$0xff]
          %v6447 = vld [vmem:[%s5 + $0xbd8] sm:$0xff]
          %v6448 = vld [vmem:[%s5 + $0xbe0] sm:$0xff]
          %v6449 = vld [vmem:[%s5 + $0xbe8] sm:$0xff]
          %v6450 = vld [vmem:[%s5 + $0xbf0] sm:$0xff]
          %v6451 = vld [vmem:[%s5 + $0xbf8] sm:$0xff]
          %v6452 = vld [vmem:[%s6] sm:$0xf]
          %v6837 = vunpack.c.l.b16 %v6068
          %v6838 = vunpack.c.h.b16 %v6068
          %v6839 = vunpack.c.l.b16 %v6069
          %v6840 = vunpack.c.h.b16 %v6069
          %v6841 = vunpack.c.l.b16 %v6070
          %v6842 = vunpack.c.h.b16 %v6070
          %v6843 = vunpack.c.l.b16 %v6071
          %v6844 = vunpack.c.h.b16 %v6071
          %v6845 = vunpack.c.l.b16 %v6072
          %v6846 = vunpack.c.h.b16 %v6072
          %v6847 = vunpack.c.l.b16 %v6073
          %v6848 = vunpack.c.h.b16 %v6073
          %v6849 = vunpack.c.l.b16 %v6074
          %v6850 = vunpack.c.h.b16 %v6074
          %v6851 = vunpack.c.l.b16 %v6075
          %v6852 = vunpack.c.h.b16 %v6075
          %v6853 = vunpack.c.l.b16 %v6076
          %v6854 = vunpack.c.h.b16 %v6076
          %v6855 = vunpack.c.l.b16 %v6077
          %v6856 = vunpack.c.h.b16 %v6077
          %v6857 = vunpack.c.l.b16 %v6078
          %v6858 = vunpack.c.h.b16 %v6078
          %v6859 = vunpack.c.l.b16 %v6079
          %v6860 = vunpack.c.h.b16 %v6079
          %v6861 = vunpack.c.l.b16 %v6080
          %v6862 = vunpack.c.h.b16 %v6080
          %v6863 = vunpack.c.l.b16 %v6081
          %v6864 = vunpack.c.h.b16 %v6081
          %v6865 = vunpack.c.l.b16 %v6082
          %v6866 = vunpack.c.h.b16 %v6082
          %v6867 = vunpack.c.l.b16 %v6083
          %v6868 = vunpack.c.h.b16 %v6083
          %v6869 = vunpack.c.l.b16 %v6084
          %v6870 = vunpack.c.h.b16 %v6084
          %v6871 = vunpack.c.l.b16 %v6085
          %v6872 = vunpack.c.h.b16 %v6085
          %v6873 = vunpack.c.l.b16 %v6086
          %v6874 = vunpack.c.h.b16 %v6086
          %v6875 = vunpack.c.l.b16 %v6087
          %v6876 = vunpack.c.h.b16 %v6087
          %v6877 = vunpack.c.l.b16 %v6088
          %v6878 = vunpack.c.h.b16 %v6088
          %v6879 = vunpack.c.l.b16 %v6089
          %v6880 = vunpack.c.h.b16 %v6089
          %v6881 = vunpack.c.l.b16 %v6090
          %v6882 = vunpack.c.h.b16 %v6090
          %v6883 = vunpack.c.l.b16 %v6091
          %v6884 = vunpack.c.h.b16 %v6091
          %v6885 = vunpack.c.l.b16 %v6092
          %v6886 = vunpack.c.h.b16 %v6092
          %v6887 = vunpack.c.l.b16 %v6093
          %v6888 = vunpack.c.h.b16 %v6093
          %v6889 = vunpack.c.l.b16 %v6094
          %v6890 = vunpack.c.h.b16 %v6094
          %v6891 = vunpack.c.l.b16 %v6095
          %v6892 = vunpack.c.h.b16 %v6095
          %v6893 = vunpack.c.l.b16 %v6096
          %v6894 = vunpack.c.h.b16 %v6096
          %v6895 = vunpack.c.l.b16 %v6097
          %v6896 = vunpack.c.h.b16 %v6097
          %v6897 = vunpack.c.l.b16 %v6098
          %v6898 = vunpack.c.h.b16 %v6098
          %v6899 = vunpack.c.l.b16 %v6099
          %v6900 = vunpack.c.h.b16 %v6099
          %v6901 = vunpack.c.l.b16 %v6100
          %v6902 = vunpack.c.h.b16 %v6100
          %v6903 = vunpack.c.l.b16 %v6101
          %v6904 = vunpack.c.h.b16 %v6101
          %v6905 = vunpack.c.l.b16 %v6102
          %v6906 = vunpack.c.h.b16 %v6102
          %v6907 = vunpack.c.l.b16 %v6103
          %v6908 = vunpack.c.h.b16 %v6103
          %v6909 = vunpack.c.l.b16 %v6104
          %v6910 = vunpack.c.h.b16 %v6104
          %v6911 = vunpack.c.l.b16 %v6105
          %v6912 = vunpack.c.h.b16 %v6105
          %v6913 = vunpack.c.l.b16 %v6106
          %v6914 = vunpack.c.h.b16 %v6106
          %v6915 = vunpack.c.l.b16 %v6107
          %v6916 = vunpack.c.h.b16 %v6107
          %v6917 = vunpack.c.l.b16 %v6108
          %v6918 = vunpack.c.h.b16 %v6108
          %v6919 = vunpack.c.l.b16 %v6109
          %v6920 = vunpack.c.h.b16 %v6109
          %v6921 = vunpack.c.l.b16 %v6110
          %v6922 = vunpack.c.h.b16 %v6110
          %v6923 = vunpack.c.l.b16 %v6111
          %v6924 = vunpack.c.h.b16 %v6111
          %v6925 = vunpack.c.l.b16 %v6112
          %v6926 = vunpack.c.h.b16 %v6112
          %v6927 = vunpack.c.l.b16 %v6113
          %v6928 = vunpack.c.h.b16 %v6113
          %v6929 = vunpack.c.l.b16 %v6114
          %v6930 = vunpack.c.h.b16 %v6114
          %v6931 = vunpack.c.l.b16 %v6115
          %v6932 = vunpack.c.h.b16 %v6115
          %v6933 = vunpack.c.l.b16 %v6116
          %v6934 = vunpack.c.h.b16 %v6116
          %v6935 = vunpack.c.l.b16 %v6117
          %v6936 = vunpack.c.h.b16 %v6117
          %v6937 = vunpack.c.l.b16 %v6118
          %v6938 = vunpack.c.h.b16 %v6118
          %v6939 = vunpack.c.l.b16 %v6119
          %v6940 = vunpack.c.h.b16 %v6119
          %v6941 = vunpack.c.l.b16 %v6120
          %v6942 = vunpack.c.h.b16 %v6120
          %v6943 = vunpack.c.l.b16 %v6121
          %v6944 = vunpack.c.h.b16 %v6121
          %v6945 = vunpack.c.l.b16 %v6122
          %v6946 = vunpack.c.h.b16 %v6122
          %v6947 = vunpack.c.l.b16 %v6123
          %v6948 = vunpack.c.h.b16 %v6123
          %v6949 = vunpack.c.l.b16 %v6124
          %v6950 = vunpack.c.h.b16 %v6124
          %v6951 = vunpack.c.l.b16 %v6125
          %v6952 = vunpack.c.h.b16 %v6125
          %v6953 = vunpack.c.l.b16 %v6126
          %v6954 = vunpack.c.h.b16 %v6126
          %v6955 = vunpack.c.l.b16 %v6127
          %v6956 = vunpack.c.h.b16 %v6127
          %v6957 = vunpack.c.l.b16 %v6128
          %v6958 = vunpack.c.h.b16 %v6128
          %v6959 = vunpack.c.l.b16 %v6129
          %v6960 = vunpack.c.h.b16 %v6129
          %v6961 = vunpack.c.l.b16 %v6130
          %v6962 = vunpack.c.h.b16 %v6130
          %v6963 = vunpack.c.l.b16 %v6131
          %v6964 = vunpack.c.h.b16 %v6131
          %v6965 = vunpack.c.l.b16 %v6132
          %v6966 = vunpack.c.h.b16 %v6132
          %v6967 = vunpack.c.l.b16 %v6133
          %v6968 = vunpack.c.h.b16 %v6133
          %v6969 = vunpack.c.l.b16 %v6134
          %v6970 = vunpack.c.h.b16 %v6134
          %v6971 = vunpack.c.l.b16 %v6135
          %v6972 = vunpack.c.h.b16 %v6135
          %v6973 = vunpack.c.l.b16 %v6136
          %v6974 = vunpack.c.h.b16 %v6136
          %v6975 = vunpack.c.l.b16 %v6137
          %v6976 = vunpack.c.h.b16 %v6137
          %v6977 = vunpack.c.l.b16 %v6138
          %v6978 = vunpack.c.h.b16 %v6138
          %v6979 = vunpack.c.l.b16 %v6139
          %v6980 = vunpack.c.h.b16 %v6139
          %v6981 = vunpack.c.l.b16 %v6140
          %v6982 = vunpack.c.h.b16 %v6140
          %v6983 = vunpack.c.l.b16 %v6141
          %v6984 = vunpack.c.h.b16 %v6141
          %v6985 = vunpack.c.l.b16 %v6142
          %v6986 = vunpack.c.h.b16 %v6142
          %v6987 = vunpack.c.l.b16 %v6143
          %v6988 = vunpack.c.h.b16 %v6143
          %v6989 = vunpack.c.l.b16 %v6144
          %v6990 = vunpack.c.h.b16 %v6144
          %v6991 = vunpack.c.l.b16 %v6145
          %v6992 = vunpack.c.h.b16 %v6145
          %v6993 = vunpack.c.l.b16 %v6146
          %v6994 = vunpack.c.h.b16 %v6146
          %v6995 = vunpack.c.l.b16 %v6147
          %v6996 = vunpack.c.h.b16 %v6147
          %v6997 = vunpack.c.l.b16 %v6148
          %v6998 = vunpack.c.h.b16 %v6148
          %v6999 = vunpack.c.l.b16 %v6149
          %v7000 = vunpack.c.h.b16 %v6149
          %v7001 = vunpack.c.l.b16 %v6150
          %v7002 = vunpack.c.h.b16 %v6150
          %v7003 = vunpack.c.l.b16 %v6151
          %v7004 = vunpack.c.h.b16 %v6151
          %v7005 = vunpack.c.l.b16 %v6152
          %v7006 = vunpack.c.h.b16 %v6152
          %v7007 = vunpack.c.l.b16 %v6153
          %v7008 = vunpack.c.h.b16 %v6153
          %v7009 = vunpack.c.l.b16 %v6154
          %v7010 = vunpack.c.h.b16 %v6154
          %v7011 = vunpack.c.l.b16 %v6155
          %v7012 = vunpack.c.h.b16 %v6155
          %v7013 = vunpack.c.l.b16 %v6156
          %v7014 = vunpack.c.h.b16 %v6156
          %v7015 = vunpack.c.l.b16 %v6157
          %v7016 = vunpack.c.h.b16 %v6157
          %v7017 = vunpack.c.l.b16 %v6158
          %v7018 = vunpack.c.h.b16 %v6158
          %v7019 = vunpack.c.l.b16 %v6159
          %v7020 = vunpack.c.h.b16 %v6159
          %v7021 = vunpack.c.l.b16 %v6160
          %v7022 = vunpack.c.h.b16 %v6160
          %v7023 = vunpack.c.l.b16 %v6161
          %v7024 = vunpack.c.h.b16 %v6161
          %v7025 = vunpack.c.l.b16 %v6162
          %v7026 = vunpack.c.h.b16 %v6162
          %v7027 = vunpack.c.l.b16 %v6163
          %v7028 = vunpack.c.h.b16 %v6163
          %v7029 = vunpack.c.l.b16 %v6164
          %v7030 = vunpack.c.h.b16 %v6164
          %v7031 = vunpack.c.l.b16 %v6165
          %v7032 = vunpack.c.h.b16 %v6165
          %v7033 = vunpack.c.l.b16 %v6166
          %v7034 = vunpack.c.h.b16 %v6166
          %v7035 = vunpack.c.l.b16 %v6167
          %v7036 = vunpack.c.h.b16 %v6167
          %v7037 = vunpack.c.l.b16 %v6168
          %v7038 = vunpack.c.h.b16 %v6168
          %v7039 = vunpack.c.l.b16 %v6169
          %v7040 = vunpack.c.h.b16 %v6169
          %v7041 = vunpack.c.l.b16 %v6170
          %v7042 = vunpack.c.h.b16 %v6170
          %v7043 = vunpack.c.l.b16 %v6171
          %v7044 = vunpack.c.h.b16 %v6171
          %v7045 = vunpack.c.l.b16 %v6172
          %v7046 = vunpack.c.h.b16 %v6172
          %v7047 = vunpack.c.l.b16 %v6173
          %v7048 = vunpack.c.h.b16 %v6173
          %v7049 = vunpack.c.l.b16 %v6174
          %v7050 = vunpack.c.h.b16 %v6174
          %v7051 = vunpack.c.l.b16 %v6175
          %v7052 = vunpack.c.h.b16 %v6175
          %v7053 = vunpack.c.l.b16 %v6176
          %v7054 = vunpack.c.h.b16 %v6176
          %v7055 = vunpack.c.l.b16 %v6177
          %v7056 = vunpack.c.h.b16 %v6177
          %v7057 = vunpack.c.l.b16 %v6178
          %v7058 = vunpack.c.h.b16 %v6178
          %v7059 = vunpack.c.l.b16 %v6179
          %v7060 = vunpack.c.h.b16 %v6179
          %v7061 = vunpack.c.l.b16 %v6180
          %v7062 = vunpack.c.h.b16 %v6180
          %v7063 = vunpack.c.l.b16 %v6181
          %v7064 = vunpack.c.h.b16 %v6181
          %v7065 = vunpack.c.l.b16 %v6182
          %v7066 = vunpack.c.h.b16 %v6182
          %v7067 = vunpack.c.l.b16 %v6183
          %v7068 = vunpack.c.h.b16 %v6183
          %v7069 = vunpack.c.l.b16 %v6184
          %v7070 = vunpack.c.h.b16 %v6184
          %v7071 = vunpack.c.l.b16 %v6185
          %v7072 = vunpack.c.h.b16 %v6185
          %v7073 = vunpack.c.l.b16 %v6186
          %v7074 = vunpack.c.h.b16 %v6186
          %v7075 = vunpack.c.l.b16 %v6187
          %v7076 = vunpack.c.h.b16 %v6187
          %v7077 = vunpack.c.l.b16 %v6188
          %v7078 = vunpack.c.h.b16 %v6188
          %v7079 = vunpack.c.l.b16 %v6189
          %v7080 = vunpack.c.h.b16 %v6189
          %v7081 = vunpack.c.l.b16 %v6190
          %v7082 = vunpack.c.h.b16 %v6190
          %v7083 = vunpack.c.l.b16 %v6191
          %v7084 = vunpack.c.h.b16 %v6191
          %v7085 = vunpack.c.l.b16 %v6192
          %v7086 = vunpack.c.h.b16 %v6192
          %v7087 = vunpack.c.l.b16 %v6193
          %v7088 = vunpack.c.h.b16 %v6193
          %v7089 = vunpack.c.l.b16 %v6194
          %v7090 = vunpack.c.h.b16 %v6194
          %v7091 = vunpack.c.l.b16 %v6195
          %v7092 = vunpack.c.h.b16 %v6195
          %v7093 = vunpack.c.l.b16 %v6196
          %v7094 = vunpack.c.h.b16 %v6196
          %v7095 = vunpack.c.l.b16 %v6197
          %v7096 = vunpack.c.h.b16 %v6197
          %v7097 = vunpack.c.l.b16 %v6198
          %v7098 = vunpack.c.h.b16 %v6198
          %v7099 = vunpack.c.l.b16 %v6199
          %v7100 = vunpack.c.h.b16 %v6199
          %v7101 = vunpack.c.l.b16 %v6200
          %v7102 = vunpack.c.h.b16 %v6200
          %v7103 = vunpack.c.l.b16 %v6201
          %v7104 = vunpack.c.h.b16 %v6201
          %v7105 = vunpack.c.l.b16 %v6202
          %v7106 = vunpack.c.h.b16 %v6202
          %v7107 = vunpack.c.l.b16 %v6203
          %v7108 = vunpack.c.h.b16 %v6203
          %v7109 = vunpack.c.l.b16 %v6204
          %v7110 = vunpack.c.h.b16 %v6204
          %v7111 = vunpack.c.l.b16 %v6205
          %v7112 = vunpack.c.h.b16 %v6205
          %v7113 = vunpack.c.l.b16 %v6206
          %v7114 = vunpack.c.h.b16 %v6206
          %v7115 = vunpack.c.l.b16 %v6207
          %v7116 = vunpack.c.h.b16 %v6207
          %v7117 = vunpack.c.l.b16 %v6208
          %v7118 = vunpack.c.h.b16 %v6208
          %v7119 = vunpack.c.l.b16 %v6209
          %v7120 = vunpack.c.h.b16 %v6209
          %v7121 = vunpack.c.l.b16 %v6210
          %v7122 = vunpack.c.h.b16 %v6210
          %v7123 = vunpack.c.l.b16 %v6211
          %v7124 = vunpack.c.h.b16 %v6211
          %v7125 = vunpack.c.l.b16 %v6212
          %v7126 = vunpack.c.h.b16 %v6212
          %v7127 = vunpack.c.l.b16 %v6213
          %v7128 = vunpack.c.h.b16 %v6213
          %v7129 = vunpack.c.l.b16 %v6214
          %v7130 = vunpack.c.h.b16 %v6214
          %v7131 = vunpack.c.l.b16 %v6215
          %v7132 = vunpack.c.h.b16 %v6215
          %v7133 = vunpack.c.l.b16 %v6216
          %v7134 = vunpack.c.h.b16 %v6216
          %v7135 = vunpack.c.l.b16 %v6217
          %v7136 = vunpack.c.h.b16 %v6217
          %v7137 = vunpack.c.l.b16 %v6218
          %v7138 = vunpack.c.h.b16 %v6218
          %v7139 = vunpack.c.l.b16 %v6219
          %v7140 = vunpack.c.h.b16 %v6219
          %v7141 = vunpack.c.l.b16 %v6220
          %v7142 = vunpack.c.h.b16 %v6220
          %v7143 = vunpack.c.l.b16 %v6221
          %v7144 = vunpack.c.h.b16 %v6221
          %v7145 = vunpack.c.l.b16 %v6222
          %v7146 = vunpack.c.h.b16 %v6222
          %v7147 = vunpack.c.l.b16 %v6223
          %v7148 = vunpack.c.h.b16 %v6223
          %v7149 = vunpack.c.l.b16 %v6224
          %v7150 = vunpack.c.h.b16 %v6224
          %v7151 = vunpack.c.l.b16 %v6225
          %v7152 = vunpack.c.h.b16 %v6225
          %v7153 = vunpack.c.l.b16 %v6226
          %v7154 = vunpack.c.h.b16 %v6226
          %v7155 = vunpack.c.l.b16 %v6227
          %v7156 = vunpack.c.h.b16 %v6227
          %v7157 = vunpack.c.l.b16 %v6228
          %v7158 = vunpack.c.h.b16 %v6228
          %v7159 = vunpack.c.l.b16 %v6229
          %v7160 = vunpack.c.h.b16 %v6229
          %v7161 = vunpack.c.l.b16 %v6230
          %v7162 = vunpack.c.h.b16 %v6230
          %v7163 = vunpack.c.l.b16 %v6231
          %v7164 = vunpack.c.h.b16 %v6231
          %v7165 = vunpack.c.l.b16 %v6232
          %v7166 = vunpack.c.h.b16 %v6232
          %v7167 = vunpack.c.l.b16 %v6233
          %v7168 = vunpack.c.h.b16 %v6233
          %v7169 = vunpack.c.l.b16 %v6234
          %v7170 = vunpack.c.h.b16 %v6234
          %v7171 = vunpack.c.l.b16 %v6235
          %v7172 = vunpack.c.h.b16 %v6235
          %v7173 = vunpack.c.l.b16 %v6236
          %v7174 = vunpack.c.h.b16 %v6236
          %v7175 = vunpack.c.l.b16 %v6237
          %v7176 = vunpack.c.h.b16 %v6237
          %v7177 = vunpack.c.l.b16 %v6238
          %v7178 = vunpack.c.h.b16 %v6238
          %v7179 = vunpack.c.l.b16 %v6239
          %v7180 = vunpack.c.h.b16 %v6239
          %v7181 = vunpack.c.l.b16 %v6240
          %v7182 = vunpack.c.h.b16 %v6240
          %v7183 = vunpack.c.l.b16 %v6241
          %v7184 = vunpack.c.h.b16 %v6241
          %v7185 = vunpack.c.l.b16 %v6242
          %v7186 = vunpack.c.h.b16 %v6242
          %v7187 = vunpack.c.l.b16 %v6243
          %v7188 = vunpack.c.h.b16 %v6243
          %v7189 = vunpack.c.l.b16 %v6244
          %v7190 = vunpack.c.h.b16 %v6244
          %v7191 = vunpack.c.l.b16 %v6245
          %v7192 = vunpack.c.h.b16 %v6245
          %v7193 = vunpack.c.l.b16 %v6246
          %v7194 = vunpack.c.h.b16 %v6246
          %v7195 = vunpack.c.l.b16 %v6247
          %v7196 = vunpack.c.h.b16 %v6247
          %v7197 = vunpack.c.l.b16 %v6248
          %v7198 = vunpack.c.h.b16 %v6248
          %v7199 = vunpack.c.l.b16 %v6249
          %v7200 = vunpack.c.h.b16 %v6249
          %v7201 = vunpack.c.l.b16 %v6250
          %v7202 = vunpack.c.h.b16 %v6250
          %v7203 = vunpack.c.l.b16 %v6251
          %v7204 = vunpack.c.h.b16 %v6251
          %v7205 = vunpack.c.l.b16 %v6252
          %v7206 = vunpack.c.h.b16 %v6252
          %v7207 = vunpack.c.l.b16 %v6253
          %v7208 = vunpack.c.h.b16 %v6253
          %v7209 = vunpack.c.l.b16 %v6254
          %v7210 = vunpack.c.h.b16 %v6254
          %v7211 = vunpack.c.l.b16 %v6255
          %v7212 = vunpack.c.h.b16 %v6255
          %v7213 = vunpack.c.l.b16 %v6256
          %v7214 = vunpack.c.h.b16 %v6256
          %v7215 = vunpack.c.l.b16 %v6257
          %v7216 = vunpack.c.h.b16 %v6257
          %v7217 = vunpack.c.l.b16 %v6258
          %v7218 = vunpack.c.h.b16 %v6258
          %v7219 = vunpack.c.l.b16 %v6259
          %v7220 = vunpack.c.h.b16 %v6259
          %v7221 = vunpack.c.l.b16 %v6260
          %v7222 = vunpack.c.h.b16 %v6260
          %v7223 = vunpack.c.l.b16 %v6261
          %v7224 = vunpack.c.h.b16 %v6261
          %v7225 = vunpack.c.l.b16 %v6262
          %v7226 = vunpack.c.h.b16 %v6262
          %v7227 = vunpack.c.l.b16 %v6263
          %v7228 = vunpack.c.h.b16 %v6263
          %v7229 = vunpack.c.l.b16 %v6264
          %v7230 = vunpack.c.h.b16 %v6264
          %v7231 = vunpack.c.l.b16 %v6265
          %v7232 = vunpack.c.h.b16 %v6265
          %v7233 = vunpack.c.l.b16 %v6266
          %v7234 = vunpack.c.h.b16 %v6266
          %v7235 = vunpack.c.l.b16 %v6267
          %v7236 = vunpack.c.h.b16 %v6267
          %v7237 = vunpack.c.l.b16 %v6268
          %v7238 = vunpack.c.h.b16 %v6268
          %v7239 = vunpack.c.l.b16 %v6269
          %v7240 = vunpack.c.h.b16 %v6269
          %v7241 = vunpack.c.l.b16 %v6270
          %v7242 = vunpack.c.h.b16 %v6270
          %v7243 = vunpack.c.l.b16 %v6271
          %v7244 = vunpack.c.h.b16 %v6271
          %v7245 = vunpack.c.l.b16 %v6272
          %v7246 = vunpack.c.h.b16 %v6272
          %v7247 = vunpack.c.l.b16 %v6273
          %v7248 = vunpack.c.h.b16 %v6273
          %v7249 = vunpack.c.l.b16 %v6274
          %v7250 = vunpack.c.h.b16 %v6274
          %v7251 = vunpack.c.l.b16 %v6275
          %v7252 = vunpack.c.h.b16 %v6275
          %v7253 = vunpack.c.l.b16 %v6276
          %v7254 = vunpack.c.h.b16 %v6276
          %v7255 = vunpack.c.l.b16 %v6277
          %v7256 = vunpack.c.h.b16 %v6277
          %v7257 = vunpack.c.l.b16 %v6278
          %v7258 = vunpack.c.h.b16 %v6278
          %v7259 = vunpack.c.l.b16 %v6279
          %v7260 = vunpack.c.h.b16 %v6279
          %v7261 = vunpack.c.l.b16 %v6280
          %v7262 = vunpack.c.h.b16 %v6280
          %v7263 = vunpack.c.l.b16 %v6281
          %v7264 = vunpack.c.h.b16 %v6281
          %v7265 = vunpack.c.l.b16 %v6282
          %v7266 = vunpack.c.h.b16 %v6282
          %v7267 = vunpack.c.l.b16 %v6283
          %v7268 = vunpack.c.h.b16 %v6283
          %v7269 = vunpack.c.l.b16 %v6284
          %v7270 = vunpack.c.h.b16 %v6284
          %v7271 = vunpack.c.l.b16 %v6285
          %v7272 = vunpack.c.h.b16 %v6285
          %v7273 = vunpack.c.l.b16 %v6286
          %v7274 = vunpack.c.h.b16 %v6286
          %v7275 = vunpack.c.l.b16 %v6287
          %v7276 = vunpack.c.h.b16 %v6287
          %v7277 = vunpack.c.l.b16 %v6288
          %v7278 = vunpack.c.h.b16 %v6288
          %v7279 = vunpack.c.l.b16 %v6289
          %v7280 = vunpack.c.h.b16 %v6289
          %v7281 = vunpack.c.l.b16 %v6290
          %v7282 = vunpack.c.h.b16 %v6290
          %v7283 = vunpack.c.l.b16 %v6291
          %v7284 = vunpack.c.h.b16 %v6291
          %v7285 = vunpack.c.l.b16 %v6292
          %v7286 = vunpack.c.h.b16 %v6292
          %v7287 = vunpack.c.l.b16 %v6293
          %v7288 = vunpack.c.h.b16 %v6293
          %v7289 = vunpack.c.l.b16 %v6294
          %v7290 = vunpack.c.h.b16 %v6294
          %v7291 = vunpack.c.l.b16 %v6295
          %v7292 = vunpack.c.h.b16 %v6295
          %v7293 = vunpack.c.l.b16 %v6296
          %v7294 = vunpack.c.h.b16 %v6296
          %v7295 = vunpack.c.l.b16 %v6297
          %v7296 = vunpack.c.h.b16 %v6297
          %v7297 = vunpack.c.l.b16 %v6298
          %v7298 = vunpack.c.h.b16 %v6298
          %v7299 = vunpack.c.l.b16 %v6299
          %v7300 = vunpack.c.h.b16 %v6299
          %v7301 = vunpack.c.l.b16 %v6300
          %v7302 = vunpack.c.h.b16 %v6300
          %v7303 = vunpack.c.l.b16 %v6301
          %v7304 = vunpack.c.h.b16 %v6301
          %v7305 = vunpack.c.l.b16 %v6302
          %v7306 = vunpack.c.h.b16 %v6302
          %v7307 = vunpack.c.l.b16 %v6303
          %v7308 = vunpack.c.h.b16 %v6303
          %v7309 = vunpack.c.l.b16 %v6304
          %v7310 = vunpack.c.h.b16 %v6304
          %v7311 = vunpack.c.l.b16 %v6305
          %v7312 = vunpack.c.h.b16 %v6305
          %v7313 = vunpack.c.l.b16 %v6306
          %v7314 = vunpack.c.h.b16 %v6306
          %v7315 = vunpack.c.l.b16 %v6307
          %v7316 = vunpack.c.h.b16 %v6307
          %v7317 = vunpack.c.l.b16 %v6308
          %v7318 = vunpack.c.h.b16 %v6308
          %v7319 = vunpack.c.l.b16 %v6309
          %v7320 = vunpack.c.h.b16 %v6309
          %v7321 = vunpack.c.l.b16 %v6310
          %v7322 = vunpack.c.h.b16 %v6310
          %v7323 = vunpack.c.l.b16 %v6311
          %v7324 = vunpack.c.h.b16 %v6311
          %v7325 = vunpack.c.l.b16 %v6312
          %v7326 = vunpack.c.h.b16 %v6312
          %v7327 = vunpack.c.l.b16 %v6313
          %v7328 = vunpack.c.h.b16 %v6313
          %v7329 = vunpack.c.l.b16 %v6314
          %v7330 = vunpack.c.h.b16 %v6314
          %v7331 = vunpack.c.l.b16 %v6315
          %v7332 = vunpack.c.h.b16 %v6315
          %v7333 = vunpack.c.l.b16 %v6316
          %v7334 = vunpack.c.h.b16 %v6316
          %v7335 = vunpack.c.l.b16 %v6317
          %v7336 = vunpack.c.h.b16 %v6317
          %v7337 = vunpack.c.l.b16 %v6318
          %v7338 = vunpack.c.h.b16 %v6318
          %v7339 = vunpack.c.l.b16 %v6319
          %v7340 = vunpack.c.h.b16 %v6319
          %v7341 = vunpack.c.l.b16 %v6320
          %v7342 = vunpack.c.h.b16 %v6320
          %v7343 = vunpack.c.l.b16 %v6321
          %v7344 = vunpack.c.h.b16 %v6321
          %v7345 = vunpack.c.l.b16 %v6322
          %v7346 = vunpack.c.h.b16 %v6322
          %v7347 = vunpack.c.l.b16 %v6323
          %v7348 = vunpack.c.h.b16 %v6323
          %v7349 = vunpack.c.l.b16 %v6324
          %v7350 = vunpack.c.h.b16 %v6324
          %v7351 = vunpack.c.l.b16 %v6325
          %v7352 = vunpack.c.h.b16 %v6325
          %v7353 = vunpack.c.l.b16 %v6326
          %v7354 = vunpack.c.h.b16 %v6326
          %v7355 = vunpack.c.l.b16 %v6327
          %v7356 = vunpack.c.h.b16 %v6327
          %v7357 = vunpack.c.l.b16 %v6328
          %v7358 = vunpack.c.h.b16 %v6328
          %v7359 = vunpack.c.l.b16 %v6329
          %v7360 = vunpack.c.h.b16 %v6329
          %v7361 = vunpack.c.l.b16 %v6330
          %v7362 = vunpack.c.h.b16 %v6330
          %v7363 = vunpack.c.l.b16 %v6331
          %v7364 = vunpack.c.h.b16 %v6331
          %v7365 = vunpack.c.l.b16 %v6332
          %v7366 = vunpack.c.h.b16 %v6332
          %v7367 = vunpack.c.l.b16 %v6333
          %v7368 = vunpack.c.h.b16 %v6333
          %v7369 = vunpack.c.l.b16 %v6334
          %v7370 = vunpack.c.h.b16 %v6334
          %v7371 = vunpack.c.l.b16 %v6335
          %v7372 = vunpack.c.h.b16 %v6335
          %v7373 = vunpack.c.l.b16 %v6336
          %v7374 = vunpack.c.h.b16 %v6336
          %v7375 = vunpack.c.l.b16 %v6337
          %v7376 = vunpack.c.h.b16 %v6337
          %v7377 = vunpack.c.l.b16 %v6338
          %v7378 = vunpack.c.h.b16 %v6338
          %v7379 = vunpack.c.l.b16 %v6339
          %v7380 = vunpack.c.h.b16 %v6339
          %v7381 = vunpack.c.l.b16 %v6340
          %v7382 = vunpack.c.h.b16 %v6340
          %v7383 = vunpack.c.l.b16 %v6341
          %v7384 = vunpack.c.h.b16 %v6341
          %v7385 = vunpack.c.l.b16 %v6342
          %v7386 = vunpack.c.h.b16 %v6342
          %v7387 = vunpack.c.l.b16 %v6343
          %v7388 = vunpack.c.h.b16 %v6343
          %v7389 = vunpack.c.l.b16 %v6344
          %v7390 = vunpack.c.h.b16 %v6344
          %v7391 = vunpack.c.l.b16 %v6345
          %v7392 = vunpack.c.h.b16 %v6345
          %v7393 = vunpack.c.l.b16 %v6346
          %v7394 = vunpack.c.h.b16 %v6346
          %v7395 = vunpack.c.l.b16 %v6347
          %v7396 = vunpack.c.h.b16 %v6347
          %v7397 = vunpack.c.l.b16 %v6348
          %v7398 = vunpack.c.h.b16 %v6348
          %v7399 = vunpack.c.l.b16 %v6349
          %v7400 = vunpack.c.h.b16 %v6349
          %v7401 = vunpack.c.l.b16 %v6350
          %v7402 = vunpack.c.h.b16 %v6350
          %v7403 = vunpack.c.l.b16 %v6351
          %v7404 = vunpack.c.h.b16 %v6351
          %v7405 = vunpack.c.l.b16 %v6352
          %v7406 = vunpack.c.h.b16 %v6352
          %v7407 = vunpack.c.l.b16 %v6353
          %v7408 = vunpack.c.h.b16 %v6353
          %v7409 = vunpack.c.l.b16 %v6354
          %v7410 = vunpack.c.h.b16 %v6354
          %v7411 = vunpack.c.l.b16 %v6355
          %v7412 = vunpack.c.h.b16 %v6355
          %v7413 = vunpack.c.l.b16 %v6356
          %v7414 = vunpack.c.h.b16 %v6356
          %v7415 = vunpack.c.l.b16 %v6357
          %v7416 = vunpack.c.h.b16 %v6357
          %v7417 = vunpack.c.l.b16 %v6358
          %v7418 = vunpack.c.h.b16 %v6358
          %v7419 = vunpack.c.l.b16 %v6359
          %v7420 = vunpack.c.h.b16 %v6359
          %v7421 = vunpack.c.l.b16 %v6360
          %v7422 = vunpack.c.h.b16 %v6360
          %v7423 = vunpack.c.l.b16 %v6361
          %v7424 = vunpack.c.h.b16 %v6361
          %v7425 = vunpack.c.l.b16 %v6362
          %v7426 = vunpack.c.h.b16 %v6362
          %v7427 = vunpack.c.l.b16 %v6363
          %v7428 = vunpack.c.h.b16 %v6363
          %v7429 = vunpack.c.l.b16 %v6364
          %v7430 = vunpack.c.h.b16 %v6364
          %v7431 = vunpack.c.l.b16 %v6365
          %v7432 = vunpack.c.h.b16 %v6365
          %v7433 = vunpack.c.l.b16 %v6366
          %v7434 = vunpack.c.h.b16 %v6366
          %v7435 = vunpack.c.l.b16 %v6367
          %v7436 = vunpack.c.h.b16 %v6367
          %v7437 = vunpack.c.l.b16 %v6368
          %v7438 = vunpack.c.h.b16 %v6368
          %v7439 = vunpack.c.l.b16 %v6369
          %v7440 = vunpack.c.h.b16 %v6369
          %v7441 = vunpack.c.l.b16 %v6370
          %v7442 = vunpack.c.h.b16 %v6370
          %v7443 = vunpack.c.l.b16 %v6371
          %v7444 = vunpack.c.h.b16 %v6371
          %v7445 = vunpack.c.l.b16 %v6372
          %v7446 = vunpack.c.h.b16 %v6372
          %v7447 = vunpack.c.l.b16 %v6373
          %v7448 = vunpack.c.h.b16 %v6373
          %v7449 = vunpack.c.l.b16 %v6374
          %v7450 = vunpack.c.h.b16 %v6374
          %v7451 = vunpack.c.l.b16 %v6375
          %v7452 = vunpack.c.h.b16 %v6375
          %v7453 = vunpack.c.l.b16 %v6376
          %v7454 = vunpack.c.h.b16 %v6376
          %v7455 = vunpack.c.l.b16 %v6377
          %v7456 = vunpack.c.h.b16 %v6377
          %v7457 = vunpack.c.l.b16 %v6378
          %v7458 = vunpack.c.h.b16 %v6378
          %v7459 = vunpack.c.l.b16 %v6379
          %v7460 = vunpack.c.h.b16 %v6379
          %v7461 = vunpack.c.l.b16 %v6380
          %v7462 = vunpack.c.h.b16 %v6380
          %v7463 = vunpack.c.l.b16 %v6381
          %v7464 = vunpack.c.h.b16 %v6381
          %v7465 = vunpack.c.l.b16 %v6382
          %v7466 = vunpack.c.h.b16 %v6382
          %v7467 = vunpack.c.l.b16 %v6383
          %v7468 = vunpack.c.h.b16 %v6383
          %v7469 = vunpack.c.l.b16 %v6384
          %v7470 = vunpack.c.h.b16 %v6384
          %v7471 = vunpack.c.l.b16 %v6385
          %v7472 = vunpack.c.h.b16 %v6385
          %v7473 = vunpack.c.l.b16 %v6386
          %v7474 = vunpack.c.h.b16 %v6386
          %v7475 = vunpack.c.l.b16 %v6387
          %v7476 = vunpack.c.h.b16 %v6387
          %v7477 = vunpack.c.l.b16 %v6388
          %v7478 = vunpack.c.h.b16 %v6388
          %v7479 = vunpack.c.l.b16 %v6389
          %v7480 = vunpack.c.h.b16 %v6389
          %v7481 = vunpack.c.l.b16 %v6390
          %v7482 = vunpack.c.h.b16 %v6390
          %v7483 = vunpack.c.l.b16 %v6391
          %v7484 = vunpack.c.h.b16 %v6391
          %v7485 = vunpack.c.l.b16 %v6392
          %v7486 = vunpack.c.h.b16 %v6392
          %v7487 = vunpack.c.l.b16 %v6393
          %v7488 = vunpack.c.h.b16 %v6393
          %v7489 = vunpack.c.l.b16 %v6394
          %v7490 = vunpack.c.h.b16 %v6394
          %v7491 = vunpack.c.l.b16 %v6395
          %v7492 = vunpack.c.h.b16 %v6395
          %v7493 = vunpack.c.l.b16 %v6396
          %v7494 = vunpack.c.h.b16 %v6396
          %v7495 = vunpack.c.l.b16 %v6397
          %v7496 = vunpack.c.h.b16 %v6397
          %v7497 = vunpack.c.l.b16 %v6398
          %v7498 = vunpack.c.h.b16 %v6398
          %v7499 = vunpack.c.l.b16 %v6399
          %v7500 = vunpack.c.h.b16 %v6399
          %v7501 = vunpack.c.l.b16 %v6400
          %v7502 = vunpack.c.h.b16 %v6400
          %v7503 = vunpack.c.l.b16 %v6401
          %v7504 = vunpack.c.h.b16 %v6401
          %v7505 = vunpack.c.l.b16 %v6402
          %v7506 = vunpack.c.h.b16 %v6402
          %v7507 = vunpack.c.l.b16 %v6403
          %v7508 = vunpack.c.h.b16 %v6403
          %v7509 = vunpack.c.l.b16 %v6404
          %v7510 = vunpack.c.h.b16 %v6404
          %v7511 = vunpack.c.l.b16 %v6405
          %v7512 = vunpack.c.h.b16 %v6405
          %v7513 = vunpack.c.l.b16 %v6406
          %v7514 = vunpack.c.h.b16 %v6406
          %v7515 = vunpack.c.l.b16 %v6407
          %v7516 = vunpack.c.h.b16 %v6407
          %v7517 = vunpack.c.l.b16 %v6408
          %v7518 = vunpack.c.h.b16 %v6408
          %v7519 = vunpack.c.l.b16 %v6409
          %v7520 = vunpack.c.h.b16 %v6409
          %v7521 = vunpack.c.l.b16 %v6410
          %v7522 = vunpack.c.h.b16 %v6410
          %v7523 = vunpack.c.l.b16 %v6411
          %v7524 = vunpack.c.h.b16 %v6411
          %v7525 = vunpack.c.l.b16 %v6412
          %v7526 = vunpack.c.h.b16 %v6412
          %v7527 = vunpack.c.l.b16 %v6413
          %v7528 = vunpack.c.h.b16 %v6413
          %v7529 = vunpack.c.l.b16 %v6414
          %v7530 = vunpack.c.h.b16 %v6414
          %v7531 = vunpack.c.l.b16 %v6415
          %v7532 = vunpack.c.h.b16 %v6415
          %v7533 = vunpack.c.l.b16 %v6416
          %v7534 = vunpack.c.h.b16 %v6416
          %v7535 = vunpack.c.l.b16 %v6417
          %v7536 = vunpack.c.h.b16 %v6417
          %v7537 = vunpack.c.l.b16 %v6418
          %v7538 = vunpack.c.h.b16 %v6418
          %v7539 = vunpack.c.l.b16 %v6419
          %v7540 = vunpack.c.h.b16 %v6419
          %v7541 = vunpack.c.l.b16 %v6420
          %v7542 = vunpack.c.h.b16 %v6420
          %v7543 = vunpack.c.l.b16 %v6421
          %v7544 = vunpack.c.h.b16 %v6421
          %v7545 = vunpack.c.l.b16 %v6422
          %v7546 = vunpack.c.h.b16 %v6422
          %v7547 = vunpack.c.l.b16 %v6423
          %v7548 = vunpack.c.h.b16 %v6423
          %v7549 = vunpack.c.l.b16 %v6424
          %v7550 = vunpack.c.h.b16 %v6424
          %v7551 = vunpack.c.l.b16 %v6425
          %v7552 = vunpack.c.h.b16 %v6425
          %v7553 = vunpack.c.l.b16 %v6426
          %v7554 = vunpack.c.h.b16 %v6426
          %v7555 = vunpack.c.l.b16 %v6427
          %v7556 = vunpack.c.h.b16 %v6427
          %v7557 = vunpack.c.l.b16 %v6428
          %v7558 = vunpack.c.h.b16 %v6428
          %v7559 = vunpack.c.l.b16 %v6429
          %v7560 = vunpack.c.h.b16 %v6429
          %v7561 = vunpack.c.l.b16 %v6430
          %v7562 = vunpack.c.h.b16 %v6430
          %v7563 = vunpack.c.l.b16 %v6431
          %v7564 = vunpack.c.h.b16 %v6431
          %v7565 = vunpack.c.l.b16 %v6432
          %v7566 = vunpack.c.h.b16 %v6432
          %v7567 = vunpack.c.l.b16 %v6433
          %v7568 = vunpack.c.h.b16 %v6433
          %v7569 = vunpack.c.l.b16 %v6434
          %v7570 = vunpack.c.h.b16 %v6434
          %v7571 = vunpack.c.l.b16 %v6435
          %v7572 = vunpack.c.h.b16 %v6435
          %v7573 = vunpack.c.l.b16 %v6436
          %v7574 = vunpack.c.h.b16 %v6436
          %v7575 = vunpack.c.l.b16 %v6437
          %v7576 = vunpack.c.h.b16 %v6437
          %v7577 = vunpack.c.l.b16 %v6438
          %v7578 = vunpack.c.h.b16 %v6438
          %v7579 = vunpack.c.l.b16 %v6439
          %v7580 = vunpack.c.h.b16 %v6439
          %v7581 = vunpack.c.l.b16 %v6440
          %v7582 = vunpack.c.h.b16 %v6440
          %v7583 = vunpack.c.l.b16 %v6441
          %v7584 = vunpack.c.h.b16 %v6441
          %v7585 = vunpack.c.l.b16 %v6442
          %v7586 = vunpack.c.h.b16 %v6442
          %v7587 = vunpack.c.l.b16 %v6443
          %v7588 = vunpack.c.h.b16 %v6443
          %v7589 = vunpack.c.l.b16 %v6444
          %v7590 = vunpack.c.h.b16 %v6444
          %v7591 = vunpack.c.l.b16 %v6445
          %v7592 = vunpack.c.h.b16 %v6445
          %v7593 = vunpack.c.l.b16 %v6446
          %v7594 = vunpack.c.h.b16 %v6446
          %v7595 = vunpack.c.l.b16 %v6447
          %v7596 = vunpack.c.h.b16 %v6447
          %v7597 = vunpack.c.l.b16 %v6448
          %v7598 = vunpack.c.h.b16 %v6448
          %v7599 = vunpack.c.l.b16 %v6449
          %v7600 = vunpack.c.h.b16 %v6449
          %v7601 = vunpack.c.l.b16 %v6450
          %v7602 = vunpack.c.h.b16 %v6450
          %v7603 = vunpack.c.l.b16 %v6451
          %v7604 = vunpack.c.h.b16 %v6451
          %v7605 = vpack.c.b16 %v6841, %v6837
          %v7606 = vpack.c.b16 %v6842, %v6838
          %v7607 = vpack.c.b16 %v6843, %v6839
          %v7608 = vpack.c.b16 %v6844, %v6840
          %v7609 = vpack.c.b16 %v6849, %v6845
          %v7610 = vpack.c.b16 %v6850, %v6846
          %v7611 = vpack.c.b16 %v6851, %v6847
          %v7612 = vpack.c.b16 %v6852, %v6848
          %v7613 = vpack.c.b16 %v6857, %v6853
          %v7614 = vpack.c.b16 %v6858, %v6854
          %v7615 = vpack.c.b16 %v6859, %v6855
          %v7616 = vpack.c.b16 %v6860, %v6856
          %v7617 = vpack.c.b16 %v6865, %v6861
          %v7618 = vpack.c.b16 %v6866, %v6862
          %v7619 = vpack.c.b16 %v6867, %v6863
          %v7620 = vpack.c.b16 %v6868, %v6864
          %v7621 = vpack.c.b16 %v6873, %v6869
          %v7622 = vpack.c.b16 %v6874, %v6870
          %v7623 = vpack.c.b16 %v6875, %v6871
          %v7624 = vpack.c.b16 %v6876, %v6872
          %v7625 = vpack.c.b16 %v6881, %v6877
          %v7626 = vpack.c.b16 %v6882, %v6878
          %v7627 = vpack.c.b16 %v6883, %v6879
          %v7628 = vpack.c.b16 %v6884, %v6880
          %v7629 = vpack.c.b16 %v6889, %v6885
          %v7630 = vpack.c.b16 %v6890, %v6886
          %v7631 = vpack.c.b16 %v6891, %v6887
          %v7632 = vpack.c.b16 %v6892, %v6888
          %v7633 = vpack.c.b16 %v6897, %v6893
          %v7634 = vpack.c.b16 %v6898, %v6894
          %v7635 = vpack.c.b16 %v6899, %v6895
          %v7636 = vpack.c.b16 %v6900, %v6896
          %v7637 = vpack.c.b16 %v6905, %v6901
          %v7638 = vpack.c.b16 %v6906, %v6902
          %v7639 = vpack.c.b16 %v6907, %v6903
          %v7640 = vpack.c.b16 %v6908, %v6904
          %v7641 = vpack.c.b16 %v6913, %v6909
          %v7642 = vpack.c.b16 %v6914, %v6910
          %v7643 = vpack.c.b16 %v6915, %v6911
          %v7644 = vpack.c.b16 %v6916, %v6912
          %v7645 = vpack.c.b16 %v6921, %v6917
          %v7646 = vpack.c.b16 %v6922, %v6918
          %v7647 = vpack.c.b16 %v6923, %v6919
          %v7648 = vpack.c.b16 %v6924, %v6920
          %v7649 = vpack.c.b16 %v6929, %v6925
          %v7650 = vpack.c.b16 %v6930, %v6926
          %v7651 = vpack.c.b16 %v6931, %v6927
          %v7652 = vpack.c.b16 %v6932, %v6928
          %v7653 = vpack.c.b16 %v6937, %v6933
          %v7654 = vpack.c.b16 %v6938, %v6934
          %v7655 = vpack.c.b16 %v6939, %v6935
          %v7656 = vpack.c.b16 %v6940, %v6936
          %v7657 = vpack.c.b16 %v6945, %v6941
          %v7658 = vpack.c.b16 %v6946, %v6942
          %v7659 = vpack.c.b16 %v6947, %v6943
          %v7660 = vpack.c.b16 %v6948, %v6944
          %v7661 = vpack.c.b16 %v6953, %v6949
          %v7662 = vpack.c.b16 %v6954, %v6950
          %v7663 = vpack.c.b16 %v6955, %v6951
          %v7664 = vpack.c.b16 %v6956, %v6952
          %v7665 = vpack.c.b16 %v6961, %v6957
          %v7666 = vpack.c.b16 %v6962, %v6958
          %v7667 = vpack.c.b16 %v6963, %v6959
          %v7668 = vpack.c.b16 %v6964, %v6960
          %v7669 = vpack.c.b16 %v6969, %v6965
          %v7670 = vpack.c.b16 %v6970, %v6966
          %v7671 = vpack.c.b16 %v6971, %v6967
          %v7672 = vpack.c.b16 %v6972, %v6968
          %v7673 = vpack.c.b16 %v6977, %v6973
          %v7674 = vpack.c.b16 %v6978, %v6974
          %v7675 = vpack.c.b16 %v6979, %v6975
          %v7676 = vpack.c.b16 %v6980, %v6976
          %v7677 = vpack.c.b16 %v6985, %v6981
          %v7678 = vpack.c.b16 %v6986, %v6982
          %v7679 = vpack.c.b16 %v6987, %v6983
          %v7680 = vpack.c.b16 %v6988, %v6984
          %v7681 = vpack.c.b16 %v6993, %v6989
          %v7682 = vpack.c.b16 %v6994, %v6990
          %v7683 = vpack.c.b16 %v6995, %v6991
          %v7684 = vpack.c.b16 %v6996, %v6992
          %v7685 = vpack.c.b16 %v7001, %v6997
          %v7686 = vpack.c.b16 %v7002, %v6998
          %v7687 = vpack.c.b16 %v7003, %v6999
          %v7688 = vpack.c.b16 %v7004, %v7000
          %v7689 = vpack.c.b16 %v7009, %v7005
          %v7690 = vpack.c.b16 %v7010, %v7006
          %v7691 = vpack.c.b16 %v7011, %v7007
          %v7692 = vpack.c.b16 %v7012, %v7008
          %v7693 = vpack.c.b16 %v7017, %v7013
          %v7694 = vpack.c.b16 %v7018, %v7014
          %v7695 = vpack.c.b16 %v7019, %v7015
          %v7696 = vpack.c.b16 %v7020, %v7016
          %v7697 = vpack.c.b16 %v7025, %v7021
          %v7698 = vpack.c.b16 %v7026, %v7022
          %v7699 = vpack.c.b16 %v7027, %v7023
          %v7700 = vpack.c.b16 %v7028, %v7024
          %v7701 = vpack.c.b16 %v7033, %v7029
          %v7702 = vpack.c.b16 %v7034, %v7030
          %v7703 = vpack.c.b16 %v7035, %v7031
          %v7704 = vpack.c.b16 %v7036, %v7032
          %v7705 = vpack.c.b16 %v7041, %v7037
          %v7706 = vpack.c.b16 %v7042, %v7038
          %v7707 = vpack.c.b16 %v7043, %v7039
          %v7708 = vpack.c.b16 %v7044, %v7040
          %v7709 = vpack.c.b16 %v7049, %v7045
          %v7710 = vpack.c.b16 %v7050, %v7046
          %v7711 = vpack.c.b16 %v7051, %v7047
          %v7712 = vpack.c.b16 %v7052, %v7048
          %v7713 = vpack.c.b16 %v7057, %v7053
          %v7714 = vpack.c.b16 %v7058, %v7054
          %v7715 = vpack.c.b16 %v7059, %v7055
          %v7716 = vpack.c.b16 %v7060, %v7056
          %v7717 = vpack.c.b16 %v7065, %v7061
          %v7718 = vpack.c.b16 %v7066, %v7062
          %v7719 = vpack.c.b16 %v7067, %v7063
          %v7720 = vpack.c.b16 %v7068, %v7064
          %v7721 = vpack.c.b16 %v7073, %v7069
          %v7722 = vpack.c.b16 %v7074, %v7070
          %v7723 = vpack.c.b16 %v7075, %v7071
          %v7724 = vpack.c.b16 %v7076, %v7072
          %v7725 = vpack.c.b16 %v7081, %v7077
          %v7726 = vpack.c.b16 %v7082, %v7078
          %v7727 = vpack.c.b16 %v7083, %v7079
          %v7728 = vpack.c.b16 %v7084, %v7080
          %v7729 = vpack.c.b16 %v7089, %v7085
          %v7730 = vpack.c.b16 %v7090, %v7086
          %v7731 = vpack.c.b16 %v7091, %v7087
          %v7732 = vpack.c.b16 %v7092, %v7088
          %v7733 = vpack.c.b16 %v7097, %v7093
          %v7734 = vpack.c.b16 %v7098, %v7094
          %v7735 = vpack.c.b16 %v7099, %v7095
          %v7736 = vpack.c.b16 %v7100, %v7096
          %v7737 = vpack.c.b16 %v7105, %v7101
          %v7738 = vpack.c.b16 %v7106, %v7102
          %v7739 = vpack.c.b16 %v7107, %v7103
          %v7740 = vpack.c.b16 %v7108, %v7104
          %v7741 = vpack.c.b16 %v7113, %v7109
          %v7742 = vpack.c.b16 %v7114, %v7110
          %v7743 = vpack.c.b16 %v7115, %v7111
          %v7744 = vpack.c.b16 %v7116, %v7112
          %v7745 = vpack.c.b16 %v7121, %v7117
          %v7746 = vpack.c.b16 %v7122, %v7118
          %v7747 = vpack.c.b16 %v7123, %v7119
          %v7748 = vpack.c.b16 %v7124, %v7120
          %v7749 = vpack.c.b16 %v7129, %v7125
          %v7750 = vpack.c.b16 %v7130, %v7126
          %v7751 = vpack.c.b16 %v7131, %v7127
          %v7752 = vpack.c.b16 %v7132, %v7128
          %v7753 = vpack.c.b16 %v7137, %v7133
          %v7754 = vpack.c.b16 %v7138, %v7134
          %v7755 = vpack.c.b16 %v7139, %v7135
          %v7756 = vpack.c.b16 %v7140, %v7136
          %v7757 = vpack.c.b16 %v7145, %v7141
          %v7758 = vpack.c.b16 %v7146, %v7142
          %v7759 = vpack.c.b16 %v7147, %v7143
          %v7760 = vpack.c.b16 %v7148, %v7144
          %v7761 = vpack.c.b16 %v7153, %v7149
          %v7762 = vpack.c.b16 %v7154, %v7150
          %v7763 = vpack.c.b16 %v7155, %v7151
          %v7764 = vpack.c.b16 %v7156, %v7152
          %v7765 = vpack.c.b16 %v7161, %v7157
          %v7766 = vpack.c.b16 %v7162, %v7158
          %v7767 = vpack.c.b16 %v7163, %v7159
          %v7768 = vpack.c.b16 %v7164, %v7160
          %v7769 = vpack.c.b16 %v7169, %v7165
          %v7770 = vpack.c.b16 %v7170, %v7166
          %v7771 = vpack.c.b16 %v7171, %v7167
          %v7772 = vpack.c.b16 %v7172, %v7168
          %v7773 = vpack.c.b16 %v7177, %v7173
          %v7774 = vpack.c.b16 %v7178, %v7174
          %v7775 = vpack.c.b16 %v7179, %v7175
          %v7776 = vpack.c.b16 %v7180, %v7176
          %v7777 = vpack.c.b16 %v7185, %v7181
          %v7778 = vpack.c.b16 %v7186, %v7182
          %v7779 = vpack.c.b16 %v7187, %v7183
          %v7780 = vpack.c.b16 %v7188, %v7184
          %v7781 = vpack.c.b16 %v7193, %v7189
          %v7782 = vpack.c.b16 %v7194, %v7190
          %v7783 = vpack.c.b16 %v7195, %v7191
          %v7784 = vpack.c.b16 %v7196, %v7192
          %v7785 = vpack.c.b16 %v7201, %v7197
          %v7786 = vpack.c.b16 %v7202, %v7198
          %v7787 = vpack.c.b16 %v7203, %v7199
          %v7788 = vpack.c.b16 %v7204, %v7200
          %v7789 = vpack.c.b16 %v7209, %v7205
          %v7790 = vpack.c.b16 %v7210, %v7206
          %v7791 = vpack.c.b16 %v7211, %v7207
          %v7792 = vpack.c.b16 %v7212, %v7208
          %v7793 = vpack.c.b16 %v7217, %v7213
          %v7794 = vpack.c.b16 %v7218, %v7214
          %v7795 = vpack.c.b16 %v7219, %v7215
          %v7796 = vpack.c.b16 %v7220, %v7216
          %v7797 = vpack.c.b16 %v7225, %v7221
          %v7798 = vpack.c.b16 %v7226, %v7222
          %v7799 = vpack.c.b16 %v7227, %v7223
          %v7800 = vpack.c.b16 %v7228, %v7224
          %v7801 = vpack.c.b16 %v7233, %v7229
          %v7802 = vpack.c.b16 %v7234, %v7230
          %v7803 = vpack.c.b16 %v7235, %v7231
          %v7804 = vpack.c.b16 %v7236, %v7232
          %v7805 = vpack.c.b16 %v7241, %v7237
          %v7806 = vpack.c.b16 %v7242, %v7238
          %v7807 = vpack.c.b16 %v7243, %v7239
          %v7808 = vpack.c.b16 %v7244, %v7240
          %v7809 = vpack.c.b16 %v7249, %v7245
          %v7810 = vpack.c.b16 %v7250, %v7246
          %v7811 = vpack.c.b16 %v7251, %v7247
          %v7812 = vpack.c.b16 %v7252, %v7248
          %v7813 = vpack.c.b16 %v7257, %v7253
          %v7814 = vpack.c.b16 %v7258, %v7254
          %v7815 = vpack.c.b16 %v7259, %v7255
          %v7816 = vpack.c.b16 %v7260, %v7256
          %v7817 = vpack.c.b16 %v7265, %v7261
          %v7818 = vpack.c.b16 %v7266, %v7262
          %v7819 = vpack.c.b16 %v7267, %v7263
          %v7820 = vpack.c.b16 %v7268, %v7264
          %v7821 = vpack.c.b16 %v7273, %v7269
          %v7822 = vpack.c.b16 %v7274, %v7270
          %v7823 = vpack.c.b16 %v7275, %v7271
          %v7824 = vpack.c.b16 %v7276, %v7272
          %v7825 = vpack.c.b16 %v7281, %v7277
          %v7826 = vpack.c.b16 %v7282, %v7278
          %v7827 = vpack.c.b16 %v7283, %v7279
          %v7828 = vpack.c.b16 %v7284, %v7280
          %v7829 = vpack.c.b16 %v7289, %v7285
          %v7830 = vpack.c.b16 %v7290, %v7286
          %v7831 = vpack.c.b16 %v7291, %v7287
          %v7832 = vpack.c.b16 %v7292, %v7288
          %v7833 = vpack.c.b16 %v7297, %v7293
          %v7834 = vpack.c.b16 %v7298, %v7294
          %v7835 = vpack.c.b16 %v7299, %v7295
          %v7836 = vpack.c.b16 %v7300, %v7296
          %v7837 = vpack.c.b16 %v7305, %v7301
          %v7838 = vpack.c.b16 %v7306, %v7302
          %v7839 = vpack.c.b16 %v7307, %v7303
          %v7840 = vpack.c.b16 %v7308, %v7304
          %v7841 = vpack.c.b16 %v7313, %v7309
          %v7842 = vpack.c.b16 %v7314, %v7310
          %v7843 = vpack.c.b16 %v7315, %v7311
          %v7844 = vpack.c.b16 %v7316, %v7312
          %v7845 = vpack.c.b16 %v7321, %v7317
          %v7846 = vpack.c.b16 %v7322, %v7318
          %v7847 = vpack.c.b16 %v7323, %v7319
          %v7848 = vpack.c.b16 %v7324, %v7320
          %v7849 = vpack.c.b16 %v7329, %v7325
          %v7850 = vpack.c.b16 %v7330, %v7326
          %v7851 = vpack.c.b16 %v7331, %v7327
          %v7852 = vpack.c.b16 %v7332, %v7328
          %v7853 = vpack.c.b16 %v7337, %v7333
          %v7854 = vpack.c.b16 %v7338, %v7334
          %v7855 = vpack.c.b16 %v7339, %v7335
          %v7856 = vpack.c.b16 %v7340, %v7336
          %v7857 = vpack.c.b16 %v7345, %v7341
          %v7858 = vpack.c.b16 %v7346, %v7342
          %v7859 = vpack.c.b16 %v7347, %v7343
          %v7860 = vpack.c.b16 %v7348, %v7344
          %v7861 = vpack.c.b16 %v7353, %v7349
          %v7862 = vpack.c.b16 %v7354, %v7350
          %v7863 = vpack.c.b16 %v7355, %v7351
          %v7864 = vpack.c.b16 %v7356, %v7352
          %v7865 = vpack.c.b16 %v7361, %v7357
          %v7866 = vpack.c.b16 %v7362, %v7358
          %v7867 = vpack.c.b16 %v7363, %v7359
          %v7868 = vpack.c.b16 %v7364, %v7360
          %v7869 = vpack.c.b16 %v7369, %v7365
          %v7870 = vpack.c.b16 %v7370, %v7366
          %v7871 = vpack.c.b16 %v7371, %v7367
          %v7872 = vpack.c.b16 %v7372, %v7368
          %v7873 = vpack.c.b16 %v7377, %v7373
          %v7874 = vpack.c.b16 %v7378, %v7374
          %v7875 = vpack.c.b16 %v7379, %v7375
          %v7876 = vpack.c.b16 %v7380, %v7376
          %v7877 = vpack.c.b16 %v7385, %v7381
          %v7878 = vpack.c.b16 %v7386, %v7382
          %v7879 = vpack.c.b16 %v7387, %v7383
          %v7880 = vpack.c.b16 %v7388, %v7384
          %v7881 = vpack.c.b16 %v7393, %v7389
          %v7882 = vpack.c.b16 %v7394, %v7390
          %v7883 = vpack.c.b16 %v7395, %v7391
          %v7884 = vpack.c.b16 %v7396, %v7392
          %v7885 = vpack.c.b16 %v7401, %v7397
          %v7886 = vpack.c.b16 %v7402, %v7398
          %v7887 = vpack.c.b16 %v7403, %v7399
          %v7888 = vpack.c.b16 %v7404, %v7400
          %v7889 = vpack.c.b16 %v7409, %v7405
          %v7890 = vpack.c.b16 %v7410, %v7406
          %v7891 = vpack.c.b16 %v7411, %v7407
          %v7892 = vpack.c.b16 %v7412, %v7408
          %v7893 = vpack.c.b16 %v7417, %v7413
          %v7894 = vpack.c.b16 %v7418, %v7414
          %v7895 = vpack.c.b16 %v7419, %v7415
          %v7896 = vpack.c.b16 %v7420, %v7416
          %v7897 = vpack.c.b16 %v7425, %v7421
          %v7898 = vpack.c.b16 %v7426, %v7422
          %v7899 = vpack.c.b16 %v7427, %v7423
          %v7900 = vpack.c.b16 %v7428, %v7424
          %v7901 = vpack.c.b16 %v7433, %v7429
          %v7902 = vpack.c.b16 %v7434, %v7430
          %v7903 = vpack.c.b16 %v7435, %v7431
          %v7904 = vpack.c.b16 %v7436, %v7432
          %v7905 = vpack.c.b16 %v7441, %v7437
          %v7906 = vpack.c.b16 %v7442, %v7438
          %v7907 = vpack.c.b16 %v7443, %v7439
          %v7908 = vpack.c.b16 %v7444, %v7440
          %v7909 = vpack.c.b16 %v7449, %v7445
          %v7910 = vpack.c.b16 %v7450, %v7446
          %v7911 = vpack.c.b16 %v7451, %v7447
          %v7912 = vpack.c.b16 %v7452, %v7448
          %v7913 = vpack.c.b16 %v7457, %v7453
          %v7914 = vpack.c.b16 %v7458, %v7454
          %v7915 = vpack.c.b16 %v7459, %v7455
          %v7916 = vpack.c.b16 %v7460, %v7456
          %v7917 = vpack.c.b16 %v7465, %v7461
          %v7918 = vpack.c.b16 %v7466, %v7462
          %v7919 = vpack.c.b16 %v7467, %v7463
          %v7920 = vpack.c.b16 %v7468, %v7464
          %v7921 = vpack.c.b16 %v7473, %v7469
          %v7922 = vpack.c.b16 %v7474, %v7470
          %v7923 = vpack.c.b16 %v7475, %v7471
          %v7924 = vpack.c.b16 %v7476, %v7472
          %v7925 = vpack.c.b16 %v7481, %v7477
          %v7926 = vpack.c.b16 %v7482, %v7478
          %v7927 = vpack.c.b16 %v7483, %v7479
          %v7928 = vpack.c.b16 %v7484, %v7480
          %v7929 = vpack.c.b16 %v7489, %v7485
          %v7930 = vpack.c.b16 %v7490, %v7486
          %v7931 = vpack.c.b16 %v7491, %v7487
          %v7932 = vpack.c.b16 %v7492, %v7488
          %v7933 = vpack.c.b16 %v7497, %v7493
          %v7934 = vpack.c.b16 %v7498, %v7494
          %v7935 = vpack.c.b16 %v7499, %v7495
          %v7936 = vpack.c.b16 %v7500, %v7496
          %v7937 = vpack.c.b16 %v7505, %v7501
          %v7938 = vpack.c.b16 %v7506, %v7502
          %v7939 = vpack.c.b16 %v7507, %v7503
          %v7940 = vpack.c.b16 %v7508, %v7504
          %v7941 = vpack.c.b16 %v7513, %v7509
          %v7942 = vpack.c.b16 %v7514, %v7510
          %v7943 = vpack.c.b16 %v7515, %v7511
          %v7944 = vpack.c.b16 %v7516, %v7512
          %v7945 = vpack.c.b16 %v7521, %v7517
          %v7946 = vpack.c.b16 %v7522, %v7518
          %v7947 = vpack.c.b16 %v7523, %v7519
          %v7948 = vpack.c.b16 %v7524, %v7520
          %v7949 = vpack.c.b16 %v7529, %v7525
          %v7950 = vpack.c.b16 %v7530, %v7526
          %v7951 = vpack.c.b16 %v7531, %v7527
          %v7952 = vpack.c.b16 %v7532, %v7528
          %v7953 = vpack.c.b16 %v7537, %v7533
          %v7954 = vpack.c.b16 %v7538, %v7534
          %v7955 = vpack.c.b16 %v7539, %v7535
          %v7956 = vpack.c.b16 %v7540, %v7536
          %v7957 = vpack.c.b16 %v7545, %v7541
          %v7958 = vpack.c.b16 %v7546, %v7542
          %v7959 = vpack.c.b16 %v7547, %v7543
          %v7960 = vpack.c.b16 %v7548, %v7544
          %v7961 = vpack.c.b16 %v7553, %v7549
          %v7962 = vpack.c.b16 %v7554, %v7550
          %v7963 = vpack.c.b16 %v7555, %v7551
          %v7964 = vpack.c.b16 %v7556, %v7552
          %v7965 = vpack.c.b16 %v7561, %v7557
          %v7966 = vpack.c.b16 %v7562, %v7558
          %v7967 = vpack.c.b16 %v7563, %v7559
          %v7968 = vpack.c.b16 %v7564, %v7560
          %v7969 = vpack.c.b16 %v7569, %v7565
          %v7970 = vpack.c.b16 %v7570, %v7566
          %v7971 = vpack.c.b16 %v7571, %v7567
          %v7972 = vpack.c.b16 %v7572, %v7568
          %v7973 = vpack.c.b16 %v7577, %v7573
          %v7974 = vpack.c.b16 %v7578, %v7574
          %v7975 = vpack.c.b16 %v7579, %v7575
          %v7976 = vpack.c.b16 %v7580, %v7576
          %v7977 = vpack.c.b16 %v7585, %v7581
          %v7978 = vpack.c.b16 %v7586, %v7582
          %v7979 = vpack.c.b16 %v7587, %v7583
          %v7980 = vpack.c.b16 %v7588, %v7584
          %v7981 = vpack.c.b16 %v7593, %v7589
          %v7982 = vpack.c.b16 %v7594, %v7590
          %v7983 = vpack.c.b16 %v7595, %v7591
          %v7984 = vpack.c.b16 %v7596, %v7592
          %v7985 = vpack.c.b16 %v7601, %v7597
          %v7986 = vpack.c.b16 %v7602, %v7598
          %v7987 = vpack.c.b16 %v7603, %v7599
          %v7988 = vpack.c.b16 %v7604, %v7600
          %v8374 = vlaneseq
          %v8375 = vshrl.u32 %v8374, 7
          %v8376 = vsub.s32 0, %v8375
          %v8377 = vrot.slane %v6452, %v8376
          %v8378 = vlaneseq
          %v8379 = vshrl.u32 %v8378, 7
          %v8380 = vsub.s32 1, %v8379
          %v8381 = vrot.slane %v6452, %v8380
          %v8382 = vlaneseq
          %v8383 = vshrl.u32 %v8382, 7
          %v8384 = vsub.s32 2, %v8383
          %v8385 = vrot.slane %v6452, %v8384
          %v8386 = vlaneseq
          %v8387 = vshrl.u32 %v8386, 7
          %v8388 = vsub.s32 3, %v8387
          %v8389 = vrot.slane %v6452, %v8388
          %8394 = vmatprep.subr.bf16.mxu0 %v7606
          %8395 = vmatpush1.bf16.msra.mxu0 %v7605
          %8396 = vmatprep.subr.bf16.mxu0 %v7610
          %8397 = vmatpush1.bf16.msra.mxu0 %v7609
          %8398 = vmatprep.subr.bf16.mxu0 %v7614
          %8399 = vmatpush1.bf16.msra.mxu0 %v7613
          %8400 = vmatprep.subr.bf16.mxu0 %v7618
          %8401 = vmatpush1.bf16.msra.mxu0 %v7617
          %8402 = vmatprep.subr.bf16.mxu0 %v7622
          %8403 = vmatpush1.bf16.msra.mxu0 %v7621
          %8404 = vmatprep.subr.bf16.mxu0 %v7626
          %8405 = vmatpush1.bf16.msra.mxu0 %v7625
          %8406 = vmatprep.subr.bf16.mxu0 %v7630
          %8407 = vmatpush1.bf16.msra.mxu0 %v7629
          %8408 = vmatprep.subr.bf16.mxu0 %v7634
          %8409 = vmatpush1.bf16.msra.mxu0 %v7633
          %8410 = vmatprep.subr.bf16.mxu0 %v7638
          %8411 = vmatpush1.bf16.msra.mxu0 %v7637
          %8412 = vmatprep.subr.bf16.mxu0 %v7642
          %8413 = vmatpush1.bf16.msra.mxu0 %v7641
          %8414 = vmatprep.subr.bf16.mxu0 %v7646
          %8415 = vmatpush1.bf16.msra.mxu0 %v7645
          %8416 = vmatprep.subr.bf16.mxu0 %v7650
          %8417 = vmatpush1.bf16.msra.mxu0 %v7649
          %8418 = vmatprep.subr.bf16.mxu0 %v7654
          %8419 = vmatpush1.bf16.msra.mxu0 %v7653
          %8420 = vmatprep.subr.bf16.mxu0 %v7658
          %8421 = vmatpush1.bf16.msra.mxu0 %v7657
          %8422 = vmatprep.subr.bf16.mxu0 %v7662
          %8423 = vmatpush1.bf16.msra.mxu0 %v7661
          %8424 = vmatprep.subr.bf16.mxu0 %v7666
          %8425 = vmatpush1.bf16.msra.mxu0 %v7665
          %8426 = vmatprep.mubr.bf16.mxu0 %v6057
          %8427 = vmatmul.mubr.bf16.gmra.mrb[0].mxu0 %v6056
          %v8428 = vpop.f32.mrb[0].mxu0
          %v8429 = vadd.f32 %v8377, %v8428
          %v8430 = vpop.f32.mrb[0].mxu0
          %v8431 = vadd.f32 %v8381, %v8430
          %v8432 = vpop.f32.mrb[0].mxu0
          %v8433 = vpop.f32.mrb[0].mxu0
          %8434 = vdwg.mxu0
          %8435 = vmatprep.subr.bf16.mxu0 %v7670
          %8436 = vmatpush1.bf16.msra.mxu0 %v7669
          %8437 = vmatprep.subr.bf16.mxu0 %v7674
          %8438 = vmatpush1.bf16.msra.mxu0 %v7673
          %8439 = vmatprep.subr.bf16.mxu0 %v7678
          %8440 = vmatpush1.bf16.msra.mxu0 %v7677
          %8441 = vmatprep.subr.bf16.mxu0 %v7682
          %8442 = vmatpush1.bf16.msra.mxu0 %v7681
          %8443 = vmatprep.subr.bf16.mxu0 %v7686
          %8444 = vmatpush1.bf16.msra.mxu0 %v7685
          %8445 = vmatprep.subr.bf16.mxu0 %v7690
          %8446 = vmatpush1.bf16.msra.mxu0 %v7689
          %8447 = vmatprep.subr.bf16.mxu0 %v7694
          %8448 = vmatpush1.bf16.msra.mxu0 %v7693
          %8449 = vmatprep.subr.bf16.mxu0 %v7698
          %8450 = vmatpush1.bf16.msra.mxu0 %v7697
          %8451 = vmatprep.subr.bf16.mxu0 %v7702
          %8452 = vmatpush1.bf16.msra.mxu0 %v7701
          %8453 = vmatprep.subr.bf16.mxu0 %v7706
          %8454 = vmatpush1.bf16.msra.mxu0 %v7705
          %8455 = vmatprep.subr.bf16.mxu0 %v7710
          %8456 = vmatpush1.bf16.msra.mxu0 %v7709
          %8457 = vmatprep.subr.bf16.mxu0 %v7714
          %8458 = vmatpush1.bf16.msra.mxu0 %v7713
          %8459 = vmatprep.subr.bf16.mxu0 %v7718
          %8460 = vmatpush1.bf16.msra.mxu0 %v7717
          %8461 = vmatprep.subr.bf16.mxu0 %v7722
          %8462 = vmatpush1.bf16.msra.mxu0 %v7721
          %8463 = vmatprep.subr.bf16.mxu0 %v7726
          %8464 = vmatpush1.bf16.msra.mxu0 %v7725
          %8465 = vmatprep.subr.bf16.mxu0 %v7730
          %8466 = vmatpush1.bf16.msra.mxu0 %v7729
          %8467 = vmatprep.mubr.bf16.mxu0 %v6059
          %8468 = vmatmul.mubr.bf16.gmra.mrb[0].mxu0 %v6058
          %v8469 = vpop.f32.mrb[0].mxu0
          %v8470 = vadd.f32 %v8429, %v8469
          %v8471 = vpop.f32.mrb[0].mxu0
          %v8472 = vadd.f32 %v8431, %v8471
          %v8473 = vpop.f32.mrb[0].mxu0
          %v8474 = vpop.f32.mrb[0].mxu0
          %8475 = vdwg.mxu0
          %8476 = vmatprep.subr.bf16.mxu0 %v7734
          %8477 = vmatpush1.bf16.msra.mxu0 %v7733
          %8478 = vmatprep.subr.bf16.mxu0 %v7738
          %8479 = vmatpush1.bf16.msra.mxu0 %v7737
          %8480 = vmatprep.subr.bf16.mxu0 %v7742
          %8481 = vmatpush1.bf16.msra.mxu0 %v7741
          %8482 = vmatprep.subr.bf16.mxu0 %v7746
          %8483 = vmatpush1.bf16.msra.mxu0 %v7745
          %8484 = vmatprep.subr.bf16.mxu0 %v7750
          %8485 = vmatpush1.bf16.msra.mxu0 %v7749
          %8486 = vmatprep.subr.bf16.mxu0 %v7754
          %8487 = vmatpush1.bf16.msra.mxu0 %v7753
          %8488 = vmatprep.subr.bf16.mxu0 %v7758
          %8489 = vmatpush1.bf16.msra.mxu0 %v7757
          %8490 = vmatprep.subr.bf16.mxu0 %v7762
          %8491 = vmatpush1.bf16.msra.mxu0 %v7761
          %8492 = vmatprep.subr.bf16.mxu0 %v7766
          %8493 = vmatpush1.bf16.msra.mxu0 %v7765
          %8494 = vmatprep.subr.bf16.mxu0 %v7770
          %8495 = vmatpush1.bf16.msra.mxu0 %v7769
          %8496 = vmatprep.subr.bf16.mxu0 %v7774
          %8497 = vmatpush1.bf16.msra.mxu0 %v7773
          %8498 = vmatprep.subr.bf16.mxu0 %v7778
          %8499 = vmatpush1.bf16.msra.mxu0 %v7777
          %8500 = vmatprep.subr.bf16.mxu0 %v7782
          %8501 = vmatpush1.bf16.msra.mxu0 %v7781
          %8502 = vmatprep.subr.bf16.mxu0 %v7786
          %8503 = vmatpush1.bf16.msra.mxu0 %v7785
          %8504 = vmatprep.subr.bf16.mxu0 %v7790
          %8505 = vmatpush1.bf16.msra.mxu0 %v7789
          %8506 = vmatprep.subr.bf16.mxu0 %v7794
          %8507 = vmatpush1.bf16.msra.mxu0 %v7793
          %8508 = vmatprep.mubr.bf16.mxu0 %v6061
          %8509 = vmatmul.mubr.bf16.gmra.mrb[0].mxu0 %v6060
          %v8510 = vpop.f32.mrb[0].mxu0
          %v8511 = vadd.f32 %v8470, %v8510
          %v8512 = vpop.f32.mrb[0].mxu0
          %v8513 = vadd.f32 %v8472, %v8512
          %v8514 = vpop.f32.mrb[0].mxu0
          %v8515 = vpop.f32.mrb[0].mxu0
          %8516 = vdwg.mxu0
          %8517 = vmatprep.subr.bf16.mxu0 %v7798
          %8518 = vmatpush1.bf16.msra.mxu0 %v7797
          %8519 = vmatprep.subr.bf16.mxu0 %v7802
          %8520 = vmatpush1.bf16.msra.mxu0 %v7801
          %8521 = vmatprep.subr.bf16.mxu0 %v7806
          %8522 = vmatpush1.bf16.msra.mxu0 %v7805
          %8523 = vmatprep.subr.bf16.mxu0 %v7810
          %8524 = vmatpush1.bf16.msra.mxu0 %v7809
          %8525 = vmatprep.subr.bf16.mxu0 %v7814
          %8526 = vmatpush1.bf16.msra.mxu0 %v7813
          %8527 = vmatprep.subr.bf16.mxu0 %v7818
          %8528 = vmatpush1.bf16.msra.mxu0 %v7817
          %8529 = vmatprep.subr.bf16.mxu0 %v7822
          %8530 = vmatpush1.bf16.msra.mxu0 %v7821
          %8531 = vmatprep.subr.bf16.mxu0 %v7826
          %8532 = vmatpush1.bf16.msra.mxu0 %v7825
          %8533 = vmatprep.subr.bf16.mxu0 %v7830
          %8534 = vmatpush1.bf16.msra.mxu0 %v7829
          %8535 = vmatprep.subr.bf16.mxu0 %v7834
          %8536 = vmatpush1.bf16.msra.mxu0 %v7833
          %8537 = vmatprep.subr.bf16.mxu0 %v7838
          %8538 = vmatpush1.bf16.msra.mxu0 %v7837
          %8539 = vmatprep.subr.bf16.mxu0 %v7842
          %8540 = vmatpush1.bf16.msra.mxu0 %v7841
          %8541 = vmatprep.subr.bf16.mxu0 %v7846
          %8542 = vmatpush1.bf16.msra.mxu0 %v7845
          %8543 = vmatprep.subr.bf16.mxu0 %v7850
          %8544 = vmatpush1.bf16.msra.mxu0 %v7849
          %8545 = vmatprep.subr.bf16.mxu0 %v7854
          %8546 = vmatpush1.bf16.msra.mxu0 %v7853
          %8547 = vmatprep.subr.bf16.mxu0 %v7858
          %8548 = vmatpush1.bf16.msra.mxu0 %v7857
          %8549 = vmatprep.mubr.bf16.mxu0 %v6063
          %8550 = vmatmul.mubr.bf16.gmra.mrb[0].mxu0 %v6062
          %v8551 = vpop.f32.mrb[0].mxu0
          %v8552 = vadd.f32 %v8511, %v8551
          %v8553 = vpop.f32.mrb[0].mxu0
          %v8554 = vadd.f32 %v8513, %v8553
          %v8555 = vpop.f32.mrb[0].mxu0
          %v8556 = vpop.f32.mrb[0].mxu0
          %8557 = vdwg.mxu0
          %8558 = vmatprep.subr.bf16.mxu0 %v7862
          %8559 = vmatpush1.bf16.msra.mxu0 %v7861
          %8560 = vmatprep.subr.bf16.mxu0 %v7866
          %8561 = vmatpush1.bf16.msra.mxu0 %v7865
          %8562 = vmatprep.subr.bf16.mxu0 %v7870
          %8563 = vmatpush1.bf16.msra.mxu0 %v7869
          %8564 = vmatprep.subr.bf16.mxu0 %v7874
          %8565 = vmatpush1.bf16.msra.mxu0 %v7873
          %8566 = vmatprep.subr.bf16.mxu0 %v7878
          %8567 = vmatpush1.bf16.msra.mxu0 %v7877
          %8568 = vmatprep.subr.bf16.mxu0 %v7882
          %8569 = vmatpush1.bf16.msra.mxu0 %v7881
          %8570 = vmatprep.subr.bf16.mxu0 %v7886
          %8571 = vmatpush1.bf16.msra.mxu0 %v7885
          %8572 = vmatprep.subr.bf16.mxu0 %v7890
          %8573 = vmatpush1.bf16.msra.mxu0 %v7889
          %8574 = vmatprep.subr.bf16.mxu0 %v7894
          %8575 = vmatpush1.bf16.msra.mxu0 %v7893
          %8576 = vmatprep.subr.bf16.mxu0 %v7898
          %8577 = vmatpush1.bf16.msra.mxu0 %v7897
          %8578 = vmatprep.subr.bf16.mxu0 %v7902
          %8579 = vmatpush1.bf16.msra.mxu0 %v7901
          %8580 = vmatprep.subr.bf16.mxu0 %v7906
          %8581 = vmatpush1.bf16.msra.mxu0 %v7905
          %8582 = vmatprep.subr.bf16.mxu0 %v7910
          %8583 = vmatpush1.bf16.msra.mxu0 %v7909
          %8584 = vmatprep.subr.bf16.mxu0 %v7914
          %8585 = vmatpush1.bf16.msra.mxu0 %v7913
          %8586 = vmatprep.subr.bf16.mxu0 %v7918
          %8587 = vmatpush1.bf16.msra.mxu0 %v7917
          %8588 = vmatprep.subr.bf16.mxu0 %v7922
          %8589 = vmatpush1.bf16.msra.mxu0 %v7921
          %8590 = vmatprep.mubr.bf16.mxu0 %v6065
          %8591 = vmatmul.mubr.bf16.gmra.mrb[0].mxu0 %v6064
          %v8592 = vpop.f32.mrb[0].mxu0
          %v8593 = vadd.f32 %v8552, %v8592
          %v8594 = vpop.f32.mrb[0].mxu0
          %v8595 = vadd.f32 %v8554, %v8594
          %v8596 = vpop.f32.mrb[0].mxu0
          %v8597 = vpop.f32.mrb[0].mxu0
          %8598 = vdwg.mxu0
          %8599 = vmatprep.subr.bf16.mxu0 %v7926
          %8600 = vmatpush1.bf16.msra.mxu0 %v7925
          %8601 = vmatprep.subr.bf16.mxu0 %v7930
          %8602 = vmatpush1.bf16.msra.mxu0 %v7929
          %8603 = vmatprep.subr.bf16.mxu0 %v7934
          %8604 = vmatpush1.bf16.msra.mxu0 %v7933
          %8605 = vmatprep.subr.bf16.mxu0 %v7938
          %8606 = vmatpush1.bf16.msra.mxu0 %v7937
          %8607 = vmatprep.subr.bf16.mxu0 %v7942
          %8608 = vmatpush1.bf16.msra.mxu0 %v7941
          %8609 = vmatprep.subr.bf16.mxu0 %v7946
          %8610 = vmatpush1.bf16.msra.mxu0 %v7945
          %8611 = vmatprep.subr.bf16.mxu0 %v7950
          %8612 = vmatpush1.bf16.msra.mxu0 %v7949
          %8613 = vmatprep.subr.bf16.mxu0 %v7954
          %8614 = vmatpush1.bf16.msra.mxu0 %v7953
          %8615 = vmatprep.subr.bf16.mxu0 %v7958
          %8616 = vmatpush1.bf16.msra.mxu0 %v7957
          %8617 = vmatprep.subr.bf16.mxu0 %v7962
          %8618 = vmatpush1.bf16.msra.mxu0 %v7961
          %8619 = vmatprep.subr.bf16.mxu0 %v7966
          %8620 = vmatpush1.bf16.msra.mxu0 %v7965
          %8621 = vmatprep.subr.bf16.mxu0 %v7970
          %8622 = vmatpush1.bf16.msra.mxu0 %v7969
          %8623 = vmatprep.subr.bf16.mxu0 %v7974
          %8624 = vmatpush1.bf16.msra.mxu0 %v7973
          %8625 = vmatprep.subr.bf16.mxu0 %v7978
          %8626 = vmatpush1.bf16.msra.mxu0 %v7977
          %8627 = vmatprep.subr.bf16.mxu0 %v7982
          %8628 = vmatpush1.bf16.msra.mxu0 %v7981
          %8629 = vmatprep.subr.bf16.mxu0 %v7986
          %8630 = vmatpush1.bf16.msra.mxu0 %v7985
          %8631 = vmatprep.mubr.bf16.mxu0 %v6067
          %8632 = vmatmul.mubr.bf16.gmra.mrb[0].mxu0 %v6066
          %v8633 = vpop.f32.mrb[0].mxu0
          %v8634 = vadd.f32 %v8593, %v8633
          %v8635 = vpop.f32.mrb[0].mxu0
          %v8636 = vadd.f32 %v8595, %v8635
          %v8637 = vpop.f32.mrb[0].mxu0
          %v8638 = vpop.f32.mrb[0].mxu0
          %8639 = vdwg.mxu0
          %8640 = vmatprep.subr.bf16.mxu0 %v7608
          %8641 = vmatpush1.bf16.msra.mxu0 %v7607
          %8642 = vmatprep.subr.bf16.mxu0 %v7612
          %8643 = vmatpush1.bf16.msra.mxu0 %v7611
          %8644 = vmatprep.subr.bf16.mxu0 %v7616
          %8645 = vmatpush1.bf16.msra.mxu0 %v7615
          %8646 = vmatprep.subr.bf16.mxu0 %v7620
          %8647 = vmatpush1.bf16.msra.mxu0 %v7619
          %8648 = vmatprep.subr.bf16.mxu0 %v7624
          %8649 = vmatpush1.bf16.msra.mxu0 %v7623
          %8650 = vmatprep.subr.bf16.mxu0 %v7628
          %8651 = vmatpush1.bf16.msra.mxu0 %v7627
          %8652 = vmatprep.subr.bf16.mxu0 %v7632
          %8653 = vmatpush1.bf16.msra.mxu0 %v7631
          %8654 = vmatprep.subr.bf16.mxu0 %v7636
          %8655 = vmatpush1.bf16.msra.mxu0 %v7635
          %8656 = vmatprep.subr.bf16.mxu0 %v7640
          %8657 = vmatpush1.bf16.msra.mxu0 %v7639
          %8658 = vmatprep.subr.bf16.mxu0 %v7644
          %8659 = vmatpush1.bf16.msra.mxu0 %v7643
          %8660 = vmatprep.subr.bf16.mxu0 %v7648
          %8661 = vmatpush1.bf16.msra.mxu0 %v7647
          %8662 = vmatprep.subr.bf16.mxu0 %v7652
          %8663 = vmatpush1.bf16.msra.mxu0 %v7651
          %8664 = vmatprep.subr.bf16.mxu0 %v7656
          %8665 = vmatpush1.bf16.msra.mxu0 %v7655
          %8666 = vmatprep.subr.bf16.mxu0 %v7660
          %8667 = vmatpush1.bf16.msra.mxu0 %v7659
          %8668 = vmatprep.subr.bf16.mxu0 %v7664
          %8669 = vmatpush1.bf16.msra.mxu0 %v7663
          %8670 = vmatprep.subr.bf16.mxu0 %v7668
          %8671 = vmatpush1.bf16.msra.mxu0 %v7667
          %8672 = vmatprep.mubr.bf16.mxu0 %v6057
          %8673 = vmatmul.mubr.bf16.gmra.mrb[0].mxu0 %v6056
          %v8674 = vpop.f32.mrb[0].mxu0
          %v8675 = vadd.f32 %v8385, %v8674
          %v8676 = vpop.f32.mrb[0].mxu0
          %v8677 = vadd.f32 %v8389, %v8676
          %v8678 = vpop.f32.mrb[0].mxu0
          %v8679 = vpop.f32.mrb[0].mxu0
          %8680 = vdwg.mxu0
          %8681 = vmatprep.subr.bf16.mxu0 %v7672
          %8682 = vmatpush1.bf16.msra.mxu0 %v7671
          %8683 = vmatprep.subr.bf16.mxu0 %v7676
          %8684 = vmatpush1.bf16.msra.mxu0 %v7675
          %8685 = vmatprep.subr.bf16.mxu0 %v7680
          %8686 = vmatpush1.bf16.msra.mxu0 %v7679
          %8687 = vmatprep.subr.bf16.mxu0 %v7684
          %8688 = vmatpush1.bf16.msra.mxu0 %v7683
          %8689 = vmatprep.subr.bf16.mxu0 %v7688
          %8690 = vmatpush1.bf16.msra.mxu0 %v7687
          %8691 = vmatprep.subr.bf16.mxu0 %v7692
          %8692 = vmatpush1.bf16.msra.mxu0 %v7691
          %8693 = vmatprep.subr.bf16.mxu0 %v7696
          %8694 = vmatpush1.bf16.msra.mxu0 %v7695
          %8695 = vmatprep.subr.bf16.mxu0 %v7700
          %8696 = vmatpush1.bf16.msra.mxu0 %v7699
          %8697 = vmatprep.subr.bf16.mxu0 %v7704
          %8698 = vmatpush1.bf16.msra.mxu0 %v7703
          %8699 = vmatprep.subr.bf16.mxu0 %v7708
          %8700 = vmatpush1.bf16.msra.mxu0 %v7707
          %8701 = vmatprep.subr.bf16.mxu0 %v7712
          %8702 = vmatpush1.bf16.msra.mxu0 %v7711
          %8703 = vmatprep.subr.bf16.mxu0 %v7716
          %8704 = vmatpush1.bf16.msra.mxu0 %v7715
          %8705 = vmatprep.subr.bf16.mxu0 %v7720
          %8706 = vmatpush1.bf16.msra.mxu0 %v7719
          %8707 = vmatprep.subr.bf16.mxu0 %v7724
          %8708 = vmatpush1.bf16.msra.mxu0 %v7723
          %8709 = vmatprep.subr.bf16.mxu0 %v7728
          %8710 = vmatpush1.bf16.msra.mxu0 %v7727
          %8711 = vmatprep.subr.bf16.mxu0 %v7732
          %8712 = vmatpush1.bf16.msra.mxu0 %v7731
          %8713 = vmatprep.mubr.bf16.mxu0 %v6059
          %8714 = vmatmul.mubr.bf16.gmra.mrb[0].mxu0 %v6058
          %v8715 = vpop.f32.mrb[0].mxu0
          %v8716 = vadd.f32 %v8675, %v8715
          %v8717 = vpop.f32.mrb[0].mxu0
          %v8718 = vadd.f32 %v8677, %v8717
          %v8719 = vpop.f32.mrb[0].mxu0
          %v8720 = vpop.f32.mrb[0].mxu0
          %8721 = vdwg.mxu0
          %8722 = vmatprep.subr.bf16.mxu0 %v7736
          %8723 = vmatpush1.bf16.msra.mxu0 %v7735
          %8724 = vmatprep.subr.bf16.mxu0 %v7740
          %8725 = vmatpush1.bf16.msra.mxu0 %v7739
          %8726 = vmatprep.subr.bf16.mxu0 %v7744
          %8727 = vmatpush1.bf16.msra.mxu0 %v7743
          %8728 = vmatprep.subr.bf16.mxu0 %v7748
          %8729 = vmatpush1.bf16.msra.mxu0 %v7747
          %8730 = vmatprep.subr.bf16.mxu0 %v7752
          %8731 = vmatpush1.bf16.msra.mxu0 %v7751
          %8732 = vmatprep.subr.bf16.mxu0 %v7756
          %8733 = vmatpush1.bf16.msra.mxu0 %v7755
          %8734 = vmatprep.subr.bf16.mxu0 %v7760
          %8735 = vmatpush1.bf16.msra.mxu0 %v7759
          %8736 = vmatprep.subr.bf16.mxu0 %v7764
          %8737 = vmatpush1.bf16.msra.mxu0 %v7763
          %8738 = vmatprep.subr.bf16.mxu0 %v7768
          %8739 = vmatpush1.bf16.msra.mxu0 %v7767
          %8740 = vmatprep.subr.bf16.mxu0 %v7772
          %8741 = vmatpush1.bf16.msra.mxu0 %v7771
          %8742 = vmatprep.subr.bf16.mxu0 %v7776
          %8743 = vmatpush1.bf16.msra.mxu0 %v7775
          %8744 = vmatprep.subr.bf16.mxu0 %v7780
          %8745 = vmatpush1.bf16.msra.mxu0 %v7779
          %8746 = vmatprep.subr.bf16.mxu0 %v7784
          %8747 = vmatpush1.bf16.msra.mxu0 %v7783
          %8748 = vmatprep.subr.bf16.mxu0 %v7788
          %8749 = vmatpush1.bf16.msra.mxu0 %v7787
          %8750 = vmatprep.subr.bf16.mxu0 %v7792
          %8751 = vmatpush1.bf16.msra.mxu0 %v7791
          %8752 = vmatprep.subr.bf16.mxu0 %v7796
          %8753 = vmatpush1.bf16.msra.mxu0 %v7795
          %8754 = vmatprep.mubr.bf16.mxu0 %v6061
          %8755 = vmatmul.mubr.bf16.gmra.mrb[0].mxu0 %v6060
          %v8756 = vpop.f32.mrb[0].mxu0
          %v8757 = vadd.f32 %v8716, %v8756
          %v8758 = vpop.f32.mrb[0].mxu0
          %v8759 = vadd.f32 %v8718, %v8758
          %v8760 = vpop.f32.mrb[0].mxu0
          %v8761 = vpop.f32.mrb[0].mxu0
          %8762 = vdwg.mxu0
          %8763 = vmatprep.subr.bf16.mxu0 %v7800
          %8764 = vmatpush1.bf16.msra.mxu0 %v7799
          %8765 = vmatprep.subr.bf16.mxu0 %v7804
          %8766 = vmatpush1.bf16.msra.mxu0 %v7803
          %8767 = vmatprep.subr.bf16.mxu0 %v7808
          %8768 = vmatpush1.bf16.msra.mxu0 %v7807
          %8769 = vmatprep.subr.bf16.mxu0 %v7812
          %8770 = vmatpush1.bf16.msra.mxu0 %v7811
          %8771 = vmatprep.subr.bf16.mxu0 %v7816
          %8772 = vmatpush1.bf16.msra.mxu0 %v7815
          %8773 = vmatprep.subr.bf16.mxu0 %v7820
          %8774 = vmatpush1.bf16.msra.mxu0 %v7819
          %8775 = vmatprep.subr.bf16.mxu0 %v7824
          %8776 = vmatpush1.bf16.msra.mxu0 %v7823
          %8777 = vmatprep.subr.bf16.mxu0 %v7828
          %8778 = vmatpush1.bf16.msra.mxu0 %v7827
          %8779 = vmatprep.subr.bf16.mxu0 %v7832
          %8780 = vmatpush1.bf16.msra.mxu0 %v7831
          %8781 = vmatprep.subr.bf16.mxu0 %v7836
          %8782 = vmatpush1.bf16.msra.mxu0 %v7835
          %8783 = vmatprep.subr.bf16.mxu0 %v7840
          %8784 = vmatpush1.bf16.msra.mxu0 %v7839
          %8785 = vmatprep.subr.bf16.mxu0 %v7844
          %8786 = vmatpush1.bf16.msra.mxu0 %v7843
          %8787 = vmatprep.subr.bf16.mxu0 %v7848
          %8788 = vmatpush1.bf16.msra.mxu0 %v7847
          %8789 = vmatprep.subr.bf16.mxu0 %v7852
          %8790 = vmatpush1.bf16.msra.mxu0 %v7851
          %8791 = vmatprep.subr.bf16.mxu0 %v7856
          %8792 = vmatpush1.bf16.msra.mxu0 %v7855
          %8793 = vmatprep.subr.bf16.mxu0 %v7860
          %8794 = vmatpush1.bf16.msra.mxu0 %v7859
          %8795 = vmatprep.mubr.bf16.mxu0 %v6063
          %8796 = vmatmul.mubr.bf16.gmra.mrb[0].mxu0 %v6062
          %v8797 = vpop.f32.mrb[0].mxu0
          %v8798 = vadd.f32 %v8757, %v8797
          %v8799 = vpop.f32.mrb[0].mxu0
          %v8800 = vadd.f32 %v8759, %v8799
          %v8801 = vpop.f32.mrb[0].mxu0
          %v8802 = vpop.f32.mrb[0].mxu0
          %8803 = vdwg.mxu0
          %8804 = vmatprep.subr.bf16.mxu0 %v7864
          %8805 = vmatpush1.bf16.msra.mxu0 %v7863
          %8806 = vmatprep.subr.bf16.mxu0 %v7868
          %8807 = vmatpush1.bf16.msra.mxu0 %v7867
          %8808 = vmatprep.subr.bf16.mxu0 %v7872
          %8809 = vmatpush1.bf16.msra.mxu0 %v7871
          %8810 = vmatprep.subr.bf16.mxu0 %v7876
          %8811 = vmatpush1.bf16.msra.mxu0 %v7875
          %8812 = vmatprep.subr.bf16.mxu0 %v7880
          %8813 = vmatpush1.bf16.msra.mxu0 %v7879
          %8814 = vmatprep.subr.bf16.mxu0 %v7884
          %8815 = vmatpush1.bf16.msra.mxu0 %v7883
          %8816 = vmatprep.subr.bf16.mxu0 %v7888
          %8817 = vmatpush1.bf16.msra.mxu0 %v7887
          %8818 = vmatprep.subr.bf16.mxu0 %v7892
          %8819 = vmatpush1.bf16.msra.mxu0 %v7891
          %8820 = vmatprep.subr.bf16.mxu0 %v7896
          %8821 = vmatpush1.bf16.msra.mxu0 %v7895
          %8822 = vmatprep.subr.bf16.mxu0 %v7900
          %8823 = vmatpush1.bf16.msra.mxu0 %v7899
          %8824 = vmatprep.subr.bf16.mxu0 %v7904
          %8825 = vmatpush1.bf16.msra.mxu0 %v7903
          %8826 = vmatprep.subr.bf16.mxu0 %v7908
          %8827 = vmatpush1.bf16.msra.mxu0 %v7907
          %8828 = vmatprep.subr.bf16.mxu0 %v7912
          %8829 = vmatpush1.bf16.msra.mxu0 %v7911
          %8830 = vmatprep.subr.bf16.mxu0 %v7916
          %8831 = vmatpush1.bf16.msra.mxu0 %v7915
          %8832 = vmatprep.subr.bf16.mxu0 %v7920
          %8833 = vmatpush1.bf16.msra.mxu0 %v7919
          %8834 = vmatprep.subr.bf16.mxu0 %v7924
          %8835 = vmatpush1.bf16.msra.mxu0 %v7923
          %8836 = vmatprep.mubr.bf16.mxu0 %v6065
          %8837 = vmatmul.mubr.bf16.gmra.mrb[0].mxu0 %v6064
          %v8838 = vpop.f32.mrb[0].mxu0
          %v8839 = vadd.f32 %v8798, %v8838
          %v8840 = vpop.f32.mrb[0].mxu0
          %v8841 = vadd.f32 %v8800, %v8840
          %v8842 = vpop.f32.mrb[0].mxu0
          %v8843 = vpop.f32.mrb[0].mxu0
          %8844 = vdwg.mxu0
          %8845 = vmatprep.subr.bf16.mxu0 %v7928
          %8846 = vmatpush1.bf16.msra.mxu0 %v7927
          %8847 = vmatprep.subr.bf16.mxu0 %v7932
          %8848 = vmatpush1.bf16.msra.mxu0 %v7931
          %8849 = vmatprep.subr.bf16.mxu0 %v7936
          %8850 = vmatpush1.bf16.msra.mxu0 %v7935
          %8851 = vmatprep.subr.bf16.mxu0 %v7940
          %8852 = vmatpush1.bf16.msra.mxu0 %v7939
          %8853 = vmatprep.subr.bf16.mxu0 %v7944
          %8854 = vmatpush1.bf16.msra.mxu0 %v7943
          %8855 = vmatprep.subr.bf16.mxu0 %v7948
          %8856 = vmatpush1.bf16.msra.mxu0 %v7947
          %8857 = vmatprep.subr.bf16.mxu0 %v7952
          %8858 = vmatpush1.bf16.msra.mxu0 %v7951
          %8859 = vmatprep.subr.bf16.mxu0 %v7956
          %8860 = vmatpush1.bf16.msra.mxu0 %v7955
          %8861 = vmatprep.subr.bf16.mxu0 %v7960
          %8862 = vmatpush1.bf16.msra.mxu0 %v7959
          %8863 = vmatprep.subr.bf16.mxu0 %v7964
          %8864 = vmatpush1.bf16.msra.mxu0 %v7963
          %8865 = vmatprep.subr.bf16.mxu0 %v7968
          %8866 = vmatpush1.bf16.msra.mxu0 %v7967
          %8867 = vmatprep.subr.bf16.mxu0 %v7972
          %8868 = vmatpush1.bf16.msra.mxu0 %v7971
          %8869 = vmatprep.subr.bf16.mxu0 %v7976
          %8870 = vmatpush1.bf16.msra.mxu0 %v7975
          %8871 = vmatprep.subr.bf16.mxu0 %v7980
          %8872 = vmatpush1.bf16.msra.mxu0 %v7979
          %8873 = vmatprep.subr.bf16.mxu0 %v7984
          %8874 = vmatpush1.bf16.msra.mxu0 %v7983
          %8875 = vmatprep.subr.bf16.mxu0 %v7988
          %8876 = vmatpush1.bf16.msra.mxu0 %v7987
          %8877 = vmatprep.mubr.bf16.mxu0 %v6067
          %8878 = vmatmul.mubr.bf16.gmra.mrb[0].mxu0 %v6066
          %v8879 = vpop.f32.mrb[0].mxu0
          %v8880 = vadd.f32 %v8839, %v8879
          %v8881 = vpop.f32.mrb[0].mxu0
          %v8882 = vadd.f32 %v8841, %v8881
          %v8883 = vpop.f32.mrb[0].mxu0
          %v8884 = vpop.f32.mrb[0].mxu0
          %8885 = vdwg.mxu0
          %v8886 = vmax.f32 %v8634, 0.0
          %v8887 = vmax.f32 %v8636, 0.0
          %v8888 = vmax.f32 %v8880, 0.0
          %v8889 = vmax.f32 %v8882, 0.0
          %v8890 = vpack.c.bf16 %v8886, %v8886
          %v8891 = vpack.c.bf16 %v8887, %v8887
          %v8892 = vpack.c.bf16 %v8888, %v8888
          %v8893 = vpack.c.bf16 %v8889, %v8889
          %v8894 = vld [vmem:[%s7] sm:$0xf]
          %v8895 = vld [vmem:[%s7 + $0x4] sm:$0xf]
          %v8896 = vld [vmem:[%s7 + $0x8] sm:$0xf]
          %v8897 = vld [vmem:[%s7 + $0xc] sm:$0xf]
          %v8898 = vld [vmem:[%s7 + $0x10] sm:$0xf]
          %v8899 = vld [vmem:[%s7 + $0x14] sm:$0xf]
          %v8900 = vld [vmem:[%s7 + $0x18] sm:$0xf]
          %v8901 = vld [vmem:[%s7 + $0x1c] sm:$0xf]
          %v8902 = vld [vmem:[%s7 + $0x20] sm:$0xf]
          %v8903 = vld [vmem:[%s7 + $0x24] sm:$0xf]
          %v8904 = vld [vmem:[%s7 + $0x28] sm:$0xf]
          %v8905 = vld [vmem:[%s7 + $0x2c] sm:$0xf]
          %v8906 = vld [vmem:[%s7 + $0x30] sm:$0xf]
          %v8907 = vld [vmem:[%s7 + $0x34] sm:$0xf]
          %v8908 = vld [vmem:[%s7 + $0x38] sm:$0xf]
          %v8909 = vld [vmem:[%s7 + $0x3c] sm:$0xf]
          %v8910 = vld [vmem:[%s7 + $0x40] sm:$0xf]
          %v8911 = vld [vmem:[%s7 + $0x44] sm:$0xf]
          %v8912 = vld [vmem:[%s7 + $0x48] sm:$0xf]
          %v8913 = vld [vmem:[%s7 + $0x4c] sm:$0xf]
          %v8914 = vld [vmem:[%s7 + $0x50] sm:$0xf]
          %v8915 = vld [vmem:[%s7 + $0x54] sm:$0xf]
          %v8916 = vld [vmem:[%s7 + $0x58] sm:$0xf]
          %v8917 = vld [vmem:[%s7 + $0x5c] sm:$0xf]
          %v8918 = vld [vmem:[%s7 + $0x60] sm:$0xf]
          %v8919 = vld [vmem:[%s7 + $0x64] sm:$0xf]
          %v8920 = vld [vmem:[%s7 + $0x68] sm:$0xf]
          %v8921 = vld [vmem:[%s7 + $0x6c] sm:$0xf]
          %v8922 = vld [vmem:[%s7 + $0x70] sm:$0xf]
          %v8923 = vld [vmem:[%s7 + $0x74] sm:$0xf]
          %v8924 = vld [vmem:[%s7 + $0x78] sm:$0xf]
          %v8925 = vld [vmem:[%s7 + $0x7c] sm:$0xf]
          %v8926 = vld [vmem:[%s7 + $0x80] sm:$0xf]
          %v8927 = vld [vmem:[%s7 + $0x84] sm:$0xf]
          %v8928 = vld [vmem:[%s7 + $0x88] sm:$0xf]
          %v8929 = vld [vmem:[%s7 + $0x8c] sm:$0xf]
          %v8930 = vld [vmem:[%s7 + $0x90] sm:$0xf]
          %v8931 = vld [vmem:[%s7 + $0x94] sm:$0xf]
          %v8932 = vld [vmem:[%s7 + $0x98] sm:$0xf]
          %v8933 = vld [vmem:[%s7 + $0x9c] sm:$0xf]
          %v8934 = vld [vmem:[%s7 + $0xa0] sm:$0xf]
          %v8935 = vld [vmem:[%s7 + $0xa4] sm:$0xf]
          %v8936 = vld [vmem:[%s7 + $0xa8] sm:$0xf]
          %v8937 = vld [vmem:[%s7 + $0xac] sm:$0xf]
          %v8938 = vld [vmem:[%s7 + $0xb0] sm:$0xf]
          %v8939 = vld [vmem:[%s7 + $0xb4] sm:$0xf]
          %v8940 = vld [vmem:[%s7 + $0xb8] sm:$0xf]
          %v8941 = vld [vmem:[%s7 + $0xbc] sm:$0xf]
          %v8942 = vld [vmem:[%s7 + $0xc0] sm:$0xf]
          %v8943 = vld [vmem:[%s7 + $0xc4] sm:$0xf]
          %v8944 = vld [vmem:[%s7 + $0xc8] sm:$0xf]
          %v8945 = vld [vmem:[%s7 + $0xcc] sm:$0xf]
          %v8946 = vld [vmem:[%s7 + $0xd0] sm:$0xf]
          %v8947 = vld [vmem:[%s7 + $0xd4] sm:$0xf]
          %v8948 = vld [vmem:[%s7 + $0xd8] sm:$0xf]
          %v8949 = vld [vmem:[%s7 + $0xdc] sm:$0xf]
          %v8950 = vld [vmem:[%s7 + $0xe0] sm:$0xf]
          %v8951 = vld [vmem:[%s7 + $0xe4] sm:$0xf]
          %v8952 = vld [vmem:[%s7 + $0xe8] sm:$0xf]
          %v8953 = vld [vmem:[%s7 + $0xec] sm:$0xf]
          %v8954 = vld [vmem:[%s7 + $0xf0] sm:$0xf]
          %v8955 = vld [vmem:[%s7 + $0xf4] sm:$0xf]
          %v8956 = vld [vmem:[%s7 + $0xf8] sm:$0xf]
          %v8957 = vld [vmem:[%s7 + $0xfc] sm:$0xf]
          %v8958 = vld [vmem:[%s8] sm:$0x1]
          %v9023 = vunpack.c.l.b16 %v8894
          %v9024 = vunpack.c.l.b16 %v8895
          %v9025 = vunpack.c.l.b16 %v8896
          %v9026 = vunpack.c.l.b16 %v8897
          %v9027 = vunpack.c.l.b16 %v8898
          %v9028 = vunpack.c.l.b16 %v8899
          %v9029 = vunpack.c.l.b16 %v8900
          %v9030 = vunpack.c.l.b16 %v8901
          %v9031 = vunpack.c.l.b16 %v8902
          %v9032 = vunpack.c.l.b16 %v8903
          %v9033 = vunpack.c.l.b16 %v8904
          %v9034 = vunpack.c.l.b16 %v8905
          %v9035 = vunpack.c.l.b16 %v8906
          %v9036 = vunpack.c.l.b16 %v8907
          %v9037 = vunpack.c.l.b16 %v8908
          %v9038 = vunpack.c.l.b16 %v8909
          %v9039 = vunpack.c.l.b16 %v8910
          %v9040 = vunpack.c.l.b16 %v8911
          %v9041 = vunpack.c.l.b16 %v8912
          %v9042 = vunpack.c.l.b16 %v8913
          %v9043 = vunpack.c.l.b16 %v8914
          %v9044 = vunpack.c.l.b16 %v8915
          %v9045 = vunpack.c.l.b16 %v8916
          %v9046 = vunpack.c.l.b16 %v8917
          %v9047 = vunpack.c.l.b16 %v8918
          %v9048 = vunpack.c.l.b16 %v8919
          %v9049 = vunpack.c.l.b16 %v8920
          %v9050 = vunpack.c.l.b16 %v8921
          %v9051 = vunpack.c.l.b16 %v8922
          %v9052 = vunpack.c.l.b16 %v8923
          %v9053 = vunpack.c.l.b16 %v8924
          %v9054 = vunpack.c.l.b16 %v8925
          %v9055 = vunpack.c.l.b16 %v8926
          %v9056 = vunpack.c.l.b16 %v8927
          %v9057 = vunpack.c.l.b16 %v8928
          %v9058 = vunpack.c.l.b16 %v8929
          %v9059 = vunpack.c.l.b16 %v8930
          %v9060 = vunpack.c.l.b16 %v8931
          %v9061 = vunpack.c.l.b16 %v8932
          %v9062 = vunpack.c.l.b16 %v8933
          %v9063 = vunpack.c.l.b16 %v8934
          %v9064 = vunpack.c.l.b16 %v8935
          %v9065 = vunpack.c.l.b16 %v8936
          %v9066 = vunpack.c.l.b16 %v8937
          %v9067 = vunpack.c.l.b16 %v8938
          %v9068 = vunpack.c.l.b16 %v8939
          %v9069 = vunpack.c.l.b16 %v8940
          %v9070 = vunpack.c.l.b16 %v8941
          %v9071 = vunpack.c.l.b16 %v8942
          %v9072 = vunpack.c.l.b16 %v8943
          %v9073 = vunpack.c.l.b16 %v8944
          %v9074 = vunpack.c.l.b16 %v8945
          %v9075 = vunpack.c.l.b16 %v8946
          %v9076 = vunpack.c.l.b16 %v8947
          %v9077 = vunpack.c.l.b16 %v8948
          %v9078 = vunpack.c.l.b16 %v8949
          %v9079 = vunpack.c.l.b16 %v8950
          %v9080 = vunpack.c.l.b16 %v8951
          %v9081 = vunpack.c.l.b16 %v8952
          %v9082 = vunpack.c.l.b16 %v8953
          %v9083 = vunpack.c.l.b16 %v8954
          %v9084 = vunpack.c.l.b16 %v8955
          %v9085 = vunpack.c.l.b16 %v8956
          %v9086 = vunpack.c.l.b16 %v8957
          %v9087 = vpack.c.b16 %v9024, %v9023
          %v9088 = vpack.c.b16 %v9026, %v9025
          %v9089 = vpack.c.b16 %v9028, %v9027
          %v9090 = vpack.c.b16 %v9030, %v9029
          %v9091 = vpack.c.b16 %v9032, %v9031
          %v9092 = vpack.c.b16 %v9034, %v9033
          %v9093 = vpack.c.b16 %v9036, %v9035
          %v9094 = vpack.c.b16 %v9038, %v9037
          %v9095 = vpack.c.b16 %v9040, %v9039
          %v9096 = vpack.c.b16 %v9042, %v9041
          %v9097 = vpack.c.b16 %v9044, %v9043
          %v9098 = vpack.c.b16 %v9046, %v9045
          %v9099 = vpack.c.b16 %v9048, %v9047
          %v9100 = vpack.c.b16 %v9050, %v9049
          %v9101 = vpack.c.b16 %v9052, %v9051
          %v9102 = vpack.c.b16 %v9054, %v9053
          %v9103 = vpack.c.b16 %v9056, %v9055
          %v9104 = vpack.c.b16 %v9058, %v9057
          %v9105 = vpack.c.b16 %v9060, %v9059
          %v9106 = vpack.c.b16 %v9062, %v9061
          %v9107 = vpack.c.b16 %v9064, %v9063
          %v9108 = vpack.c.b16 %v9066, %v9065
          %v9109 = vpack.c.b16 %v9068, %v9067
          %v9110 = vpack.c.b16 %v9070, %v9069
          %v9111 = vpack.c.b16 %v9072, %v9071
          %v9112 = vpack.c.b16 %v9074, %v9073
          %v9113 = vpack.c.b16 %v9076, %v9075
          %v9114 = vpack.c.b16 %v9078, %v9077
          %v9115 = vpack.c.b16 %v9080, %v9079
          %v9116 = vpack.c.b16 %v9082, %v9081
          %v9117 = vpack.c.b16 %v9084, %v9083
          %v9118 = vpack.c.b16 %v9086, %v9085
          %9151 = vmatprep.subr.bf16.mxu0 0
          %9152 = vmatpush1.bf16.msra.mxu0 %v9087
          %9153 = vmatprep.subr.bf16.mxu0 0
          %9154 = vmatpush1.bf16.msra.mxu0 %v9088
          %9155 = vmatprep.subr.bf16.mxu0 0
          %9156 = vmatpush1.bf16.msra.mxu0 %v9089
          %9157 = vmatprep.subr.bf16.mxu0 0
          %9158 = vmatpush1.bf16.msra.mxu0 %v9090
          %9159 = vmatprep.subr.bf16.mxu0 0
          %9160 = vmatpush1.bf16.msra.mxu0 %v9091
          %9161 = vmatprep.subr.bf16.mxu0 0
          %9162 = vmatpush1.bf16.msra.mxu0 %v9092
          %9163 = vmatprep.subr.bf16.mxu0 0
          %9164 = vmatpush1.bf16.msra.mxu0 %v9093
          %9165 = vmatprep.subr.bf16.mxu0 0
          %9166 = vmatpush1.bf16.msra.mxu0 %v9094
          %9167 = vmatprep.subr.bf16.mxu0 0
          %9168 = vmatpush1.bf16.msra.mxu0 %v9095
          %9169 = vmatprep.subr.bf16.mxu0 0
          %9170 = vmatpush1.bf16.msra.mxu0 %v9096
          %9171 = vmatprep.subr.bf16.mxu0 0
          %9172 = vmatpush1.bf16.msra.mxu0 %v9097
          %9173 = vmatprep.subr.bf16.mxu0 0
          %9174 = vmatpush1.bf16.msra.mxu0 %v9098
          %9175 = vmatprep.subr.bf16.mxu0 0
          %9176 = vmatpush1.bf16.msra.mxu0 %v9099
          %9177 = vmatprep.subr.bf16.mxu0 0
          %9178 = vmatpush1.bf16.msra.mxu0 %v9100
          %9179 = vmatprep.subr.bf16.mxu0 0
          %9180 = vmatpush1.bf16.msra.mxu0 %v9101
          %9181 = vmatprep.subr.bf16.mxu0 0
          %9182 = vmatpush1.bf16.msra.mxu0 %v9102
          %9183 = vmatprep.mubr.bf16.mxu0 %v8891
          %9184 = vmatmul.mubr.bf16.gmra.mrb[0].mxu0 %v8890
          %v9185 = vpop.f32.mrb[0].mxu0
          %v9186 = vadd.f32 %v8958, %v9185
          %v9187 = vpop.f32.mrb[0].mxu0
          %v9188 = vpop.f32.mrb[0].mxu0
          %v9189 = vpop.f32.mrb[0].mxu0
          %9190 = vdwg.mxu0
          %9191 = vmatprep.subr.bf16.mxu0 0
          %9192 = vmatpush1.bf16.msra.mxu0 %v9103
          %9193 = vmatprep.subr.bf16.mxu0 0
          %9194 = vmatpush1.bf16.msra.mxu0 %v9104
          %9195 = vmatprep.subr.bf16.mxu0 0
          %9196 = vmatpush1.bf16.msra.mxu0 %v9105
          %9197 = vmatprep.subr.bf16.mxu0 0
          %9198 = vmatpush1.bf16.msra.mxu0 %v9106
          %9199 = vmatprep.subr.bf16.mxu0 0
          %9200 = vmatpush1.bf16.msra.mxu0 %v9107
          %9201 = vmatprep.subr.bf16.mxu0 0
          %9202 = vmatpush1.bf16.msra.mxu0 %v9108
          %9203 = vmatprep.subr.bf16.mxu0 0
          %9204 = vmatpush1.bf16.msra.mxu0 %v9109
          %9205 = vmatprep.subr.bf16.mxu0 0
          %9206 = vmatpush1.bf16.msra.mxu0 %v9110
          %9207 = vmatprep.subr.bf16.mxu0 0
          %9208 = vmatpush1.bf16.msra.mxu0 %v9111
          %9209 = vmatprep.subr.bf16.mxu0 0
          %9210 = vmatpush1.bf16.msra.mxu0 %v9112
          %9211 = vmatprep.subr.bf16.mxu0 0
          %9212 = vmatpush1.bf16.msra.mxu0 %v9113
          %9213 = vmatprep.subr.bf16.mxu0 0
          %9214 = vmatpush1.bf16.msra.mxu0 %v9114
          %9215 = vmatprep.subr.bf16.mxu0 0
          %9216 = vmatpush1.bf16.msra.mxu0 %v9115
          %9217 = vmatprep.subr.bf16.mxu0 0
          %9218 = vmatpush1.bf16.msra.mxu0 %v9116
          %9219 = vmatprep.subr.bf16.mxu0 0
          %9220 = vmatpush1.bf16.msra.mxu0 %v9117
          %9221 = vmatprep.subr.bf16.mxu0 0
          %9222 = vmatpush1.bf16.msra.mxu0 %v9118
          %9223 = vmatprep.mubr.bf16.mxu0 %v8893
          %9224 = vmatmul.mubr.bf16.gmra.mrb[0].mxu0 %v8892
          %v9225 = vpop.f32.mrb[0].mxu0
          %v9226 = vadd.f32 %v9186, %v9225
          %v9227 = vpop.f32.mrb[0].mxu0
          %v9228 = vpop.f32.mrb[0].mxu0
          %v9229 = vpop.f32.mrb[0].mxu0
          %9230 = vdwg.mxu0
          %9231 = vst [vmem:[%s347] sm:$0x1] %v9226
        $region64: #{efficientnet_b3_custom_forward.1} parent=55 // pred_fallthru
          _
        %s9232 = sand.u32 %s239, 1
        %s9233 = scalar_lea.sflag [#allocation4], %s9232
        %s9234 = sand.u32 %s239, 1
        %s9235 = scalar_lea.vmem [#allocation3], %s9234
        // Predicated region
        $region65: #{efficientnet_b3_custom_forward.1} parent=55 // pred_check
          %p9236 = pneg %p249
        $region66: #{efficientnet_b3_custom_forward.1} parent=55 // pred_check_branch
          %9238 = sbr.rel (%p9236) target = $region68
        $region67: #{efficientnet_b3_custom_forward.1} parent=55 // pred_region
          %s9240 = ssub.s32 16, 16
          %9241 = vsyncadd %s9233, %s9240
          %s9242 = smul.addr %s27, 16
          %s9243 = scalar_lea.hbm %s9, %s9242
          %s9245 = sshll.u32 %s9235, 4
          %s9246 = int_to_ptr.vmem [resolvable:$true] %s9245
          %9248 = dma.vmem_to_hbm [thread:$0]  %s9246, 16, %s9243, %s9233
        $region68: #{efficientnet_b3_custom_forward.1} parent=55 // pred_fallthru
          _
      $region56: #{efficientnet_b3_custom_forward.1} parent=5 // pred_fallthru
        _
      %p9249 = scmp.le.s32.totalorder 2, %s18
      // Predicated region
      $region69: #{efficientnet_b3_custom_forward.1} parent=5 // pred_check
        %p9250 = pneg %p9249
      $region70: #{efficientnet_b3_custom_forward.1} parent=5 // pred_check_branch
        %9252 = sbr.rel (%p9250) target = $region72
      $region71: #{efficientnet_b3_custom_forward.1} parent=5 // pred_region
        %s9253 = ssub.s32 %s18, 2
        // Predicated region
        $region73: #{efficientnet_b3_custom_forward.1} parent=71 // pred_check
          %p9254 = pneg %p255
        $region74: #{efficientnet_b3_custom_forward.1} parent=71 // pred_check_branch
          %9256 = sbr.rel (%p9254) target = $region76
        $region75: #{efficientnet_b3_custom_forward.1} parent=71 // pred_region
          %s9257 = sand.u32 %s240, 1
          %s9258 = scalar_lea.sflag [#allocation4], %s9257
          %s9259 = sand.u32 %s240, 1
          %s9260 = scalar_lea.vmem [#allocation3], %s9259
          %9261 = dma.done %s9258, 16
        $region76: #{efficientnet_b3_custom_forward.1} parent=71 // pred_fallthru
          _
      $region72: #{efficientnet_b3_custom_forward.1} parent=5 // pred_fallthru
        _
    $region6: #{efficientnet_b3_custom_forward.1} parent=1 // loop_footer
      %s22 = sadd.s32 1, %s18
    $region7: #{efficientnet_b3_custom_forward.1} parent=1 // loop_footer_branch
      %17 = sbr.rel target = $region3
    $region8: #{efficientnet_b3_custom_forward.1} parent=1 // loop_exit
      _
    %9262 = vsyncpa [#allocation4], 1
    %s9263 = scalar_lea.sflag [#allocation4], 1
    %9264 = vsyncpa %s9263, 1

</llo_original>
